<compile_context>
chip_gen: v7x
topology: tpu7x:2x2x1
jax: 0.10.0
libtpu: 0.0.40
codegen_flags: <defaults>
</compile_context>

<pallas_src>
import functools

import jax
import jax.numpy as jnp
from jax.experimental import pallas as pl
from jax.experimental.pallas import tpu as pltpu


# ------------------------------ fused kernel ------------------------------- #

def _fused_forward_kernel(x_ref,
                          cw1_ref, cb1_ref, cw2_ref, cb2_ref, cw3_ref, cb3_ref,
                          wqkv_ref, bqkv_ref, wo_ref, bo_ref,
                          w1_ref, b1_ref, w2_ref, b2_ref,
                          o_ref, *, num_heads, num_layers):
    f32 = jnp.float32
    bf16 = jnp.bfloat16

    def mm(a, b):
        # bf16 x bf16 MXU matmul with f32 accumulation.
        return jnp.dot(a.astype(bf16), b, preferred_element_type=f32)

    # ---- conv stack.  H = W = 1  =>  only the centre 3x3 tap contributes. ----
    a = jnp.maximum(mm(x_ref[...], cw1_ref[...]) + cb1_ref[...], 0.0)   # (B, F)
    a = jnp.maximum(mm(a, cw2_ref[...]) + cb2_ref[...], 0.0)            # (B, 2F)
    x = jnp.maximum(mm(a, cw3_ref[...]) + cb3_ref[...], 0.0)            # (B, 4F)

    B, E = x.shape
    dh = E // num_heads
    scale = 1.0 / (dh ** 0.5)

    # ---- transformer layers (activations stay in vregs/VMEM throughout). ----
    for l in range(num_layers):
        wqkv = wqkv_ref[l]          # (E, 3E) bf16
        wo = wo_ref[l]              # (E, E)  bf16
        w1 = w1_ref[l]              # (E, 4E) bf16
        w2 = w2_ref[l]              # (4E, E) bf16

        qkv = mm(x, wqkv) + bqkv_ref[l]          # (B, 3E) f32
        q = qkv[:, :E] * scale                   # lane-aligned 128-wide slices
        k = qkv[:, E:2 * E]
        v = qkv[:, 2 * E:]

        # Per-head scaled-dot-product attention with the out-projection folded
        # into each head's output dot (no narrow-lane concatenate).
        attn = jnp.zeros((B, E), f32)
        for hd in range(num_heads):
            sl = slice(hd * dh, (hd + 1) * dh)
            qh = q[:, sl].astype(bf16)           # (B, dh)
            kh = k[:, sl].astype(bf16)
            vh = v[:, sl].astype(bf16)
            s = jax.lax.dot_general(qh, kh, (((1,), (1,)), ((), ())),
                                    preferred_element_type=f32)       # (B, B)
            s = s - jnp.max(s, axis=-1, keepdims=True)
            p = jnp.exp(s)
            p = p * pl.reciprocal(jnp.sum(p, axis=-1, keepdims=True), approx=True)
            oh = mm(p, vh)                       # (B, dh)
            attn = attn + mm(oh, wo[sl, :])      # fold W_o slice: (B, E)
        attn = attn + bo_ref[l]

        # Reference: `x, _ = attn(x,x,x); x = x + x`  ->  2 * attn_out.
        y = attn + attn

        # FFN: Linear(E, 4E) -> ReLU -> Linear(4E, E)   (no residual, as in ref)
        ffn_h = jnp.maximum(mm(y, w1) + b1_ref[l], 0.0)
        x = mm(ffn_h, w2) + b2_ref[l]

    o_ref[...] = x


def fused_forward(x2d, cw, cb, t, num_heads):
    """Single pallas_call running the whole forward; all operands whole-array VMEM blocks."""
    B = x2d.shape[0]
    E = cw[2].shape[1]
    num_layers = t["wqkv"].shape[0]
    args = (x2d,
            cw[0], cb[0], cw[1], cb[1], cw[2], cb[2],
            t["wqkv"], t["bqkv"], t["wo"], t["bo"],
            t["w1"], t["b1"], t["w2"], t["b2"])
    kernel = functools.partial(_fused_forward_kernel,
                               num_heads=num_heads, num_layers=num_layers)
    return pl.pallas_call(
        kernel,
        out_shape=jax.ShapeDtypeStruct((B, E), jnp.float32),
        grid=(1,),
        in_specs=[pl.BlockSpec(a.shape, lambda i, _n=a.ndim: (0,) * _n) for a in args],
        out_specs=pl.BlockSpec((B, E), lambda i: (0, 0)),
        compiler_params=pltpu.CompilerParams(dimension_semantics=("arbitrary",)),
    )(*args)


# ------------------------------- JAX wrapper -------------------------------- #

@functools.partial(jax.jit, static_argnames=("num_heads",))
def fighter_net_forward(x_nchw, cw, cb, t, num_heads=4):
    B, C, H, W = x_nchw.shape
    # The reference module only composes end-to-end when the flattened conv
    # output (B, 4F*H*W) equals the transformer embed dim 4F, i.e. H = W = 1.
    # TODO(synk): general H,W>1 conv path omitted — it cannot feed the
    # transformer stack of the reference module anyway.
    assert H == 1 and W == 1, "FighterNetModel forward only type-checks for H=W=1"
    x2d = x_nchw.reshape(B, C)                   # NCHW with H=W=1 -> (B, C)
    return fused_forward(x2d, cw, cb, t, num_heads)


def prepare_params(convs, layers):
    """One-time hoisted preprocessing: centre-tap conv weights, bf16 matmul
    operands, 2-D biases, transformer weights stacked on a leading layer axis."""
    cw = [w[1, 1].astype(jnp.bfloat16) for (w, _) in convs]       # (Cin, Cout)
    cb = [b.reshape(1, -1) for (_, b) in convs]                   # (1, Cout) f32

    def stack_w(name):
        return jnp.stack([l[name] for l in layers]).astype(jnp.bfloat16)

    def stack_b(name):
        return jnp.stack([l[name].reshape(1, -1) for l in layers])  # (NL, 1, D) f32

    t = dict(wqkv=stack_w("wqkv"), bqkv=stack_b("bqkv"),
             wo=stack_w("wo"), bo=stack_b("bo"),
             w1=stack_w("w1"), b1=stack_b("b1"),
             w2=stack_w("w2"), b2=stack_b("b2"))
    return cw, cb, t


def init_params(key, num_filters=32, num_transformer_layers=4):
    """Deterministic synthetic parameters (model_size='small')."""
    E = num_filters * 4
    keys = jax.random.split(key, 3 + num_transformer_layers)
    cins = [3, num_filters, num_filters * 2]
    couts = [num_filters, num_filters * 2, num_filters * 4]
    convs = []
    for i in range(3):
        kw, kb = jax.random.split(keys[i])
        convs.append((
            jax.random.normal(kw, (3, 3, cins[i], couts[i]), jnp.float32) * 0.05,
            jax.random.normal(kb, (couts[i],), jnp.float32) * 0.05,
        ))
    layers = []
    for i in range(num_transformer_layers):
        k = jax.random.split(keys[3 + i], 8)
        layers.append(dict(
            wqkv=jax.random.normal(k[0], (E, 3 * E), jnp.float32) * 0.05,
            bqkv=jax.random.normal(k[1], (3 * E,), jnp.float32) * 0.05,
            wo=jax.random.normal(k[2], (E, E), jnp.float32) * 0.05,
            bo=jax.random.normal(k[3], (E,), jnp.float32) * 0.05,
            w1=jax.random.normal(k[4], (E, 4 * E), jnp.float32) * 0.05,
            b1=jax.random.normal(k[5], (4 * E,), jnp.float32) * 0.05,
            w2=jax.random.normal(k[6], (4 * E, E), jnp.float32) * 0.05,
            b2=jax.random.normal(k[7], (E,), jnp.float32) * 0.05,
        ))
    return convs, layers


if __name__ == "__main__":
    key = jax.random.PRNGKey(0)
    kx, kp = jax.random.split(key)
    # H = W = 1: only spatial size for which the reference module's flatten
    # (B, 4F*H*W) matches the transformer embed dim 4F and the forward runs.
    x = jax.random.normal(kx, (2, 3, 1, 1), jnp.float32)        # NCHW, batch=2
    convs, layers = init_params(kp, num_filters=32, num_transformer_layers=4)
    cw, cb, t = prepare_params(convs, layers)
    out = fighter_net_forward(x, cw, cb, t, num_heads=4)
    jax.block_until_ready(out)
    assert out.shape == (2, 128) and out.dtype == jnp.float32
    print("KERNEL_OK")
</pallas_src>

<mosaic_0001>
module attributes {stable_mosaic.version = 11 : i64} {
  func.func @_fused_forward_kernel(%arg0: i32, %arg1: memref<2x3xf32, #tpu.memory_space<vmem>>, %arg2: memref<3x32xbf16, #tpu.memory_space<vmem>>, %arg3: memref<1x32xf32, #tpu.memory_space<vmem>>, %arg4: memref<32x64xbf16, #tpu.memory_space<vmem>>, %arg5: memref<1x64xf32, #tpu.memory_space<vmem>>, %arg6: memref<64x128xbf16, #tpu.memory_space<vmem>>, %arg7: memref<1x128xf32, #tpu.memory_space<vmem>>, %arg8: memref<4x128x384xbf16, #tpu.memory_space<vmem>>, %arg9: memref<4x1x384xf32, #tpu.memory_space<vmem>>, %arg10: memref<4x128x128xbf16, #tpu.memory_space<vmem>>, %arg11: memref<4x1x128xf32, #tpu.memory_space<vmem>>, %arg12: memref<4x128x512xbf16, #tpu.memory_space<vmem>>, %arg13: memref<4x1x512xf32, #tpu.memory_space<vmem>>, %arg14: memref<4x512x128xbf16, #tpu.memory_space<vmem>>, %arg15: memref<4x1x128xf32, #tpu.memory_space<vmem>>, %arg16: memref<2x128xf32, #tpu.memory_space<vmem>>) attributes {dimension_semantics = [#tpu.dimension_semantics<arbitrary>], iteration_bounds = array<i64: 1>, scalar_prefetch = 0 : i64, scratch_operands = 0 : i64, tpu.core_type = #tpu.core_type<tc>, window_params = [{pipeline_mode = #tpu.pipeline_mode<synchronous>, transform_indices = @transform_0, window_bounds = array<i64: 2, 3>}, {pipeline_mode = #tpu.pipeline_mode<synchronous>, transform_indices = @transform_1, window_bounds = array<i64: 3, 32>}, {pipeline_mode = #tpu.pipeline_mode<synchronous>, transform_indices = @transform_2, window_bounds = array<i64: 1, 32>}, {pipeline_mode = #tpu.pipeline_mode<synchronous>, transform_indices = @transform_3, window_bounds = array<i64: 32, 64>}, {pipeline_mode = #tpu.pipeline_mode<synchronous>, transform_indices = @transform_4, window_bounds = array<i64: 1, 64>}, {pipeline_mode = #tpu.pipeline_mode<synchronous>, transform_indices = @transform_5, window_bounds = array<i64: 64, 128>}, {pipeline_mode = #tpu.pipeline_mode<synchronous>, transform_indices = @transform_6, window_bounds = array<i64: 1, 128>}, {pipeline_mode = #tpu.pipeline_mode<synchronous>, transform_indices = @transform_7, window_bounds = array<i64: 4, 128, 384>}, {pipeline_mode = #tpu.pipeline_mode<synchronous>, transform_indices = @transform_8, window_bounds = array<i64: 4, 1, 384>}, {pipeline_mode = #tpu.pipeline_mode<synchronous>, transform_indices = @transform_9, window_bounds = array<i64: 4, 128, 128>}, {pipeline_mode = #tpu.pipeline_mode<synchronous>, transform_indices = @transform_10, window_bounds = array<i64: 4, 1, 128>}, {pipeline_mode = #tpu.pipeline_mode<synchronous>, transform_indices = @transform_11, window_bounds = array<i64: 4, 128, 512>}, {pipeline_mode = #tpu.pipeline_mode<synchronous>, transform_indices = @transform_12, window_bounds = array<i64: 4, 1, 512>}, {pipeline_mode = #tpu.pipeline_mode<synchronous>, transform_indices = @transform_13, window_bounds = array<i64: 4, 512, 128>}, {pipeline_mode = #tpu.pipeline_mode<synchronous>, transform_indices = @transform_14, window_bounds = array<i64: 4, 1, 128>}, {pipeline_mode = #tpu.pipeline_mode<synchronous>, transform_indices = @transform_15, window_bounds = array<i64: 2, 128>}]} {
    %c0 = arith.constant 0 : index
    %c0_0 = arith.constant 0 : index
    %0 = vector.load %arg1[%c0, %c0_0] : memref<2x3xf32, #tpu.memory_space<vmem>>, vector<2x3xf32>
    %c0_1 = arith.constant 0 : index
    %c0_2 = arith.constant 0 : index
    %1 = vector.load %arg2[%c0_1, %c0_2] : memref<3x32xbf16, #tpu.memory_space<vmem>>, vector<3x32xbf16>
    %2 = arith.truncf %0 : vector<2x3xf32> to vector<2x3xbf16>
    %cst = arith.constant dense<0.000000e+00> : vector<2x32xf32>
    %3 = tpu.matmul %2, %1, %cst {dimension_numbers = #tpu.dot_dimension_numbers<[1], [0], [0], [1], [0, 0, 1, 1], [], []>} : vector<2x3xbf16>, vector<3x32xbf16>, vector<2x32xf32> -> vector<2x32xf32>
    %c0_3 = arith.constant 0 : index
    %c0_4 = arith.constant 0 : index
    %4 = vector.load %arg3[%c0_3, %c0_4] : memref<1x32xf32, #tpu.memory_space<vmem>>, vector<1x32xf32>
    %5 = vector.broadcast %4 : vector<1x32xf32> to vector<2x32xf32>
    %6 = arith.addf %3, %5 : vector<2x32xf32>
    %cst_5 = arith.constant 0.000000e+00 : f32
    %7 = vector.broadcast %cst_5 : f32 to vector<2x32xf32>
    %8 = arith.maximumf %6, %7 : vector<2x32xf32>
    %c0_6 = arith.constant 0 : index
    %c0_7 = arith.constant 0 : index
    %9 = vector.load %arg4[%c0_6, %c0_7] : memref<32x64xbf16, #tpu.memory_space<vmem>>, vector<32x64xbf16>
    %10 = arith.truncf %8 : vector<2x32xf32> to vector<2x32xbf16>
    %cst_8 = arith.constant dense<0.000000e+00> : vector<2x64xf32>
    %11 = tpu.matmul %10, %9, %cst_8 {dimension_numbers = #tpu.dot_dimension_numbers<[1], [0], [0], [1], [0, 0, 1, 1], [], []>} : vector<2x32xbf16>, vector<32x64xbf16>, vector<2x64xf32> -> vector<2x64xf32>
    %c0_9 = arith.constant 0 : index
    %c0_10 = arith.constant 0 : index
    %12 = vector.load %arg5[%c0_9, %c0_10] : memref<1x64xf32, #tpu.memory_space<vmem>>, vector<1x64xf32>
    %13 = vector.broadcast %12 : vector<1x64xf32> to vector<2x64xf32>
    %14 = arith.addf %11, %13 : vector<2x64xf32>
    %cst_11 = arith.constant 0.000000e+00 : f32
    %15 = vector.broadcast %cst_11 : f32 to vector<2x64xf32>
    %16 = arith.maximumf %14, %15 : vector<2x64xf32>
    %c0_12 = arith.constant 0 : index
    %c0_13 = arith.constant 0 : index
    %17 = vector.load %arg6[%c0_12, %c0_13] : memref<64x128xbf16, #tpu.memory_space<vmem>>, vector<64x128xbf16>
    %18 = arith.truncf %16 : vector<2x64xf32> to vector<2x64xbf16>
    %cst_14 = arith.constant dense<0.000000e+00> : vector<2x128xf32>
    %19 = tpu.matmul %18, %17, %cst_14 {dimension_numbers = #tpu.dot_dimension_numbers<[1], [0], [0], [1], [0, 0, 1, 1], [], []>} : vector<2x64xbf16>, vector<64x128xbf16>, vector<2x128xf32> -> vector<2x128xf32>
    %c0_15 = arith.constant 0 : index
    %c0_16 = arith.constant 0 : index
    %20 = vector.load %arg7[%c0_15, %c0_16] : memref<1x128xf32, #tpu.memory_space<vmem>>, vector<1x128xf32>
    %21 = vector.broadcast %20 : vector<1x128xf32> to vector<2x128xf32>
    %22 = arith.addf %19, %21 : vector<2x128xf32>
    %cst_17 = arith.constant 0.000000e+00 : f32
    %23 = vector.broadcast %cst_17 : f32 to vector<2x128xf32>
    %24 = arith.maximumf %22, %23 : vector<2x128xf32>
    %c0_18 = arith.constant 0 : index
    %c0_19 = arith.constant 0 : index
    %c0_20 = arith.constant 0 : index
    %25 = vector.load %arg8[%c0_18, %c0_19, %c0_20] : memref<4x128x384xbf16, #tpu.memory_space<vmem>>, vector<1x128x384xbf16>
    %26 = vector.shape_cast %25 : vector<1x128x384xbf16> to vector<128x384xbf16>
    %c0_21 = arith.constant 0 : index
    %c0_22 = arith.constant 0 : index
    %c0_23 = arith.constant 0 : index
    %27 = vector.load %arg10[%c0_21, %c0_22, %c0_23] : memref<4x128x128xbf16, #tpu.memory_space<vmem>>, vector<1x128x128xbf16>
    %28 = vector.shape_cast %27 : vector<1x128x128xbf16> to vector<128x128xbf16>
    %c0_24 = arith.constant 0 : index
    %c0_25 = arith.constant 0 : index
    %c0_26 = arith.constant 0 : index
    %29 = vector.load %arg12[%c0_24, %c0_25, %c0_26] : memref<4x128x512xbf16, #tpu.memory_space<vmem>>, vector<1x128x512xbf16>
    %30 = vector.shape_cast %29 : vector<1x128x512xbf16> to vector<128x512xbf16>
    %c0_27 = arith.constant 0 : index
    %c0_28 = arith.constant 0 : index
    %c0_29 = arith.constant 0 : index
    %31 = vector.load %arg14[%c0_27, %c0_28, %c0_29] : memref<4x512x128xbf16, #tpu.memory_space<vmem>>, vector<1x512x128xbf16>
    %32 = vector.shape_cast %31 : vector<1x512x128xbf16> to vector<512x128xbf16>
    %33 = arith.truncf %24 : vector<2x128xf32> to vector<2x128xbf16>
    %cst_30 = arith.constant dense<0.000000e+00> : vector<2x384xf32>
    %34 = tpu.matmul %33, %26, %cst_30 {dimension_numbers = #tpu.dot_dimension_numbers<[1], [0], [0], [1], [0, 0, 1, 1], [], []>} : vector<2x128xbf16>, vector<128x384xbf16>, vector<2x384xf32> -> vector<2x384xf32>
    %c0_31 = arith.constant 0 : index
    %c0_32 = arith.constant 0 : index
    %c0_33 = arith.constant 0 : index
    %35 = vector.load %arg9[%c0_31, %c0_32, %c0_33] : memref<4x1x384xf32, #tpu.memory_space<vmem>>, vector<1x1x384xf32>
    %36 = vector.shape_cast %35 : vector<1x1x384xf32> to vector<1x384xf32>
    %37 = vector.broadcast %36 : vector<1x384xf32> to vector<2x384xf32>
    %38 = arith.addf %34, %37 : vector<2x384xf32>
    %39 = vector.extract_strided_slice %38 {offsets = [0, 0], sizes = [2, 128], strides = [1, 1]} : vector<2x384xf32> to vector<2x128xf32>
    %cst_34 = arith.constant 0.176776692 : f32
    %40 = vector.broadcast %cst_34 : f32 to vector<2x128xf32>
    %41 = arith.mulf %39, %40 : vector<2x128xf32>
    %42 = vector.extract_strided_slice %38 {offsets = [0, 128], sizes = [2, 128], strides = [1, 1]} : vector<2x384xf32> to vector<2x128xf32>
    %43 = vector.extract_strided_slice %38 {offsets = [0, 256], sizes = [2, 128], strides = [1, 1]} : vector<2x384xf32> to vector<2x128xf32>
    %cst_35 = arith.constant 0.000000e+00 : f32
    %44 = vector.broadcast %cst_35 : f32 to vector<2x128xf32>
    %45 = vector.extract_strided_slice %41 {offsets = [0, 0], sizes = [2, 32], strides = [1, 1]} : vector<2x128xf32> to vector<2x32xf32>
    %46 = arith.truncf %45 : vector<2x32xf32> to vector<2x32xbf16>
    %47 = vector.extract_strided_slice %42 {offsets = [0, 0], sizes = [2, 32], strides = [1, 1]} : vector<2x128xf32> to vector<2x32xf32>
    %48 = arith.truncf %47 : vector<2x32xf32> to vector<2x32xbf16>
    %49 = vector.extract_strided_slice %43 {offsets = [0, 0], sizes = [2, 32], strides = [1, 1]} : vector<2x128xf32> to vector<2x32xf32>
    %50 = arith.truncf %49 : vector<2x32xf32> to vector<2x32xbf16>
    %cst_36 = arith.constant dense<0.000000e+00> : vector<2x2xf32>
    %51 = tpu.matmul %46, %48, %cst_36 {dimension_numbers = #tpu.dot_dimension_numbers<[1], [1], [0], [0], [0, 0, 1, 0], [], []>} : vector<2x32xbf16>, vector<2x32xbf16>, vector<2x2xf32> -> vector<2x2xf32>
    %cst_37 = arith.constant dense<0xFF800000> : vector<2xf32>
    %52 = vector.multi_reduction <maximumf>, %51, %cst_37 [1] : vector<2x2xf32> to vector<2xf32>
    %53 = vector.shape_cast %52 : vector<2xf32> to vector<2x1xf32>
    %54 = vector.broadcast %53 : vector<2x1xf32> to vector<2x2xf32>
    %55 = arith.subf %51, %54 : vector<2x2xf32>
    %56 = math.exp %55 : vector<2x2xf32>
    %cst_38 = arith.constant dense<0.000000e+00> : vector<2xf32>
    %57 = vector.multi_reduction <add>, %56, %cst_38 [1] : vector<2x2xf32> to vector<2xf32>
    %58 = vector.shape_cast %57 : vector<2xf32> to vector<2x1xf32>
    %59 = tpu.reciprocal %58 {approx = true} : vector<2x1xf32> -> vector<2x1xf32>
    %60 = vector.broadcast %59 : vector<2x1xf32> to vector<2x2xf32>
    %61 = arith.mulf %56, %60 : vector<2x2xf32>
    %62 = arith.truncf %61 : vector<2x2xf32> to vector<2x2xbf16>
    %cst_39 = arith.constant dense<0.000000e+00> : vector<2x32xf32>
    %63 = tpu.matmul %62, %50, %cst_39 {dimension_numbers = #tpu.dot_dimension_numbers<[1], [0], [0], [1], [0, 0, 1, 1], [], []>} : vector<2x2xbf16>, vector<2x32xbf16>, vector<2x32xf32> -> vector<2x32xf32>
    %64 = vector.extract_strided_slice %28 {offsets = [0, 0], sizes = [32, 128], strides = [1, 1]} : vector<128x128xbf16> to vector<32x128xbf16>
    %65 = arith.truncf %63 : vector<2x32xf32> to vector<2x32xbf16>
    %cst_40 = arith.constant dense<0.000000e+00> : vector<2x128xf32>
    %66 = tpu.matmul %65, %64, %cst_40 {dimension_numbers = #tpu.dot_dimension_numbers<[1], [0], [0], [1], [0, 0, 1, 1], [], []>} : vector<2x32xbf16>, vector<32x128xbf16>, vector<2x128xf32> -> vector<2x128xf32>
    %67 = arith.addf %44, %66 : vector<2x128xf32>
    %68 = vector.extract_strided_slice %41 {offsets = [0, 32], sizes = [2, 32], strides = [1, 1]} : vector<2x128xf32> to vector<2x32xf32>
    %69 = arith.truncf %68 : vector<2x32xf32> to vector<2x32xbf16>
    %70 = vector.extract_strided_slice %42 {offsets = [0, 32], sizes = [2, 32], strides = [1, 1]} : vector<2x128xf32> to vector<2x32xf32>
    %71 = arith.truncf %70 : vector<2x32xf32> to vector<2x32xbf16>
    %72 = vector.extract_strided_slice %43 {offsets = [0, 32], sizes = [2, 32], strides = [1, 1]} : vector<2x128xf32> to vector<2x32xf32>
    %73 = arith.truncf %72 : vector<2x32xf32> to vector<2x32xbf16>
    %cst_41 = arith.constant dense<0.000000e+00> : vector<2x2xf32>
    %74 = tpu.matmul %69, %71, %cst_41 {dimension_numbers = #tpu.dot_dimension_numbers<[1], [1], [0], [0], [0, 0, 1, 0], [], []>} : vector<2x32xbf16>, vector<2x32xbf16>, vector<2x2xf32> -> vector<2x2xf32>
    %cst_42 = arith.constant dense<0xFF800000> : vector<2xf32>
    %75 = vector.multi_reduction <maximumf>, %74, %cst_42 [1] : vector<2x2xf32> to vector<2xf32>
    %76 = vector.shape_cast %75 : vector<2xf32> to vector<2x1xf32>
    %77 = vector.broadcast %76 : vector<2x1xf32> to vector<2x2xf32>
    %78 = arith.subf %74, %77 : vector<2x2xf32>
    %79 = math.exp %78 : vector<2x2xf32>
    %cst_43 = arith.constant dense<0.000000e+00> : vector<2xf32>
    %80 = vector.multi_reduction <add>, %79, %cst_43 [1] : vector<2x2xf32> to vector<2xf32>
    %81 = vector.shape_cast %80 : vector<2xf32> to vector<2x1xf32>
    %82 = tpu.reciprocal %81 {approx = true} : vector<2x1xf32> -> vector<2x1xf32>
    %83 = vector.broadcast %82 : vector<2x1xf32> to vector<2x2xf32>
    %84 = arith.mulf %79, %83 : vector<2x2xf32>
    %85 = arith.truncf %84 : vector<2x2xf32> to vector<2x2xbf16>
    %cst_44 = arith.constant dense<0.000000e+00> : vector<2x32xf32>
    %86 = tpu.matmul %85, %73, %cst_44 {dimension_numbers = #tpu.dot_dimension_numbers<[1], [0], [0], [1], [0, 0, 1, 1], [], []>} : vector<2x2xbf16>, vector<2x32xbf16>, vector<2x32xf32> -> vector<2x32xf32>
    %87 = vector.extract_strided_slice %28 {offsets = [32, 0], sizes = [32, 128], strides = [1, 1]} : vector<128x128xbf16> to vector<32x128xbf16>
    %88 = arith.truncf %86 : vector<2x32xf32> to vector<2x32xbf16>
    %cst_45 = arith.constant dense<0.000000e+00> : vector<2x128xf32>
    %89 = tpu.matmul %88, %87, %cst_45 {dimension_numbers = #tpu.dot_dimension_numbers<[1], [0], [0], [1], [0, 0, 1, 1], [], []>} : vector<2x32xbf16>, vector<32x128xbf16>, vector<2x128xf32> -> vector<2x128xf32>
    %90 = arith.addf %67, %89 : vector<2x128xf32>
    %91 = vector.extract_strided_slice %41 {offsets = [0, 64], sizes = [2, 32], strides = [1, 1]} : vector<2x128xf32> to vector<2x32xf32>
    %92 = arith.truncf %91 : vector<2x32xf32> to vector<2x32xbf16>
    %93 = vector.extract_strided_slice %42 {offsets = [0, 64], sizes = [2, 32], strides = [1, 1]} : vector<2x128xf32> to vector<2x32xf32>
    %94 = arith.truncf %93 : vector<2x32xf32> to vector<2x32xbf16>
    %95 = vector.extract_strided_slice %43 {offsets = [0, 64], sizes = [2, 32], strides = [1, 1]} : vector<2x128xf32> to vector<2x32xf32>
    %96 = arith.truncf %95 : vector<2x32xf32> to vector<2x32xbf16>
    %cst_46 = arith.constant dense<0.000000e+00> : vector<2x2xf32>
    %97 = tpu.matmul %92, %94, %cst_46 {dimension_numbers = #tpu.dot_dimension_numbers<[1], [1], [0], [0], [0, 0, 1, 0], [], []>} : vector<2x32xbf16>, vector<2x32xbf16>, vector<2x2xf32> -> vector<2x2xf32>
    %cst_47 = arith.constant dense<0xFF800000> : vector<2xf32>
    %98 = vector.multi_reduction <maximumf>, %97, %cst_47 [1] : vector<2x2xf32> to vector<2xf32>
    %99 = vector.shape_cast %98 : vector<2xf32> to vector<2x1xf32>
    %100 = vector.broadcast %99 : vector<2x1xf32> to vector<2x2xf32>
    %101 = arith.subf %97, %100 : vector<2x2xf32>
    %102 = math.exp %101 : vector<2x2xf32>
    %cst_48 = arith.constant dense<0.000000e+00> : vector<2xf32>
    %103 = vector.multi_reduction <add>, %102, %cst_48 [1] : vector<2x2xf32> to vector<2xf32>
    %104 = vector.shape_cast %103 : vector<2xf32> to vector<2x1xf32>
    %105 = tpu.reciprocal %104 {approx = true} : vector<2x1xf32> -> vector<2x1xf32>
    %106 = vector.broadcast %105 : vector<2x1xf32> to vector<2x2xf32>
    %107 = arith.mulf %102, %106 : vector<2x2xf32>
    %108 = arith.truncf %107 : vector<2x2xf32> to vector<2x2xbf16>
    %cst_49 = arith.constant dense<0.000000e+00> : vector<2x32xf32>
    %109 = tpu.matmul %108, %96, %cst_49 {dimension_numbers = #tpu.dot_dimension_numbers<[1], [0], [0], [1], [0, 0, 1, 1], [], []>} : vector<2x2xbf16>, vector<2x32xbf16>, vector<2x32xf32> -> vector<2x32xf32>
    %110 = vector.extract_strided_slice %28 {offsets = [64, 0], sizes = [32, 128], strides = [1, 1]} : vector<128x128xbf16> to vector<32x128xbf16>
    %111 = arith.truncf %109 : vector<2x32xf32> to vector<2x32xbf16>
    %cst_50 = arith.constant dense<0.000000e+00> : vector<2x128xf32>
    %112 = tpu.matmul %111, %110, %cst_50 {dimension_numbers = #tpu.dot_dimension_numbers<[1], [0], [0], [1], [0, 0, 1, 1], [], []>} : vector<2x32xbf16>, vector<32x128xbf16>, vector<2x128xf32> -> vector<2x128xf32>
    %113 = arith.addf %90, %112 : vector<2x128xf32>
    %114 = vector.extract_strided_slice %41 {offsets = [0, 96], sizes = [2, 32], strides = [1, 1]} : vector<2x128xf32> to vector<2x32xf32>
    %115 = arith.truncf %114 : vector<2x32xf32> to vector<2x32xbf16>
    %116 = vector.extract_strided_slice %42 {offsets = [0, 96], sizes = [2, 32], strides = [1, 1]} : vector<2x128xf32> to vector<2x32xf32>
    %117 = arith.truncf %116 : vector<2x32xf32> to vector<2x32xbf16>
    %118 = vector.extract_strided_slice %43 {offsets = [0, 96], sizes = [2, 32], strides = [1, 1]} : vector<2x128xf32> to vector<2x32xf32>
    %119 = arith.truncf %118 : vector<2x32xf32> to vector<2x32xbf16>
    %cst_51 = arith.constant dense<0.000000e+00> : vector<2x2xf32>
    %120 = tpu.matmul %115, %117, %cst_51 {dimension_numbers = #tpu.dot_dimension_numbers<[1], [1], [0], [0], [0, 0, 1, 0], [], []>} : vector<2x32xbf16>, vector<2x32xbf16>, vector<2x2xf32> -> vector<2x2xf32>
    %cst_52 = arith.constant dense<0xFF800000> : vector<2xf32>
    %121 = vector.multi_reduction <maximumf>, %120, %cst_52 [1] : vector<2x2xf32> to vector<2xf32>
    %122 = vector.shape_cast %121 : vector<2xf32> to vector<2x1xf32>
    %123 = vector.broadcast %122 : vector<2x1xf32> to vector<2x2xf32>
    %124 = arith.subf %120, %123 : vector<2x2xf32>
    %125 = math.exp %124 : vector<2x2xf32>
    %cst_53 = arith.constant dense<0.000000e+00> : vector<2xf32>
    %126 = vector.multi_reduction <add>, %125, %cst_53 [1] : vector<2x2xf32> to vector<2xf32>
    %127 = vector.shape_cast %126 : vector<2xf32> to vector<2x1xf32>
    %128 = tpu.reciprocal %127 {approx = true} : vector<2x1xf32> -> vector<2x1xf32>
    %129 = vector.broadcast %128 : vector<2x1xf32> to vector<2x2xf32>
    %130 = arith.mulf %125, %129 : vector<2x2xf32>
    %131 = arith.truncf %130 : vector<2x2xf32> to vector<2x2xbf16>
    %cst_54 = arith.constant dense<0.000000e+00> : vector<2x32xf32>
    %132 = tpu.matmul %131, %119, %cst_54 {dimension_numbers = #tpu.dot_dimension_numbers<[1], [0], [0], [1], [0, 0, 1, 1], [], []>} : vector<2x2xbf16>, vector<2x32xbf16>, vector<2x32xf32> -> vector<2x32xf32>
    %133 = vector.extract_strided_slice %28 {offsets = [96, 0], sizes = [32, 128], strides = [1, 1]} : vector<128x128xbf16> to vector<32x128xbf16>
    %134 = arith.truncf %132 : vector<2x32xf32> to vector<2x32xbf16>
    %cst_55 = arith.constant dense<0.000000e+00> : vector<2x128xf32>
    %135 = tpu.matmul %134, %133, %cst_55 {dimension_numbers = #tpu.dot_dimension_numbers<[1], [0], [0], [1], [0, 0, 1, 1], [], []>} : vector<2x32xbf16>, vector<32x128xbf16>, vector<2x128xf32> -> vector<2x128xf32>
    %136 = arith.addf %113, %135 : vector<2x128xf32>
    %c0_56 = arith.constant 0 : index
    %c0_57 = arith.constant 0 : index
    %c0_58 = arith.constant 0 : index
    %137 = vector.load %arg11[%c0_56, %c0_57, %c0_58] : memref<4x1x128xf32, #tpu.memory_space<vmem>>, vector<1x1x128xf32>
    %138 = vector.shape_cast %137 : vector<1x1x128xf32> to vector<1x128xf32>
    %139 = vector.broadcast %138 : vector<1x128xf32> to vector<2x128xf32>
    %140 = arith.addf %136, %139 : vector<2x128xf32>
    %141 = arith.addf %140, %140 : vector<2x128xf32>
    %142 = arith.truncf %141 : vector<2x128xf32> to vector<2x128xbf16>
    %cst_59 = arith.constant dense<0.000000e+00> : vector<2x512xf32>
    %143 = tpu.matmul %142, %30, %cst_59 {dimension_numbers = #tpu.dot_dimension_numbers<[1], [0], [0], [1], [0, 0, 1, 1], [], []>} : vector<2x128xbf16>, vector<128x512xbf16>, vector<2x512xf32> -> vector<2x512xf32>
    %c0_60 = arith.constant 0 : index
    %c0_61 = arith.constant 0 : index
    %c0_62 = arith.constant 0 : index
    %144 = vector.load %arg13[%c0_60, %c0_61, %c0_62] : memref<4x1x512xf32, #tpu.memory_space<vmem>>, vector<1x1x512xf32>
    %145 = vector.shape_cast %144 : vector<1x1x512xf32> to vector<1x512xf32>
    %146 = vector.broadcast %145 : vector<1x512xf32> to vector<2x512xf32>
    %147 = arith.addf %143, %146 : vector<2x512xf32>
    %cst_63 = arith.constant 0.000000e+00 : f32
    %148 = vector.broadcast %cst_63 : f32 to vector<2x512xf32>
    %149 = arith.maximumf %147, %148 : vector<2x512xf32>
    %150 = arith.truncf %149 : vector<2x512xf32> to vector<2x512xbf16>
    %cst_64 = arith.constant dense<0.000000e+00> : vector<2x128xf32>
    %151 = tpu.matmul %150, %32, %cst_64 {dimension_numbers = #tpu.dot_dimension_numbers<[1], [0], [0], [1], [0, 0, 1, 1], [], []>} : vector<2x512xbf16>, vector<512x128xbf16>, vector<2x128xf32> -> vector<2x128xf32>
    %c0_65 = arith.constant 0 : index
    %c0_66 = arith.constant 0 : index
    %c0_67 = arith.constant 0 : index
    %152 = vector.load %arg15[%c0_65, %c0_66, %c0_67] : memref<4x1x128xf32, #tpu.memory_space<vmem>>, vector<1x1x128xf32>
    %153 = vector.shape_cast %152 : vector<1x1x128xf32> to vector<1x128xf32>
    %154 = vector.broadcast %153 : vector<1x128xf32> to vector<2x128xf32>
    %155 = arith.addf %151, %154 : vector<2x128xf32>
    %c1 = arith.constant 1 : index
    %c0_68 = arith.constant 0 : index
    %c0_69 = arith.constant 0 : index
    %156 = vector.load %arg8[%c1, %c0_68, %c0_69] : memref<4x128x384xbf16, #tpu.memory_space<vmem>>, vector<1x128x384xbf16>
    %157 = vector.shape_cast %156 : vector<1x128x384xbf16> to vector<128x384xbf16>
    %c1_70 = arith.constant 1 : index
    %c0_71 = arith.constant 0 : index
    %c0_72 = arith.constant 0 : index
    %158 = vector.load %arg10[%c1_70, %c0_71, %c0_72] : memref<4x128x128xbf16, #tpu.memory_space<vmem>>, vector<1x128x128xbf16>
    %159 = vector.shape_cast %158 : vector<1x128x128xbf16> to vector<128x128xbf16>
    %c1_73 = arith.constant 1 : index
    %c0_74 = arith.constant 0 : index
    %c0_75 = arith.constant 0 : index
    %160 = vector.load %arg12[%c1_73, %c0_74, %c0_75] : memref<4x128x512xbf16, #tpu.memory_space<vmem>>, vector<1x128x512xbf16>
    %161 = vector.shape_cast %160 : vector<1x128x512xbf16> to vector<128x512xbf16>
    %c1_76 = arith.constant 1 : index
    %c0_77 = arith.constant 0 : index
    %c0_78 = arith.constant 0 : index
    %162 = vector.load %arg14[%c1_76, %c0_77, %c0_78] : memref<4x512x128xbf16, #tpu.memory_space<vmem>>, vector<1x512x128xbf16>
    %163 = vector.shape_cast %162 : vector<1x512x128xbf16> to vector<512x128xbf16>
    %164 = arith.truncf %155 : vector<2x128xf32> to vector<2x128xbf16>
    %cst_79 = arith.constant dense<0.000000e+00> : vector<2x384xf32>
    %165 = tpu.matmul %164, %157, %cst_79 {dimension_numbers = #tpu.dot_dimension_numbers<[1], [0], [0], [1], [0, 0, 1, 1], [], []>} : vector<2x128xbf16>, vector<128x384xbf16>, vector<2x384xf32> -> vector<2x384xf32>
    %c1_80 = arith.constant 1 : index
    %c0_81 = arith.constant 0 : index
    %c0_82 = arith.constant 0 : index
    %166 = vector.load %arg9[%c1_80, %c0_81, %c0_82] : memref<4x1x384xf32, #tpu.memory_space<vmem>>, vector<1x1x384xf32>
    %167 = vector.shape_cast %166 : vector<1x1x384xf32> to vector<1x384xf32>
    %168 = vector.broadcast %167 : vector<1x384xf32> to vector<2x384xf32>
    %169 = arith.addf %165, %168 : vector<2x384xf32>
    %170 = vector.extract_strided_slice %169 {offsets = [0, 0], sizes = [2, 128], strides = [1, 1]} : vector<2x384xf32> to vector<2x128xf32>
    %cst_83 = arith.constant 0.176776692 : f32
    %171 = vector.broadcast %cst_83 : f32 to vector<2x128xf32>
    %172 = arith.mulf %170, %171 : vector<2x128xf32>
    %173 = vector.extract_strided_slice %169 {offsets = [0, 128], sizes = [2, 128], strides = [1, 1]} : vector<2x384xf32> to vector<2x128xf32>
    %174 = vector.extract_strided_slice %169 {offsets = [0, 256], sizes = [2, 128], strides = [1, 1]} : vector<2x384xf32> to vector<2x128xf32>
    %cst_84 = arith.constant 0.000000e+00 : f32
    %175 = vector.broadcast %cst_84 : f32 to vector<2x128xf32>
    %176 = vector.extract_strided_slice %172 {offsets = [0, 0], sizes = [2, 32], strides = [1, 1]} : vector<2x128xf32> to vector<2x32xf32>
    %177 = arith.truncf %176 : vector<2x32xf32> to vector<2x32xbf16>
    %178 = vector.extract_strided_slice %173 {offsets = [0, 0], sizes = [2, 32], strides = [1, 1]} : vector<2x128xf32> to vector<2x32xf32>
    %179 = arith.truncf %178 : vector<2x32xf32> to vector<2x32xbf16>
    %180 = vector.extract_strided_slice %174 {offsets = [0, 0], sizes = [2, 32], strides = [1, 1]} : vector<2x128xf32> to vector<2x32xf32>
    %181 = arith.truncf %180 : vector<2x32xf32> to vector<2x32xbf16>
    %cst_85 = arith.constant dense<0.000000e+00> : vector<2x2xf32>
    %182 = tpu.matmul %177, %179, %cst_85 {dimension_numbers = #tpu.dot_dimension_numbers<[1], [1], [0], [0], [0, 0, 1, 0], [], []>} : vector<2x32xbf16>, vector<2x32xbf16>, vector<2x2xf32> -> vector<2x2xf32>
    %cst_86 = arith.constant dense<0xFF800000> : vector<2xf32>
    %183 = vector.multi_reduction <maximumf>, %182, %cst_86 [1] : vector<2x2xf32> to vector<2xf32>
    %184 = vector.shape_cast %183 : vector<2xf32> to vector<2x1xf32>
    %185 = vector.broadcast %184 : vector<2x1xf32> to vector<2x2xf32>
    %186 = arith.subf %182, %185 : vector<2x2xf32>
    %187 = math.exp %186 : vector<2x2xf32>
    %cst_87 = arith.constant dense<0.000000e+00> : vector<2xf32>
    %188 = vector.multi_reduction <add>, %187, %cst_87 [1] : vector<2x2xf32> to vector<2xf32>
    %189 = vector.shape_cast %188 : vector<2xf32> to vector<2x1xf32>
    %190 = tpu.reciprocal %189 {approx = true} : vector<2x1xf32> -> vector<2x1xf32>
    %191 = vector.broadcast %190 : vector<2x1xf32> to vector<2x2xf32>
    %192 = arith.mulf %187, %191 : vector<2x2xf32>
    %193 = arith.truncf %192 : vector<2x2xf32> to vector<2x2xbf16>
    %cst_88 = arith.constant dense<0.000000e+00> : vector<2x32xf32>
    %194 = tpu.matmul %193, %181, %cst_88 {dimension_numbers = #tpu.dot_dimension_numbers<[1], [0], [0], [1], [0, 0, 1, 1], [], []>} : vector<2x2xbf16>, vector<2x32xbf16>, vector<2x32xf32> -> vector<2x32xf32>
    %195 = vector.extract_strided_slice %159 {offsets = [0, 0], sizes = [32, 128], strides = [1, 1]} : vector<128x128xbf16> to vector<32x128xbf16>
    %196 = arith.truncf %194 : vector<2x32xf32> to vector<2x32xbf16>
    %cst_89 = arith.constant dense<0.000000e+00> : vector<2x128xf32>
    %197 = tpu.matmul %196, %195, %cst_89 {dimension_numbers = #tpu.dot_dimension_numbers<[1], [0], [0], [1], [0, 0, 1, 1], [], []>} : vector<2x32xbf16>, vector<32x128xbf16>, vector<2x128xf32> -> vector<2x128xf32>
    %198 = arith.addf %175, %197 : vector<2x128xf32>
    %199 = vector.extract_strided_slice %172 {offsets = [0, 32], sizes = [2, 32], strides = [1, 1]} : vector<2x128xf32> to vector<2x32xf32>
    %200 = arith.truncf %199 : vector<2x32xf32> to vector<2x32xbf16>
    %201 = vector.extract_strided_slice %173 {offsets = [0, 32], sizes = [2, 32], strides = [1, 1]} : vector<2x128xf32> to vector<2x32xf32>
    %202 = arith.truncf %201 : vector<2x32xf32> to vector<2x32xbf16>
    %203 = vector.extract_strided_slice %174 {offsets = [0, 32], sizes = [2, 32], strides = [1, 1]} : vector<2x128xf32> to vector<2x32xf32>
    %204 = arith.truncf %203 : vector<2x32xf32> to vector<2x32xbf16>
    %cst_90 = arith.constant dense<0.000000e+00> : vector<2x2xf32>
    %205 = tpu.matmul %200, %202, %cst_90 {dimension_numbers = #tpu.dot_dimension_numbers<[1], [1], [0], [0], [0, 0, 1, 0], [], []>} : vector<2x32xbf16>, vector<2x32xbf16>, vector<2x2xf32> -> vector<2x2xf32>
    %cst_91 = arith.constant dense<0xFF800000> : vector<2xf32>
    %206 = vector.multi_reduction <maximumf>, %205, %cst_91 [1] : vector<2x2xf32> to vector<2xf32>
    %207 = vector.shape_cast %206 : vector<2xf32> to vector<2x1xf32>
    %208 = vector.broadcast %207 : vector<2x1xf32> to vector<2x2xf32>
    %209 = arith.subf %205, %208 : vector<2x2xf32>
    %210 = math.exp %209 : vector<2x2xf32>
    %cst_92 = arith.constant dense<0.000000e+00> : vector<2xf32>
    %211 = vector.multi_reduction <add>, %210, %cst_92 [1] : vector<2x2xf32> to vector<2xf32>
    %212 = vector.shape_cast %211 : vector<2xf32> to vector<2x1xf32>
    %213 = tpu.reciprocal %212 {approx = true} : vector<2x1xf32> -> vector<2x1xf32>
    %214 = vector.broadcast %213 : vector<2x1xf32> to vector<2x2xf32>
    %215 = arith.mulf %210, %214 : vector<2x2xf32>
    %216 = arith.truncf %215 : vector<2x2xf32> to vector<2x2xbf16>
    %cst_93 = arith.constant dense<0.000000e+00> : vector<2x32xf32>
    %217 = tpu.matmul %216, %204, %cst_93 {dimension_numbers = #tpu.dot_dimension_numbers<[1], [0], [0], [1], [0, 0, 1, 1], [], []>} : vector<2x2xbf16>, vector<2x32xbf16>, vector<2x32xf32> -> vector<2x32xf32>
    %218 = vector.extract_strided_slice %159 {offsets = [32, 0], sizes = [32, 128], strides = [1, 1]} : vector<128x128xbf16> to vector<32x128xbf16>
    %219 = arith.truncf %217 : vector<2x32xf32> to vector<2x32xbf16>
    %cst_94 = arith.constant dense<0.000000e+00> : vector<2x128xf32>
    %220 = tpu.matmul %219, %218, %cst_94 {dimension_numbers = #tpu.dot_dimension_numbers<[1], [0], [0], [1], [0, 0, 1, 1], [], []>} : vector<2x32xbf16>, vector<32x128xbf16>, vector<2x128xf32> -> vector<2x128xf32>
    %221 = arith.addf %198, %220 : vector<2x128xf32>
    %222 = vector.extract_strided_slice %172 {offsets = [0, 64], sizes = [2, 32], strides = [1, 1]} : vector<2x128xf32> to vector<2x32xf32>
    %223 = arith.truncf %222 : vector<2x32xf32> to vector<2x32xbf16>
    %224 = vector.extract_strided_slice %173 {offsets = [0, 64], sizes = [2, 32], strides = [1, 1]} : vector<2x128xf32> to vector<2x32xf32>
    %225 = arith.truncf %224 : vector<2x32xf32> to vector<2x32xbf16>
    %226 = vector.extract_strided_slice %174 {offsets = [0, 64], sizes = [2, 32], strides = [1, 1]} : vector<2x128xf32> to vector<2x32xf32>
    %227 = arith.truncf %226 : vector<2x32xf32> to vector<2x32xbf16>
    %cst_95 = arith.constant dense<0.000000e+00> : vector<2x2xf32>
    %228 = tpu.matmul %223, %225, %cst_95 {dimension_numbers = #tpu.dot_dimension_numbers<[1], [1], [0], [0], [0, 0, 1, 0], [], []>} : vector<2x32xbf16>, vector<2x32xbf16>, vector<2x2xf32> -> vector<2x2xf32>
    %cst_96 = arith.constant dense<0xFF800000> : vector<2xf32>
    %229 = vector.multi_reduction <maximumf>, %228, %cst_96 [1] : vector<2x2xf32> to vector<2xf32>
    %230 = vector.shape_cast %229 : vector<2xf32> to vector<2x1xf32>
    %231 = vector.broadcast %230 : vector<2x1xf32> to vector<2x2xf32>
    %232 = arith.subf %228, %231 : vector<2x2xf32>
    %233 = math.exp %232 : vector<2x2xf32>
    %cst_97 = arith.constant dense<0.000000e+00> : vector<2xf32>
    %234 = vector.multi_reduction <add>, %233, %cst_97 [1] : vector<2x2xf32> to vector<2xf32>
    %235 = vector.shape_cast %234 : vector<2xf32> to vector<2x1xf32>
    %236 = tpu.reciprocal %235 {approx = true} : vector<2x1xf32> -> vector<2x1xf32>
    %237 = vector.broadcast %236 : vector<2x1xf32> to vector<2x2xf32>
    %238 = arith.mulf %233, %237 : vector<2x2xf32>
    %239 = arith.truncf %238 : vector<2x2xf32> to vector<2x2xbf16>
    %cst_98 = arith.constant dense<0.000000e+00> : vector<2x32xf32>
    %240 = tpu.matmul %239, %227, %cst_98 {dimension_numbers = #tpu.dot_dimension_numbers<[1], [0], [0], [1], [0, 0, 1, 1], [], []>} : vector<2x2xbf16>, vector<2x32xbf16>, vector<2x32xf32> -> vector<2x32xf32>
    %241 = vector.extract_strided_slice %159 {offsets = [64, 0], sizes = [32, 128], strides = [1, 1]} : vector<128x128xbf16> to vector<32x128xbf16>
    %242 = arith.truncf %240 : vector<2x32xf32> to vector<2x32xbf16>
    %cst_99 = arith.constant dense<0.000000e+00> : vector<2x128xf32>
    %243 = tpu.matmul %242, %241, %cst_99 {dimension_numbers = #tpu.dot_dimension_numbers<[1], [0], [0], [1], [0, 0, 1, 1], [], []>} : vector<2x32xbf16>, vector<32x128xbf16>, vector<2x128xf32> -> vector<2x128xf32>
    %244 = arith.addf %221, %243 : vector<2x128xf32>
    %245 = vector.extract_strided_slice %172 {offsets = [0, 96], sizes = [2, 32], strides = [1, 1]} : vector<2x128xf32> to vector<2x32xf32>
    %246 = arith.truncf %245 : vector<2x32xf32> to vector<2x32xbf16>
    %247 = vector.extract_strided_slice %173 {offsets = [0, 96], sizes = [2, 32], strides = [1, 1]} : vector<2x128xf32> to vector<2x32xf32>
    %248 = arith.truncf %247 : vector<2x32xf32> to vector<2x32xbf16>
    %249 = vector.extract_strided_slice %174 {offsets = [0, 96], sizes = [2, 32], strides = [1, 1]} : vector<2x128xf32> to vector<2x32xf32>
    %250 = arith.truncf %249 : vector<2x32xf32> to vector<2x32xbf16>
    %cst_100 = arith.constant dense<0.000000e+00> : vector<2x2xf32>
    %251 = tpu.matmul %246, %248, %cst_100 {dimension_numbers = #tpu.dot_dimension_numbers<[1], [1], [0], [0], [0, 0, 1, 0], [], []>} : vector<2x32xbf16>, vector<2x32xbf16>, vector<2x2xf32> -> vector<2x2xf32>
    %cst_101 = arith.constant dense<0xFF800000> : vector<2xf32>
    %252 = vector.multi_reduction <maximumf>, %251, %cst_101 [1] : vector<2x2xf32> to vector<2xf32>
    %253 = vector.shape_cast %252 : vector<2xf32> to vector<2x1xf32>
    %254 = vector.broadcast %253 : vector<2x1xf32> to vector<2x2xf32>
    %255 = arith.subf %251, %254 : vector<2x2xf32>
    %256 = math.exp %255 : vector<2x2xf32>
    %cst_102 = arith.constant dense<0.000000e+00> : vector<2xf32>
    %257 = vector.multi_reduction <add>, %256, %cst_102 [1] : vector<2x2xf32> to vector<2xf32>
    %258 = vector.shape_cast %257 : vector<2xf32> to vector<2x1xf32>
    %259 = tpu.reciprocal %258 {approx = true} : vector<2x1xf32> -> vector<2x1xf32>
    %260 = vector.broadcast %259 : vector<2x1xf32> to vector<2x2xf32>
    %261 = arith.mulf %256, %260 : vector<2x2xf32>
    %262 = arith.truncf %261 : vector<2x2xf32> to vector<2x2xbf16>
    %cst_103 = arith.constant dense<0.000000e+00> : vector<2x32xf32>
    %263 = tpu.matmul %262, %250, %cst_103 {dimension_numbers = #tpu.dot_dimension_numbers<[1], [0], [0], [1], [0, 0, 1, 1], [], []>} : vector<2x2xbf16>, vector<2x32xbf16>, vector<2x32xf32> -> vector<2x32xf32>
    %264 = vector.extract_strided_slice %159 {offsets = [96, 0], sizes = [32, 128], strides = [1, 1]} : vector<128x128xbf16> to vector<32x128xbf16>
    %265 = arith.truncf %263 : vector<2x32xf32> to vector<2x32xbf16>
    %cst_104 = arith.constant dense<0.000000e+00> : vector<2x128xf32>
    %266 = tpu.matmul %265, %264, %cst_104 {dimension_numbers = #tpu.dot_dimension_numbers<[1], [0], [0], [1], [0, 0, 1, 1], [], []>} : vector<2x32xbf16>, vector<32x128xbf16>, vector<2x128xf32> -> vector<2x128xf32>
    %267 = arith.addf %244, %266 : vector<2x128xf32>
    %c1_105 = arith.constant 1 : index
    %c0_106 = arith.constant 0 : index
    %c0_107 = arith.constant 0 : index
    %268 = vector.load %arg11[%c1_105, %c0_106, %c0_107] : memref<4x1x128xf32, #tpu.memory_space<vmem>>, vector<1x1x128xf32>
    %269 = vector.shape_cast %268 : vector<1x1x128xf32> to vector<1x128xf32>
    %270 = vector.broadcast %269 : vector<1x128xf32> to vector<2x128xf32>
    %271 = arith.addf %267, %270 : vector<2x128xf32>
    %272 = arith.addf %271, %271 : vector<2x128xf32>
    %273 = arith.truncf %272 : vector<2x128xf32> to vector<2x128xbf16>
    %cst_108 = arith.constant dense<0.000000e+00> : vector<2x512xf32>
    %274 = tpu.matmul %273, %161, %cst_108 {dimension_numbers = #tpu.dot_dimension_numbers<[1], [0], [0], [1], [0, 0, 1, 1], [], []>} : vector<2x128xbf16>, vector<128x512xbf16>, vector<2x512xf32> -> vector<2x512xf32>
    %c1_109 = arith.constant 1 : index
    %c0_110 = arith.constant 0 : index
    %c0_111 = arith.constant 0 : index
    %275 = vector.load %arg13[%c1_109, %c0_110, %c0_111] : memref<4x1x512xf32, #tpu.memory_space<vmem>>, vector<1x1x512xf32>
    %276 = vector.shape_cast %275 : vector<1x1x512xf32> to vector<1x512xf32>
    %277 = vector.broadcast %276 : vector<1x512xf32> to vector<2x512xf32>
    %278 = arith.addf %274, %277 : vector<2x512xf32>
    %cst_112 = arith.constant 0.000000e+00 : f32
    %279 = vector.broadcast %cst_112 : f32 to vector<2x512xf32>
    %280 = arith.maximumf %278, %279 : vector<2x512xf32>
    %281 = arith.truncf %280 : vector<2x512xf32> to vector<2x512xbf16>
    %cst_113 = arith.constant dense<0.000000e+00> : vector<2x128xf32>
    %282 = tpu.matmul %281, %163, %cst_113 {dimension_numbers = #tpu.dot_dimension_numbers<[1], [0], [0], [1], [0, 0, 1, 1], [], []>} : vector<2x512xbf16>, vector<512x128xbf16>, vector<2x128xf32> -> vector<2x128xf32>
    %c1_114 = arith.constant 1 : index
    %c0_115 = arith.constant 0 : index
    %c0_116 = arith.constant 0 : index
    %283 = vector.load %arg15[%c1_114, %c0_115, %c0_116] : memref<4x1x128xf32, #tpu.memory_space<vmem>>, vector<1x1x128xf32>
    %284 = vector.shape_cast %283 : vector<1x1x128xf32> to vector<1x128xf32>
    %285 = vector.broadcast %284 : vector<1x128xf32> to vector<2x128xf32>
    %286 = arith.addf %282, %285 : vector<2x128xf32>
    %c2 = arith.constant 2 : index
    %c0_117 = arith.constant 0 : index
    %c0_118 = arith.constant 0 : index
    %287 = vector.load %arg8[%c2, %c0_117, %c0_118] : memref<4x128x384xbf16, #tpu.memory_space<vmem>>, vector<1x128x384xbf16>
    %288 = vector.shape_cast %287 : vector<1x128x384xbf16> to vector<128x384xbf16>
    %c2_119 = arith.constant 2 : index
    %c0_120 = arith.constant 0 : index
    %c0_121 = arith.constant 0 : index
    %289 = vector.load %arg10[%c2_119, %c0_120, %c0_121] : memref<4x128x128xbf16, #tpu.memory_space<vmem>>, vector<1x128x128xbf16>
    %290 = vector.shape_cast %289 : vector<1x128x128xbf16> to vector<128x128xbf16>
    %c2_122 = arith.constant 2 : index
    %c0_123 = arith.constant 0 : index
    %c0_124 = arith.constant 0 : index
    %291 = vector.load %arg12[%c2_122, %c0_123, %c0_124] : memref<4x128x512xbf16, #tpu.memory_space<vmem>>, vector<1x128x512xbf16>
    %292 = vector.shape_cast %291 : vector<1x128x512xbf16> to vector<128x512xbf16>
    %c2_125 = arith.constant 2 : index
    %c0_126 = arith.constant 0 : index
    %c0_127 = arith.constant 0 : index
    %293 = vector.load %arg14[%c2_125, %c0_126, %c0_127] : memref<4x512x128xbf16, #tpu.memory_space<vmem>>, vector<1x512x128xbf16>
    %294 = vector.shape_cast %293 : vector<1x512x128xbf16> to vector<512x128xbf16>
    %295 = arith.truncf %286 : vector<2x128xf32> to vector<2x128xbf16>
    %cst_128 = arith.constant dense<0.000000e+00> : vector<2x384xf32>
    %296 = tpu.matmul %295, %288, %cst_128 {dimension_numbers = #tpu.dot_dimension_numbers<[1], [0], [0], [1], [0, 0, 1, 1], [], []>} : vector<2x128xbf16>, vector<128x384xbf16>, vector<2x384xf32> -> vector<2x384xf32>
    %c2_129 = arith.constant 2 : index
    %c0_130 = arith.constant 0 : index
    %c0_131 = arith.constant 0 : index
    %297 = vector.load %arg9[%c2_129, %c0_130, %c0_131] : memref<4x1x384xf32, #tpu.memory_space<vmem>>, vector<1x1x384xf32>
    %298 = vector.shape_cast %297 : vector<1x1x384xf32> to vector<1x384xf32>
    %299 = vector.broadcast %298 : vector<1x384xf32> to vector<2x384xf32>
    %300 = arith.addf %296, %299 : vector<2x384xf32>
    %301 = vector.extract_strided_slice %300 {offsets = [0, 0], sizes = [2, 128], strides = [1, 1]} : vector<2x384xf32> to vector<2x128xf32>
    %cst_132 = arith.constant 0.176776692 : f32
    %302 = vector.broadcast %cst_132 : f32 to vector<2x128xf32>
    %303 = arith.mulf %301, %302 : vector<2x128xf32>
    %304 = vector.extract_strided_slice %300 {offsets = [0, 128], sizes = [2, 128], strides = [1, 1]} : vector<2x384xf32> to vector<2x128xf32>
    %305 = vector.extract_strided_slice %300 {offsets = [0, 256], sizes = [2, 128], strides = [1, 1]} : vector<2x384xf32> to vector<2x128xf32>
    %cst_133 = arith.constant 0.000000e+00 : f32
    %306 = vector.broadcast %cst_133 : f32 to vector<2x128xf32>
    %307 = vector.extract_strided_slice %303 {offsets = [0, 0], sizes = [2, 32], strides = [1, 1]} : vector<2x128xf32> to vector<2x32xf32>
    %308 = arith.truncf %307 : vector<2x32xf32> to vector<2x32xbf16>
    %309 = vector.extract_strided_slice %304 {offsets = [0, 0], sizes = [2, 32], strides = [1, 1]} : vector<2x128xf32> to vector<2x32xf32>
    %310 = arith.truncf %309 : vector<2x32xf32> to vector<2x32xbf16>
    %311 = vector.extract_strided_slice %305 {offsets = [0, 0], sizes = [2, 32], strides = [1, 1]} : vector<2x128xf32> to vector<2x32xf32>
    %312 = arith.truncf %311 : vector<2x32xf32> to vector<2x32xbf16>
    %cst_134 = arith.constant dense<0.000000e+00> : vector<2x2xf32>
    %313 = tpu.matmul %308, %310, %cst_134 {dimension_numbers = #tpu.dot_dimension_numbers<[1], [1], [0], [0], [0, 0, 1, 0], [], []>} : vector<2x32xbf16>, vector<2x32xbf16>, vector<2x2xf32> -> vector<2x2xf32>
    %cst_135 = arith.constant dense<0xFF800000> : vector<2xf32>
    %314 = vector.multi_reduction <maximumf>, %313, %cst_135 [1] : vector<2x2xf32> to vector<2xf32>
    %315 = vector.shape_cast %314 : vector<2xf32> to vector<2x1xf32>
    %316 = vector.broadcast %315 : vector<2x1xf32> to vector<2x2xf32>
    %317 = arith.subf %313, %316 : vector<2x2xf32>
    %318 = math.exp %317 : vector<2x2xf32>
    %cst_136 = arith.constant dense<0.000000e+00> : vector<2xf32>
    %319 = vector.multi_reduction <add>, %318, %cst_136 [1] : vector<2x2xf32> to vector<2xf32>
    %320 = vector.shape_cast %319 : vector<2xf32> to vector<2x1xf32>
    %321 = tpu.reciprocal %320 {approx = true} : vector<2x1xf32> -> vector<2x1xf32>
    %322 = vector.broadcast %321 : vector<2x1xf32> to vector<2x2xf32>
    %323 = arith.mulf %318, %322 : vector<2x2xf32>
    %324 = arith.truncf %323 : vector<2x2xf32> to vector<2x2xbf16>
    %cst_137 = arith.constant dense<0.000000e+00> : vector<2x32xf32>
    %325 = tpu.matmul %324, %312, %cst_137 {dimension_numbers = #tpu.dot_dimension_numbers<[1], [0], [0], [1], [0, 0, 1, 1], [], []>} : vector<2x2xbf16>, vector<2x32xbf16>, vector<2x32xf32> -> vector<2x32xf32>
    %326 = vector.extract_strided_slice %290 {offsets = [0, 0], sizes = [32, 128], strides = [1, 1]} : vector<128x128xbf16> to vector<32x128xbf16>
    %327 = arith.truncf %325 : vector<2x32xf32> to vector<2x32xbf16>
    %cst_138 = arith.constant dense<0.000000e+00> : vector<2x128xf32>
    %328 = tpu.matmul %327, %326, %cst_138 {dimension_numbers = #tpu.dot_dimension_numbers<[1], [0], [0], [1], [0, 0, 1, 1], [], []>} : vector<2x32xbf16>, vector<32x128xbf16>, vector<2x128xf32> -> vector<2x128xf32>
    %329 = arith.addf %306, %328 : vector<2x128xf32>
    %330 = vector.extract_strided_slice %303 {offsets = [0, 32], sizes = [2, 32], strides = [1, 1]} : vector<2x128xf32> to vector<2x32xf32>
    %331 = arith.truncf %330 : vector<2x32xf32> to vector<2x32xbf16>
    %332 = vector.extract_strided_slice %304 {offsets = [0, 32], sizes = [2, 32], strides = [1, 1]} : vector<2x128xf32> to vector<2x32xf32>
    %333 = arith.truncf %332 : vector<2x32xf32> to vector<2x32xbf16>
    %334 = vector.extract_strided_slice %305 {offsets = [0, 32], sizes = [2, 32], strides = [1, 1]} : vector<2x128xf32> to vector<2x32xf32>
    %335 = arith.truncf %334 : vector<2x32xf32> to vector<2x32xbf16>
    %cst_139 = arith.constant dense<0.000000e+00> : vector<2x2xf32>
    %336 = tpu.matmul %331, %333, %cst_139 {dimension_numbers = #tpu.dot_dimension_numbers<[1], [1], [0], [0], [0, 0, 1, 0], [], []>} : vector<2x32xbf16>, vector<2x32xbf16>, vector<2x2xf32> -> vector<2x2xf32>
    %cst_140 = arith.constant dense<0xFF800000> : vector<2xf32>
    %337 = vector.multi_reduction <maximumf>, %336, %cst_140 [1] : vector<2x2xf32> to vector<2xf32>
    %338 = vector.shape_cast %337 : vector<2xf32> to vector<2x1xf32>
    %339 = vector.broadcast %338 : vector<2x1xf32> to vector<2x2xf32>
    %340 = arith.subf %336, %339 : vector<2x2xf32>
    %341 = math.exp %340 : vector<2x2xf32>
    %cst_141 = arith.constant dense<0.000000e+00> : vector<2xf32>
    %342 = vector.multi_reduction <add>, %341, %cst_141 [1] : vector<2x2xf32> to vector<2xf32>
    %343 = vector.shape_cast %342 : vector<2xf32> to vector<2x1xf32>
    %344 = tpu.reciprocal %343 {approx = true} : vector<2x1xf32> -> vector<2x1xf32>
    %345 = vector.broadcast %344 : vector<2x1xf32> to vector<2x2xf32>
    %346 = arith.mulf %341, %345 : vector<2x2xf32>
    %347 = arith.truncf %346 : vector<2x2xf32> to vector<2x2xbf16>
    %cst_142 = arith.constant dense<0.000000e+00> : vector<2x32xf32>
    %348 = tpu.matmul %347, %335, %cst_142 {dimension_numbers = #tpu.dot_dimension_numbers<[1], [0], [0], [1], [0, 0, 1, 1], [], []>} : vector<2x2xbf16>, vector<2x32xbf16>, vector<2x32xf32> -> vector<2x32xf32>
    %349 = vector.extract_strided_slice %290 {offsets = [32, 0], sizes = [32, 128], strides = [1, 1]} : vector<128x128xbf16> to vector<32x128xbf16>
    %350 = arith.truncf %348 : vector<2x32xf32> to vector<2x32xbf16>
    %cst_143 = arith.constant dense<0.000000e+00> : vector<2x128xf32>
    %351 = tpu.matmul %350, %349, %cst_143 {dimension_numbers = #tpu.dot_dimension_numbers<[1], [0], [0], [1], [0, 0, 1, 1], [], []>} : vector<2x32xbf16>, vector<32x128xbf16>, vector<2x128xf32> -> vector<2x128xf32>
    %352 = arith.addf %329, %351 : vector<2x128xf32>
    %353 = vector.extract_strided_slice %303 {offsets = [0, 64], sizes = [2, 32], strides = [1, 1]} : vector<2x128xf32> to vector<2x32xf32>
    %354 = arith.truncf %353 : vector<2x32xf32> to vector<2x32xbf16>
    %355 = vector.extract_strided_slice %304 {offsets = [0, 64], sizes = [2, 32], strides = [1, 1]} : vector<2x128xf32> to vector<2x32xf32>
    %356 = arith.truncf %355 : vector<2x32xf32> to vector<2x32xbf16>
    %357 = vector.extract_strided_slice %305 {offsets = [0, 64], sizes = [2, 32], strides = [1, 1]} : vector<2x128xf32> to vector<2x32xf32>
    %358 = arith.truncf %357 : vector<2x32xf32> to vector<2x32xbf16>
    %cst_144 = arith.constant dense<0.000000e+00> : vector<2x2xf32>
    %359 = tpu.matmul %354, %356, %cst_144 {dimension_numbers = #tpu.dot_dimension_numbers<[1], [1], [0], [0], [0, 0, 1, 0], [], []>} : vector<2x32xbf16>, vector<2x32xbf16>, vector<2x2xf32> -> vector<2x2xf32>
    %cst_145 = arith.constant dense<0xFF800000> : vector<2xf32>
    %360 = vector.multi_reduction <maximumf>, %359, %cst_145 [1] : vector<2x2xf32> to vector<2xf32>
    %361 = vector.shape_cast %360 : vector<2xf32> to vector<2x1xf32>
    %362 = vector.broadcast %361 : vector<2x1xf32> to vector<2x2xf32>
    %363 = arith.subf %359, %362 : vector<2x2xf32>
    %364 = math.exp %363 : vector<2x2xf32>
    %cst_146 = arith.constant dense<0.000000e+00> : vector<2xf32>
    %365 = vector.multi_reduction <add>, %364, %cst_146 [1] : vector<2x2xf32> to vector<2xf32>
    %366 = vector.shape_cast %365 : vector<2xf32> to vector<2x1xf32>
    %367 = tpu.reciprocal %366 {approx = true} : vector<2x1xf32> -> vector<2x1xf32>
    %368 = vector.broadcast %367 : vector<2x1xf32> to vector<2x2xf32>
    %369 = arith.mulf %364, %368 : vector<2x2xf32>
    %370 = arith.truncf %369 : vector<2x2xf32> to vector<2x2xbf16>
    %cst_147 = arith.constant dense<0.000000e+00> : vector<2x32xf32>
    %371 = tpu.matmul %370, %358, %cst_147 {dimension_numbers = #tpu.dot_dimension_numbers<[1], [0], [0], [1], [0, 0, 1, 1], [], []>} : vector<2x2xbf16>, vector<2x32xbf16>, vector<2x32xf32> -> vector<2x32xf32>
    %372 = vector.extract_strided_slice %290 {offsets = [64, 0], sizes = [32, 128], strides = [1, 1]} : vector<128x128xbf16> to vector<32x128xbf16>
    %373 = arith.truncf %371 : vector<2x32xf32> to vector<2x32xbf16>
    %cst_148 = arith.constant dense<0.000000e+00> : vector<2x128xf32>
    %374 = tpu.matmul %373, %372, %cst_148 {dimension_numbers = #tpu.dot_dimension_numbers<[1], [0], [0], [1], [0, 0, 1, 1], [], []>} : vector<2x32xbf16>, vector<32x128xbf16>, vector<2x128xf32> -> vector<2x128xf32>
    %375 = arith.addf %352, %374 : vector<2x128xf32>
    %376 = vector.extract_strided_slice %303 {offsets = [0, 96], sizes = [2, 32], strides = [1, 1]} : vector<2x128xf32> to vector<2x32xf32>
    %377 = arith.truncf %376 : vector<2x32xf32> to vector<2x32xbf16>
    %378 = vector.extract_strided_slice %304 {offsets = [0, 96], sizes = [2, 32], strides = [1, 1]} : vector<2x128xf32> to vector<2x32xf32>
    %379 = arith.truncf %378 : vector<2x32xf32> to vector<2x32xbf16>
    %380 = vector.extract_strided_slice %305 {offsets = [0, 96], sizes = [2, 32], strides = [1, 1]} : vector<2x128xf32> to vector<2x32xf32>
    %381 = arith.truncf %380 : vector<2x32xf32> to vector<2x32xbf16>
    %cst_149 = arith.constant dense<0.000000e+00> : vector<2x2xf32>
    %382 = tpu.matmul %377, %379, %cst_149 {dimension_numbers = #tpu.dot_dimension_numbers<[1], [1], [0], [0], [0, 0, 1, 0], [], []>} : vector<2x32xbf16>, vector<2x32xbf16>, vector<2x2xf32> -> vector<2x2xf32>
    %cst_150 = arith.constant dense<0xFF800000> : vector<2xf32>
    %383 = vector.multi_reduction <maximumf>, %382, %cst_150 [1] : vector<2x2xf32> to vector<2xf32>
    %384 = vector.shape_cast %383 : vector<2xf32> to vector<2x1xf32>
    %385 = vector.broadcast %384 : vector<2x1xf32> to vector<2x2xf32>
    %386 = arith.subf %382, %385 : vector<2x2xf32>
    %387 = math.exp %386 : vector<2x2xf32>
    %cst_151 = arith.constant dense<0.000000e+00> : vector<2xf32>
    %388 = vector.multi_reduction <add>, %387, %cst_151 [1] : vector<2x2xf32> to vector<2xf32>
    %389 = vector.shape_cast %388 : vector<2xf32> to vector<2x1xf32>
    %390 = tpu.reciprocal %389 {approx = true} : vector<2x1xf32> -> vector<2x1xf32>
    %391 = vector.broadcast %390 : vector<2x1xf32> to vector<2x2xf32>
    %392 = arith.mulf %387, %391 : vector<2x2xf32>
    %393 = arith.truncf %392 : vector<2x2xf32> to vector<2x2xbf16>
    %cst_152 = arith.constant dense<0.000000e+00> : vector<2x32xf32>
    %394 = tpu.matmul %393, %381, %cst_152 {dimension_numbers = #tpu.dot_dimension_numbers<[1], [0], [0], [1], [0, 0, 1, 1], [], []>} : vector<2x2xbf16>, vector<2x32xbf16>, vector<2x32xf32> -> vector<2x32xf32>
    %395 = vector.extract_strided_slice %290 {offsets = [96, 0], sizes = [32, 128], strides = [1, 1]} : vector<128x128xbf16> to vector<32x128xbf16>
    %396 = arith.truncf %394 : vector<2x32xf32> to vector<2x32xbf16>
    %cst_153 = arith.constant dense<0.000000e+00> : vector<2x128xf32>
    %397 = tpu.matmul %396, %395, %cst_153 {dimension_numbers = #tpu.dot_dimension_numbers<[1], [0], [0], [1], [0, 0, 1, 1], [], []>} : vector<2x32xbf16>, vector<32x128xbf16>, vector<2x128xf32> -> vector<2x128xf32>
    %398 = arith.addf %375, %397 : vector<2x128xf32>
    %c2_154 = arith.constant 2 : index
    %c0_155 = arith.constant 0 : index
    %c0_156 = arith.constant 0 : index
    %399 = vector.load %arg11[%c2_154, %c0_155, %c0_156] : memref<4x1x128xf32, #tpu.memory_space<vmem>>, vector<1x1x128xf32>
    %400 = vector.shape_cast %399 : vector<1x1x128xf32> to vector<1x128xf32>
    %401 = vector.broadcast %400 : vector<1x128xf32> to vector<2x128xf32>
    %402 = arith.addf %398, %401 : vector<2x128xf32>
    %403 = arith.addf %402, %402 : vector<2x128xf32>
    %404 = arith.truncf %403 : vector<2x128xf32> to vector<2x128xbf16>
    %cst_157 = arith.constant dense<0.000000e+00> : vector<2x512xf32>
    %405 = tpu.matmul %404, %292, %cst_157 {dimension_numbers = #tpu.dot_dimension_numbers<[1], [0], [0], [1], [0, 0, 1, 1], [], []>} : vector<2x128xbf16>, vector<128x512xbf16>, vector<2x512xf32> -> vector<2x512xf32>
    %c2_158 = arith.constant 2 : index
    %c0_159 = arith.constant 0 : index
    %c0_160 = arith.constant 0 : index
    %406 = vector.load %arg13[%c2_158, %c0_159, %c0_160] : memref<4x1x512xf32, #tpu.memory_space<vmem>>, vector<1x1x512xf32>
    %407 = vector.shape_cast %406 : vector<1x1x512xf32> to vector<1x512xf32>
    %408 = vector.broadcast %407 : vector<1x512xf32> to vector<2x512xf32>
    %409 = arith.addf %405, %408 : vector<2x512xf32>
    %cst_161 = arith.constant 0.000000e+00 : f32
    %410 = vector.broadcast %cst_161 : f32 to vector<2x512xf32>
    %411 = arith.maximumf %409, %410 : vector<2x512xf32>
    %412 = arith.truncf %411 : vector<2x512xf32> to vector<2x512xbf16>
    %cst_162 = arith.constant dense<0.000000e+00> : vector<2x128xf32>
    %413 = tpu.matmul %412, %294, %cst_162 {dimension_numbers = #tpu.dot_dimension_numbers<[1], [0], [0], [1], [0, 0, 1, 1], [], []>} : vector<2x512xbf16>, vector<512x128xbf16>, vector<2x128xf32> -> vector<2x128xf32>
    %c2_163 = arith.constant 2 : index
    %c0_164 = arith.constant 0 : index
    %c0_165 = arith.constant 0 : index
    %414 = vector.load %arg15[%c2_163, %c0_164, %c0_165] : memref<4x1x128xf32, #tpu.memory_space<vmem>>, vector<1x1x128xf32>
    %415 = vector.shape_cast %414 : vector<1x1x128xf32> to vector<1x128xf32>
    %416 = vector.broadcast %415 : vector<1x128xf32> to vector<2x128xf32>
    %417 = arith.addf %413, %416 : vector<2x128xf32>
    %c3 = arith.constant 3 : index
    %c0_166 = arith.constant 0 : index
    %c0_167 = arith.constant 0 : index
    %418 = vector.load %arg8[%c3, %c0_166, %c0_167] : memref<4x128x384xbf16, #tpu.memory_space<vmem>>, vector<1x128x384xbf16>
    %419 = vector.shape_cast %418 : vector<1x128x384xbf16> to vector<128x384xbf16>
    %c3_168 = arith.constant 3 : index
    %c0_169 = arith.constant 0 : index
    %c0_170 = arith.constant 0 : index
    %420 = vector.load %arg10[%c3_168, %c0_169, %c0_170] : memref<4x128x128xbf16, #tpu.memory_space<vmem>>, vector<1x128x128xbf16>
    %421 = vector.shape_cast %420 : vector<1x128x128xbf16> to vector<128x128xbf16>
    %c3_171 = arith.constant 3 : index
    %c0_172 = arith.constant 0 : index
    %c0_173 = arith.constant 0 : index
    %422 = vector.load %arg12[%c3_171, %c0_172, %c0_173] : memref<4x128x512xbf16, #tpu.memory_space<vmem>>, vector<1x128x512xbf16>
    %423 = vector.shape_cast %422 : vector<1x128x512xbf16> to vector<128x512xbf16>
    %c3_174 = arith.constant 3 : index
    %c0_175 = arith.constant 0 : index
    %c0_176 = arith.constant 0 : index
    %424 = vector.load %arg14[%c3_174, %c0_175, %c0_176] : memref<4x512x128xbf16, #tpu.memory_space<vmem>>, vector<1x512x128xbf16>
    %425 = vector.shape_cast %424 : vector<1x512x128xbf16> to vector<512x128xbf16>
    %426 = arith.truncf %417 : vector<2x128xf32> to vector<2x128xbf16>
    %cst_177 = arith.constant dense<0.000000e+00> : vector<2x384xf32>
    %427 = tpu.matmul %426, %419, %cst_177 {dimension_numbers = #tpu.dot_dimension_numbers<[1], [0], [0], [1], [0, 0, 1, 1], [], []>} : vector<2x128xbf16>, vector<128x384xbf16>, vector<2x384xf32> -> vector<2x384xf32>
    %c3_178 = arith.constant 3 : index
    %c0_179 = arith.constant 0 : index
    %c0_180 = arith.constant 0 : index
    %428 = vector.load %arg9[%c3_178, %c0_179, %c0_180] : memref<4x1x384xf32, #tpu.memory_space<vmem>>, vector<1x1x384xf32>
    %429 = vector.shape_cast %428 : vector<1x1x384xf32> to vector<1x384xf32>
    %430 = vector.broadcast %429 : vector<1x384xf32> to vector<2x384xf32>
    %431 = arith.addf %427, %430 : vector<2x384xf32>
    %432 = vector.extract_strided_slice %431 {offsets = [0, 0], sizes = [2, 128], strides = [1, 1]} : vector<2x384xf32> to vector<2x128xf32>
    %cst_181 = arith.constant 0.176776692 : f32
    %433 = vector.broadcast %cst_181 : f32 to vector<2x128xf32>
    %434 = arith.mulf %432, %433 : vector<2x128xf32>
    %435 = vector.extract_strided_slice %431 {offsets = [0, 128], sizes = [2, 128], strides = [1, 1]} : vector<2x384xf32> to vector<2x128xf32>
    %436 = vector.extract_strided_slice %431 {offsets = [0, 256], sizes = [2, 128], strides = [1, 1]} : vector<2x384xf32> to vector<2x128xf32>
    %cst_182 = arith.constant 0.000000e+00 : f32
    %437 = vector.broadcast %cst_182 : f32 to vector<2x128xf32>
    %438 = vector.extract_strided_slice %434 {offsets = [0, 0], sizes = [2, 32], strides = [1, 1]} : vector<2x128xf32> to vector<2x32xf32>
    %439 = arith.truncf %438 : vector<2x32xf32> to vector<2x32xbf16>
    %440 = vector.extract_strided_slice %435 {offsets = [0, 0], sizes = [2, 32], strides = [1, 1]} : vector<2x128xf32> to vector<2x32xf32>
    %441 = arith.truncf %440 : vector<2x32xf32> to vector<2x32xbf16>
    %442 = vector.extract_strided_slice %436 {offsets = [0, 0], sizes = [2, 32], strides = [1, 1]} : vector<2x128xf32> to vector<2x32xf32>
    %443 = arith.truncf %442 : vector<2x32xf32> to vector<2x32xbf16>
    %cst_183 = arith.constant dense<0.000000e+00> : vector<2x2xf32>
    %444 = tpu.matmul %439, %441, %cst_183 {dimension_numbers = #tpu.dot_dimension_numbers<[1], [1], [0], [0], [0, 0, 1, 0], [], []>} : vector<2x32xbf16>, vector<2x32xbf16>, vector<2x2xf32> -> vector<2x2xf32>
    %cst_184 = arith.constant dense<0xFF800000> : vector<2xf32>
    %445 = vector.multi_reduction <maximumf>, %444, %cst_184 [1] : vector<2x2xf32> to vector<2xf32>
    %446 = vector.shape_cast %445 : vector<2xf32> to vector<2x1xf32>
    %447 = vector.broadcast %446 : vector<2x1xf32> to vector<2x2xf32>
    %448 = arith.subf %444, %447 : vector<2x2xf32>
    %449 = math.exp %448 : vector<2x2xf32>
    %cst_185 = arith.constant dense<0.000000e+00> : vector<2xf32>
    %450 = vector.multi_reduction <add>, %449, %cst_185 [1] : vector<2x2xf32> to vector<2xf32>
    %451 = vector.shape_cast %450 : vector<2xf32> to vector<2x1xf32>
    %452 = tpu.reciprocal %451 {approx = true} : vector<2x1xf32> -> vector<2x1xf32>
    %453 = vector.broadcast %452 : vector<2x1xf32> to vector<2x2xf32>
    %454 = arith.mulf %449, %453 : vector<2x2xf32>
    %455 = arith.truncf %454 : vector<2x2xf32> to vector<2x2xbf16>
    %cst_186 = arith.constant dense<0.000000e+00> : vector<2x32xf32>
    %456 = tpu.matmul %455, %443, %cst_186 {dimension_numbers = #tpu.dot_dimension_numbers<[1], [0], [0], [1], [0, 0, 1, 1], [], []>} : vector<2x2xbf16>, vector<2x32xbf16>, vector<2x32xf32> -> vector<2x32xf32>
    %457 = vector.extract_strided_slice %421 {offsets = [0, 0], sizes = [32, 128], strides = [1, 1]} : vector<128x128xbf16> to vector<32x128xbf16>
    %458 = arith.truncf %456 : vector<2x32xf32> to vector<2x32xbf16>
    %cst_187 = arith.constant dense<0.000000e+00> : vector<2x128xf32>
    %459 = tpu.matmul %458, %457, %cst_187 {dimension_numbers = #tpu.dot_dimension_numbers<[1], [0], [0], [1], [0, 0, 1, 1], [], []>} : vector<2x32xbf16>, vector<32x128xbf16>, vector<2x128xf32> -> vector<2x128xf32>
    %460 = arith.addf %437, %459 : vector<2x128xf32>
    %461 = vector.extract_strided_slice %434 {offsets = [0, 32], sizes = [2, 32], strides = [1, 1]} : vector<2x128xf32> to vector<2x32xf32>
    %462 = arith.truncf %461 : vector<2x32xf32> to vector<2x32xbf16>
    %463 = vector.extract_strided_slice %435 {offsets = [0, 32], sizes = [2, 32], strides = [1, 1]} : vector<2x128xf32> to vector<2x32xf32>
    %464 = arith.truncf %463 : vector<2x32xf32> to vector<2x32xbf16>
    %465 = vector.extract_strided_slice %436 {offsets = [0, 32], sizes = [2, 32], strides = [1, 1]} : vector<2x128xf32> to vector<2x32xf32>
    %466 = arith.truncf %465 : vector<2x32xf32> to vector<2x32xbf16>
    %cst_188 = arith.constant dense<0.000000e+00> : vector<2x2xf32>
    %467 = tpu.matmul %462, %464, %cst_188 {dimension_numbers = #tpu.dot_dimension_numbers<[1], [1], [0], [0], [0, 0, 1, 0], [], []>} : vector<2x32xbf16>, vector<2x32xbf16>, vector<2x2xf32> -> vector<2x2xf32>
    %cst_189 = arith.constant dense<0xFF800000> : vector<2xf32>
    %468 = vector.multi_reduction <maximumf>, %467, %cst_189 [1] : vector<2x2xf32> to vector<2xf32>
    %469 = vector.shape_cast %468 : vector<2xf32> to vector<2x1xf32>
    %470 = vector.broadcast %469 : vector<2x1xf32> to vector<2x2xf32>
    %471 = arith.subf %467, %470 : vector<2x2xf32>
    %472 = math.exp %471 : vector<2x2xf32>
    %cst_190 = arith.constant dense<0.000000e+00> : vector<2xf32>
    %473 = vector.multi_reduction <add>, %472, %cst_190 [1] : vector<2x2xf32> to vector<2xf32>
    %474 = vector.shape_cast %473 : vector<2xf32> to vector<2x1xf32>
    %475 = tpu.reciprocal %474 {approx = true} : vector<2x1xf32> -> vector<2x1xf32>
    %476 = vector.broadcast %475 : vector<2x1xf32> to vector<2x2xf32>
    %477 = arith.mulf %472, %476 : vector<2x2xf32>
    %478 = arith.truncf %477 : vector<2x2xf32> to vector<2x2xbf16>
    %cst_191 = arith.constant dense<0.000000e+00> : vector<2x32xf32>
    %479 = tpu.matmul %478, %466, %cst_191 {dimension_numbers = #tpu.dot_dimension_numbers<[1], [0], [0], [1], [0, 0, 1, 1], [], []>} : vector<2x2xbf16>, vector<2x32xbf16>, vector<2x32xf32> -> vector<2x32xf32>
    %480 = vector.extract_strided_slice %421 {offsets = [32, 0], sizes = [32, 128], strides = [1, 1]} : vector<128x128xbf16> to vector<32x128xbf16>
    %481 = arith.truncf %479 : vector<2x32xf32> to vector<2x32xbf16>
    %cst_192 = arith.constant dense<0.000000e+00> : vector<2x128xf32>
    %482 = tpu.matmul %481, %480, %cst_192 {dimension_numbers = #tpu.dot_dimension_numbers<[1], [0], [0], [1], [0, 0, 1, 1], [], []>} : vector<2x32xbf16>, vector<32x128xbf16>, vector<2x128xf32> -> vector<2x128xf32>
    %483 = arith.addf %460, %482 : vector<2x128xf32>
    %484 = vector.extract_strided_slice %434 {offsets = [0, 64], sizes = [2, 32], strides = [1, 1]} : vector<2x128xf32> to vector<2x32xf32>
    %485 = arith.truncf %484 : vector<2x32xf32> to vector<2x32xbf16>
    %486 = vector.extract_strided_slice %435 {offsets = [0, 64], sizes = [2, 32], strides = [1, 1]} : vector<2x128xf32> to vector<2x32xf32>
    %487 = arith.truncf %486 : vector<2x32xf32> to vector<2x32xbf16>
    %488 = vector.extract_strided_slice %436 {offsets = [0, 64], sizes = [2, 32], strides = [1, 1]} : vector<2x128xf32> to vector<2x32xf32>
    %489 = arith.truncf %488 : vector<2x32xf32> to vector<2x32xbf16>
    %cst_193 = arith.constant dense<0.000000e+00> : vector<2x2xf32>
    %490 = tpu.matmul %485, %487, %cst_193 {dimension_numbers = #tpu.dot_dimension_numbers<[1], [1], [0], [0], [0, 0, 1, 0], [], []>} : vector<2x32xbf16>, vector<2x32xbf16>, vector<2x2xf32> -> vector<2x2xf32>
    %cst_194 = arith.constant dense<0xFF800000> : vector<2xf32>
    %491 = vector.multi_reduction <maximumf>, %490, %cst_194 [1] : vector<2x2xf32> to vector<2xf32>
    %492 = vector.shape_cast %491 : vector<2xf32> to vector<2x1xf32>
    %493 = vector.broadcast %492 : vector<2x1xf32> to vector<2x2xf32>
    %494 = arith.subf %490, %493 : vector<2x2xf32>
    %495 = math.exp %494 : vector<2x2xf32>
    %cst_195 = arith.constant dense<0.000000e+00> : vector<2xf32>
    %496 = vector.multi_reduction <add>, %495, %cst_195 [1] : vector<2x2xf32> to vector<2xf32>
    %497 = vector.shape_cast %496 : vector<2xf32> to vector<2x1xf32>
    %498 = tpu.reciprocal %497 {approx = true} : vector<2x1xf32> -> vector<2x1xf32>
    %499 = vector.broadcast %498 : vector<2x1xf32> to vector<2x2xf32>
    %500 = arith.mulf %495, %499 : vector<2x2xf32>
    %501 = arith.truncf %500 : vector<2x2xf32> to vector<2x2xbf16>
    %cst_196 = arith.constant dense<0.000000e+00> : vector<2x32xf32>
    %502 = tpu.matmul %501, %489, %cst_196 {dimension_numbers = #tpu.dot_dimension_numbers<[1], [0], [0], [1], [0, 0, 1, 1], [], []>} : vector<2x2xbf16>, vector<2x32xbf16>, vector<2x32xf32> -> vector<2x32xf32>
    %503 = vector.extract_strided_slice %421 {offsets = [64, 0], sizes = [32, 128], strides = [1, 1]} : vector<128x128xbf16> to vector<32x128xbf16>
    %504 = arith.truncf %502 : vector<2x32xf32> to vector<2x32xbf16>
    %cst_197 = arith.constant dense<0.000000e+00> : vector<2x128xf32>
    %505 = tpu.matmul %504, %503, %cst_197 {dimension_numbers = #tpu.dot_dimension_numbers<[1], [0], [0], [1], [0, 0, 1, 1], [], []>} : vector<2x32xbf16>, vector<32x128xbf16>, vector<2x128xf32> -> vector<2x128xf32>
    %506 = arith.addf %483, %505 : vector<2x128xf32>
    %507 = vector.extract_strided_slice %434 {offsets = [0, 96], sizes = [2, 32], strides = [1, 1]} : vector<2x128xf32> to vector<2x32xf32>
    %508 = arith.truncf %507 : vector<2x32xf32> to vector<2x32xbf16>
    %509 = vector.extract_strided_slice %435 {offsets = [0, 96], sizes = [2, 32], strides = [1, 1]} : vector<2x128xf32> to vector<2x32xf32>
    %510 = arith.truncf %509 : vector<2x32xf32> to vector<2x32xbf16>
    %511 = vector.extract_strided_slice %436 {offsets = [0, 96], sizes = [2, 32], strides = [1, 1]} : vector<2x128xf32> to vector<2x32xf32>
    %512 = arith.truncf %511 : vector<2x32xf32> to vector<2x32xbf16>
    %cst_198 = arith.constant dense<0.000000e+00> : vector<2x2xf32>
    %513 = tpu.matmul %508, %510, %cst_198 {dimension_numbers = #tpu.dot_dimension_numbers<[1], [1], [0], [0], [0, 0, 1, 0], [], []>} : vector<2x32xbf16>, vector<2x32xbf16>, vector<2x2xf32> -> vector<2x2xf32>
    %cst_199 = arith.constant dense<0xFF800000> : vector<2xf32>
    %514 = vector.multi_reduction <maximumf>, %513, %cst_199 [1] : vector<2x2xf32> to vector<2xf32>
    %515 = vector.shape_cast %514 : vector<2xf32> to vector<2x1xf32>
    %516 = vector.broadcast %515 : vector<2x1xf32> to vector<2x2xf32>
    %517 = arith.subf %513, %516 : vector<2x2xf32>
    %518 = math.exp %517 : vector<2x2xf32>
    %cst_200 = arith.constant dense<0.000000e+00> : vector<2xf32>
    %519 = vector.multi_reduction <add>, %518, %cst_200 [1] : vector<2x2xf32> to vector<2xf32>
    %520 = vector.shape_cast %519 : vector<2xf32> to vector<2x1xf32>
    %521 = tpu.reciprocal %520 {approx = true} : vector<2x1xf32> -> vector<2x1xf32>
    %522 = vector.broadcast %521 : vector<2x1xf32> to vector<2x2xf32>
    %523 = arith.mulf %518, %522 : vector<2x2xf32>
    %524 = arith.truncf %523 : vector<2x2xf32> to vector<2x2xbf16>
    %cst_201 = arith.constant dense<0.000000e+00> : vector<2x32xf32>
    %525 = tpu.matmul %524, %512, %cst_201 {dimension_numbers = #tpu.dot_dimension_numbers<[1], [0], [0], [1], [0, 0, 1, 1], [], []>} : vector<2x2xbf16>, vector<2x32xbf16>, vector<2x32xf32> -> vector<2x32xf32>
    %526 = vector.extract_strided_slice %421 {offsets = [96, 0], sizes = [32, 128], strides = [1, 1]} : vector<128x128xbf16> to vector<32x128xbf16>
    %527 = arith.truncf %525 : vector<2x32xf32> to vector<2x32xbf16>
    %cst_202 = arith.constant dense<0.000000e+00> : vector<2x128xf32>
    %528 = tpu.matmul %527, %526, %cst_202 {dimension_numbers = #tpu.dot_dimension_numbers<[1], [0], [0], [1], [0, 0, 1, 1], [], []>} : vector<2x32xbf16>, vector<32x128xbf16>, vector<2x128xf32> -> vector<2x128xf32>
    %529 = arith.addf %506, %528 : vector<2x128xf32>
    %c3_203 = arith.constant 3 : index
    %c0_204 = arith.constant 0 : index
    %c0_205 = arith.constant 0 : index
    %530 = vector.load %arg11[%c3_203, %c0_204, %c0_205] : memref<4x1x128xf32, #tpu.memory_space<vmem>>, vector<1x1x128xf32>
    %531 = vector.shape_cast %530 : vector<1x1x128xf32> to vector<1x128xf32>
    %532 = vector.broadcast %531 : vector<1x128xf32> to vector<2x128xf32>
    %533 = arith.addf %529, %532 : vector<2x128xf32>
    %534 = arith.addf %533, %533 : vector<2x128xf32>
    %535 = arith.truncf %534 : vector<2x128xf32> to vector<2x128xbf16>
    %cst_206 = arith.constant dense<0.000000e+00> : vector<2x512xf32>
    %536 = tpu.matmul %535, %423, %cst_206 {dimension_numbers = #tpu.dot_dimension_numbers<[1], [0], [0], [1], [0, 0, 1, 1], [], []>} : vector<2x128xbf16>, vector<128x512xbf16>, vector<2x512xf32> -> vector<2x512xf32>
    %c3_207 = arith.constant 3 : index
    %c0_208 = arith.constant 0 : index
    %c0_209 = arith.constant 0 : index
    %537 = vector.load %arg13[%c3_207, %c0_208, %c0_209] : memref<4x1x512xf32, #tpu.memory_space<vmem>>, vector<1x1x512xf32>
    %538 = vector.shape_cast %537 : vector<1x1x512xf32> to vector<1x512xf32>
    %539 = vector.broadcast %538 : vector<1x512xf32> to vector<2x512xf32>
    %540 = arith.addf %536, %539 : vector<2x512xf32>
    %cst_210 = arith.constant 0.000000e+00 : f32
    %541 = vector.broadcast %cst_210 : f32 to vector<2x512xf32>
    %542 = arith.maximumf %540, %541 : vector<2x512xf32>
    %543 = arith.truncf %542 : vector<2x512xf32> to vector<2x512xbf16>
    %cst_211 = arith.constant dense<0.000000e+00> : vector<2x128xf32>
    %544 = tpu.matmul %543, %425, %cst_211 {dimension_numbers = #tpu.dot_dimension_numbers<[1], [0], [0], [1], [0, 0, 1, 1], [], []>} : vector<2x512xbf16>, vector<512x128xbf16>, vector<2x128xf32> -> vector<2x128xf32>
    %c3_212 = arith.constant 3 : index
    %c0_213 = arith.constant 0 : index
    %c0_214 = arith.constant 0 : index
    %545 = vector.load %arg15[%c3_212, %c0_213, %c0_214] : memref<4x1x128xf32, #tpu.memory_space<vmem>>, vector<1x1x128xf32>
    %546 = vector.shape_cast %545 : vector<1x1x128xf32> to vector<1x128xf32>
    %547 = vector.broadcast %546 : vector<1x128xf32> to vector<2x128xf32>
    %548 = arith.addf %544, %547 : vector<2x128xf32>
    %c0_215 = arith.constant 0 : index
    %c0_216 = arith.constant 0 : index
    %549 = vector.load %arg16[%c0_215, %c0_216] : memref<2x128xf32, #tpu.memory_space<vmem>>, vector<2x128xf32>
    tpu.vector_store %arg16[%c0_215, %c0_216], %548 {strides = array<i32>} : memref<2x128xf32, #tpu.memory_space<vmem>>, vector<2x128xf32>,
    return
  }
  func.func @transform_0(%arg0: i32) -> (i32, i32) {
    %c0_i32 = arith.constant 0 : i32
    %c0_i32_0 = arith.constant 0 : i32
    %c0_i32_1 = arith.constant 0 : i32
    return %c0_i32, %c0_i32_0 : i32, i32
  }
  func.func @transform_1(%arg0: i32) -> (i32, i32) {
    %c0_i32 = arith.constant 0 : i32
    %c0_i32_0 = arith.constant 0 : i32
    %c0_i32_1 = arith.constant 0 : i32
    return %c0_i32, %c0_i32_0 : i32, i32
  }
  func.func @transform_2(%arg0: i32) -> (i32, i32) {
    %c0_i32 = arith.constant 0 : i32
    %c0_i32_0 = arith.constant 0 : i32
    %c0_i32_1 = arith.constant 0 : i32
    return %c0_i32, %c0_i32_0 : i32, i32
  }
  func.func @transform_3(%arg0: i32) -> (i32, i32) {
    %c0_i32 = arith.constant 0 : i32
    %c0_i32_0 = arith.constant 0 : i32
    %c0_i32_1 = arith.constant 0 : i32
    return %c0_i32, %c0_i32_0 : i32, i32
  }
  func.func @transform_4(%arg0: i32) -> (i32, i32) {
    %c0_i32 = arith.constant 0 : i32
    %c0_i32_0 = arith.constant 0 : i32
    %c0_i32_1 = arith.constant 0 : i32
    return %c0_i32, %c0_i32_0 : i32, i32
  }
  func.func @transform_5(%arg0: i32) -> (i32, i32) {
    %c0_i32 = arith.constant 0 : i32
    %c0_i32_0 = arith.constant 0 : i32
    %c0_i32_1 = arith.constant 0 : i32
    return %c0_i32, %c0_i32_0 : i32, i32
  }
  func.func @transform_6(%arg0: i32) -> (i32, i32) {
    %c0_i32 = arith.constant 0 : i32
    %c0_i32_0 = arith.constant 0 : i32
    %c0_i32_1 = arith.constant 0 : i32
    return %c0_i32, %c0_i32_0 : i32, i32
  }
  func.func @transform_7(%arg0: i32) -> (i32, i32, i32) {
    %c0_i32 = arith.constant 0 : i32
    %c0_i32_0 = arith.constant 0 : i32
    %c0_i32_1 = arith.constant 0 : i32
    %c0_i32_2 = arith.constant 0 : i32
    return %c0_i32, %c0_i32_0, %c0_i32_1 : i32, i32, i32
  }
  func.func @transform_8(%arg0: i32) -> (i32, i32, i32) {
    %c0_i32 = arith.constant 0 : i32
    %c0_i32_0 = arith.constant 0 : i32
    %c0_i32_1 = arith.constant 0 : i32
    %c0_i32_2 = arith.constant 0 : i32
    return %c0_i32, %c0_i32_0, %c0_i32_1 : i32, i32, i32
  }
  func.func @transform_9(%arg0: i32) -> (i32, i32, i32) {
    %c0_i32 = arith.constant 0 : i32
    %c0_i32_0 = arith.constant 0 : i32
    %c0_i32_1 = arith.constant 0 : i32
    %c0_i32_2 = arith.constant 0 : i32
    return %c0_i32, %c0_i32_0, %c0_i32_1 : i32, i32, i32
  }
  func.func @transform_10(%arg0: i32) -> (i32, i32, i32) {
    %c0_i32 = arith.constant 0 : i32
    %c0_i32_0 = arith.constant 0 : i32
    %c0_i32_1 = arith.constant 0 : i32
    %c0_i32_2 = arith.constant 0 : i32
    return %c0_i32, %c0_i32_0, %c0_i32_1 : i32, i32, i32
  }
  func.func @transform_11(%arg0: i32) -> (i32, i32, i32) {
    %c0_i32 = arith.constant 0 : i32
    %c0_i32_0 = arith.constant 0 : i32
    %c0_i32_1 = arith.constant 0 : i32
    %c0_i32_2 = arith.constant 0 : i32
    return %c0_i32, %c0_i32_0, %c0_i32_1 : i32, i32, i32
  }
  func.func @transform_12(%arg0: i32) -> (i32, i32, i32) {
    %c0_i32 = arith.constant 0 : i32
    %c0_i32_0 = arith.constant 0 : i32
    %c0_i32_1 = arith.constant 0 : i32
    %c0_i32_2 = arith.constant 0 : i32
    return %c0_i32, %c0_i32_0, %c0_i32_1 : i32, i32, i32
  }
  func.func @transform_13(%arg0: i32) -> (i32, i32, i32) {
    %c0_i32 = arith.constant 0 : i32
    %c0_i32_0 = arith.constant 0 : i32
    %c0_i32_1 = arith.constant 0 : i32
    %c0_i32_2 = arith.constant 0 : i32
    return %c0_i32, %c0_i32_0, %c0_i32_1 : i32, i32, i32
  }
  func.func @transform_14(%arg0: i32) -> (i32, i32, i32) {
    %c0_i32 = arith.constant 0 : i32
    %c0_i32_0 = arith.constant 0 : i32
    %c0_i32_1 = arith.constant 0 : i32
    %c0_i32_2 = arith.constant 0 : i32
    return %c0_i32, %c0_i32_0, %c0_i32_1 : i32, i32, i32
  }
  func.func @transform_15(%arg0: i32) -> (i32, i32) {
    %c0_i32 = arith.constant 0 : i32
    %c0_i32_0 = arith.constant 0 : i32
    %c0_i32_1 = arith.constant 0 : i32
    return %c0_i32, %c0_i32_0 : i32, i32
  }
}

</mosaic_0001>

<llo_original>
// kernel: fighter_net_forward.1
$region0: #{fighter_net_forward.1}
  #allocation0 [shape = 'u32[]', space=smem, size = 0x4, offset = 0x4, fixed_abs, tag = 'smem constant byte address 0x4 - core index']
  #allocation1 [shape = 'u32[144,128]{1,0:T(1,128)}', space=vmem, size = 0x12000, scoped, tag = 'internal scratch']
  %s0 = inlined_call_operand.vmem [shape: f32[2,3], index: 0, kind: input, shape index: {}]
  %s1 = inlined_call_operand.hbm [shape: bf16[3,32], index: 1, kind: input, shape index: {}]
  %s2 = inlined_call_operand.hbm [shape: f32[1,32], index: 2, kind: input, shape index: {}]
  %s3 = inlined_call_operand.hbm [shape: bf16[32,64], index: 3, kind: input, shape index: {}]
  %s4 = inlined_call_operand.hbm [shape: f32[1,64], index: 4, kind: input, shape index: {}]
  %s5 = inlined_call_operand.hbm [shape: bf16[64,128], index: 5, kind: input, shape index: {}]
  %s6 = inlined_call_operand.hbm [shape: f32[1,128], index: 6, kind: input, shape index: {}]
  %s7 = inlined_call_operand.hbm [shape: bf16[4,128,384], index: 7, kind: input, shape index: {}]
  %s8 = inlined_call_operand.vmem [shape: f32[4,1,384], index: 8, kind: input, shape index: {}]
  %s9 = inlined_call_operand.hbm [shape: bf16[4,128,128], index: 9, kind: input, shape index: {}]
  %s10 = inlined_call_operand.vmem [shape: f32[4,1,128], index: 10, kind: input, shape index: {}]
  %s11 = inlined_call_operand.hbm [shape: bf16[4,128,512], index: 11, kind: input, shape index: {}]
  %s12 = inlined_call_operand.vmem [shape: f32[4,1,512], index: 12, kind: input, shape index: {}]
  %s13 = inlined_call_operand.hbm [shape: bf16[4,512,128], index: 13, kind: input, shape index: {}]
  %s14 = inlined_call_operand.hbm [shape: f32[4,1,128], index: 14, kind: input, shape index: {}]
  %s15 = inlined_call_operand.hbm [shape: f32[2,128], index: 15, kind: output, shape index: {}]
  %s16 = sld [smem:[#allocation0]]
  $region114: #{fighter_net_forward.1} parent=0
    _
  %s18 = ssub.s32 1, %s16
  %s19 = scalar_select 0, %s18, %s16
  $region1: #{fighter_net_forward.1} parent=0
    #allocation2 [shape = 'u8[1024]{0}', space=vmem, size = 0x400, scoped, tag = 'input window, operand 1, single buffered']
    #allocation3 [shape = 's32[1]{0}', space=sflag, size = 0x4, scoped, tag = 'scoped memory for fighter_net_forward.1']
    #allocation4 [shape = 's32[1]{0}', space=sflag, size = 0x4, scoped, tag = 'scoped memory for fighter_net_forward.1']
    #allocation5 [shape = 'u8[512]{0}', space=vmem, size = 0x400, scoped, tag = 'input window, operand 2, single buffered']
    #allocation6 [shape = 's32[1]{0}', space=sflag, size = 0x4, scoped, tag = 'scoped memory for fighter_net_forward.1']
    #allocation7 [shape = 'u8[8192]{0}', space=vmem, size = 0x2000, scoped, tag = 'input window, operand 3, single buffered']
    #allocation8 [shape = 'u8[512]{0}', space=vmem, size = 0x400, scoped, tag = 'input window, operand 4, single buffered']
    #allocation9 [shape = 's32[1]{0}', space=sflag, size = 0x4, scoped, tag = 'scoped memory for fighter_net_forward.1']
    #allocation10 [shape = 'u8[16384]{0}', space=vmem, size = 0x4000, scoped, tag = 'input window, operand 5, single buffered']
    #allocation11 [shape = 'u8[512]{0}', space=vmem, size = 0x400, scoped, tag = 'input window, operand 6, single buffered']
    #allocation12 [shape = 's32[1]{0}', space=sflag, size = 0x4, scoped, tag = 'scoped memory for fighter_net_forward.1']
    #allocation13 [shape = 'u8[393216]{0}', space=vmem, size = 0x60000, scoped, tag = 'input window, operand 7, single buffered']
    #allocation14 [shape = 'u8[131072]{0}', space=vmem, size = 0x20000, scoped, tag = 'input window, operand 9, single buffered']
    #allocation15 [shape = 's32[1]{0}', space=sflag, size = 0x4, scoped, tag = 'scoped memory for fighter_net_forward.1']
    #allocation16 [shape = 'u8[524288]{0}', space=vmem, size = 0x80000, scoped, tag = 'input window, operand 11, single buffered']
    #allocation17 [shape = 'u8[524288]{0}', space=vmem, size = 0x80000, scoped, tag = 'input window, operand 13, single buffered']
    #allocation18 [shape = 's32[1]{0}', space=sflag, size = 0x4, scoped, tag = 'scoped memory for fighter_net_forward.1']
    #allocation19 [shape = 'u8[2048]{0}', space=vmem, size = 0x800, scoped, tag = 'input window, operand 14, single buffered']
    #allocation20 [shape = 'u8[1024]{0}', space=vmem, size = 0x400, scoped, tag = 'output window, operand 0, single buffered']
    %20 = vsyncpa [#allocation3], 0
    %21 = vsyncpa [#allocation6], 0
    %22 = vsyncpa [#allocation9], 0
    %23 = vsyncpa [#allocation12], 0
    %24 = vsyncpa [#allocation15], 0
    %25 = vsyncpa [#allocation18], 0
    %26 = vsyncpa [#allocation4], 0
    // Predicated region
    $region2: #{fighter_net_forward.1} parent=1 // pred_check
      _
    $region3: #{fighter_net_forward.1} parent=1 // pred_check_branch
      %28 = sbr.rel (0) target = $region5
    $region4: #{fighter_net_forward.1} parent=1 // pred_region
      _
    $region5: #{fighter_net_forward.1} parent=1 // pred_fallthru
      _
    // Predicated region
    $region6: #{fighter_net_forward.1} parent=1 // pred_check
      _
    $region7: #{fighter_net_forward.1} parent=1 // pred_check_branch
      %30 = sbr.rel (0) target = $region9
    $region8: #{fighter_net_forward.1} parent=1 // pred_region
      %s32 = ssub.s32 32, 32
      %33 = vsyncadd [#allocation3], %s32
      %s35 = sshll.u32 [#allocation2], 4
      %s36 = int_to_ptr.vmem [resolvable:$true] %s35
      %38 = dma.hbm_to_vmem [thread:$0]  %s1, 32, %s36, [#allocation3]
    $region9: #{fighter_net_forward.1} parent=1 // pred_fallthru
      _
    // Predicated region
    $region10: #{fighter_net_forward.1} parent=1 // pred_check
      _
    $region11: #{fighter_net_forward.1} parent=1 // pred_check_branch
      %40 = sbr.rel (0) target = $region13
    $region12: #{fighter_net_forward.1} parent=1 // pred_region
      %s42 = ssub.s32 16, 16
      %43 = vsyncadd [#allocation6], %s42
      %s45 = sshll.u32 [#allocation5], 4
      %s46 = int_to_ptr.vmem [resolvable:$true] %s45
      %48 = dma.hbm_to_vmem [thread:$0]  %s2, 16, %s46, [#allocation6]
    $region13: #{fighter_net_forward.1} parent=1 // pred_fallthru
      _
    // Predicated region
    $region14: #{fighter_net_forward.1} parent=1 // pred_check
      _
    $region15: #{fighter_net_forward.1} parent=1 // pred_check_branch
      %50 = sbr.rel (0) target = $region17
    $region16: #{fighter_net_forward.1} parent=1 // pred_region
      %s52 = ssub.s32 256, 256
      %53 = vsyncadd [#allocation6], %s52
      %s54 = sshll.u32 [#allocation7], 4
      %s55 = int_to_ptr.vmem [resolvable:$true] %s54
      %60 = dma.hbm_to_vmem [thread:$0]  %s3, 256, %s55, [#allocation6], 64, 64, 4
    $region17: #{fighter_net_forward.1} parent=1 // pred_fallthru
      _
    // Predicated region
    $region18: #{fighter_net_forward.1} parent=1 // pred_check
      _
    $region19: #{fighter_net_forward.1} parent=1 // pred_check_branch
      %62 = sbr.rel (0) target = $region21
    $region20: #{fighter_net_forward.1} parent=1 // pred_region
      %s64 = ssub.s32 16, 16
      %65 = vsyncadd [#allocation9], %s64
      %s67 = sshll.u32 [#allocation8], 4
      %s68 = int_to_ptr.vmem [resolvable:$true] %s67
      %70 = dma.hbm_to_vmem [thread:$0]  %s4, 16, %s68, [#allocation9]
    $region21: #{fighter_net_forward.1} parent=1 // pred_fallthru
      _
    // Predicated region
    $region22: #{fighter_net_forward.1} parent=1 // pred_check
      _
    $region23: #{fighter_net_forward.1} parent=1 // pred_check_branch
      %72 = sbr.rel (0) target = $region25
    $region24: #{fighter_net_forward.1} parent=1 // pred_region
      %s74 = ssub.s32 512, 512
      %75 = vsyncadd [#allocation9], %s74
      %s76 = sshll.u32 [#allocation10], 4
      %s77 = int_to_ptr.vmem [resolvable:$true] %s76
      %82 = dma.hbm_to_vmem [thread:$0]  %s5, 512, %s77, [#allocation9], 64, 64, 4
    $region25: #{fighter_net_forward.1} parent=1 // pred_fallthru
      _
    // Predicated region
    $region26: #{fighter_net_forward.1} parent=1 // pred_check
      _
    $region27: #{fighter_net_forward.1} parent=1 // pred_check_branch
      %84 = sbr.rel (0) target = $region29
    $region28: #{fighter_net_forward.1} parent=1 // pred_region
      %s86 = ssub.s32 16, 16
      %87 = vsyncadd [#allocation12], %s86
      %s89 = sshll.u32 [#allocation11], 4
      %s90 = int_to_ptr.vmem [resolvable:$true] %s89
      %92 = dma.hbm_to_vmem [thread:$0]  %s6, 16, %s90, [#allocation12]
    $region29: #{fighter_net_forward.1} parent=1 // pred_fallthru
      _
    // Predicated region
    $region30: #{fighter_net_forward.1} parent=1 // pred_check
      _
    $region31: #{fighter_net_forward.1} parent=1 // pred_check_branch
      %94 = sbr.rel (0) target = $region33
    $region32: #{fighter_net_forward.1} parent=1 // pred_region
      %s96 = ssub.s32 12288, 12288
      %97 = vsyncadd [#allocation12], %s96
      %s98 = sshll.u32 [#allocation13], 4
      %s99 = int_to_ptr.vmem [resolvable:$true] %s98
      %104 = dma.hbm_to_vmem [thread:$0]  %s7, 12288, %s99, [#allocation12], 192, 192, 12
    $region33: #{fighter_net_forward.1} parent=1 // pred_fallthru
      _
    // Predicated region
    $region34: #{fighter_net_forward.1} parent=1 // pred_check
      _
    $region35: #{fighter_net_forward.1} parent=1 // pred_check_branch
      %106 = sbr.rel (0) target = $region37
    $region36: #{fighter_net_forward.1} parent=1 // pred_region
      _
    $region37: #{fighter_net_forward.1} parent=1 // pred_fallthru
      _
    // Predicated region
    $region38: #{fighter_net_forward.1} parent=1 // pred_check
      _
    $region39: #{fighter_net_forward.1} parent=1 // pred_check_branch
      %108 = sbr.rel (0) target = $region41
    $region40: #{fighter_net_forward.1} parent=1 // pred_region
      %s110 = ssub.s32 4096, 4096
      %111 = vsyncadd [#allocation15], %s110
      %s112 = sshll.u32 [#allocation14], 4
      %s113 = int_to_ptr.vmem [resolvable:$true] %s112
      %118 = dma.hbm_to_vmem [thread:$0]  %s9, 4096, %s113, [#allocation15], 64, 64, 4
    $region41: #{fighter_net_forward.1} parent=1 // pred_fallthru
      _
    // Predicated region
    $region42: #{fighter_net_forward.1} parent=1 // pred_check
      _
    $region43: #{fighter_net_forward.1} parent=1 // pred_check_branch
      %120 = sbr.rel (0) target = $region45
    $region44: #{fighter_net_forward.1} parent=1 // pred_region
      _
    $region45: #{fighter_net_forward.1} parent=1 // pred_fallthru
      _
    // Predicated region
    $region46: #{fighter_net_forward.1} parent=1 // pred_check
      _
    $region47: #{fighter_net_forward.1} parent=1 // pred_check_branch
      %122 = sbr.rel (0) target = $region49
    $region48: #{fighter_net_forward.1} parent=1 // pred_region
      %s124 = ssub.s32 16384, 16384
      %125 = vsyncadd [#allocation15], %s124
      %s126 = sshll.u32 [#allocation16], 4
      %s127 = int_to_ptr.vmem [resolvable:$true] %s126
      %132 = dma.hbm_to_vmem [thread:$0]  %s11, 16384, %s127, [#allocation15], 256, 256, 16
    $region49: #{fighter_net_forward.1} parent=1 // pred_fallthru
      _
    // Predicated region
    $region50: #{fighter_net_forward.1} parent=1 // pred_check
      _
    $region51: #{fighter_net_forward.1} parent=1 // pred_check_branch
      %134 = sbr.rel (0) target = $region53
    $region52: #{fighter_net_forward.1} parent=1 // pred_region
      _
    $region53: #{fighter_net_forward.1} parent=1 // pred_fallthru
      _
    // Predicated region
    $region54: #{fighter_net_forward.1} parent=1 // pred_check
      _
    $region55: #{fighter_net_forward.1} parent=1 // pred_check_branch
      %136 = sbr.rel (0) target = $region57
    $region56: #{fighter_net_forward.1} parent=1 // pred_region
      %s138 = ssub.s32 16384, 16384
      %139 = vsyncadd [#allocation18], %s138
      %s140 = sshll.u32 [#allocation17], 4
      %s141 = int_to_ptr.vmem [resolvable:$true] %s140
      %146 = dma.hbm_to_vmem [thread:$0]  %s13, 16384, %s141, [#allocation18], 64, 64, 4
    $region57: #{fighter_net_forward.1} parent=1 // pred_fallthru
      _
    // Predicated region
    $region58: #{fighter_net_forward.1} parent=1 // pred_check
      _
    $region59: #{fighter_net_forward.1} parent=1 // pred_check_branch
      %148 = sbr.rel (0) target = $region61
    $region60: #{fighter_net_forward.1} parent=1 // pred_region
      %s150 = ssub.s32 64, 64
      %151 = vsyncadd [#allocation18], %s150
      %s152 = sshll.u32 [#allocation19], 4
      %s153 = int_to_ptr.vmem [resolvable:$true] %s152
      %158 = dma.hbm_to_vmem [thread:$0]  %s14, 64, %s153, [#allocation18], 16, 16, 1
    $region61: #{fighter_net_forward.1} parent=1 // pred_fallthru
      _
    // Predicated region
    $region62: #{fighter_net_forward.1} parent=1 // pred_check
      _
    $region63: #{fighter_net_forward.1} parent=1 // pred_check_branch
      %160 = sbr.rel (0) target = $region65
    $region64: #{fighter_net_forward.1} parent=1 // pred_region
      %161 = dma.done [#allocation3], 32
    $region65: #{fighter_net_forward.1} parent=1 // pred_fallthru
      _
    // Predicated region
    $region66: #{fighter_net_forward.1} parent=1 // pred_check
      _
    $region67: #{fighter_net_forward.1} parent=1 // pred_check_branch
      %163 = sbr.rel (0) target = $region69
    $region68: #{fighter_net_forward.1} parent=1 // pred_region
      %164 = dma.done [#allocation6], 16
    $region69: #{fighter_net_forward.1} parent=1 // pred_fallthru
      _
    // Predicated region
    $region70: #{fighter_net_forward.1} parent=1 // pred_check
      _
    $region71: #{fighter_net_forward.1} parent=1 // pred_check_branch
      %166 = sbr.rel (0) target = $region73
    $region72: #{fighter_net_forward.1} parent=1 // pred_region
      %167 = dma.done [#allocation6], 256
    $region73: #{fighter_net_forward.1} parent=1 // pred_fallthru
      _
    // Predicated region
    $region74: #{fighter_net_forward.1} parent=1 // pred_check
      _
    $region75: #{fighter_net_forward.1} parent=1 // pred_check_branch
      %169 = sbr.rel (0) target = $region77
    $region76: #{fighter_net_forward.1} parent=1 // pred_region
      %170 = dma.done [#allocation9], 16
    $region77: #{fighter_net_forward.1} parent=1 // pred_fallthru
      _
    // Predicated region
    $region78: #{fighter_net_forward.1} parent=1 // pred_check
      _
    $region79: #{fighter_net_forward.1} parent=1 // pred_check_branch
      %172 = sbr.rel (0) target = $region81
    $region80: #{fighter_net_forward.1} parent=1 // pred_region
      %173 = dma.done [#allocation9], 512
    $region81: #{fighter_net_forward.1} parent=1 // pred_fallthru
      _
    // Predicated region
    $region82: #{fighter_net_forward.1} parent=1 // pred_check
      _
    $region83: #{fighter_net_forward.1} parent=1 // pred_check_branch
      %175 = sbr.rel (0) target = $region85
    $region84: #{fighter_net_forward.1} parent=1 // pred_region
      %176 = dma.done [#allocation12], 16
    $region85: #{fighter_net_forward.1} parent=1 // pred_fallthru
      _
    // Predicated region
    $region86: #{fighter_net_forward.1} parent=1 // pred_check
      _
    $region87: #{fighter_net_forward.1} parent=1 // pred_check_branch
      %178 = sbr.rel (0) target = $region89
    $region88: #{fighter_net_forward.1} parent=1 // pred_region
      %179 = dma.done [#allocation12], 12288
    $region89: #{fighter_net_forward.1} parent=1 // pred_fallthru
      _
    // Predicated region
    $region90: #{fighter_net_forward.1} parent=1 // pred_check
      _
    $region91: #{fighter_net_forward.1} parent=1 // pred_check_branch
      %181 = sbr.rel (0) target = $region93
    $region92: #{fighter_net_forward.1} parent=1 // pred_region
      %182 = dma.done [#allocation15], 4096
    $region93: #{fighter_net_forward.1} parent=1 // pred_fallthru
      _
    // Predicated region
    $region94: #{fighter_net_forward.1} parent=1 // pred_check
      _
    $region95: #{fighter_net_forward.1} parent=1 // pred_check_branch
      %184 = sbr.rel (0) target = $region97
    $region96: #{fighter_net_forward.1} parent=1 // pred_region
      %185 = dma.done [#allocation15], 16384
    $region97: #{fighter_net_forward.1} parent=1 // pred_fallthru
      _
    // Predicated region
    $region98: #{fighter_net_forward.1} parent=1 // pred_check
      _
    $region99: #{fighter_net_forward.1} parent=1 // pred_check_branch
      %187 = sbr.rel (0) target = $region101
    $region100: #{fighter_net_forward.1} parent=1 // pred_region
      %188 = dma.done [#allocation18], 16384
    $region101: #{fighter_net_forward.1} parent=1 // pred_fallthru
      _
    // Predicated region
    $region102: #{fighter_net_forward.1} parent=1 // pred_check
      _
    $region103: #{fighter_net_forward.1} parent=1 // pred_check_branch
      %190 = sbr.rel (0) target = $region105
    $region104: #{fighter_net_forward.1} parent=1 // pred_region
      %191 = dma.done [#allocation18], 64
    $region105: #{fighter_net_forward.1} parent=1 // pred_fallthru
      _
    %v193 = vld [vmem:[%s0] sm:$0x3]
    %v194 = vld [vmem:[#allocation2] sm:$0x3]
    %v195 = vpack.c.bf16 %v193, %v193
    %v196 = vld [vmem:[#allocation5] sm:$0x1]
    %v198 = vlaneseq
    %v199 = vshrl.u32 %v198, 7
    %v200 = vsub.s32 0, %v199
    %v201 = vrot.slane %v196, %v200
    %vm203 = vcmask 23552
    %v205 = vsel %vm203, %v195, 0
    %vm207 = vcmask 1040384
    %vm208 = vcmask 1041408
    %v209 = vsel %vm207, 4294967295, 65535
    %v210 = vsel %vm208, %v209, 0
    %v212 = vand.u32 %v194, %v210
    %214 = vmatprep.subr.bf16.mxu0 0
    %215 = vmatpush1.bf16.msra.mxu0 %v212
    %216 = vmatprep.subr.bf16.mxu0 0
    %217 = vmatpush1.bf16.msra.mxu0 0
    %218 = vmatprep.subr.bf16.mxu0 0
    %219 = vmatpush1.bf16.msra.mxu0 0
    %220 = vmatprep.subr.bf16.mxu0 0
    %221 = vmatpush1.bf16.msra.mxu0 0
    %222 = vmatprep.subr.bf16.mxu0 0
    %223 = vmatpush1.bf16.msra.mxu0 0
    %224 = vmatprep.subr.bf16.mxu0 0
    %225 = vmatpush1.bf16.msra.mxu0 0
    %226 = vmatprep.subr.bf16.mxu0 0
    %227 = vmatpush1.bf16.msra.mxu0 0
    %228 = vmatprep.subr.bf16.mxu0 0
    %229 = vmatpush1.bf16.msra.mxu0 0
    %230 = vmatprep.subr.bf16.mxu0 0
    %231 = vmatpush1.bf16.msra.mxu0 0
    %232 = vmatprep.subr.bf16.mxu0 0
    %233 = vmatpush1.bf16.msra.mxu0 0
    %234 = vmatprep.subr.bf16.mxu0 0
    %235 = vmatpush1.bf16.msra.mxu0 0
    %236 = vmatprep.subr.bf16.mxu0 0
    %237 = vmatpush1.bf16.msra.mxu0 0
    %238 = vmatprep.subr.bf16.mxu0 0
    %239 = vmatpush1.bf16.msra.mxu0 0
    %240 = vmatprep.subr.bf16.mxu0 0
    %241 = vmatpush1.bf16.msra.mxu0 0
    %242 = vmatprep.subr.bf16.mxu0 0
    %243 = vmatpush1.bf16.msra.mxu0 0
    %244 = vmatprep.subr.bf16.mxu0 0
    %245 = vmatpush1.bf16.msra.mxu0 0
    %246 = vmatprep.mubr.bf16.mxu0 0
    %247 = vmatmul.mubr.bf16.gmra.mrb[0].mxu0 %v205
    %v248 = vpop.f32.mrb[0].mxu0
    %v249 = vadd.f32 %v201, %v248
    %v250 = vpop.f32.mrb[0].mxu0
    %v251 = vpop.f32.mrb[0].mxu0
    %v252 = vpop.f32.mrb[0].mxu0
    %253 = vdwg.mxu0
    %v254 = vmax.f32 %v249, 0.0
    %v255 = vld [vmem:[#allocation7] sm:$0xf]
    %v256 = vld [vmem:[#allocation7 + $0x4] sm:$0xf]
    %v257 = vld [vmem:[#allocation7 + $0x8] sm:$0xf]
    %v258 = vld [vmem:[#allocation7 + $0xc] sm:$0xf]
    %v259 = vpack.c.bf16 %v254, %v254
    %v260 = vld [vmem:[#allocation8] sm:$0x1]
    %v262 = vlaneseq
    %v263 = vshrl.u32 %v262, 7
    %v264 = vsub.s32 0, %v263
    %v265 = vrot.slane %v260, %v264
    %v271 = vunpack.c.l.b16 %v255
    %v272 = vunpack.c.l.b16 %v256
    %v273 = vunpack.c.l.b16 %v257
    %v274 = vunpack.c.l.b16 %v258
    %v275 = vpack.c.b16 %v272, %v271
    %v276 = vpack.c.b16 %v274, %v273
    %vm279 = vcmask 261120
    %v281 = vsel %vm279, %v259, 0
    %283 = vmatprep.subr.bf16.mxu0 0
    %284 = vmatpush1.bf16.msra.mxu0 %v275
    %285 = vmatprep.subr.bf16.mxu0 0
    %286 = vmatpush1.bf16.msra.mxu0 %v276
    %287 = vmatprep.subr.bf16.mxu0 0
    %288 = vmatpush1.bf16.msra.mxu0 0
    %289 = vmatprep.subr.bf16.mxu0 0
    %290 = vmatpush1.bf16.msra.mxu0 0
    %291 = vmatprep.subr.bf16.mxu0 0
    %292 = vmatpush1.bf16.msra.mxu0 0
    %293 = vmatprep.subr.bf16.mxu0 0
    %294 = vmatpush1.bf16.msra.mxu0 0
    %295 = vmatprep.subr.bf16.mxu0 0
    %296 = vmatpush1.bf16.msra.mxu0 0
    %297 = vmatprep.subr.bf16.mxu0 0
    %298 = vmatpush1.bf16.msra.mxu0 0
    %299 = vmatprep.subr.bf16.mxu0 0
    %300 = vmatpush1.bf16.msra.mxu0 0
    %301 = vmatprep.subr.bf16.mxu0 0
    %302 = vmatpush1.bf16.msra.mxu0 0
    %303 = vmatprep.subr.bf16.mxu0 0
    %304 = vmatpush1.bf16.msra.mxu0 0
    %305 = vmatprep.subr.bf16.mxu0 0
    %306 = vmatpush1.bf16.msra.mxu0 0
    %307 = vmatprep.subr.bf16.mxu0 0
    %308 = vmatpush1.bf16.msra.mxu0 0
    %309 = vmatprep.subr.bf16.mxu0 0
    %310 = vmatpush1.bf16.msra.mxu0 0
    %311 = vmatprep.subr.bf16.mxu0 0
    %312 = vmatpush1.bf16.msra.mxu0 0
    %313 = vmatprep.subr.bf16.mxu0 0
    %314 = vmatpush1.bf16.msra.mxu0 0
    %315 = vmatprep.mubr.bf16.mxu0 0
    %316 = vmatmul.mubr.bf16.gmra.mrb[0].mxu0 %v281
    %v317 = vpop.f32.mrb[0].mxu0
    %v318 = vadd.f32 %v265, %v317
    %v319 = vpop.f32.mrb[0].mxu0
    %v320 = vpop.f32.mrb[0].mxu0
    %v321 = vpop.f32.mrb[0].mxu0
    %322 = vdwg.mxu0
    %v323 = vmax.f32 %v318, 0.0
    %v324 = vld [vmem:[#allocation10] sm:$0xf]
    %v325 = vld [vmem:[#allocation10 + $0x4] sm:$0xf]
    %v326 = vld [vmem:[#allocation10 + $0x8] sm:$0xf]
    %v327 = vld [vmem:[#allocation10 + $0xc] sm:$0xf]
    %v328 = vld [vmem:[#allocation10 + $0x10] sm:$0xf]
    %v329 = vld [vmem:[#allocation10 + $0x14] sm:$0xf]
    %v330 = vld [vmem:[#allocation10 + $0x18] sm:$0xf]
    %v331 = vld [vmem:[#allocation10 + $0x1c] sm:$0xf]
    %v332 = vpack.c.bf16 %v323, %v323
    %v333 = vld [vmem:[#allocation11] sm:$0x1]
    %v335 = vlaneseq
    %v336 = vshrl.u32 %v335, 7
    %v337 = vsub.s32 0, %v336
    %v338 = vrot.slane %v333, %v337
    %v348 = vunpack.c.l.b16 %v324
    %v349 = vunpack.c.l.b16 %v325
    %v350 = vunpack.c.l.b16 %v326
    %v351 = vunpack.c.l.b16 %v327
    %v352 = vunpack.c.l.b16 %v328
    %v353 = vunpack.c.l.b16 %v329
    %v354 = vunpack.c.l.b16 %v330
    %v355 = vunpack.c.l.b16 %v331
    %v356 = vpack.c.b16 %v349, %v348
    %v357 = vpack.c.b16 %v351, %v350
    %v358 = vpack.c.b16 %v353, %v352
    %v359 = vpack.c.b16 %v355, %v354
    %vm364 = vcmask 523264
    %v366 = vsel %vm364, %v332, 0
    %368 = vmatprep.subr.bf16.mxu0 0
    %369 = vmatpush1.bf16.msra.mxu0 %v356
    %370 = vmatprep.subr.bf16.mxu0 0
    %371 = vmatpush1.bf16.msra.mxu0 %v357
    %372 = vmatprep.subr.bf16.mxu0 0
    %373 = vmatpush1.bf16.msra.mxu0 %v358
    %374 = vmatprep.subr.bf16.mxu0 0
    %375 = vmatpush1.bf16.msra.mxu0 %v359
    %376 = vmatprep.subr.bf16.mxu0 0
    %377 = vmatpush1.bf16.msra.mxu0 0
    %378 = vmatprep.subr.bf16.mxu0 0
    %379 = vmatpush1.bf16.msra.mxu0 0
    %380 = vmatprep.subr.bf16.mxu0 0
    %381 = vmatpush1.bf16.msra.mxu0 0
    %382 = vmatprep.subr.bf16.mxu0 0
    %383 = vmatpush1.bf16.msra.mxu0 0
    %384 = vmatprep.subr.bf16.mxu0 0
    %385 = vmatpush1.bf16.msra.mxu0 0
    %386 = vmatprep.subr.bf16.mxu0 0
    %387 = vmatpush1.bf16.msra.mxu0 0
    %388 = vmatprep.subr.bf16.mxu0 0
    %389 = vmatpush1.bf16.msra.mxu0 0
    %390 = vmatprep.subr.bf16.mxu0 0
    %391 = vmatpush1.bf16.msra.mxu0 0
    %392 = vmatprep.subr.bf16.mxu0 0
    %393 = vmatpush1.bf16.msra.mxu0 0
    %394 = vmatprep.subr.bf16.mxu0 0
    %395 = vmatpush1.bf16.msra.mxu0 0
    %396 = vmatprep.subr.bf16.mxu0 0
    %397 = vmatpush1.bf16.msra.mxu0 0
    %398 = vmatprep.subr.bf16.mxu0 0
    %399 = vmatpush1.bf16.msra.mxu0 0
    %400 = vmatprep.mubr.bf16.mxu0 0
    %401 = vmatmul.mubr.bf16.gmra.mrb[0].mxu0 %v366
    %v402 = vpop.f32.mrb[0].mxu0
    %v403 = vadd.f32 %v338, %v402
    %v404 = vpop.f32.mrb[0].mxu0
    %v405 = vpop.f32.mrb[0].mxu0
    %v406 = vpop.f32.mrb[0].mxu0
    %407 = vdwg.mxu0
    %v408 = vmax.f32 %v403, 0.0
    %v409 = vld [vmem:[#allocation13] sm:$0xff]
    %v410 = vld [vmem:[#allocation13 + $0x8] sm:$0xf]
    %v411 = vld [vmem:[#allocation13 + $0xc] sm:$0xff]
    %v412 = vld [vmem:[#allocation13 + $0x14] sm:$0xf]
    %v413 = vld [vmem:[#allocation13 + $0x18] sm:$0xff]
    %v414 = vld [vmem:[#allocation13 + $0x20] sm:$0xf]
    %v415 = vld [vmem:[#allocation13 + $0x24] sm:$0xff]
    %v416 = vld [vmem:[#allocation13 + $0x2c] sm:$0xf]
    %v417 = vld [vmem:[#allocation13 + $0x30] sm:$0xff]
    %v418 = vld [vmem:[#allocation13 + $0x38] sm:$0xf]
    %v419 = vld [vmem:[#allocation13 + $0x3c] sm:$0xff]
    %v420 = vld [vmem:[#allocation13 + $0x44] sm:$0xf]
    %v421 = vld [vmem:[#allocation13 + $0x48] sm:$0xff]
    %v422 = vld [vmem:[#allocation13 + $0x50] sm:$0xf]
    %v423 = vld [vmem:[#allocation13 + $0x54] sm:$0xff]
    %v424 = vld [vmem:[#allocation13 + $0x5c] sm:$0xf]
    %v425 = vld [vmem:[#allocation13 + $0x60] sm:$0xff]
    %v426 = vld [vmem:[#allocation13 + $0x68] sm:$0xf]
    %v427 = vld [vmem:[#allocation13 + $0x6c] sm:$0xff]
    %v428 = vld [vmem:[#allocation13 + $0x74] sm:$0xf]
    %v429 = vld [vmem:[#allocation13 + $0x78] sm:$0xff]
    %v430 = vld [vmem:[#allocation13 + $0x80] sm:$0xf]
    %v431 = vld [vmem:[#allocation13 + $0x84] sm:$0xff]
    %v432 = vld [vmem:[#allocation13 + $0x8c] sm:$0xf]
    %v433 = vld [vmem:[#allocation13 + $0x90] sm:$0xff]
    %v434 = vld [vmem:[#allocation13 + $0x98] sm:$0xf]
    %v435 = vld [vmem:[#allocation13 + $0x9c] sm:$0xff]
    %v436 = vld [vmem:[#allocation13 + $0xa4] sm:$0xf]
    %v437 = vld [vmem:[#allocation13 + $0xa8] sm:$0xff]
    %v438 = vld [vmem:[#allocation13 + $0xb0] sm:$0xf]
    %v439 = vld [vmem:[#allocation13 + $0xb4] sm:$0xff]
    %v440 = vld [vmem:[#allocation13 + $0xbc] sm:$0xf]
    %v441 = vld [vmem:[#allocation14] sm:$0xf]
    %v442 = vld [vmem:[#allocation14 + $0x4] sm:$0xf]
    %v443 = vld [vmem:[#allocation14 + $0x8] sm:$0xf]
    %v444 = vld [vmem:[#allocation14 + $0xc] sm:$0xf]
    %v445 = vld [vmem:[#allocation14 + $0x10] sm:$0xf]
    %v446 = vld [vmem:[#allocation14 + $0x14] sm:$0xf]
    %v447 = vld [vmem:[#allocation14 + $0x18] sm:$0xf]
    %v448 = vld [vmem:[#allocation14 + $0x1c] sm:$0xf]
    %v449 = vld [vmem:[#allocation14 + $0x20] sm:$0xf]
    %v450 = vld [vmem:[#allocation14 + $0x24] sm:$0xf]
    %v451 = vld [vmem:[#allocation14 + $0x28] sm:$0xf]
    %v452 = vld [vmem:[#allocation14 + $0x2c] sm:$0xf]
    %v453 = vld [vmem:[#allocation14 + $0x30] sm:$0xf]
    %v454 = vld [vmem:[#allocation14 + $0x34] sm:$0xf]
    %v455 = vld [vmem:[#allocation14 + $0x38] sm:$0xf]
    %v456 = vld [vmem:[#allocation14 + $0x3c] sm:$0xf]
    %v457 = vld [vmem:[#allocation16] sm:$0xff]
    %v458 = vld [vmem:[#allocation16 + $0x8] sm:$0xff]
    %v459 = vld [vmem:[#allocation16 + $0x10] sm:$0xff]
    %v460 = vld [vmem:[#allocation16 + $0x18] sm:$0xff]
    %v461 = vld [vmem:[#allocation16 + $0x20] sm:$0xff]
    %v462 = vld [vmem:[#allocation16 + $0x28] sm:$0xff]
    %v463 = vld [vmem:[#allocation16 + $0x30] sm:$0xff]
    %v464 = vld [vmem:[#allocation16 + $0x38] sm:$0xff]
    %v465 = vld [vmem:[#allocation16 + $0x40] sm:$0xff]
    %v466 = vld [vmem:[#allocation16 + $0x48] sm:$0xff]
    %v467 = vld [vmem:[#allocation16 + $0x50] sm:$0xff]
    %v468 = vld [vmem:[#allocation16 + $0x58] sm:$0xff]
    %v469 = vld [vmem:[#allocation16 + $0x60] sm:$0xff]
    %v470 = vld [vmem:[#allocation16 + $0x68] sm:$0xff]
    %v471 = vld [vmem:[#allocation16 + $0x70] sm:$0xff]
    %v472 = vld [vmem:[#allocation16 + $0x78] sm:$0xff]
    %v473 = vld [vmem:[#allocation16 + $0x80] sm:$0xff]
    %v474 = vld [vmem:[#allocation16 + $0x88] sm:$0xff]
    %v475 = vld [vmem:[#allocation16 + $0x90] sm:$0xff]
    %v476 = vld [vmem:[#allocation16 + $0x98] sm:$0xff]
    %v477 = vld [vmem:[#allocation16 + $0xa0] sm:$0xff]
    %v478 = vld [vmem:[#allocation16 + $0xa8] sm:$0xff]
    %v479 = vld [vmem:[#allocation16 + $0xb0] sm:$0xff]
    %v480 = vld [vmem:[#allocation16 + $0xb8] sm:$0xff]
    %v481 = vld [vmem:[#allocation16 + $0xc0] sm:$0xff]
    %v482 = vld [vmem:[#allocation16 + $0xc8] sm:$0xff]
    %v483 = vld [vmem:[#allocation16 + $0xd0] sm:$0xff]
    %v484 = vld [vmem:[#allocation16 + $0xd8] sm:$0xff]
    %v485 = vld [vmem:[#allocation16 + $0xe0] sm:$0xff]
    %v486 = vld [vmem:[#allocation16 + $0xe8] sm:$0xff]
    %v487 = vld [vmem:[#allocation16 + $0xf0] sm:$0xff]
    %v488 = vld [vmem:[#allocation16 + $0xf8] sm:$0xff]
    %v489 = vld [vmem:[#allocation17] sm:$0xf]
    %v490 = vld [vmem:[#allocation17 + $0x4] sm:$0xf]
    %v491 = vld [vmem:[#allocation17 + $0x8] sm:$0xf]
    %v492 = vld [vmem:[#allocation17 + $0xc] sm:$0xf]
    %v493 = vld [vmem:[#allocation17 + $0x10] sm:$0xf]
    %v494 = vld [vmem:[#allocation17 + $0x14] sm:$0xf]
    %v495 = vld [vmem:[#allocation17 + $0x18] sm:$0xf]
    %v496 = vld [vmem:[#allocation17 + $0x1c] sm:$0xf]
    %v497 = vld [vmem:[#allocation17 + $0x20] sm:$0xf]
    %v498 = vld [vmem:[#allocation17 + $0x24] sm:$0xf]
    %v499 = vld [vmem:[#allocation17 + $0x28] sm:$0xf]
    %v500 = vld [vmem:[#allocation17 + $0x2c] sm:$0xf]
    %v501 = vld [vmem:[#allocation17 + $0x30] sm:$0xf]
    %v502 = vld [vmem:[#allocation17 + $0x34] sm:$0xf]
    %v503 = vld [vmem:[#allocation17 + $0x38] sm:$0xf]
    %v504 = vld [vmem:[#allocation17 + $0x3c] sm:$0xf]
    %v505 = vld [vmem:[#allocation17 + $0x40] sm:$0xf]
    %v506 = vld [vmem:[#allocation17 + $0x44] sm:$0xf]
    %v507 = vld [vmem:[#allocation17 + $0x48] sm:$0xf]
    %v508 = vld [vmem:[#allocation17 + $0x4c] sm:$0xf]
    %v509 = vld [vmem:[#allocation17 + $0x50] sm:$0xf]
    %v510 = vld [vmem:[#allocation17 + $0x54] sm:$0xf]
    %v511 = vld [vmem:[#allocation17 + $0x58] sm:$0xf]
    %v512 = vld [vmem:[#allocation17 + $0x5c] sm:$0xf]
    %v513 = vld [vmem:[#allocation17 + $0x60] sm:$0xf]
    %v514 = vld [vmem:[#allocation17 + $0x64] sm:$0xf]
    %v515 = vld [vmem:[#allocation17 + $0x68] sm:$0xf]
    %v516 = vld [vmem:[#allocation17 + $0x6c] sm:$0xf]
    %v517 = vld [vmem:[#allocation17 + $0x70] sm:$0xf]
    %v518 = vld [vmem:[#allocation17 + $0x74] sm:$0xf]
    %v519 = vld [vmem:[#allocation17 + $0x78] sm:$0xf]
    %v520 = vld [vmem:[#allocation17 + $0x7c] sm:$0xf]
    %v521 = vld [vmem:[#allocation17 + $0x80] sm:$0xf]
    %v522 = vld [vmem:[#allocation17 + $0x84] sm:$0xf]
    %v523 = vld [vmem:[#allocation17 + $0x88] sm:$0xf]
    %v524 = vld [vmem:[#allocation17 + $0x8c] sm:$0xf]
    %v525 = vld [vmem:[#allocation17 + $0x90] sm:$0xf]
    %v526 = vld [vmem:[#allocation17 + $0x94] sm:$0xf]
    %v527 = vld [vmem:[#allocation17 + $0x98] sm:$0xf]
    %v528 = vld [vmem:[#allocation17 + $0x9c] sm:$0xf]
    %v529 = vld [vmem:[#allocation17 + $0xa0] sm:$0xf]
    %v530 = vld [vmem:[#allocation17 + $0xa4] sm:$0xf]
    %v531 = vld [vmem:[#allocation17 + $0xa8] sm:$0xf]
    %v532 = vld [vmem:[#allocation17 + $0xac] sm:$0xf]
    %v533 = vld [vmem:[#allocation17 + $0xb0] sm:$0xf]
    %v534 = vld [vmem:[#allocation17 + $0xb4] sm:$0xf]
    %v535 = vld [vmem:[#allocation17 + $0xb8] sm:$0xf]
    %v536 = vld [vmem:[#allocation17 + $0xbc] sm:$0xf]
    %v537 = vld [vmem:[#allocation17 + $0xc0] sm:$0xf]
    %v538 = vld [vmem:[#allocation17 + $0xc4] sm:$0xf]
    %v539 = vld [vmem:[#allocation17 + $0xc8] sm:$0xf]
    %v540 = vld [vmem:[#allocation17 + $0xcc] sm:$0xf]
    %v541 = vld [vmem:[#allocation17 + $0xd0] sm:$0xf]
    %v542 = vld [vmem:[#allocation17 + $0xd4] sm:$0xf]
    %v543 = vld [vmem:[#allocation17 + $0xd8] sm:$0xf]
    %v544 = vld [vmem:[#allocation17 + $0xdc] sm:$0xf]
    %v545 = vld [vmem:[#allocation17 + $0xe0] sm:$0xf]
    %v546 = vld [vmem:[#allocation17 + $0xe4] sm:$0xf]
    %v547 = vld [vmem:[#allocation17 + $0xe8] sm:$0xf]
    %v548 = vld [vmem:[#allocation17 + $0xec] sm:$0xf]
    %v549 = vld [vmem:[#allocation17 + $0xf0] sm:$0xf]
    %v550 = vld [vmem:[#allocation17 + $0xf4] sm:$0xf]
    %v551 = vld [vmem:[#allocation17 + $0xf8] sm:$0xf]
    %v552 = vld [vmem:[#allocation17 + $0xfc] sm:$0xf]
    %v553 = vpack.c.bf16 %v408, %v408
    %v554 = vld [vmem:[%s8] sm:$0x7]
    %v556 = vlaneseq
    %v557 = vshrl.u32 %v556, 7
    %v558 = vsub.s32 0, %v557
    %v559 = vrot.slane %v554, %v558
    %v560 = vlaneseq
    %v561 = vshrl.u32 %v560, 7
    %v562 = vsub.s32 1, %v561
    %v563 = vrot.slane %v554, %v562
    %v564 = vlaneseq
    %v565 = vshrl.u32 %v564, 7
    %v566 = vsub.s32 2, %v565
    %v567 = vrot.slane %v554, %v566
    %v603 = vunpack.c.l.b16 %v409
    %v604 = vunpack.c.h.b16 %v409
    %v605 = vunpack.c.l.b16 %v410
    %v606 = vunpack.c.l.b16 %v411
    %v607 = vunpack.c.h.b16 %v411
    %v608 = vunpack.c.l.b16 %v412
    %v609 = vunpack.c.l.b16 %v413
    %v610 = vunpack.c.h.b16 %v413
    %v611 = vunpack.c.l.b16 %v414
    %v612 = vunpack.c.l.b16 %v415
    %v613 = vunpack.c.h.b16 %v415
    %v614 = vunpack.c.l.b16 %v416
    %v615 = vunpack.c.l.b16 %v417
    %v616 = vunpack.c.h.b16 %v417
    %v617 = vunpack.c.l.b16 %v418
    %v618 = vunpack.c.l.b16 %v419
    %v619 = vunpack.c.h.b16 %v419
    %v620 = vunpack.c.l.b16 %v420
    %v621 = vunpack.c.l.b16 %v421
    %v622 = vunpack.c.h.b16 %v421
    %v623 = vunpack.c.l.b16 %v422
    %v624 = vunpack.c.l.b16 %v423
    %v625 = vunpack.c.h.b16 %v423
    %v626 = vunpack.c.l.b16 %v424
    %v627 = vunpack.c.l.b16 %v425
    %v628 = vunpack.c.h.b16 %v425
    %v629 = vunpack.c.l.b16 %v426
    %v630 = vunpack.c.l.b16 %v427
    %v631 = vunpack.c.h.b16 %v427
    %v632 = vunpack.c.l.b16 %v428
    %v633 = vunpack.c.l.b16 %v429
    %v634 = vunpack.c.h.b16 %v429
    %v635 = vunpack.c.l.b16 %v430
    %v636 = vunpack.c.l.b16 %v431
    %v637 = vunpack.c.h.b16 %v431
    %v638 = vunpack.c.l.b16 %v432
    %v639 = vunpack.c.l.b16 %v433
    %v640 = vunpack.c.h.b16 %v433
    %v641 = vunpack.c.l.b16 %v434
    %v642 = vunpack.c.l.b16 %v435
    %v643 = vunpack.c.h.b16 %v435
    %v644 = vunpack.c.l.b16 %v436
    %v645 = vunpack.c.l.b16 %v437
    %v646 = vunpack.c.h.b16 %v437
    %v647 = vunpack.c.l.b16 %v438
    %v648 = vunpack.c.l.b16 %v439
    %v649 = vunpack.c.h.b16 %v439
    %v650 = vunpack.c.l.b16 %v440
    %v651 = vpack.c.b16 %v606, %v603
    %v652 = vpack.c.b16 %v607, %v604
    %v653 = vpack.c.b16 %v608, %v605
    %v654 = vpack.c.b16 %v612, %v609
    %v655 = vpack.c.b16 %v613, %v610
    %v656 = vpack.c.b16 %v614, %v611
    %v657 = vpack.c.b16 %v618, %v615
    %v658 = vpack.c.b16 %v619, %v616
    %v659 = vpack.c.b16 %v620, %v617
    %v660 = vpack.c.b16 %v624, %v621
    %v661 = vpack.c.b16 %v625, %v622
    %v662 = vpack.c.b16 %v626, %v623
    %v663 = vpack.c.b16 %v630, %v627
    %v664 = vpack.c.b16 %v631, %v628
    %v665 = vpack.c.b16 %v632, %v629
    %v666 = vpack.c.b16 %v636, %v633
    %v667 = vpack.c.b16 %v637, %v634
    %v668 = vpack.c.b16 %v638, %v635
    %v669 = vpack.c.b16 %v642, %v639
    %v670 = vpack.c.b16 %v643, %v640
    %v671 = vpack.c.b16 %v644, %v641
    %v672 = vpack.c.b16 %v648, %v645
    %v673 = vpack.c.b16 %v649, %v646
    %v674 = vpack.c.b16 %v650, %v647
    %699 = vmatprep.subr.bf16.mxu0 %v652
    %700 = vmatpush1.bf16.msra.mxu0 %v651
    %701 = vmatprep.subr.bf16.mxu0 %v655
    %702 = vmatpush1.bf16.msra.mxu0 %v654
    %703 = vmatprep.subr.bf16.mxu0 %v658
    %704 = vmatpush1.bf16.msra.mxu0 %v657
    %705 = vmatprep.subr.bf16.mxu0 %v661
    %706 = vmatpush1.bf16.msra.mxu0 %v660
    %707 = vmatprep.subr.bf16.mxu0 %v664
    %708 = vmatpush1.bf16.msra.mxu0 %v663
    %709 = vmatprep.subr.bf16.mxu0 %v667
    %710 = vmatpush1.bf16.msra.mxu0 %v666
    %711 = vmatprep.subr.bf16.mxu0 %v670
    %712 = vmatpush1.bf16.msra.mxu0 %v669
    %713 = vmatprep.subr.bf16.mxu0 %v673
    %714 = vmatpush1.bf16.msra.mxu0 %v672
    %715 = vmatprep.subr.bf16.mxu0 0
    %716 = vmatpush1.bf16.msra.mxu0 0
    %717 = vmatprep.subr.bf16.mxu0 0
    %718 = vmatpush1.bf16.msra.mxu0 0
    %719 = vmatprep.subr.bf16.mxu0 0
    %720 = vmatpush1.bf16.msra.mxu0 0
    %721 = vmatprep.subr.bf16.mxu0 0
    %722 = vmatpush1.bf16.msra.mxu0 0
    %723 = vmatprep.subr.bf16.mxu0 0
    %724 = vmatpush1.bf16.msra.mxu0 0
    %725 = vmatprep.subr.bf16.mxu0 0
    %726 = vmatpush1.bf16.msra.mxu0 0
    %727 = vmatprep.subr.bf16.mxu0 0
    %728 = vmatpush1.bf16.msra.mxu0 0
    %729 = vmatprep.subr.bf16.mxu0 0
    %730 = vmatpush1.bf16.msra.mxu0 0
    %731 = vmatprep.mubr.bf16.mxu0 0
    %732 = vmatmul.mubr.bf16.gmra.mrb[0].mxu0 %v553
    %v733 = vpop.f32.mrb[0].mxu0
    %v734 = vadd.f32 %v559, %v733
    %v735 = vpop.f32.mrb[0].mxu0
    %v736 = vadd.f32 %v563, %v735
    %v737 = vpop.f32.mrb[0].mxu0
    %v738 = vpop.f32.mrb[0].mxu0
    %739 = vdwg.mxu0
    %740 = vmatprep.subr.bf16.mxu0 0
    %741 = vmatpush1.bf16.msra.mxu0 %v653
    %742 = vmatprep.subr.bf16.mxu0 0
    %743 = vmatpush1.bf16.msra.mxu0 %v656
    %744 = vmatprep.subr.bf16.mxu0 0
    %745 = vmatpush1.bf16.msra.mxu0 %v659
    %746 = vmatprep.subr.bf16.mxu0 0
    %747 = vmatpush1.bf16.msra.mxu0 %v662
    %748 = vmatprep.subr.bf16.mxu0 0
    %749 = vmatpush1.bf16.msra.mxu0 %v665
    %750 = vmatprep.subr.bf16.mxu0 0
    %751 = vmatpush1.bf16.msra.mxu0 %v668
    %752 = vmatprep.subr.bf16.mxu0 0
    %753 = vmatpush1.bf16.msra.mxu0 %v671
    %754 = vmatprep.subr.bf16.mxu0 0
    %755 = vmatpush1.bf16.msra.mxu0 %v674
    %756 = vmatprep.subr.bf16.mxu0 0
    %757 = vmatpush1.bf16.msra.mxu0 0
    %758 = vmatprep.subr.bf16.mxu0 0
    %759 = vmatpush1.bf16.msra.mxu0 0
    %760 = vmatprep.subr.bf16.mxu0 0
    %761 = vmatpush1.bf16.msra.mxu0 0
    %762 = vmatprep.subr.bf16.mxu0 0
    %763 = vmatpush1.bf16.msra.mxu0 0
    %764 = vmatprep.subr.bf16.mxu0 0
    %765 = vmatpush1.bf16.msra.mxu0 0
    %766 = vmatprep.subr.bf16.mxu0 0
    %767 = vmatpush1.bf16.msra.mxu0 0
    %768 = vmatprep.subr.bf16.mxu0 0
    %769 = vmatpush1.bf16.msra.mxu0 0
    %770 = vmatprep.subr.bf16.mxu0 0
    %771 = vmatpush1.bf16.msra.mxu0 0
    %772 = vmatprep.mubr.bf16.mxu0 0
    %773 = vmatmul.mubr.bf16.gmra.mrb[0].mxu0 %v553
    %v774 = vpop.f32.mrb[0].mxu0
    %v775 = vadd.f32 %v567, %v774
    %v776 = vpop.f32.mrb[0].mxu0
    %v777 = vpop.f32.mrb[0].mxu0
    %v778 = vpop.f32.mrb[0].mxu0
    %779 = vdwg.mxu0
    %v780 = vmul.f32 %v734, 0.17677669
    %v781 = vpack.c.bf16 %v780, %v780
    %v782 = vpack.c.bf16 %v736, %v736
    %v783 = vpack.c.bf16 %v775, %v775
    %v785 = vsel %vm279, %v781, 0
    %v788 = vsel %vm279, %v782, 0
    %790 = vmatprep.subr.bf16.mxu0 0
    %791 = vmatpush1.bf16.xpose.msra.mxu0 %v788
    %792 = vmatprep.subr.bf16.mxu0 0
    %793 = vmatpush1.bf16.xpose.msra.mxu0 0
    %794 = vmatprep.subr.bf16.mxu0 0
    %795 = vmatpush1.bf16.xpose.msra.mxu0 0
    %796 = vmatprep.subr.bf16.mxu0 0
    %797 = vmatpush1.bf16.xpose.msra.mxu0 0
    %798 = vmatprep.subr.bf16.mxu0 0
    %799 = vmatpush1.bf16.xpose.msra.mxu0 0
    %800 = vmatprep.subr.bf16.mxu0 0
    %801 = vmatpush1.bf16.xpose.msra.mxu0 0
    %802 = vmatprep.subr.bf16.mxu0 0
    %803 = vmatpush1.bf16.xpose.msra.mxu0 0
    %804 = vmatprep.subr.bf16.mxu0 0
    %805 = vmatpush1.bf16.xpose.msra.mxu0 0
    %806 = vmatprep.subr.bf16.mxu0 0
    %807 = vmatpush1.bf16.xpose.msra.mxu0 0
    %808 = vmatprep.subr.bf16.mxu0 0
    %809 = vmatpush1.bf16.xpose.msra.mxu0 0
    %810 = vmatprep.subr.bf16.mxu0 0
    %811 = vmatpush1.bf16.xpose.msra.mxu0 0
    %812 = vmatprep.subr.bf16.mxu0 0
    %813 = vmatpush1.bf16.xpose.msra.mxu0 0
    %814 = vmatprep.subr.bf16.mxu0 0
    %815 = vmatpush1.bf16.xpose.msra.mxu0 0
    %816 = vmatprep.subr.bf16.mxu0 0
    %817 = vmatpush1.bf16.xpose.msra.mxu0 0
    %818 = vmatprep.subr.bf16.mxu0 0
    %819 = vmatpush1.bf16.xpose.msra.mxu0 0
    %820 = vmatprep.subr.bf16.mxu0 0
    %821 = vmatpush1.bf16.xpose.msra.mxu0 0
    %822 = vmatprep.mubr.bf16.mxu0 0
    %823 = vmatmul.mubr.bf16.gmra.mrb[0].mxu0 %v785
    %v824 = vpop.f32.mrb[0].mxu0
    %v825 = vadd.f32 0.0, %v824
    %v826 = vpop.f32.mrb[0].mxu0
    %v827 = vpop.f32.mrb[0].mxu0
    %v828 = vpop.f32.mrb[0].mxu0
    %829 = vdwg.mxu0
    %vm830 = vcmask 9216
    %v831 = vsel %vm830, %v825, -inf
    %832 = vmax.xlane.f32.xlu0 %v831
    %v833 = vpop.xlane.xlu0 %832
    %v834 = vsub.f32 %v825, %v833
    %v835 = vmul.f32 %v834, 1.442695
    %v836 = vpow.pop %v835
    %v837 = vsel %vm830, %v836, 0.0
    %838 = vadd.xlane.f32.xlu0 %v837
    %v839 = vpop.xlane.xlu0 %838
    %v840 = vrcp.pop %v839
    %v841 = vmul.f32 %v836, %v840
    %v842 = vpack.c.bf16 %v841, %v841
    %vm843 = vcmask 15360
    %v845 = vsel %vm843, %v842, 0
    %v848 = vsel %vm207, %v783, 0
    %850 = vmatprep.subr.bf16.mxu0 0
    %851 = vmatpush1.bf16.msra.mxu0 %v848
    %852 = vmatprep.subr.bf16.mxu0 0
    %853 = vmatpush1.bf16.msra.mxu0 0
    %854 = vmatprep.subr.bf16.mxu0 0
    %855 = vmatpush1.bf16.msra.mxu0 0
    %856 = vmatprep.subr.bf16.mxu0 0
    %857 = vmatpush1.bf16.msra.mxu0 0
    %858 = vmatprep.subr.bf16.mxu0 0
    %859 = vmatpush1.bf16.msra.mxu0 0
    %860 = vmatprep.subr.bf16.mxu0 0
    %861 = vmatpush1.bf16.msra.mxu0 0
    %862 = vmatprep.subr.bf16.mxu0 0
    %863 = vmatpush1.bf16.msra.mxu0 0
    %864 = vmatprep.subr.bf16.mxu0 0
    %865 = vmatpush1.bf16.msra.mxu0 0
    %866 = vmatprep.subr.bf16.mxu0 0
    %867 = vmatpush1.bf16.msra.mxu0 0
    %868 = vmatprep.subr.bf16.mxu0 0
    %869 = vmatpush1.bf16.msra.mxu0 0
    %870 = vmatprep.subr.bf16.mxu0 0
    %871 = vmatpush1.bf16.msra.mxu0 0
    %872 = vmatprep.subr.bf16.mxu0 0
    %873 = vmatpush1.bf16.msra.mxu0 0
    %874 = vmatprep.subr.bf16.mxu0 0
    %875 = vmatpush1.bf16.msra.mxu0 0
    %876 = vmatprep.subr.bf16.mxu0 0
    %877 = vmatpush1.bf16.msra.mxu0 0
    %878 = vmatprep.subr.bf16.mxu0 0
    %879 = vmatpush1.bf16.msra.mxu0 0
    %880 = vmatprep.subr.bf16.mxu0 0
    %881 = vmatpush1.bf16.msra.mxu0 0
    %882 = vmatprep.mubr.bf16.mxu0 0
    %883 = vmatmul.mubr.bf16.gmra.mrb[0].mxu0 %v845
    %v884 = vpop.f32.mrb[0].mxu0
    %v885 = vadd.f32 0.0, %v884
    %v886 = vpop.f32.mrb[0].mxu0
    %v887 = vpop.f32.mrb[0].mxu0
    %v888 = vpop.f32.mrb[0].mxu0
    %889 = vdwg.mxu0
    %v890 = vpack.c.bf16 %v885, %v885
    %892 = vrot.lane.b32.xlu0 %v781, 96
    %v893 = vpop.permute.xlu0 %892
    %895 = vrot.lane.b32.xlu0 %v782, 96
    %v896 = vpop.permute.xlu0 %895
    %v898 = vsel %vm279, %v893, 0
    %v901 = vsel %vm279, %v896, 0
    %903 = vmatprep.subr.bf16.mxu0 0
    %904 = vmatpush1.bf16.xpose.msra.mxu0 %v901
    %905 = vmatprep.subr.bf16.mxu0 0
    %906 = vmatpush1.bf16.xpose.msra.mxu0 0
    %907 = vmatprep.subr.bf16.mxu0 0
    %908 = vmatpush1.bf16.xpose.msra.mxu0 0
    %909 = vmatprep.subr.bf16.mxu0 0
    %910 = vmatpush1.bf16.xpose.msra.mxu0 0
    %911 = vmatprep.subr.bf16.mxu0 0
    %912 = vmatpush1.bf16.xpose.msra.mxu0 0
    %913 = vmatprep.subr.bf16.mxu0 0
    %914 = vmatpush1.bf16.xpose.msra.mxu0 0
    %915 = vmatprep.subr.bf16.mxu0 0
    %916 = vmatpush1.bf16.xpose.msra.mxu0 0
    %917 = vmatprep.subr.bf16.mxu0 0
    %918 = vmatpush1.bf16.xpose.msra.mxu0 0
    %919 = vmatprep.subr.bf16.mxu0 0
    %920 = vmatpush1.bf16.xpose.msra.mxu0 0
    %921 = vmatprep.subr.bf16.mxu0 0
    %922 = vmatpush1.bf16.xpose.msra.mxu0 0
    %923 = vmatprep.subr.bf16.mxu0 0
    %924 = vmatpush1.bf16.xpose.msra.mxu0 0
    %925 = vmatprep.subr.bf16.mxu0 0
    %926 = vmatpush1.bf16.xpose.msra.mxu0 0
    %927 = vmatprep.subr.bf16.mxu0 0
    %928 = vmatpush1.bf16.xpose.msra.mxu0 0
    %929 = vmatprep.subr.bf16.mxu0 0
    %930 = vmatpush1.bf16.xpose.msra.mxu0 0
    %931 = vmatprep.subr.bf16.mxu0 0
    %932 = vmatpush1.bf16.xpose.msra.mxu0 0
    %933 = vmatprep.subr.bf16.mxu0 0
    %934 = vmatpush1.bf16.xpose.msra.mxu0 0
    %935 = vmatprep.mubr.bf16.mxu0 0
    %936 = vmatmul.mubr.bf16.gmra.mrb[0].mxu0 %v898
    %v937 = vpop.f32.mrb[0].mxu0
    %v938 = vadd.f32 0.0, %v937
    %v939 = vpop.f32.mrb[0].mxu0
    %v940 = vpop.f32.mrb[0].mxu0
    %v941 = vpop.f32.mrb[0].mxu0
    %942 = vdwg.mxu0
    %v943 = vsel %vm830, %v938, -inf
    %944 = vmax.xlane.f32.xlu0 %v943
    %v945 = vpop.xlane.xlu0 %944
    %v946 = vsub.f32 %v938, %v945
    %v947 = vmul.f32 %v946, 1.442695
    %v948 = vpow.pop %v947
    %v949 = vsel %vm830, %v948, 0.0
    %950 = vadd.xlane.f32.xlu0 %v949
    %v951 = vpop.xlane.xlu0 %950
    %v952 = vrcp.pop %v951
    %v953 = vmul.f32 %v948, %v952
    %v954 = vpack.c.bf16 %v953, %v953
    %956 = vrot.lane.b32.xlu0 %v783, 96
    %v957 = vpop.permute.xlu0 %956
    %v959 = vsel %vm843, %v954, 0
    %v962 = vsel %vm207, %v957, 0
    %964 = vmatprep.subr.bf16.mxu0 0
    %965 = vmatpush1.bf16.msra.mxu0 %v962
    %966 = vmatprep.subr.bf16.mxu0 0
    %967 = vmatpush1.bf16.msra.mxu0 0
    %968 = vmatprep.subr.bf16.mxu0 0
    %969 = vmatpush1.bf16.msra.mxu0 0
    %970 = vmatprep.subr.bf16.mxu0 0
    %971 = vmatpush1.bf16.msra.mxu0 0
    %972 = vmatprep.subr.bf16.mxu0 0
    %973 = vmatpush1.bf16.msra.mxu0 0
    %974 = vmatprep.subr.bf16.mxu0 0
    %975 = vmatpush1.bf16.msra.mxu0 0
    %976 = vmatprep.subr.bf16.mxu0 0
    %977 = vmatpush1.bf16.msra.mxu0 0
    %978 = vmatprep.subr.bf16.mxu0 0
    %979 = vmatpush1.bf16.msra.mxu0 0
    %980 = vmatprep.subr.bf16.mxu0 0
    %981 = vmatpush1.bf16.msra.mxu0 0
    %982 = vmatprep.subr.bf16.mxu0 0
    %983 = vmatpush1.bf16.msra.mxu0 0
    %984 = vmatprep.subr.bf16.mxu0 0
    %985 = vmatpush1.bf16.msra.mxu0 0
    %986 = vmatprep.subr.bf16.mxu0 0
    %987 = vmatpush1.bf16.msra.mxu0 0
    %988 = vmatprep.subr.bf16.mxu0 0
    %989 = vmatpush1.bf16.msra.mxu0 0
    %990 = vmatprep.subr.bf16.mxu0 0
    %991 = vmatpush1.bf16.msra.mxu0 0
    %992 = vmatprep.subr.bf16.mxu0 0
    %993 = vmatpush1.bf16.msra.mxu0 0
    %994 = vmatprep.subr.bf16.mxu0 0
    %995 = vmatpush1.bf16.msra.mxu0 0
    %996 = vmatprep.mubr.bf16.mxu0 0
    %997 = vmatmul.mubr.bf16.gmra.mrb[0].mxu0 %v959
    %v998 = vpop.f32.mrb[0].mxu0
    %v999 = vadd.f32 0.0, %v998
    %v1000 = vpop.f32.mrb[0].mxu0
    %v1001 = vpop.f32.mrb[0].mxu0
    %v1002 = vpop.f32.mrb[0].mxu0
    %1003 = vdwg.mxu0
    %v1004 = vpack.c.bf16 %v999, %v999
    %v1009 = vunpack.c.l.b16 %v445
    %v1010 = vunpack.c.l.b16 %v446
    %v1011 = vunpack.c.l.b16 %v447
    %v1012 = vunpack.c.l.b16 %v448
    %v1013 = vpack.c.b16 %v1010, %v1009
    %v1014 = vpack.c.b16 %v1012, %v1011
    %v1018 = vsel %vm279, %v1004, 0
    %1020 = vmatprep.subr.bf16.mxu0 0
    %1021 = vmatpush1.bf16.msra.mxu0 %v1013
    %1022 = vmatprep.subr.bf16.mxu0 0
    %1023 = vmatpush1.bf16.msra.mxu0 %v1014
    %1024 = vmatprep.subr.bf16.mxu0 0
    %1025 = vmatpush1.bf16.msra.mxu0 0
    %1026 = vmatprep.subr.bf16.mxu0 0
    %1027 = vmatpush1.bf16.msra.mxu0 0
    %1028 = vmatprep.subr.bf16.mxu0 0
    %1029 = vmatpush1.bf16.msra.mxu0 0
    %1030 = vmatprep.subr.bf16.mxu0 0
    %1031 = vmatpush1.bf16.msra.mxu0 0
    %1032 = vmatprep.subr.bf16.mxu0 0
    %1033 = vmatpush1.bf16.msra.mxu0 0
    %1034 = vmatprep.subr.bf16.mxu0 0
    %1035 = vmatpush1.bf16.msra.mxu0 0
    %1036 = vmatprep.subr.bf16.mxu0 0
    %1037 = vmatpush1.bf16.msra.mxu0 0
    %1038 = vmatprep.subr.bf16.mxu0 0
    %1039 = vmatpush1.bf16.msra.mxu0 0
    %1040 = vmatprep.subr.bf16.mxu0 0
    %1041 = vmatpush1.bf16.msra.mxu0 0
    %1042 = vmatprep.subr.bf16.mxu0 0
    %1043 = vmatpush1.bf16.msra.mxu0 0
    %1044 = vmatprep.subr.bf16.mxu0 0
    %1045 = vmatpush1.bf16.msra.mxu0 0
    %1046 = vmatprep.subr.bf16.mxu0 0
    %1047 = vmatpush1.bf16.msra.mxu0 0
    %1048 = vmatprep.subr.bf16.mxu0 0
    %1049 = vmatpush1.bf16.msra.mxu0 0
    %1050 = vmatprep.subr.bf16.mxu0 0
    %1051 = vmatpush1.bf16.msra.mxu0 0
    %1052 = vmatprep.mubr.bf16.mxu0 0
    %1053 = vmatmul.mubr.bf16.gmra.mrb[0].mxu0 %v1018
    %v1054 = vpop.f32.mrb[0].mxu0
    %v1055 = vadd.f32 0.0, %v1054
    %v1056 = vpop.f32.mrb[0].mxu0
    %v1057 = vpop.f32.mrb[0].mxu0
    %v1058 = vpop.f32.mrb[0].mxu0
    %1059 = vdwg.mxu0
    %v1064 = vunpack.c.l.b16 %v441
    %v1065 = vunpack.c.l.b16 %v442
    %v1066 = vunpack.c.l.b16 %v443
    %v1067 = vunpack.c.l.b16 %v444
    %v1068 = vpack.c.b16 %v1065, %v1064
    %v1069 = vpack.c.b16 %v1067, %v1066
    %v1073 = vsel %vm279, %v890, 0
    %1075 = vmatprep.subr.bf16.mxu0 0
    %1076 = vmatpush1.bf16.msra.mxu0 %v1068
    %1077 = vmatprep.subr.bf16.mxu0 0
    %1078 = vmatpush1.bf16.msra.mxu0 %v1069
    %1079 = vmatprep.subr.bf16.mxu0 0
    %1080 = vmatpush1.bf16.msra.mxu0 0
    %1081 = vmatprep.subr.bf16.mxu0 0
    %1082 = vmatpush1.bf16.msra.mxu0 0
    %1083 = vmatprep.subr.bf16.mxu0 0
    %1084 = vmatpush1.bf16.msra.mxu0 0
    %1085 = vmatprep.subr.bf16.mxu0 0
    %1086 = vmatpush1.bf16.msra.mxu0 0
    %1087 = vmatprep.subr.bf16.mxu0 0
    %1088 = vmatpush1.bf16.msra.mxu0 0
    %1089 = vmatprep.subr.bf16.mxu0 0
    %1090 = vmatpush1.bf16.msra.mxu0 0
    %1091 = vmatprep.subr.bf16.mxu0 0
    %1092 = vmatpush1.bf16.msra.mxu0 0
    %1093 = vmatprep.subr.bf16.mxu0 0
    %1094 = vmatpush1.bf16.msra.mxu0 0
    %1095 = vmatprep.subr.bf16.mxu0 0
    %1096 = vmatpush1.bf16.msra.mxu0 0
    %1097 = vmatprep.subr.bf16.mxu0 0
    %1098 = vmatpush1.bf16.msra.mxu0 0
    %1099 = vmatprep.subr.bf16.mxu0 0
    %1100 = vmatpush1.bf16.msra.mxu0 0
    %1101 = vmatprep.subr.bf16.mxu0 0
    %1102 = vmatpush1.bf16.msra.mxu0 0
    %1103 = vmatprep.subr.bf16.mxu0 0
    %1104 = vmatpush1.bf16.msra.mxu0 0
    %1105 = vmatprep.subr.bf16.mxu0 0
    %1106 = vmatpush1.bf16.msra.mxu0 0
    %1107 = vmatprep.mubr.bf16.mxu0 0
    %1108 = vmatmul.mubr.bf16.gmra.mrb[0].mxu0 %v1073
    %v1109 = vpop.f32.mrb[0].mxu0
    %v1110 = vadd.f32 %v1055, %v1109
    %v1111 = vpop.f32.mrb[0].mxu0
    %v1112 = vpop.f32.mrb[0].mxu0
    %v1113 = vpop.f32.mrb[0].mxu0
    %1114 = vdwg.mxu0
    %1115 = vrot.lane.b32.xlu0 %v781, 64
    %v1116 = vpop.permute.xlu0 %1115
    %1117 = vrot.lane.b32.xlu0 %v782, 64
    %v1118 = vpop.permute.xlu0 %1117
    %v1120 = vsel %vm279, %v1116, 0
    %v1123 = vsel %vm279, %v1118, 0
    %1125 = vmatprep.subr.bf16.mxu0 0
    %1126 = vmatpush1.bf16.xpose.msra.mxu0 %v1123
    %1127 = vmatprep.subr.bf16.mxu0 0
    %1128 = vmatpush1.bf16.xpose.msra.mxu0 0
    %1129 = vmatprep.subr.bf16.mxu0 0
    %1130 = vmatpush1.bf16.xpose.msra.mxu0 0
    %1131 = vmatprep.subr.bf16.mxu0 0
    %1132 = vmatpush1.bf16.xpose.msra.mxu0 0
    %1133 = vmatprep.subr.bf16.mxu0 0
    %1134 = vmatpush1.bf16.xpose.msra.mxu0 0
    %1135 = vmatprep.subr.bf16.mxu0 0
    %1136 = vmatpush1.bf16.xpose.msra.mxu0 0
    %1137 = vmatprep.subr.bf16.mxu0 0
    %1138 = vmatpush1.bf16.xpose.msra.mxu0 0
    %1139 = vmatprep.subr.bf16.mxu0 0
    %1140 = vmatpush1.bf16.xpose.msra.mxu0 0
    %1141 = vmatprep.subr.bf16.mxu0 0
    %1142 = vmatpush1.bf16.xpose.msra.mxu0 0
    %1143 = vmatprep.subr.bf16.mxu0 0
    %1144 = vmatpush1.bf16.xpose.msra.mxu0 0
    %1145 = vmatprep.subr.bf16.mxu0 0
    %1146 = vmatpush1.bf16.xpose.msra.mxu0 0
    %1147 = vmatprep.subr.bf16.mxu0 0
    %1148 = vmatpush1.bf16.xpose.msra.mxu0 0
    %1149 = vmatprep.subr.bf16.mxu0 0
    %1150 = vmatpush1.bf16.xpose.msra.mxu0 0
    %1151 = vmatprep.subr.bf16.mxu0 0
    %1152 = vmatpush1.bf16.xpose.msra.mxu0 0
    %1153 = vmatprep.subr.bf16.mxu0 0
    %1154 = vmatpush1.bf16.xpose.msra.mxu0 0
    %1155 = vmatprep.subr.bf16.mxu0 0
    %1156 = vmatpush1.bf16.xpose.msra.mxu0 0
    %1157 = vmatprep.mubr.bf16.mxu0 0
    %1158 = vmatmul.mubr.bf16.gmra.mrb[0].mxu0 %v1120
    %v1159 = vpop.f32.mrb[0].mxu0
    %v1160 = vadd.f32 0.0, %v1159
    %v1161 = vpop.f32.mrb[0].mxu0
    %v1162 = vpop.f32.mrb[0].mxu0
    %v1163 = vpop.f32.mrb[0].mxu0
    %1164 = vdwg.mxu0
    %v1165 = vsel %vm830, %v1160, -inf
    %1166 = vmax.xlane.f32.xlu0 %v1165
    %v1167 = vpop.xlane.xlu0 %1166
    %v1168 = vsub.f32 %v1160, %v1167
    %v1169 = vmul.f32 %v1168, 1.442695
    %v1170 = vpow.pop %v1169
    %v1171 = vsel %vm830, %v1170, 0.0
    %1172 = vadd.xlane.f32.xlu0 %v1171
    %v1173 = vpop.xlane.xlu0 %1172
    %v1174 = vrcp.pop %v1173
    %v1175 = vmul.f32 %v1170, %v1174
    %v1176 = vpack.c.bf16 %v1175, %v1175
    %1177 = vrot.lane.b32.xlu0 %v783, 64
    %v1178 = vpop.permute.xlu0 %1177
    %v1180 = vsel %vm843, %v1176, 0
    %v1183 = vsel %vm207, %v1178, 0
    %1185 = vmatprep.subr.bf16.mxu0 0
    %1186 = vmatpush1.bf16.msra.mxu0 %v1183
    %1187 = vmatprep.subr.bf16.mxu0 0
    %1188 = vmatpush1.bf16.msra.mxu0 0
    %1189 = vmatprep.subr.bf16.mxu0 0
    %1190 = vmatpush1.bf16.msra.mxu0 0
    %1191 = vmatprep.subr.bf16.mxu0 0
    %1192 = vmatpush1.bf16.msra.mxu0 0
    %1193 = vmatprep.subr.bf16.mxu0 0
    %1194 = vmatpush1.bf16.msra.mxu0 0
    %1195 = vmatprep.subr.bf16.mxu0 0
    %1196 = vmatpush1.bf16.msra.mxu0 0
    %1197 = vmatprep.subr.bf16.mxu0 0
    %1198 = vmatpush1.bf16.msra.mxu0 0
    %1199 = vmatprep.subr.bf16.mxu0 0
    %1200 = vmatpush1.bf16.msra.mxu0 0
    %1201 = vmatprep.subr.bf16.mxu0 0
    %1202 = vmatpush1.bf16.msra.mxu0 0
    %1203 = vmatprep.subr.bf16.mxu0 0
    %1204 = vmatpush1.bf16.msra.mxu0 0
    %1205 = vmatprep.subr.bf16.mxu0 0
    %1206 = vmatpush1.bf16.msra.mxu0 0
    %1207 = vmatprep.subr.bf16.mxu0 0
    %1208 = vmatpush1.bf16.msra.mxu0 0
    %1209 = vmatprep.subr.bf16.mxu0 0
    %1210 = vmatpush1.bf16.msra.mxu0 0
    %1211 = vmatprep.subr.bf16.mxu0 0
    %1212 = vmatpush1.bf16.msra.mxu0 0
    %1213 = vmatprep.subr.bf16.mxu0 0
    %1214 = vmatpush1.bf16.msra.mxu0 0
    %1215 = vmatprep.subr.bf16.mxu0 0
    %1216 = vmatpush1.bf16.msra.mxu0 0
    %1217 = vmatprep.mubr.bf16.mxu0 0
    %1218 = vmatmul.mubr.bf16.gmra.mrb[0].mxu0 %v1180
    %v1219 = vpop.f32.mrb[0].mxu0
    %v1220 = vadd.f32 0.0, %v1219
    %v1221 = vpop.f32.mrb[0].mxu0
    %v1222 = vpop.f32.mrb[0].mxu0
    %v1223 = vpop.f32.mrb[0].mxu0
    %1224 = vdwg.mxu0
    %v1225 = vpack.c.bf16 %v1220, %v1220
    %v1230 = vunpack.c.l.b16 %v449
    %v1231 = vunpack.c.l.b16 %v450
    %v1232 = vunpack.c.l.b16 %v451
    %v1233 = vunpack.c.l.b16 %v452
    %v1234 = vpack.c.b16 %v1231, %v1230
    %v1235 = vpack.c.b16 %v1233, %v1232
    %v1239 = vsel %vm279, %v1225, 0
    %1241 = vmatprep.subr.bf16.mxu0 0
    %1242 = vmatpush1.bf16.msra.mxu0 %v1234
    %1243 = vmatprep.subr.bf16.mxu0 0
    %1244 = vmatpush1.bf16.msra.mxu0 %v1235
    %1245 = vmatprep.subr.bf16.mxu0 0
    %1246 = vmatpush1.bf16.msra.mxu0 0
    %1247 = vmatprep.subr.bf16.mxu0 0
    %1248 = vmatpush1.bf16.msra.mxu0 0
    %1249 = vmatprep.subr.bf16.mxu0 0
    %1250 = vmatpush1.bf16.msra.mxu0 0
    %1251 = vmatprep.subr.bf16.mxu0 0
    %1252 = vmatpush1.bf16.msra.mxu0 0
    %1253 = vmatprep.subr.bf16.mxu0 0
    %1254 = vmatpush1.bf16.msra.mxu0 0
    %1255 = vmatprep.subr.bf16.mxu0 0
    %1256 = vmatpush1.bf16.msra.mxu0 0
    %1257 = vmatprep.subr.bf16.mxu0 0
    %1258 = vmatpush1.bf16.msra.mxu0 0
    %1259 = vmatprep.subr.bf16.mxu0 0
    %1260 = vmatpush1.bf16.msra.mxu0 0
    %1261 = vmatprep.subr.bf16.mxu0 0
    %1262 = vmatpush1.bf16.msra.mxu0 0
    %1263 = vmatprep.subr.bf16.mxu0 0
    %1264 = vmatpush1.bf16.msra.mxu0 0
    %1265 = vmatprep.subr.bf16.mxu0 0
    %1266 = vmatpush1.bf16.msra.mxu0 0
    %1267 = vmatprep.subr.bf16.mxu0 0
    %1268 = vmatpush1.bf16.msra.mxu0 0
    %1269 = vmatprep.subr.bf16.mxu0 0
    %1270 = vmatpush1.bf16.msra.mxu0 0
    %1271 = vmatprep.subr.bf16.mxu0 0
    %1272 = vmatpush1.bf16.msra.mxu0 0
    %1273 = vmatprep.mubr.bf16.mxu0 0
    %1274 = vmatmul.mubr.bf16.gmra.mrb[0].mxu0 %v1239
    %v1275 = vpop.f32.mrb[0].mxu0
    %v1276 = vadd.f32 0.0, %v1275
    %v1277 = vpop.f32.mrb[0].mxu0
    %v1278 = vpop.f32.mrb[0].mxu0
    %v1279 = vpop.f32.mrb[0].mxu0
    %1280 = vdwg.mxu0
    %v1281 = vadd.f32 %v1110, %v1276
    %1282 = vrot.lane.b32.xlu0 %v781, 32
    %v1283 = vpop.permute.xlu0 %1282
    %1284 = vrot.lane.b32.xlu0 %v782, 32
    %v1285 = vpop.permute.xlu0 %1284
    %v1287 = vsel %vm279, %v1283, 0
    %v1290 = vsel %vm279, %v1285, 0
    %1292 = vmatprep.subr.bf16.mxu0 0
    %1293 = vmatpush1.bf16.xpose.msra.mxu0 %v1290
    %1294 = vmatprep.subr.bf16.mxu0 0
    %1295 = vmatpush1.bf16.xpose.msra.mxu0 0
    %1296 = vmatprep.subr.bf16.mxu0 0
    %1297 = vmatpush1.bf16.xpose.msra.mxu0 0
    %1298 = vmatprep.subr.bf16.mxu0 0
    %1299 = vmatpush1.bf16.xpose.msra.mxu0 0
    %1300 = vmatprep.subr.bf16.mxu0 0
    %1301 = vmatpush1.bf16.xpose.msra.mxu0 0
    %1302 = vmatprep.subr.bf16.mxu0 0
    %1303 = vmatpush1.bf16.xpose.msra.mxu0 0
    %1304 = vmatprep.subr.bf16.mxu0 0
    %1305 = vmatpush1.bf16.xpose.msra.mxu0 0
    %1306 = vmatprep.subr.bf16.mxu0 0
    %1307 = vmatpush1.bf16.xpose.msra.mxu0 0
    %1308 = vmatprep.subr.bf16.mxu0 0
    %1309 = vmatpush1.bf16.xpose.msra.mxu0 0
    %1310 = vmatprep.subr.bf16.mxu0 0
    %1311 = vmatpush1.bf16.xpose.msra.mxu0 0
    %1312 = vmatprep.subr.bf16.mxu0 0
    %1313 = vmatpush1.bf16.xpose.msra.mxu0 0
    %1314 = vmatprep.subr.bf16.mxu0 0
    %1315 = vmatpush1.bf16.xpose.msra.mxu0 0
    %1316 = vmatprep.subr.bf16.mxu0 0
    %1317 = vmatpush1.bf16.xpose.msra.mxu0 0
    %1318 = vmatprep.subr.bf16.mxu0 0
    %1319 = vmatpush1.bf16.xpose.msra.mxu0 0
    %1320 = vmatprep.subr.bf16.mxu0 0
    %1321 = vmatpush1.bf16.xpose.msra.mxu0 0
    %1322 = vmatprep.subr.bf16.mxu0 0
    %1323 = vmatpush1.bf16.xpose.msra.mxu0 0
    %1324 = vmatprep.mubr.bf16.mxu0 0
    %1325 = vmatmul.mubr.bf16.gmra.mrb[0].mxu0 %v1287
    %v1326 = vpop.f32.mrb[0].mxu0
    %v1327 = vadd.f32 0.0, %v1326
    %v1328 = vpop.f32.mrb[0].mxu0
    %v1329 = vpop.f32.mrb[0].mxu0
    %v1330 = vpop.f32.mrb[0].mxu0
    %1331 = vdwg.mxu0
    %v1332 = vsel %vm830, %v1327, -inf
    %1333 = vmax.xlane.f32.xlu0 %v1332
    %v1334 = vpop.xlane.xlu0 %1333
    %v1335 = vsub.f32 %v1327, %v1334
    %v1336 = vmul.f32 %v1335, 1.442695
    %v1337 = vpow.pop %v1336
    %v1338 = vsel %vm830, %v1337, 0.0
    %1339 = vadd.xlane.f32.xlu0 %v1338
    %v1340 = vpop.xlane.xlu0 %1339
    %v1341 = vrcp.pop %v1340
    %v1342 = vmul.f32 %v1337, %v1341
    %v1343 = vpack.c.bf16 %v1342, %v1342
    %1344 = vrot.lane.b32.xlu0 %v783, 32
    %v1345 = vpop.permute.xlu0 %1344
    %v1347 = vsel %vm843, %v1343, 0
    %v1350 = vsel %vm207, %v1345, 0
    %1352 = vmatprep.subr.bf16.mxu0 0
    %1353 = vmatpush1.bf16.msra.mxu0 %v1350
    %1354 = vmatprep.subr.bf16.mxu0 0
    %1355 = vmatpush1.bf16.msra.mxu0 0
    %1356 = vmatprep.subr.bf16.mxu0 0
    %1357 = vmatpush1.bf16.msra.mxu0 0
    %1358 = vmatprep.subr.bf16.mxu0 0
    %1359 = vmatpush1.bf16.msra.mxu0 0
    %1360 = vmatprep.subr.bf16.mxu0 0
    %1361 = vmatpush1.bf16.msra.mxu0 0
    %1362 = vmatprep.subr.bf16.mxu0 0
    %1363 = vmatpush1.bf16.msra.mxu0 0
    %1364 = vmatprep.subr.bf16.mxu0 0
    %1365 = vmatpush1.bf16.msra.mxu0 0
    %1366 = vmatprep.subr.bf16.mxu0 0
    %1367 = vmatpush1.bf16.msra.mxu0 0
    %1368 = vmatprep.subr.bf16.mxu0 0
    %1369 = vmatpush1.bf16.msra.mxu0 0
    %1370 = vmatprep.subr.bf16.mxu0 0
    %1371 = vmatpush1.bf16.msra.mxu0 0
    %1372 = vmatprep.subr.bf16.mxu0 0
    %1373 = vmatpush1.bf16.msra.mxu0 0
    %1374 = vmatprep.subr.bf16.mxu0 0
    %1375 = vmatpush1.bf16.msra.mxu0 0
    %1376 = vmatprep.subr.bf16.mxu0 0
    %1377 = vmatpush1.bf16.msra.mxu0 0
    %1378 = vmatprep.subr.bf16.mxu0 0
    %1379 = vmatpush1.bf16.msra.mxu0 0
    %1380 = vmatprep.subr.bf16.mxu0 0
    %1381 = vmatpush1.bf16.msra.mxu0 0
    %1382 = vmatprep.subr.bf16.mxu0 0
    %1383 = vmatpush1.bf16.msra.mxu0 0
    %1384 = vmatprep.mubr.bf16.mxu0 0
    %1385 = vmatmul.mubr.bf16.gmra.mrb[0].mxu0 %v1347
    %v1386 = vpop.f32.mrb[0].mxu0
    %v1387 = vadd.f32 0.0, %v1386
    %v1388 = vpop.f32.mrb[0].mxu0
    %v1389 = vpop.f32.mrb[0].mxu0
    %v1390 = vpop.f32.mrb[0].mxu0
    %1391 = vdwg.mxu0
    %v1392 = vpack.c.bf16 %v1387, %v1387
    %v1397 = vunpack.c.l.b16 %v453
    %v1398 = vunpack.c.l.b16 %v454
    %v1399 = vunpack.c.l.b16 %v455
    %v1400 = vunpack.c.l.b16 %v456
    %v1401 = vpack.c.b16 %v1398, %v1397
    %v1402 = vpack.c.b16 %v1400, %v1399
    %v1406 = vsel %vm279, %v1392, 0
    %1408 = vmatprep.subr.bf16.mxu0 0
    %1409 = vmatpush1.bf16.msra.mxu0 %v1401
    %1410 = vmatprep.subr.bf16.mxu0 0
    %1411 = vmatpush1.bf16.msra.mxu0 %v1402
    %1412 = vmatprep.subr.bf16.mxu0 0
    %1413 = vmatpush1.bf16.msra.mxu0 0
    %1414 = vmatprep.subr.bf16.mxu0 0
    %1415 = vmatpush1.bf16.msra.mxu0 0
    %1416 = vmatprep.subr.bf16.mxu0 0
    %1417 = vmatpush1.bf16.msra.mxu0 0
    %1418 = vmatprep.subr.bf16.mxu0 0
    %1419 = vmatpush1.bf16.msra.mxu0 0
    %1420 = vmatprep.subr.bf16.mxu0 0
    %1421 = vmatpush1.bf16.msra.mxu0 0
    %1422 = vmatprep.subr.bf16.mxu0 0
    %1423 = vmatpush1.bf16.msra.mxu0 0
    %1424 = vmatprep.subr.bf16.mxu0 0
    %1425 = vmatpush1.bf16.msra.mxu0 0
    %1426 = vmatprep.subr.bf16.mxu0 0
    %1427 = vmatpush1.bf16.msra.mxu0 0
    %1428 = vmatprep.subr.bf16.mxu0 0
    %1429 = vmatpush1.bf16.msra.mxu0 0
    %1430 = vmatprep.subr.bf16.mxu0 0
    %1431 = vmatpush1.bf16.msra.mxu0 0
    %1432 = vmatprep.subr.bf16.mxu0 0
    %1433 = vmatpush1.bf16.msra.mxu0 0
    %1434 = vmatprep.subr.bf16.mxu0 0
    %1435 = vmatpush1.bf16.msra.mxu0 0
    %1436 = vmatprep.subr.bf16.mxu0 0
    %1437 = vmatpush1.bf16.msra.mxu0 0
    %1438 = vmatprep.subr.bf16.mxu0 0
    %1439 = vmatpush1.bf16.msra.mxu0 0
    %1440 = vmatprep.mubr.bf16.mxu0 0
    %1441 = vmatmul.mubr.bf16.gmra.mrb[0].mxu0 %v1406
    %v1442 = vpop.f32.mrb[0].mxu0
    %v1443 = vadd.f32 0.0, %v1442
    %v1444 = vpop.f32.mrb[0].mxu0
    %v1445 = vpop.f32.mrb[0].mxu0
    %v1446 = vpop.f32.mrb[0].mxu0
    %1447 = vdwg.mxu0
    %v1448 = vadd.f32 %v1281, %v1443
    %v1449 = vld [vmem:[%s10] sm:$0x1]
    %v1451 = vlaneseq
    %v1452 = vshrl.u32 %v1451, 7
    %v1453 = vsub.s32 0, %v1452
    %v1454 = vrot.slane %v1449, %v1453
    %v1456 = vadd.f32 %v1448, %v1454
    %v1457 = vadd.f32 %v1456, %v1456
    %v1458 = vpack.c.bf16 %v1457, %v1457
    %v1459 = vld [vmem:[%s12] sm:$0xf]
    %v1461 = vlaneseq
    %v1462 = vshrl.u32 %v1461, 7
    %v1463 = vsub.s32 0, %v1462
    %v1464 = vrot.slane %v1459, %v1463
    %v1465 = vlaneseq
    %v1466 = vshrl.u32 %v1465, 7
    %v1467 = vsub.s32 1, %v1466
    %v1468 = vrot.slane %v1459, %v1467
    %v1469 = vlaneseq
    %v1470 = vshrl.u32 %v1469, 7
    %v1471 = vsub.s32 2, %v1470
    %v1472 = vrot.slane %v1459, %v1471
    %v1473 = vlaneseq
    %v1474 = vshrl.u32 %v1473, 7
    %v1475 = vsub.s32 3, %v1474
    %v1476 = vrot.slane %v1459, %v1475
    %v1513 = vunpack.c.l.b16 %v457
    %v1514 = vunpack.c.h.b16 %v457
    %v1515 = vunpack.c.l.b16 %v458
    %v1516 = vunpack.c.h.b16 %v458
    %v1517 = vunpack.c.l.b16 %v459
    %v1518 = vunpack.c.h.b16 %v459
    %v1519 = vunpack.c.l.b16 %v460
    %v1520 = vunpack.c.h.b16 %v460
    %v1521 = vunpack.c.l.b16 %v461
    %v1522 = vunpack.c.h.b16 %v461
    %v1523 = vunpack.c.l.b16 %v462
    %v1524 = vunpack.c.h.b16 %v462
    %v1525 = vunpack.c.l.b16 %v463
    %v1526 = vunpack.c.h.b16 %v463
    %v1527 = vunpack.c.l.b16 %v464
    %v1528 = vunpack.c.h.b16 %v464
    %v1529 = vunpack.c.l.b16 %v465
    %v1530 = vunpack.c.h.b16 %v465
    %v1531 = vunpack.c.l.b16 %v466
    %v1532 = vunpack.c.h.b16 %v466
    %v1533 = vunpack.c.l.b16 %v467
    %v1534 = vunpack.c.h.b16 %v467
    %v1535 = vunpack.c.l.b16 %v468
    %v1536 = vunpack.c.h.b16 %v468
    %v1537 = vunpack.c.l.b16 %v469
    %v1538 = vunpack.c.h.b16 %v469
    %v1539 = vunpack.c.l.b16 %v470
    %v1540 = vunpack.c.h.b16 %v470
    %v1541 = vunpack.c.l.b16 %v471
    %v1542 = vunpack.c.h.b16 %v471
    %v1543 = vunpack.c.l.b16 %v472
    %v1544 = vunpack.c.h.b16 %v472
    %v1545 = vunpack.c.l.b16 %v473
    %v1546 = vunpack.c.h.b16 %v473
    %v1547 = vunpack.c.l.b16 %v474
    %v1548 = vunpack.c.h.b16 %v474
    %v1549 = vunpack.c.l.b16 %v475
    %v1550 = vunpack.c.h.b16 %v475
    %v1551 = vunpack.c.l.b16 %v476
    %v1552 = vunpack.c.h.b16 %v476
    %v1553 = vunpack.c.l.b16 %v477
    %v1554 = vunpack.c.h.b16 %v477
    %v1555 = vunpack.c.l.b16 %v478
    %v1556 = vunpack.c.h.b16 %v478
    %v1557 = vunpack.c.l.b16 %v479
    %v1558 = vunpack.c.h.b16 %v479
    %v1559 = vunpack.c.l.b16 %v480
    %v1560 = vunpack.c.h.b16 %v480
    %v1561 = vunpack.c.l.b16 %v481
    %v1562 = vunpack.c.h.b16 %v481
    %v1563 = vunpack.c.l.b16 %v482
    %v1564 = vunpack.c.h.b16 %v482
    %v1565 = vunpack.c.l.b16 %v483
    %v1566 = vunpack.c.h.b16 %v483
    %v1567 = vunpack.c.l.b16 %v484
    %v1568 = vunpack.c.h.b16 %v484
    %v1569 = vunpack.c.l.b16 %v485
    %v1570 = vunpack.c.h.b16 %v485
    %v1571 = vunpack.c.l.b16 %v486
    %v1572 = vunpack.c.h.b16 %v486
    %v1573 = vunpack.c.l.b16 %v487
    %v1574 = vunpack.c.h.b16 %v487
    %v1575 = vunpack.c.l.b16 %v488
    %v1576 = vunpack.c.h.b16 %v488
    %v1577 = vpack.c.b16 %v1517, %v1513
    %v1578 = vpack.c.b16 %v1518, %v1514
    %v1579 = vpack.c.b16 %v1519, %v1515
    %v1580 = vpack.c.b16 %v1520, %v1516
    %v1581 = vpack.c.b16 %v1525, %v1521
    %v1582 = vpack.c.b16 %v1526, %v1522
    %v1583 = vpack.c.b16 %v1527, %v1523
    %v1584 = vpack.c.b16 %v1528, %v1524
    %v1585 = vpack.c.b16 %v1533, %v1529
    %v1586 = vpack.c.b16 %v1534, %v1530
    %v1587 = vpack.c.b16 %v1535, %v1531
    %v1588 = vpack.c.b16 %v1536, %v1532
    %v1589 = vpack.c.b16 %v1541, %v1537
    %v1590 = vpack.c.b16 %v1542, %v1538
    %v1591 = vpack.c.b16 %v1543, %v1539
    %v1592 = vpack.c.b16 %v1544, %v1540
    %v1593 = vpack.c.b16 %v1549, %v1545
    %v1594 = vpack.c.b16 %v1550, %v1546
    %v1595 = vpack.c.b16 %v1551, %v1547
    %v1596 = vpack.c.b16 %v1552, %v1548
    %v1597 = vpack.c.b16 %v1557, %v1553
    %v1598 = vpack.c.b16 %v1558, %v1554
    %v1599 = vpack.c.b16 %v1559, %v1555
    %v1600 = vpack.c.b16 %v1560, %v1556
    %v1601 = vpack.c.b16 %v1565, %v1561
    %v1602 = vpack.c.b16 %v1566, %v1562
    %v1603 = vpack.c.b16 %v1567, %v1563
    %v1604 = vpack.c.b16 %v1568, %v1564
    %v1605 = vpack.c.b16 %v1573, %v1569
    %v1606 = vpack.c.b16 %v1574, %v1570
    %v1607 = vpack.c.b16 %v1575, %v1571
    %v1608 = vpack.c.b16 %v1576, %v1572
    %1641 = vmatprep.subr.bf16.mxu0 %v1578
    %1642 = vmatpush1.bf16.msra.mxu0 %v1577
    %1643 = vmatprep.subr.bf16.mxu0 %v1582
    %1644 = vmatpush1.bf16.msra.mxu0 %v1581
    %1645 = vmatprep.subr.bf16.mxu0 %v1586
    %1646 = vmatpush1.bf16.msra.mxu0 %v1585
    %1647 = vmatprep.subr.bf16.mxu0 %v1590
    %1648 = vmatpush1.bf16.msra.mxu0 %v1589
    %1649 = vmatprep.subr.bf16.mxu0 %v1594
    %1650 = vmatpush1.bf16.msra.mxu0 %v1593
    %1651 = vmatprep.subr.bf16.mxu0 %v1598
    %1652 = vmatpush1.bf16.msra.mxu0 %v1597
    %1653 = vmatprep.subr.bf16.mxu0 %v1602
    %1654 = vmatpush1.bf16.msra.mxu0 %v1601
    %1655 = vmatprep.subr.bf16.mxu0 %v1606
    %1656 = vmatpush1.bf16.msra.mxu0 %v1605
    %1657 = vmatprep.subr.bf16.mxu0 0
    %1658 = vmatpush1.bf16.msra.mxu0 0
    %1659 = vmatprep.subr.bf16.mxu0 0
    %1660 = vmatpush1.bf16.msra.mxu0 0
    %1661 = vmatprep.subr.bf16.mxu0 0
    %1662 = vmatpush1.bf16.msra.mxu0 0
    %1663 = vmatprep.subr.bf16.mxu0 0
    %1664 = vmatpush1.bf16.msra.mxu0 0
    %1665 = vmatprep.subr.bf16.mxu0 0
    %1666 = vmatpush1.bf16.msra.mxu0 0
    %1667 = vmatprep.subr.bf16.mxu0 0
    %1668 = vmatpush1.bf16.msra.mxu0 0
    %1669 = vmatprep.subr.bf16.mxu0 0
    %1670 = vmatpush1.bf16.msra.mxu0 0
    %1671 = vmatprep.subr.bf16.mxu0 0
    %1672 = vmatpush1.bf16.msra.mxu0 0
    %1673 = vmatprep.mubr.bf16.mxu0 0
    %1674 = vmatmul.mubr.bf16.gmra.mrb[0].mxu0 %v1458
    %v1675 = vpop.f32.mrb[0].mxu0
    %v1676 = vadd.f32 %v1464, %v1675
    %v1677 = vpop.f32.mrb[0].mxu0
    %v1678 = vadd.f32 %v1468, %v1677
    %v1679 = vpop.f32.mrb[0].mxu0
    %v1680 = vpop.f32.mrb[0].mxu0
    %1681 = vdwg.mxu0
    %1682 = vmatprep.subr.bf16.mxu0 %v1580
    %1683 = vmatpush1.bf16.msra.mxu0 %v1579
    %1684 = vmatprep.subr.bf16.mxu0 %v1584
    %1685 = vmatpush1.bf16.msra.mxu0 %v1583
    %1686 = vmatprep.subr.bf16.mxu0 %v1588
    %1687 = vmatpush1.bf16.msra.mxu0 %v1587
    %1688 = vmatprep.subr.bf16.mxu0 %v1592
    %1689 = vmatpush1.bf16.msra.mxu0 %v1591
    %1690 = vmatprep.subr.bf16.mxu0 %v1596
    %1691 = vmatpush1.bf16.msra.mxu0 %v1595
    %1692 = vmatprep.subr.bf16.mxu0 %v1600
    %1693 = vmatpush1.bf16.msra.mxu0 %v1599
    %1694 = vmatprep.subr.bf16.mxu0 %v1604
    %1695 = vmatpush1.bf16.msra.mxu0 %v1603
    %1696 = vmatprep.subr.bf16.mxu0 %v1608
    %1697 = vmatpush1.bf16.msra.mxu0 %v1607
    %1698 = vmatprep.subr.bf16.mxu0 0
    %1699 = vmatpush1.bf16.msra.mxu0 0
    %1700 = vmatprep.subr.bf16.mxu0 0
    %1701 = vmatpush1.bf16.msra.mxu0 0
    %1702 = vmatprep.subr.bf16.mxu0 0
    %1703 = vmatpush1.bf16.msra.mxu0 0
    %1704 = vmatprep.subr.bf16.mxu0 0
    %1705 = vmatpush1.bf16.msra.mxu0 0
    %1706 = vmatprep.subr.bf16.mxu0 0
    %1707 = vmatpush1.bf16.msra.mxu0 0
    %1708 = vmatprep.subr.bf16.mxu0 0
    %1709 = vmatpush1.bf16.msra.mxu0 0
    %1710 = vmatprep.subr.bf16.mxu0 0
    %1711 = vmatpush1.bf16.msra.mxu0 0
    %1712 = vmatprep.subr.bf16.mxu0 0
    %1713 = vmatpush1.bf16.msra.mxu0 0
    %1714 = vmatprep.mubr.bf16.mxu0 0
    %1715 = vmatmul.mubr.bf16.gmra.mrb[0].mxu0 %v1458
    %v1716 = vpop.f32.mrb[0].mxu0
    %v1717 = vadd.f32 %v1472, %v1716
    %v1718 = vpop.f32.mrb[0].mxu0
    %v1719 = vadd.f32 %v1476, %v1718
    %v1720 = vpop.f32.mrb[0].mxu0
    %v1721 = vpop.f32.mrb[0].mxu0
    %1722 = vdwg.mxu0
    %v1723 = vmax.f32 %v1676, 0.0
    %v1724 = vmax.f32 %v1678, 0.0
    %v1725 = vmax.f32 %v1717, 0.0
    %v1726 = vmax.f32 %v1719, 0.0
    %v1727 = vpack.c.bf16 %v1723, %v1723
    %v1728 = vpack.c.bf16 %v1724, %v1724
    %v1729 = vpack.c.bf16 %v1725, %v1725
    %v1730 = vpack.c.bf16 %v1726, %v1726
    %v1731 = vld [vmem:[#allocation19] sm:$0x1]
    %v1733 = vlaneseq
    %v1734 = vshrl.u32 %v1733, 7
    %v1735 = vsub.s32 0, %v1734
    %v1736 = vrot.slane %v1731, %v1735
    %v1802 = vunpack.c.l.b16 %v489
    %v1803 = vunpack.c.l.b16 %v490
    %v1804 = vunpack.c.l.b16 %v491
    %v1805 = vunpack.c.l.b16 %v492
    %v1806 = vunpack.c.l.b16 %v493
    %v1807 = vunpack.c.l.b16 %v494
    %v1808 = vunpack.c.l.b16 %v495
    %v1809 = vunpack.c.l.b16 %v496
    %v1810 = vunpack.c.l.b16 %v497
    %v1811 = vunpack.c.l.b16 %v498
    %v1812 = vunpack.c.l.b16 %v499
    %v1813 = vunpack.c.l.b16 %v500
    %v1814 = vunpack.c.l.b16 %v501
    %v1815 = vunpack.c.l.b16 %v502
    %v1816 = vunpack.c.l.b16 %v503
    %v1817 = vunpack.c.l.b16 %v504
    %v1818 = vunpack.c.l.b16 %v505
    %v1819 = vunpack.c.l.b16 %v506
    %v1820 = vunpack.c.l.b16 %v507
    %v1821 = vunpack.c.l.b16 %v508
    %v1822 = vunpack.c.l.b16 %v509
    %v1823 = vunpack.c.l.b16 %v510
    %v1824 = vunpack.c.l.b16 %v511
    %v1825 = vunpack.c.l.b16 %v512
    %v1826 = vunpack.c.l.b16 %v513
    %v1827 = vunpack.c.l.b16 %v514
    %v1828 = vunpack.c.l.b16 %v515
    %v1829 = vunpack.c.l.b16 %v516
    %v1830 = vunpack.c.l.b16 %v517
    %v1831 = vunpack.c.l.b16 %v518
    %v1832 = vunpack.c.l.b16 %v519
    %v1833 = vunpack.c.l.b16 %v520
    %v1834 = vunpack.c.l.b16 %v521
    %v1835 = vunpack.c.l.b16 %v522
    %v1836 = vunpack.c.l.b16 %v523
    %v1837 = vunpack.c.l.b16 %v524
    %v1838 = vunpack.c.l.b16 %v525
    %v1839 = vunpack.c.l.b16 %v526
    %v1840 = vunpack.c.l.b16 %v527
    %v1841 = vunpack.c.l.b16 %v528
    %v1842 = vunpack.c.l.b16 %v529
    %v1843 = vunpack.c.l.b16 %v530
    %v1844 = vunpack.c.l.b16 %v531
    %v1845 = vunpack.c.l.b16 %v532
    %v1846 = vunpack.c.l.b16 %v533
    %v1847 = vunpack.c.l.b16 %v534
    %v1848 = vunpack.c.l.b16 %v535
    %v1849 = vunpack.c.l.b16 %v536
    %v1850 = vunpack.c.l.b16 %v537
    %v1851 = vunpack.c.l.b16 %v538
    %v1852 = vunpack.c.l.b16 %v539
    %v1853 = vunpack.c.l.b16 %v540
    %v1854 = vunpack.c.l.b16 %v541
    %v1855 = vunpack.c.l.b16 %v542
    %v1856 = vunpack.c.l.b16 %v543
    %v1857 = vunpack.c.l.b16 %v544
    %v1858 = vunpack.c.l.b16 %v545
    %v1859 = vunpack.c.l.b16 %v546
    %v1860 = vunpack.c.l.b16 %v547
    %v1861 = vunpack.c.l.b16 %v548
    %v1862 = vunpack.c.l.b16 %v549
    %v1863 = vunpack.c.l.b16 %v550
    %v1864 = vunpack.c.l.b16 %v551
    %v1865 = vunpack.c.l.b16 %v552
    %v1866 = vpack.c.b16 %v1803, %v1802
    %v1867 = vpack.c.b16 %v1805, %v1804
    %v1868 = vpack.c.b16 %v1807, %v1806
    %v1869 = vpack.c.b16 %v1809, %v1808
    %v1870 = vpack.c.b16 %v1811, %v1810
    %v1871 = vpack.c.b16 %v1813, %v1812
    %v1872 = vpack.c.b16 %v1815, %v1814
    %v1873 = vpack.c.b16 %v1817, %v1816
    %v1874 = vpack.c.b16 %v1819, %v1818
    %v1875 = vpack.c.b16 %v1821, %v1820
    %v1876 = vpack.c.b16 %v1823, %v1822
    %v1877 = vpack.c.b16 %v1825, %v1824
    %v1878 = vpack.c.b16 %v1827, %v1826
    %v1879 = vpack.c.b16 %v1829, %v1828
    %v1880 = vpack.c.b16 %v1831, %v1830
    %v1881 = vpack.c.b16 %v1833, %v1832
    %v1882 = vpack.c.b16 %v1835, %v1834
    %v1883 = vpack.c.b16 %v1837, %v1836
    %v1884 = vpack.c.b16 %v1839, %v1838
    %v1885 = vpack.c.b16 %v1841, %v1840
    %v1886 = vpack.c.b16 %v1843, %v1842
    %v1887 = vpack.c.b16 %v1845, %v1844
    %v1888 = vpack.c.b16 %v1847, %v1846
    %v1889 = vpack.c.b16 %v1849, %v1848
    %v1890 = vpack.c.b16 %v1851, %v1850
    %v1891 = vpack.c.b16 %v1853, %v1852
    %v1892 = vpack.c.b16 %v1855, %v1854
    %v1893 = vpack.c.b16 %v1857, %v1856
    %v1894 = vpack.c.b16 %v1859, %v1858
    %v1895 = vpack.c.b16 %v1861, %v1860
    %v1896 = vpack.c.b16 %v1863, %v1862
    %v1897 = vpack.c.b16 %v1865, %v1864
    %1930 = vmatprep.subr.bf16.mxu0 0
    %1931 = vmatpush1.bf16.msra.mxu0 %v1866
    %1932 = vmatprep.subr.bf16.mxu0 0
    %1933 = vmatpush1.bf16.msra.mxu0 %v1867
    %1934 = vmatprep.subr.bf16.mxu0 0
    %1935 = vmatpush1.bf16.msra.mxu0 %v1868
    %1936 = vmatprep.subr.bf16.mxu0 0
    %1937 = vmatpush1.bf16.msra.mxu0 %v1869
    %1938 = vmatprep.subr.bf16.mxu0 0
    %1939 = vmatpush1.bf16.msra.mxu0 %v1870
    %1940 = vmatprep.subr.bf16.mxu0 0
    %1941 = vmatpush1.bf16.msra.mxu0 %v1871
    %1942 = vmatprep.subr.bf16.mxu0 0
    %1943 = vmatpush1.bf16.msra.mxu0 %v1872
    %1944 = vmatprep.subr.bf16.mxu0 0
    %1945 = vmatpush1.bf16.msra.mxu0 %v1873
    %1946 = vmatprep.subr.bf16.mxu0 0
    %1947 = vmatpush1.bf16.msra.mxu0 %v1874
    %1948 = vmatprep.subr.bf16.mxu0 0
    %1949 = vmatpush1.bf16.msra.mxu0 %v1875
    %1950 = vmatprep.subr.bf16.mxu0 0
    %1951 = vmatpush1.bf16.msra.mxu0 %v1876
    %1952 = vmatprep.subr.bf16.mxu0 0
    %1953 = vmatpush1.bf16.msra.mxu0 %v1877
    %1954 = vmatprep.subr.bf16.mxu0 0
    %1955 = vmatpush1.bf16.msra.mxu0 %v1878
    %1956 = vmatprep.subr.bf16.mxu0 0
    %1957 = vmatpush1.bf16.msra.mxu0 %v1879
    %1958 = vmatprep.subr.bf16.mxu0 0
    %1959 = vmatpush1.bf16.msra.mxu0 %v1880
    %1960 = vmatprep.subr.bf16.mxu0 0
    %1961 = vmatpush1.bf16.msra.mxu0 %v1881
    %1962 = vmatprep.mubr.bf16.mxu0 %v1728
    %1963 = vmatmul.mubr.bf16.gmra.mrb[0].mxu0 %v1727
    %v1964 = vpop.f32.mrb[0].mxu0
    %v1965 = vadd.f32 %v1736, %v1964
    %v1966 = vpop.f32.mrb[0].mxu0
    %v1967 = vpop.f32.mrb[0].mxu0
    %v1968 = vpop.f32.mrb[0].mxu0
    %1969 = vdwg.mxu0
    %1970 = vmatprep.subr.bf16.mxu0 0
    %1971 = vmatpush1.bf16.msra.mxu0 %v1882
    %1972 = vmatprep.subr.bf16.mxu0 0
    %1973 = vmatpush1.bf16.msra.mxu0 %v1883
    %1974 = vmatprep.subr.bf16.mxu0 0
    %1975 = vmatpush1.bf16.msra.mxu0 %v1884
    %1976 = vmatprep.subr.bf16.mxu0 0
    %1977 = vmatpush1.bf16.msra.mxu0 %v1885
    %1978 = vmatprep.subr.bf16.mxu0 0
    %1979 = vmatpush1.bf16.msra.mxu0 %v1886
    %1980 = vmatprep.subr.bf16.mxu0 0
    %1981 = vmatpush1.bf16.msra.mxu0 %v1887
    %1982 = vmatprep.subr.bf16.mxu0 0
    %1983 = vmatpush1.bf16.msra.mxu0 %v1888
    %1984 = vmatprep.subr.bf16.mxu0 0
    %1985 = vmatpush1.bf16.msra.mxu0 %v1889
    %1986 = vmatprep.subr.bf16.mxu0 0
    %1987 = vmatpush1.bf16.msra.mxu0 %v1890
    %1988 = vmatprep.subr.bf16.mxu0 0
    %1989 = vmatpush1.bf16.msra.mxu0 %v1891
    %1990 = vmatprep.subr.bf16.mxu0 0
    %1991 = vmatpush1.bf16.msra.mxu0 %v1892
    %1992 = vmatprep.subr.bf16.mxu0 0
    %1993 = vmatpush1.bf16.msra.mxu0 %v1893
    %1994 = vmatprep.subr.bf16.mxu0 0
    %1995 = vmatpush1.bf16.msra.mxu0 %v1894
    %1996 = vmatprep.subr.bf16.mxu0 0
    %1997 = vmatpush1.bf16.msra.mxu0 %v1895
    %1998 = vmatprep.subr.bf16.mxu0 0
    %1999 = vmatpush1.bf16.msra.mxu0 %v1896
    %2000 = vmatprep.subr.bf16.mxu0 0
    %2001 = vmatpush1.bf16.msra.mxu0 %v1897
    %2002 = vmatprep.mubr.bf16.mxu0 %v1730
    %2003 = vmatmul.mubr.bf16.gmra.mrb[0].mxu0 %v1729
    %v2004 = vpop.f32.mrb[0].mxu0
    %v2005 = vadd.f32 %v1965, %v2004
    %v2006 = vpop.f32.mrb[0].mxu0
    %v2007 = vpop.f32.mrb[0].mxu0
    %v2008 = vpop.f32.mrb[0].mxu0
    %2009 = vdwg.mxu0
    %s2010 = scalar_lea.vmem [#allocation13], 192
    %v2011 = vld [vmem:[%s2010] sm:$0xff]
    %v2012 = vld [vmem:[%s2010 + $0x8] sm:$0xf]
    %v2013 = vld [vmem:[%s2010 + $0xc] sm:$0xff]
    %v2014 = vld [vmem:[%s2010 + $0x14] sm:$0xf]
    %v2015 = vld [vmem:[%s2010 + $0x18] sm:$0xff]
    %v2016 = vld [vmem:[%s2010 + $0x20] sm:$0xf]
    %v2017 = vld [vmem:[%s2010 + $0x24] sm:$0xff]
    %v2018 = vld [vmem:[%s2010 + $0x2c] sm:$0xf]
    %v2019 = vld [vmem:[%s2010 + $0x30] sm:$0xff]
    %v2020 = vld [vmem:[%s2010 + $0x38] sm:$0xf]
    %v2021 = vld [vmem:[%s2010 + $0x3c] sm:$0xff]
    %v2022 = vld [vmem:[%s2010 + $0x44] sm:$0xf]
    %v2023 = vld [vmem:[%s2010 + $0x48] sm:$0xff]
    %v2024 = vld [vmem:[%s2010 + $0x50] sm:$0xf]
    %v2025 = vld [vmem:[%s2010 + $0x54] sm:$0xff]
    %v2026 = vld [vmem:[%s2010 + $0x5c] sm:$0xf]
    %v2027 = vld [vmem:[%s2010 + $0x60] sm:$0xff]
    %v2028 = vld [vmem:[%s2010 + $0x68] sm:$0xf]
    %v2029 = vld [vmem:[%s2010 + $0x6c] sm:$0xff]
    %v2030 = vld [vmem:[%s2010 + $0x74] sm:$0xf]
    %v2031 = vld [vmem:[%s2010 + $0x78] sm:$0xff]
    %v2032 = vld [vmem:[%s2010 + $0x80] sm:$0xf]
    %v2033 = vld [vmem:[%s2010 + $0x84] sm:$0xff]
    %v2034 = vld [vmem:[%s2010 + $0x8c] sm:$0xf]
    %v2035 = vld [vmem:[%s2010 + $0x90] sm:$0xff]
    %v2036 = vld [vmem:[%s2010 + $0x98] sm:$0xf]
    %v2037 = vld [vmem:[%s2010 + $0x9c] sm:$0xff]
    %v2038 = vld [vmem:[%s2010 + $0xa4] sm:$0xf]
    %v2039 = vld [vmem:[%s2010 + $0xa8] sm:$0xff]
    %v2040 = vld [vmem:[%s2010 + $0xb0] sm:$0xf]
    %v2041 = vld [vmem:[%s2010 + $0xb4] sm:$0xff]
    %v2042 = vld [vmem:[%s2010 + $0xbc] sm:$0xf]
    %s2043 = scalar_lea.vmem [#allocation14], 64
    %v2044 = vld [vmem:[%s2043] sm:$0xf]
    %v2045 = vld [vmem:[%s2043 + $0x4] sm:$0xf]
    %v2046 = vld [vmem:[%s2043 + $0x8] sm:$0xf]
    %v2047 = vld [vmem:[%s2043 + $0xc] sm:$0xf]
    %v2048 = vld [vmem:[%s2043 + $0x10] sm:$0xf]
    %v2049 = vld [vmem:[%s2043 + $0x14] sm:$0xf]
    %v2050 = vld [vmem:[%s2043 + $0x18] sm:$0xf]
    %v2051 = vld [vmem:[%s2043 + $0x1c] sm:$0xf]
    %v2052 = vld [vmem:[%s2043 + $0x20] sm:$0xf]
    %v2053 = vld [vmem:[%s2043 + $0x24] sm:$0xf]
    %v2054 = vld [vmem:[%s2043 + $0x28] sm:$0xf]
    %v2055 = vld [vmem:[%s2043 + $0x2c] sm:$0xf]
    %v2056 = vld [vmem:[%s2043 + $0x30] sm:$0xf]
    %v2057 = vld [vmem:[%s2043 + $0x34] sm:$0xf]
    %v2058 = vld [vmem:[%s2043 + $0x38] sm:$0xf]
    %v2059 = vld [vmem:[%s2043 + $0x3c] sm:$0xf]
    %s2060 = scalar_lea.vmem [#allocation16], 256
    %v2061 = vld [vmem:[%s2060] sm:$0xff]
    %v2062 = vld [vmem:[%s2060 + $0x8] sm:$0xff]
    %v2063 = vld [vmem:[%s2060 + $0x10] sm:$0xff]
    %v2064 = vld [vmem:[%s2060 + $0x18] sm:$0xff]
    %v2065 = vld [vmem:[%s2060 + $0x20] sm:$0xff]
    %v2066 = vld [vmem:[%s2060 + $0x28] sm:$0xff]
    %v2067 = vld [vmem:[%s2060 + $0x30] sm:$0xff]
    %v2068 = vld [vmem:[%s2060 + $0x38] sm:$0xff]
    %v2069 = vld [vmem:[%s2060 + $0x40] sm:$0xff]
    %v2070 = vld [vmem:[%s2060 + $0x48] sm:$0xff]
    %v2071 = vld [vmem:[%s2060 + $0x50] sm:$0xff]
    %v2072 = vld [vmem:[%s2060 + $0x58] sm:$0xff]
    %v2073 = vld [vmem:[%s2060 + $0x60] sm:$0xff]
    %v2074 = vld [vmem:[%s2060 + $0x68] sm:$0xff]
    %v2075 = vld [vmem:[%s2060 + $0x70] sm:$0xff]
    %v2076 = vld [vmem:[%s2060 + $0x78] sm:$0xff]
    %v2077 = vld [vmem:[%s2060 + $0x80] sm:$0xff]
    %v2078 = vld [vmem:[%s2060 + $0x88] sm:$0xff]
    %v2079 = vld [vmem:[%s2060 + $0x90] sm:$0xff]
    %v2080 = vld [vmem:[%s2060 + $0x98] sm:$0xff]
    %v2081 = vld [vmem:[%s2060 + $0xa0] sm:$0xff]
    %v2082 = vld [vmem:[%s2060 + $0xa8] sm:$0xff]
    %v2083 = vld [vmem:[%s2060 + $0xb0] sm:$0xff]
    %v2084 = vld [vmem:[%s2060 + $0xb8] sm:$0xff]
    %v2085 = vld [vmem:[%s2060 + $0xc0] sm:$0xff]
    %v2086 = vld [vmem:[%s2060 + $0xc8] sm:$0xff]
    %v2087 = vld [vmem:[%s2060 + $0xd0] sm:$0xff]
    %v2088 = vld [vmem:[%s2060 + $0xd8] sm:$0xff]
    %v2089 = vld [vmem:[%s2060 + $0xe0] sm:$0xff]
    %v2090 = vld [vmem:[%s2060 + $0xe8] sm:$0xff]
    %v2091 = vld [vmem:[%s2060 + $0xf0] sm:$0xff]
    %v2092 = vld [vmem:[%s2060 + $0xf8] sm:$0xff]
    %s2093 = scalar_lea.vmem [#allocation17], 256
    %v2094 = vld [vmem:[%s2093] sm:$0xf]
    %v2095 = vld [vmem:[%s2093 + $0x4] sm:$0xf]
    %v2096 = vld [vmem:[%s2093 + $0x8] sm:$0xf]
    %v2097 = vld [vmem:[%s2093 + $0xc] sm:$0xf]
    %v2098 = vld [vmem:[%s2093 + $0x10] sm:$0xf]
    %v2099 = vld [vmem:[%s2093 + $0x14] sm:$0xf]
    %v2100 = vld [vmem:[%s2093 + $0x18] sm:$0xf]
    %v2101 = vld [vmem:[%s2093 + $0x1c] sm:$0xf]
    %v2102 = vld [vmem:[%s2093 + $0x20] sm:$0xf]
    %v2103 = vld [vmem:[%s2093 + $0x24] sm:$0xf]
    %v2104 = vld [vmem:[%s2093 + $0x28] sm:$0xf]
    %v2105 = vld [vmem:[%s2093 + $0x2c] sm:$0xf]
    %v2106 = vld [vmem:[%s2093 + $0x30] sm:$0xf]
    %v2107 = vld [vmem:[%s2093 + $0x34] sm:$0xf]
    %v2108 = vld [vmem:[%s2093 + $0x38] sm:$0xf]
    %v2109 = vld [vmem:[%s2093 + $0x3c] sm:$0xf]
    %v2110 = vld [vmem:[%s2093 + $0x40] sm:$0xf]
    %v2111 = vld [vmem:[%s2093 + $0x44] sm:$0xf]
    %v2112 = vld [vmem:[%s2093 + $0x48] sm:$0xf]
    %v2113 = vld [vmem:[%s2093 + $0x4c] sm:$0xf]
    %v2114 = vld [vmem:[%s2093 + $0x50] sm:$0xf]
    %v2115 = vld [vmem:[%s2093 + $0x54] sm:$0xf]
    %v2116 = vld [vmem:[%s2093 + $0x58] sm:$0xf]
    %v2117 = vld [vmem:[%s2093 + $0x5c] sm:$0xf]
    %v2118 = vld [vmem:[%s2093 + $0x60] sm:$0xf]
    %v2119 = vld [vmem:[%s2093 + $0x64] sm:$0xf]
    %v2120 = vld [vmem:[%s2093 + $0x68] sm:$0xf]
    %v2121 = vld [vmem:[%s2093 + $0x6c] sm:$0xf]
    %v2122 = vld [vmem:[%s2093 + $0x70] sm:$0xf]
    %v2123 = vld [vmem:[%s2093 + $0x74] sm:$0xf]
    %v2124 = vld [vmem:[%s2093 + $0x78] sm:$0xf]
    %v2125 = vld [vmem:[%s2093 + $0x7c] sm:$0xf]
    %v2126 = vld [vmem:[%s2093 + $0x80] sm:$0xf]
    %v2127 = vld [vmem:[%s2093 + $0x84] sm:$0xf]
    %v2128 = vld [vmem:[%s2093 + $0x88] sm:$0xf]
    %v2129 = vld [vmem:[%s2093 + $0x8c] sm:$0xf]
    %v2130 = vld [vmem:[%s2093 + $0x90] sm:$0xf]
    %v2131 = vld [vmem:[%s2093 + $0x94] sm:$0xf]
    %v2132 = vld [vmem:[%s2093 + $0x98] sm:$0xf]
    %v2133 = vld [vmem:[%s2093 + $0x9c] sm:$0xf]
    %v2134 = vld [vmem:[%s2093 + $0xa0] sm:$0xf]
    %v2135 = vld [vmem:[%s2093 + $0xa4] sm:$0xf]
    %v2136 = vld [vmem:[%s2093 + $0xa8] sm:$0xf]
    %v2137 = vld [vmem:[%s2093 + $0xac] sm:$0xf]
    %v2138 = vld [vmem:[%s2093 + $0xb0] sm:$0xf]
    %v2139 = vld [vmem:[%s2093 + $0xb4] sm:$0xf]
    %v2140 = vld [vmem:[%s2093 + $0xb8] sm:$0xf]
    %v2141 = vld [vmem:[%s2093 + $0xbc] sm:$0xf]
    %v2142 = vld [vmem:[%s2093 + $0xc0] sm:$0xf]
    %v2143 = vld [vmem:[%s2093 + $0xc4] sm:$0xf]
    %v2144 = vld [vmem:[%s2093 + $0xc8] sm:$0xf]
    %v2145 = vld [vmem:[%s2093 + $0xcc] sm:$0xf]
    %v2146 = vld [vmem:[%s2093 + $0xd0] sm:$0xf]
    %v2147 = vld [vmem:[%s2093 + $0xd4] sm:$0xf]
    %v2148 = vld [vmem:[%s2093 + $0xd8] sm:$0xf]
    %v2149 = vld [vmem:[%s2093 + $0xdc] sm:$0xf]
    %v2150 = vld [vmem:[%s2093 + $0xe0] sm:$0xf]
    %v2151 = vld [vmem:[%s2093 + $0xe4] sm:$0xf]
    %v2152 = vld [vmem:[%s2093 + $0xe8] sm:$0xf]
    %v2153 = vld [vmem:[%s2093 + $0xec] sm:$0xf]
    %v2154 = vld [vmem:[%s2093 + $0xf0] sm:$0xf]
    %v2155 = vld [vmem:[%s2093 + $0xf4] sm:$0xf]
    %v2156 = vld [vmem:[%s2093 + $0xf8] sm:$0xf]
    %v2157 = vld [vmem:[%s2093 + $0xfc] sm:$0xf]
    %v2158 = vpack.c.bf16 %v2005, %v2005
    %s2159 = scalar_lea.vmem %s8, 3
    %v2160 = vld [vmem:[%s2159] sm:$0x7]
    %v2162 = vlaneseq
    %v2163 = vshrl.u32 %v2162, 7
    %v2164 = vsub.s32 0, %v2163
    %v2165 = vrot.slane %v2160, %v2164
    %v2166 = vlaneseq
    %v2167 = vshrl.u32 %v2166, 7
    %v2168 = vsub.s32 1, %v2167
    %v2169 = vrot.slane %v2160, %v2168
    %v2170 = vlaneseq
    %v2171 = vshrl.u32 %v2170, 7
    %v2172 = vsub.s32 2, %v2171
    %v2173 = vrot.slane %v2160, %v2172
    %v2209 = vunpack.c.l.b16 %v2011
    %v2210 = vunpack.c.h.b16 %v2011
    %v2211 = vunpack.c.l.b16 %v2012
    %v2212 = vunpack.c.l.b16 %v2013
    %v2213 = vunpack.c.h.b16 %v2013
    %v2214 = vunpack.c.l.b16 %v2014
    %v2215 = vunpack.c.l.b16 %v2015
    %v2216 = vunpack.c.h.b16 %v2015
    %v2217 = vunpack.c.l.b16 %v2016
    %v2218 = vunpack.c.l.b16 %v2017
    %v2219 = vunpack.c.h.b16 %v2017
    %v2220 = vunpack.c.l.b16 %v2018
    %v2221 = vunpack.c.l.b16 %v2019
    %v2222 = vunpack.c.h.b16 %v2019
    %v2223 = vunpack.c.l.b16 %v2020
    %v2224 = vunpack.c.l.b16 %v2021
    %v2225 = vunpack.c.h.b16 %v2021
    %v2226 = vunpack.c.l.b16 %v2022
    %v2227 = vunpack.c.l.b16 %v2023
    %v2228 = vunpack.c.h.b16 %v2023
    %v2229 = vunpack.c.l.b16 %v2024
    %v2230 = vunpack.c.l.b16 %v2025
    %v2231 = vunpack.c.h.b16 %v2025
    %v2232 = vunpack.c.l.b16 %v2026
    %v2233 = vunpack.c.l.b16 %v2027
    %v2234 = vunpack.c.h.b16 %v2027
    %v2235 = vunpack.c.l.b16 %v2028
    %v2236 = vunpack.c.l.b16 %v2029
    %v2237 = vunpack.c.h.b16 %v2029
    %v2238 = vunpack.c.l.b16 %v2030
    %v2239 = vunpack.c.l.b16 %v2031
    %v2240 = vunpack.c.h.b16 %v2031
    %v2241 = vunpack.c.l.b16 %v2032
    %v2242 = vunpack.c.l.b16 %v2033
    %v2243 = vunpack.c.h.b16 %v2033
    %v2244 = vunpack.c.l.b16 %v2034
    %v2245 = vunpack.c.l.b16 %v2035
    %v2246 = vunpack.c.h.b16 %v2035
    %v2247 = vunpack.c.l.b16 %v2036
    %v2248 = vunpack.c.l.b16 %v2037
    %v2249 = vunpack.c.h.b16 %v2037
    %v2250 = vunpack.c.l.b16 %v2038
    %v2251 = vunpack.c.l.b16 %v2039
    %v2252 = vunpack.c.h.b16 %v2039
    %v2253 = vunpack.c.l.b16 %v2040
    %v2254 = vunpack.c.l.b16 %v2041
    %v2255 = vunpack.c.h.b16 %v2041
    %v2256 = vunpack.c.l.b16 %v2042
    %v2257 = vpack.c.b16 %v2212, %v2209
    %v2258 = vpack.c.b16 %v2213, %v2210
    %v2259 = vpack.c.b16 %v2214, %v2211
    %v2260 = vpack.c.b16 %v2218, %v2215
    %v2261 = vpack.c.b16 %v2219, %v2216
    %v2262 = vpack.c.b16 %v2220, %v2217
    %v2263 = vpack.c.b16 %v2224, %v2221
    %v2264 = vpack.c.b16 %v2225, %v2222
    %v2265 = vpack.c.b16 %v2226, %v2223
    %v2266 = vpack.c.b16 %v2230, %v2227
    %v2267 = vpack.c.b16 %v2231, %v2228
    %v2268 = vpack.c.b16 %v2232, %v2229
    %v2269 = vpack.c.b16 %v2236, %v2233
    %v2270 = vpack.c.b16 %v2237, %v2234
    %v2271 = vpack.c.b16 %v2238, %v2235
    %v2272 = vpack.c.b16 %v2242, %v2239
    %v2273 = vpack.c.b16 %v2243, %v2240
    %v2274 = vpack.c.b16 %v2244, %v2241
    %v2275 = vpack.c.b16 %v2248, %v2245
    %v2276 = vpack.c.b16 %v2249, %v2246
    %v2277 = vpack.c.b16 %v2250, %v2247
    %v2278 = vpack.c.b16 %v2254, %v2251
    %v2279 = vpack.c.b16 %v2255, %v2252
    %v2280 = vpack.c.b16 %v2256, %v2253
    %2305 = vmatprep.subr.bf16.mxu0 %v2258
    %2306 = vmatpush1.bf16.msra.mxu0 %v2257
    %2307 = vmatprep.subr.bf16.mxu0 %v2261
    %2308 = vmatpush1.bf16.msra.mxu0 %v2260
    %2309 = vmatprep.subr.bf16.mxu0 %v2264
    %2310 = vmatpush1.bf16.msra.mxu0 %v2263
    %2311 = vmatprep.subr.bf16.mxu0 %v2267
    %2312 = vmatpush1.bf16.msra.mxu0 %v2266
    %2313 = vmatprep.subr.bf16.mxu0 %v2270
    %2314 = vmatpush1.bf16.msra.mxu0 %v2269
    %2315 = vmatprep.subr.bf16.mxu0 %v2273
    %2316 = vmatpush1.bf16.msra.mxu0 %v2272
    %2317 = vmatprep.subr.bf16.mxu0 %v2276
    %2318 = vmatpush1.bf16.msra.mxu0 %v2275
    %2319 = vmatprep.subr.bf16.mxu0 %v2279
    %2320 = vmatpush1.bf16.msra.mxu0 %v2278
    %2321 = vmatprep.subr.bf16.mxu0 0
    %2322 = vmatpush1.bf16.msra.mxu0 0
    %2323 = vmatprep.subr.bf16.mxu0 0
    %2324 = vmatpush1.bf16.msra.mxu0 0
    %2325 = vmatprep.subr.bf16.mxu0 0
    %2326 = vmatpush1.bf16.msra.mxu0 0
    %2327 = vmatprep.subr.bf16.mxu0 0
    %2328 = vmatpush1.bf16.msra.mxu0 0
    %2329 = vmatprep.subr.bf16.mxu0 0
    %2330 = vmatpush1.bf16.msra.mxu0 0
    %2331 = vmatprep.subr.bf16.mxu0 0
    %2332 = vmatpush1.bf16.msra.mxu0 0
    %2333 = vmatprep.subr.bf16.mxu0 0
    %2334 = vmatpush1.bf16.msra.mxu0 0
    %2335 = vmatprep.subr.bf16.mxu0 0
    %2336 = vmatpush1.bf16.msra.mxu0 0
    %2337 = vmatprep.mubr.bf16.mxu0 0
    %2338 = vmatmul.mubr.bf16.gmra.mrb[0].mxu0 %v2158
    %v2339 = vpop.f32.mrb[0].mxu0
    %v2340 = vadd.f32 %v2165, %v2339
    %v2341 = vpop.f32.mrb[0].mxu0
    %v2342 = vadd.f32 %v2169, %v2341
    %v2343 = vpop.f32.mrb[0].mxu0
    %v2344 = vpop.f32.mrb[0].mxu0
    %2345 = vdwg.mxu0
    %2346 = vmatprep.subr.bf16.mxu0 0
    %2347 = vmatpush1.bf16.msra.mxu0 %v2259
    %2348 = vmatprep.subr.bf16.mxu0 0
    %2349 = vmatpush1.bf16.msra.mxu0 %v2262
    %2350 = vmatprep.subr.bf16.mxu0 0
    %2351 = vmatpush1.bf16.msra.mxu0 %v2265
    %2352 = vmatprep.subr.bf16.mxu0 0
    %2353 = vmatpush1.bf16.msra.mxu0 %v2268
    %2354 = vmatprep.subr.bf16.mxu0 0
    %2355 = vmatpush1.bf16.msra.mxu0 %v2271
    %2356 = vmatprep.subr.bf16.mxu0 0
    %2357 = vmatpush1.bf16.msra.mxu0 %v2274
    %2358 = vmatprep.subr.bf16.mxu0 0
    %2359 = vmatpush1.bf16.msra.mxu0 %v2277
    %2360 = vmatprep.subr.bf16.mxu0 0
    %2361 = vmatpush1.bf16.msra.mxu0 %v2280
    %2362 = vmatprep.subr.bf16.mxu0 0
    %2363 = vmatpush1.bf16.msra.mxu0 0
    %2364 = vmatprep.subr.bf16.mxu0 0
    %2365 = vmatpush1.bf16.msra.mxu0 0
    %2366 = vmatprep.subr.bf16.mxu0 0
    %2367 = vmatpush1.bf16.msra.mxu0 0
    %2368 = vmatprep.subr.bf16.mxu0 0
    %2369 = vmatpush1.bf16.msra.mxu0 0
    %2370 = vmatprep.subr.bf16.mxu0 0
    %2371 = vmatpush1.bf16.msra.mxu0 0
    %2372 = vmatprep.subr.bf16.mxu0 0
    %2373 = vmatpush1.bf16.msra.mxu0 0
    %2374 = vmatprep.subr.bf16.mxu0 0
    %2375 = vmatpush1.bf16.msra.mxu0 0
    %2376 = vmatprep.subr.bf16.mxu0 0
    %2377 = vmatpush1.bf16.msra.mxu0 0
    %2378 = vmatprep.mubr.bf16.mxu0 0
    %2379 = vmatmul.mubr.bf16.gmra.mrb[0].mxu0 %v2158
    %v2380 = vpop.f32.mrb[0].mxu0
    %v2381 = vadd.f32 %v2173, %v2380
    %v2382 = vpop.f32.mrb[0].mxu0
    %v2383 = vpop.f32.mrb[0].mxu0
    %v2384 = vpop.f32.mrb[0].mxu0
    %2385 = vdwg.mxu0
    %v2386 = vmul.f32 %v2340, 0.17677669
    %v2387 = vpack.c.bf16 %v2386, %v2386
    %v2388 = vpack.c.bf16 %v2342, %v2342
    %v2389 = vpack.c.bf16 %v2381, %v2381
    %v2391 = vsel %vm279, %v2387, 0
    %v2394 = vsel %vm279, %v2388, 0
    %2396 = vmatprep.subr.bf16.mxu0 0
    %2397 = vmatpush1.bf16.xpose.msra.mxu0 %v2394
    %2398 = vmatprep.subr.bf16.mxu0 0
    %2399 = vmatpush1.bf16.xpose.msra.mxu0 0
    %2400 = vmatprep.subr.bf16.mxu0 0
    %2401 = vmatpush1.bf16.xpose.msra.mxu0 0
    %2402 = vmatprep.subr.bf16.mxu0 0
    %2403 = vmatpush1.bf16.xpose.msra.mxu0 0
    %2404 = vmatprep.subr.bf16.mxu0 0
    %2405 = vmatpush1.bf16.xpose.msra.mxu0 0
    %2406 = vmatprep.subr.bf16.mxu0 0
    %2407 = vmatpush1.bf16.xpose.msra.mxu0 0
    %2408 = vmatprep.subr.bf16.mxu0 0
    %2409 = vmatpush1.bf16.xpose.msra.mxu0 0
    %2410 = vmatprep.subr.bf16.mxu0 0
    %2411 = vmatpush1.bf16.xpose.msra.mxu0 0
    %2412 = vmatprep.subr.bf16.mxu0 0
    %2413 = vmatpush1.bf16.xpose.msra.mxu0 0
    %2414 = vmatprep.subr.bf16.mxu0 0
    %2415 = vmatpush1.bf16.xpose.msra.mxu0 0
    %2416 = vmatprep.subr.bf16.mxu0 0
    %2417 = vmatpush1.bf16.xpose.msra.mxu0 0
    %2418 = vmatprep.subr.bf16.mxu0 0
    %2419 = vmatpush1.bf16.xpose.msra.mxu0 0
    %2420 = vmatprep.subr.bf16.mxu0 0
    %2421 = vmatpush1.bf16.xpose.msra.mxu0 0
    %2422 = vmatprep.subr.bf16.mxu0 0
    %2423 = vmatpush1.bf16.xpose.msra.mxu0 0
    %2424 = vmatprep.subr.bf16.mxu0 0
    %2425 = vmatpush1.bf16.xpose.msra.mxu0 0
    %2426 = vmatprep.subr.bf16.mxu0 0
    %2427 = vmatpush1.bf16.xpose.msra.mxu0 0
    %2428 = vmatprep.mubr.bf16.mxu0 0
    %2429 = vmatmul.mubr.bf16.gmra.mrb[0].mxu0 %v2391
    %v2430 = vpop.f32.mrb[0].mxu0
    %v2431 = vadd.f32 0.0, %v2430
    %v2432 = vpop.f32.mrb[0].mxu0
    %v2433 = vpop.f32.mrb[0].mxu0
    %v2434 = vpop.f32.mrb[0].mxu0
    %2435 = vdwg.mxu0
    %v2436 = vsel %vm830, %v2431, -inf
    %2437 = vmax.xlane.f32.xlu0 %v2436
    %v2438 = vpop.xlane.xlu0 %2437
    %v2439 = vsub.f32 %v2431, %v2438
    %v2440 = vmul.f32 %v2439, 1.442695
    %v2441 = vpow.pop %v2440
    %v2442 = vsel %vm830, %v2441, 0.0
    %2443 = vadd.xlane.f32.xlu0 %v2442
    %v2444 = vpop.xlane.xlu0 %2443
    %v2445 = vrcp.pop %v2444
    %v2446 = vmul.f32 %v2441, %v2445
    %v2447 = vpack.c.bf16 %v2446, %v2446
    %v2449 = vsel %vm843, %v2447, 0
    %v2452 = vsel %vm207, %v2389, 0
    %2454 = vmatprep.subr.bf16.mxu0 0
    %2455 = vmatpush1.bf16.msra.mxu0 %v2452
    %2456 = vmatprep.subr.bf16.mxu0 0
    %2457 = vmatpush1.bf16.msra.mxu0 0
    %2458 = vmatprep.subr.bf16.mxu0 0
    %2459 = vmatpush1.bf16.msra.mxu0 0
    %2460 = vmatprep.subr.bf16.mxu0 0
    %2461 = vmatpush1.bf16.msra.mxu0 0
    %2462 = vmatprep.subr.bf16.mxu0 0
    %2463 = vmatpush1.bf16.msra.mxu0 0
    %2464 = vmatprep.subr.bf16.mxu0 0
    %2465 = vmatpush1.bf16.msra.mxu0 0
    %2466 = vmatprep.subr.bf16.mxu0 0
    %2467 = vmatpush1.bf16.msra.mxu0 0
    %2468 = vmatprep.subr.bf16.mxu0 0
    %2469 = vmatpush1.bf16.msra.mxu0 0
    %2470 = vmatprep.subr.bf16.mxu0 0
    %2471 = vmatpush1.bf16.msra.mxu0 0
    %2472 = vmatprep.subr.bf16.mxu0 0
    %2473 = vmatpush1.bf16.msra.mxu0 0
    %2474 = vmatprep.subr.bf16.mxu0 0
    %2475 = vmatpush1.bf16.msra.mxu0 0
    %2476 = vmatprep.subr.bf16.mxu0 0
    %2477 = vmatpush1.bf16.msra.mxu0 0
    %2478 = vmatprep.subr.bf16.mxu0 0
    %2479 = vmatpush1.bf16.msra.mxu0 0
    %2480 = vmatprep.subr.bf16.mxu0 0
    %2481 = vmatpush1.bf16.msra.mxu0 0
    %2482 = vmatprep.subr.bf16.mxu0 0
    %2483 = vmatpush1.bf16.msra.mxu0 0
    %2484 = vmatprep.subr.bf16.mxu0 0
    %2485 = vmatpush1.bf16.msra.mxu0 0
    %2486 = vmatprep.mubr.bf16.mxu0 0
    %2487 = vmatmul.mubr.bf16.gmra.mrb[0].mxu0 %v2449
    %v2488 = vpop.f32.mrb[0].mxu0
    %v2489 = vadd.f32 0.0, %v2488
    %v2490 = vpop.f32.mrb[0].mxu0
    %v2491 = vpop.f32.mrb[0].mxu0
    %v2492 = vpop.f32.mrb[0].mxu0
    %2493 = vdwg.mxu0
    %v2494 = vpack.c.bf16 %v2489, %v2489
    %2496 = vrot.lane.b32.xlu0 %v2387, 96
    %v2497 = vpop.permute.xlu0 %2496
    %2499 = vrot.lane.b32.xlu0 %v2388, 96
    %v2500 = vpop.permute.xlu0 %2499
    %v2502 = vsel %vm279, %v2497, 0
    %v2505 = vsel %vm279, %v2500, 0
    %2507 = vmatprep.subr.bf16.mxu0 0
    %2508 = vmatpush1.bf16.xpose.msra.mxu0 %v2505
    %2509 = vmatprep.subr.bf16.mxu0 0
    %2510 = vmatpush1.bf16.xpose.msra.mxu0 0
    %2511 = vmatprep.subr.bf16.mxu0 0
    %2512 = vmatpush1.bf16.xpose.msra.mxu0 0
    %2513 = vmatprep.subr.bf16.mxu0 0
    %2514 = vmatpush1.bf16.xpose.msra.mxu0 0
    %2515 = vmatprep.subr.bf16.mxu0 0
    %2516 = vmatpush1.bf16.xpose.msra.mxu0 0
    %2517 = vmatprep.subr.bf16.mxu0 0
    %2518 = vmatpush1.bf16.xpose.msra.mxu0 0
    %2519 = vmatprep.subr.bf16.mxu0 0
    %2520 = vmatpush1.bf16.xpose.msra.mxu0 0
    %2521 = vmatprep.subr.bf16.mxu0 0
    %2522 = vmatpush1.bf16.xpose.msra.mxu0 0
    %2523 = vmatprep.subr.bf16.mxu0 0
    %2524 = vmatpush1.bf16.xpose.msra.mxu0 0
    %2525 = vmatprep.subr.bf16.mxu0 0
    %2526 = vmatpush1.bf16.xpose.msra.mxu0 0
    %2527 = vmatprep.subr.bf16.mxu0 0
    %2528 = vmatpush1.bf16.xpose.msra.mxu0 0
    %2529 = vmatprep.subr.bf16.mxu0 0
    %2530 = vmatpush1.bf16.xpose.msra.mxu0 0
    %2531 = vmatprep.subr.bf16.mxu0 0
    %2532 = vmatpush1.bf16.xpose.msra.mxu0 0
    %2533 = vmatprep.subr.bf16.mxu0 0
    %2534 = vmatpush1.bf16.xpose.msra.mxu0 0
    %2535 = vmatprep.subr.bf16.mxu0 0
    %2536 = vmatpush1.bf16.xpose.msra.mxu0 0
    %2537 = vmatprep.subr.bf16.mxu0 0
    %2538 = vmatpush1.bf16.xpose.msra.mxu0 0
    %2539 = vmatprep.mubr.bf16.mxu0 0
    %2540 = vmatmul.mubr.bf16.gmra.mrb[0].mxu0 %v2502
    %v2541 = vpop.f32.mrb[0].mxu0
    %v2542 = vadd.f32 0.0, %v2541
    %v2543 = vpop.f32.mrb[0].mxu0
    %v2544 = vpop.f32.mrb[0].mxu0
    %v2545 = vpop.f32.mrb[0].mxu0
    %2546 = vdwg.mxu0
    %v2547 = vsel %vm830, %v2542, -inf
    %2548 = vmax.xlane.f32.xlu0 %v2547
    %v2549 = vpop.xlane.xlu0 %2548
    %v2550 = vsub.f32 %v2542, %v2549
    %v2551 = vmul.f32 %v2550, 1.442695
    %v2552 = vpow.pop %v2551
    %v2553 = vsel %vm830, %v2552, 0.0
    %2554 = vadd.xlane.f32.xlu0 %v2553
    %v2555 = vpop.xlane.xlu0 %2554
    %v2556 = vrcp.pop %v2555
    %v2557 = vmul.f32 %v2552, %v2556
    %v2558 = vpack.c.bf16 %v2557, %v2557
    %2560 = vrot.lane.b32.xlu0 %v2389, 96
    %v2561 = vpop.permute.xlu0 %2560
    %v2563 = vsel %vm843, %v2558, 0
    %v2566 = vsel %vm207, %v2561, 0
    %2568 = vmatprep.subr.bf16.mxu0 0
    %2569 = vmatpush1.bf16.msra.mxu0 %v2566
    %2570 = vmatprep.subr.bf16.mxu0 0
    %2571 = vmatpush1.bf16.msra.mxu0 0
    %2572 = vmatprep.subr.bf16.mxu0 0
    %2573 = vmatpush1.bf16.msra.mxu0 0
    %2574 = vmatprep.subr.bf16.mxu0 0
    %2575 = vmatpush1.bf16.msra.mxu0 0
    %2576 = vmatprep.subr.bf16.mxu0 0
    %2577 = vmatpush1.bf16.msra.mxu0 0
    %2578 = vmatprep.subr.bf16.mxu0 0
    %2579 = vmatpush1.bf16.msra.mxu0 0
    %2580 = vmatprep.subr.bf16.mxu0 0
    %2581 = vmatpush1.bf16.msra.mxu0 0
    %2582 = vmatprep.subr.bf16.mxu0 0
    %2583 = vmatpush1.bf16.msra.mxu0 0
    %2584 = vmatprep.subr.bf16.mxu0 0
    %2585 = vmatpush1.bf16.msra.mxu0 0
    %2586 = vmatprep.subr.bf16.mxu0 0
    %2587 = vmatpush1.bf16.msra.mxu0 0
    %2588 = vmatprep.subr.bf16.mxu0 0
    %2589 = vmatpush1.bf16.msra.mxu0 0
    %2590 = vmatprep.subr.bf16.mxu0 0
    %2591 = vmatpush1.bf16.msra.mxu0 0
    %2592 = vmatprep.subr.bf16.mxu0 0
    %2593 = vmatpush1.bf16.msra.mxu0 0
    %2594 = vmatprep.subr.bf16.mxu0 0
    %2595 = vmatpush1.bf16.msra.mxu0 0
    %2596 = vmatprep.subr.bf16.mxu0 0
    %2597 = vmatpush1.bf16.msra.mxu0 0
    %2598 = vmatprep.subr.bf16.mxu0 0
    %2599 = vmatpush1.bf16.msra.mxu0 0
    %2600 = vmatprep.mubr.bf16.mxu0 0
    %2601 = vmatmul.mubr.bf16.gmra.mrb[0].mxu0 %v2563
    %v2602 = vpop.f32.mrb[0].mxu0
    %v2603 = vadd.f32 0.0, %v2602
    %v2604 = vpop.f32.mrb[0].mxu0
    %v2605 = vpop.f32.mrb[0].mxu0
    %v2606 = vpop.f32.mrb[0].mxu0
    %2607 = vdwg.mxu0
    %v2608 = vpack.c.bf16 %v2603, %v2603
    %v2613 = vunpack.c.l.b16 %v2048
    %v2614 = vunpack.c.l.b16 %v2049
    %v2615 = vunpack.c.l.b16 %v2050
    %v2616 = vunpack.c.l.b16 %v2051
    %v2617 = vpack.c.b16 %v2614, %v2613
    %v2618 = vpack.c.b16 %v2616, %v2615
    %v2622 = vsel %vm279, %v2608, 0
    %2624 = vmatprep.subr.bf16.mxu0 0
    %2625 = vmatpush1.bf16.msra.mxu0 %v2617
    %2626 = vmatprep.subr.bf16.mxu0 0
    %2627 = vmatpush1.bf16.msra.mxu0 %v2618
    %2628 = vmatprep.subr.bf16.mxu0 0
    %2629 = vmatpush1.bf16.msra.mxu0 0
    %2630 = vmatprep.subr.bf16.mxu0 0
    %2631 = vmatpush1.bf16.msra.mxu0 0
    %2632 = vmatprep.subr.bf16.mxu0 0
    %2633 = vmatpush1.bf16.msra.mxu0 0
    %2634 = vmatprep.subr.bf16.mxu0 0
    %2635 = vmatpush1.bf16.msra.mxu0 0
    %2636 = vmatprep.subr.bf16.mxu0 0
    %2637 = vmatpush1.bf16.msra.mxu0 0
    %2638 = vmatprep.subr.bf16.mxu0 0
    %2639 = vmatpush1.bf16.msra.mxu0 0
    %2640 = vmatprep.subr.bf16.mxu0 0
    %2641 = vmatpush1.bf16.msra.mxu0 0
    %2642 = vmatprep.subr.bf16.mxu0 0
    %2643 = vmatpush1.bf16.msra.mxu0 0
    %2644 = vmatprep.subr.bf16.mxu0 0
    %2645 = vmatpush1.bf16.msra.mxu0 0
    %2646 = vmatprep.subr.bf16.mxu0 0
    %2647 = vmatpush1.bf16.msra.mxu0 0
    %2648 = vmatprep.subr.bf16.mxu0 0
    %2649 = vmatpush1.bf16.msra.mxu0 0
    %2650 = vmatprep.subr.bf16.mxu0 0
    %2651 = vmatpush1.bf16.msra.mxu0 0
    %2652 = vmatprep.subr.bf16.mxu0 0
    %2653 = vmatpush1.bf16.msra.mxu0 0
    %2654 = vmatprep.subr.bf16.mxu0 0
    %2655 = vmatpush1.bf16.msra.mxu0 0
    %2656 = vmatprep.mubr.bf16.mxu0 0
    %2657 = vmatmul.mubr.bf16.gmra.mrb[0].mxu0 %v2622
    %v2658 = vpop.f32.mrb[0].mxu0
    %v2659 = vadd.f32 0.0, %v2658
    %v2660 = vpop.f32.mrb[0].mxu0
    %v2661 = vpop.f32.mrb[0].mxu0
    %v2662 = vpop.f32.mrb[0].mxu0
    %2663 = vdwg.mxu0
    %v2668 = vunpack.c.l.b16 %v2044
    %v2669 = vunpack.c.l.b16 %v2045
    %v2670 = vunpack.c.l.b16 %v2046
    %v2671 = vunpack.c.l.b16 %v2047
    %v2672 = vpack.c.b16 %v2669, %v2668
    %v2673 = vpack.c.b16 %v2671, %v2670
    %v2677 = vsel %vm279, %v2494, 0
    %2679 = vmatprep.subr.bf16.mxu0 0
    %2680 = vmatpush1.bf16.msra.mxu0 %v2672
    %2681 = vmatprep.subr.bf16.mxu0 0
    %2682 = vmatpush1.bf16.msra.mxu0 %v2673
    %2683 = vmatprep.subr.bf16.mxu0 0
    %2684 = vmatpush1.bf16.msra.mxu0 0
    %2685 = vmatprep.subr.bf16.mxu0 0
    %2686 = vmatpush1.bf16.msra.mxu0 0
    %2687 = vmatprep.subr.bf16.mxu0 0
    %2688 = vmatpush1.bf16.msra.mxu0 0
    %2689 = vmatprep.subr.bf16.mxu0 0
    %2690 = vmatpush1.bf16.msra.mxu0 0
    %2691 = vmatprep.subr.bf16.mxu0 0
    %2692 = vmatpush1.bf16.msra.mxu0 0
    %2693 = vmatprep.subr.bf16.mxu0 0
    %2694 = vmatpush1.bf16.msra.mxu0 0
    %2695 = vmatprep.subr.bf16.mxu0 0
    %2696 = vmatpush1.bf16.msra.mxu0 0
    %2697 = vmatprep.subr.bf16.mxu0 0
    %2698 = vmatpush1.bf16.msra.mxu0 0
    %2699 = vmatprep.subr.bf16.mxu0 0
    %2700 = vmatpush1.bf16.msra.mxu0 0
    %2701 = vmatprep.subr.bf16.mxu0 0
    %2702 = vmatpush1.bf16.msra.mxu0 0
    %2703 = vmatprep.subr.bf16.mxu0 0
    %2704 = vmatpush1.bf16.msra.mxu0 0
    %2705 = vmatprep.subr.bf16.mxu0 0
    %2706 = vmatpush1.bf16.msra.mxu0 0
    %2707 = vmatprep.subr.bf16.mxu0 0
    %2708 = vmatpush1.bf16.msra.mxu0 0
    %2709 = vmatprep.subr.bf16.mxu0 0
    %2710 = vmatpush1.bf16.msra.mxu0 0
    %2711 = vmatprep.mubr.bf16.mxu0 0
    %2712 = vmatmul.mubr.bf16.gmra.mrb[0].mxu0 %v2677
    %v2713 = vpop.f32.mrb[0].mxu0
    %v2714 = vadd.f32 %v2659, %v2713
    %v2715 = vpop.f32.mrb[0].mxu0
    %v2716 = vpop.f32.mrb[0].mxu0
    %v2717 = vpop.f32.mrb[0].mxu0
    %2718 = vdwg.mxu0
    %2719 = vrot.lane.b32.xlu0 %v2387, 64
    %v2720 = vpop.permute.xlu0 %2719
    %2721 = vrot.lane.b32.xlu0 %v2388, 64
    %v2722 = vpop.permute.xlu0 %2721
    %v2724 = vsel %vm279, %v2720, 0
    %v2727 = vsel %vm279, %v2722, 0
    %2729 = vmatprep.subr.bf16.mxu0 0
    %2730 = vmatpush1.bf16.xpose.msra.mxu0 %v2727
    %2731 = vmatprep.subr.bf16.mxu0 0
    %2732 = vmatpush1.bf16.xpose.msra.mxu0 0
    %2733 = vmatprep.subr.bf16.mxu0 0
    %2734 = vmatpush1.bf16.xpose.msra.mxu0 0
    %2735 = vmatprep.subr.bf16.mxu0 0
    %2736 = vmatpush1.bf16.xpose.msra.mxu0 0
    %2737 = vmatprep.subr.bf16.mxu0 0
    %2738 = vmatpush1.bf16.xpose.msra.mxu0 0
    %2739 = vmatprep.subr.bf16.mxu0 0
    %2740 = vmatpush1.bf16.xpose.msra.mxu0 0
    %2741 = vmatprep.subr.bf16.mxu0 0
    %2742 = vmatpush1.bf16.xpose.msra.mxu0 0
    %2743 = vmatprep.subr.bf16.mxu0 0
    %2744 = vmatpush1.bf16.xpose.msra.mxu0 0
    %2745 = vmatprep.subr.bf16.mxu0 0
    %2746 = vmatpush1.bf16.xpose.msra.mxu0 0
    %2747 = vmatprep.subr.bf16.mxu0 0
    %2748 = vmatpush1.bf16.xpose.msra.mxu0 0
    %2749 = vmatprep.subr.bf16.mxu0 0
    %2750 = vmatpush1.bf16.xpose.msra.mxu0 0
    %2751 = vmatprep.subr.bf16.mxu0 0
    %2752 = vmatpush1.bf16.xpose.msra.mxu0 0
    %2753 = vmatprep.subr.bf16.mxu0 0
    %2754 = vmatpush1.bf16.xpose.msra.mxu0 0
    %2755 = vmatprep.subr.bf16.mxu0 0
    %2756 = vmatpush1.bf16.xpose.msra.mxu0 0
    %2757 = vmatprep.subr.bf16.mxu0 0
    %2758 = vmatpush1.bf16.xpose.msra.mxu0 0
    %2759 = vmatprep.subr.bf16.mxu0 0
    %2760 = vmatpush1.bf16.xpose.msra.mxu0 0
    %2761 = vmatprep.mubr.bf16.mxu0 0
    %2762 = vmatmul.mubr.bf16.gmra.mrb[0].mxu0 %v2724
    %v2763 = vpop.f32.mrb[0].mxu0
    %v2764 = vadd.f32 0.0, %v2763
    %v2765 = vpop.f32.mrb[0].mxu0
    %v2766 = vpop.f32.mrb[0].mxu0
    %v2767 = vpop.f32.mrb[0].mxu0
    %2768 = vdwg.mxu0
    %v2769 = vsel %vm830, %v2764, -inf
    %2770 = vmax.xlane.f32.xlu0 %v2769
    %v2771 = vpop.xlane.xlu0 %2770
    %v2772 = vsub.f32 %v2764, %v2771
    %v2773 = vmul.f32 %v2772, 1.442695
    %v2774 = vpow.pop %v2773
    %v2775 = vsel %vm830, %v2774, 0.0
    %2776 = vadd.xlane.f32.xlu0 %v2775
    %v2777 = vpop.xlane.xlu0 %2776
    %v2778 = vrcp.pop %v2777
    %v2779 = vmul.f32 %v2774, %v2778
    %v2780 = vpack.c.bf16 %v2779, %v2779
    %2781 = vrot.lane.b32.xlu0 %v2389, 64
    %v2782 = vpop.permute.xlu0 %2781
    %v2784 = vsel %vm843, %v2780, 0
    %v2787 = vsel %vm207, %v2782, 0
    %2789 = vmatprep.subr.bf16.mxu0 0
    %2790 = vmatpush1.bf16.msra.mxu0 %v2787
    %2791 = vmatprep.subr.bf16.mxu0 0
    %2792 = vmatpush1.bf16.msra.mxu0 0
    %2793 = vmatprep.subr.bf16.mxu0 0
    %2794 = vmatpush1.bf16.msra.mxu0 0
    %2795 = vmatprep.subr.bf16.mxu0 0
    %2796 = vmatpush1.bf16.msra.mxu0 0
    %2797 = vmatprep.subr.bf16.mxu0 0
    %2798 = vmatpush1.bf16.msra.mxu0 0
    %2799 = vmatprep.subr.bf16.mxu0 0
    %2800 = vmatpush1.bf16.msra.mxu0 0
    %2801 = vmatprep.subr.bf16.mxu0 0
    %2802 = vmatpush1.bf16.msra.mxu0 0
    %2803 = vmatprep.subr.bf16.mxu0 0
    %2804 = vmatpush1.bf16.msra.mxu0 0
    %2805 = vmatprep.subr.bf16.mxu0 0
    %2806 = vmatpush1.bf16.msra.mxu0 0
    %2807 = vmatprep.subr.bf16.mxu0 0
    %2808 = vmatpush1.bf16.msra.mxu0 0
    %2809 = vmatprep.subr.bf16.mxu0 0
    %2810 = vmatpush1.bf16.msra.mxu0 0
    %2811 = vmatprep.subr.bf16.mxu0 0
    %2812 = vmatpush1.bf16.msra.mxu0 0
    %2813 = vmatprep.subr.bf16.mxu0 0
    %2814 = vmatpush1.bf16.msra.mxu0 0
    %2815 = vmatprep.subr.bf16.mxu0 0
    %2816 = vmatpush1.bf16.msra.mxu0 0
    %2817 = vmatprep.subr.bf16.mxu0 0
    %2818 = vmatpush1.bf16.msra.mxu0 0
    %2819 = vmatprep.subr.bf16.mxu0 0
    %2820 = vmatpush1.bf16.msra.mxu0 0
    %2821 = vmatprep.mubr.bf16.mxu0 0
    %2822 = vmatmul.mubr.bf16.gmra.mrb[0].mxu0 %v2784
    %v2823 = vpop.f32.mrb[0].mxu0
    %v2824 = vadd.f32 0.0, %v2823
    %v2825 = vpop.f32.mrb[0].mxu0
    %v2826 = vpop.f32.mrb[0].mxu0
    %v2827 = vpop.f32.mrb[0].mxu0
    %2828 = vdwg.mxu0
    %v2829 = vpack.c.bf16 %v2824, %v2824
    %v2834 = vunpack.c.l.b16 %v2052
    %v2835 = vunpack.c.l.b16 %v2053
    %v2836 = vunpack.c.l.b16 %v2054
    %v2837 = vunpack.c.l.b16 %v2055
    %v2838 = vpack.c.b16 %v2835, %v2834
    %v2839 = vpack.c.b16 %v2837, %v2836
    %v2843 = vsel %vm279, %v2829, 0
    %2845 = vmatprep.subr.bf16.mxu0 0
    %2846 = vmatpush1.bf16.msra.mxu0 %v2838
    %2847 = vmatprep.subr.bf16.mxu0 0
    %2848 = vmatpush1.bf16.msra.mxu0 %v2839
    %2849 = vmatprep.subr.bf16.mxu0 0
    %2850 = vmatpush1.bf16.msra.mxu0 0
    %2851 = vmatprep.subr.bf16.mxu0 0
    %2852 = vmatpush1.bf16.msra.mxu0 0
    %2853 = vmatprep.subr.bf16.mxu0 0
    %2854 = vmatpush1.bf16.msra.mxu0 0
    %2855 = vmatprep.subr.bf16.mxu0 0
    %2856 = vmatpush1.bf16.msra.mxu0 0
    %2857 = vmatprep.subr.bf16.mxu0 0
    %2858 = vmatpush1.bf16.msra.mxu0 0
    %2859 = vmatprep.subr.bf16.mxu0 0
    %2860 = vmatpush1.bf16.msra.mxu0 0
    %2861 = vmatprep.subr.bf16.mxu0 0
    %2862 = vmatpush1.bf16.msra.mxu0 0
    %2863 = vmatprep.subr.bf16.mxu0 0
    %2864 = vmatpush1.bf16.msra.mxu0 0
    %2865 = vmatprep.subr.bf16.mxu0 0
    %2866 = vmatpush1.bf16.msra.mxu0 0
    %2867 = vmatprep.subr.bf16.mxu0 0
    %2868 = vmatpush1.bf16.msra.mxu0 0
    %2869 = vmatprep.subr.bf16.mxu0 0
    %2870 = vmatpush1.bf16.msra.mxu0 0
    %2871 = vmatprep.subr.bf16.mxu0 0
    %2872 = vmatpush1.bf16.msra.mxu0 0
    %2873 = vmatprep.subr.bf16.mxu0 0
    %2874 = vmatpush1.bf16.msra.mxu0 0
    %2875 = vmatprep.subr.bf16.mxu0 0
    %2876 = vmatpush1.bf16.msra.mxu0 0
    %2877 = vmatprep.mubr.bf16.mxu0 0
    %2878 = vmatmul.mubr.bf16.gmra.mrb[0].mxu0 %v2843
    %v2879 = vpop.f32.mrb[0].mxu0
    %v2880 = vadd.f32 0.0, %v2879
    %v2881 = vpop.f32.mrb[0].mxu0
    %v2882 = vpop.f32.mrb[0].mxu0
    %v2883 = vpop.f32.mrb[0].mxu0
    %2884 = vdwg.mxu0
    %v2885 = vadd.f32 %v2714, %v2880
    %2886 = vrot.lane.b32.xlu0 %v2387, 32
    %v2887 = vpop.permute.xlu0 %2886
    %2888 = vrot.lane.b32.xlu0 %v2388, 32
    %v2889 = vpop.permute.xlu0 %2888
    %v2891 = vsel %vm279, %v2887, 0
    %v2894 = vsel %vm279, %v2889, 0
    %2896 = vmatprep.subr.bf16.mxu0 0
    %2897 = vmatpush1.bf16.xpose.msra.mxu0 %v2894
    %2898 = vmatprep.subr.bf16.mxu0 0
    %2899 = vmatpush1.bf16.xpose.msra.mxu0 0
    %2900 = vmatprep.subr.bf16.mxu0 0
    %2901 = vmatpush1.bf16.xpose.msra.mxu0 0
    %2902 = vmatprep.subr.bf16.mxu0 0
    %2903 = vmatpush1.bf16.xpose.msra.mxu0 0
    %2904 = vmatprep.subr.bf16.mxu0 0
    %2905 = vmatpush1.bf16.xpose.msra.mxu0 0
    %2906 = vmatprep.subr.bf16.mxu0 0
    %2907 = vmatpush1.bf16.xpose.msra.mxu0 0
    %2908 = vmatprep.subr.bf16.mxu0 0
    %2909 = vmatpush1.bf16.xpose.msra.mxu0 0
    %2910 = vmatprep.subr.bf16.mxu0 0
    %2911 = vmatpush1.bf16.xpose.msra.mxu0 0
    %2912 = vmatprep.subr.bf16.mxu0 0
    %2913 = vmatpush1.bf16.xpose.msra.mxu0 0
    %2914 = vmatprep.subr.bf16.mxu0 0
    %2915 = vmatpush1.bf16.xpose.msra.mxu0 0
    %2916 = vmatprep.subr.bf16.mxu0 0
    %2917 = vmatpush1.bf16.xpose.msra.mxu0 0
    %2918 = vmatprep.subr.bf16.mxu0 0
    %2919 = vmatpush1.bf16.xpose.msra.mxu0 0
    %2920 = vmatprep.subr.bf16.mxu0 0
    %2921 = vmatpush1.bf16.xpose.msra.mxu0 0
    %2922 = vmatprep.subr.bf16.mxu0 0
    %2923 = vmatpush1.bf16.xpose.msra.mxu0 0
    %2924 = vmatprep.subr.bf16.mxu0 0
    %2925 = vmatpush1.bf16.xpose.msra.mxu0 0
    %2926 = vmatprep.subr.bf16.mxu0 0
    %2927 = vmatpush1.bf16.xpose.msra.mxu0 0
    %2928 = vmatprep.mubr.bf16.mxu0 0
    %2929 = vmatmul.mubr.bf16.gmra.mrb[0].mxu0 %v2891
    %v2930 = vpop.f32.mrb[0].mxu0
    %v2931 = vadd.f32 0.0, %v2930
    %v2932 = vpop.f32.mrb[0].mxu0
    %v2933 = vpop.f32.mrb[0].mxu0
    %v2934 = vpop.f32.mrb[0].mxu0
    %2935 = vdwg.mxu0
    %v2936 = vsel %vm830, %v2931, -inf
    %2937 = vmax.xlane.f32.xlu0 %v2936
    %v2938 = vpop.xlane.xlu0 %2937
    %v2939 = vsub.f32 %v2931, %v2938
    %v2940 = vmul.f32 %v2939, 1.442695
    %v2941 = vpow.pop %v2940
    %v2942 = vsel %vm830, %v2941, 0.0
    %2943 = vadd.xlane.f32.xlu0 %v2942
    %v2944 = vpop.xlane.xlu0 %2943
    %v2945 = vrcp.pop %v2944
    %v2946 = vmul.f32 %v2941, %v2945
    %v2947 = vpack.c.bf16 %v2946, %v2946
    %2948 = vrot.lane.b32.xlu0 %v2389, 32
    %v2949 = vpop.permute.xlu0 %2948
    %v2951 = vsel %vm843, %v2947, 0
    %v2954 = vsel %vm207, %v2949, 0
    %2956 = vmatprep.subr.bf16.mxu0 0
    %2957 = vmatpush1.bf16.msra.mxu0 %v2954
    %2958 = vmatprep.subr.bf16.mxu0 0
    %2959 = vmatpush1.bf16.msra.mxu0 0
    %2960 = vmatprep.subr.bf16.mxu0 0
    %2961 = vmatpush1.bf16.msra.mxu0 0
    %2962 = vmatprep.subr.bf16.mxu0 0
    %2963 = vmatpush1.bf16.msra.mxu0 0
    %2964 = vmatprep.subr.bf16.mxu0 0
    %2965 = vmatpush1.bf16.msra.mxu0 0
    %2966 = vmatprep.subr.bf16.mxu0 0
    %2967 = vmatpush1.bf16.msra.mxu0 0
    %2968 = vmatprep.subr.bf16.mxu0 0
    %2969 = vmatpush1.bf16.msra.mxu0 0
    %2970 = vmatprep.subr.bf16.mxu0 0
    %2971 = vmatpush1.bf16.msra.mxu0 0
    %2972 = vmatprep.subr.bf16.mxu0 0
    %2973 = vmatpush1.bf16.msra.mxu0 0
    %2974 = vmatprep.subr.bf16.mxu0 0
    %2975 = vmatpush1.bf16.msra.mxu0 0
    %2976 = vmatprep.subr.bf16.mxu0 0
    %2977 = vmatpush1.bf16.msra.mxu0 0
    %2978 = vmatprep.subr.bf16.mxu0 0
    %2979 = vmatpush1.bf16.msra.mxu0 0
    %2980 = vmatprep.subr.bf16.mxu0 0
    %2981 = vmatpush1.bf16.msra.mxu0 0
    %2982 = vmatprep.subr.bf16.mxu0 0
    %2983 = vmatpush1.bf16.msra.mxu0 0
    %2984 = vmatprep.subr.bf16.mxu0 0
    %2985 = vmatpush1.bf16.msra.mxu0 0
    %2986 = vmatprep.subr.bf16.mxu0 0
    %2987 = vmatpush1.bf16.msra.mxu0 0
    %2988 = vmatprep.mubr.bf16.mxu0 0
    %2989 = vmatmul.mubr.bf16.gmra.mrb[0].mxu0 %v2951
    %v2990 = vpop.f32.mrb[0].mxu0
    %v2991 = vadd.f32 0.0, %v2990
    %v2992 = vpop.f32.mrb[0].mxu0
    %v2993 = vpop.f32.mrb[0].mxu0
    %v2994 = vpop.f32.mrb[0].mxu0
    %2995 = vdwg.mxu0
    %v2996 = vpack.c.bf16 %v2991, %v2991
    %v3001 = vunpack.c.l.b16 %v2056
    %v3002 = vunpack.c.l.b16 %v2057
    %v3003 = vunpack.c.l.b16 %v2058
    %v3004 = vunpack.c.l.b16 %v2059
    %v3005 = vpack.c.b16 %v3002, %v3001
    %v3006 = vpack.c.b16 %v3004, %v3003
    %v3010 = vsel %vm279, %v2996, 0
    %3012 = vmatprep.subr.bf16.mxu0 0
    %3013 = vmatpush1.bf16.msra.mxu0 %v3005
    %3014 = vmatprep.subr.bf16.mxu0 0
    %3015 = vmatpush1.bf16.msra.mxu0 %v3006
    %3016 = vmatprep.subr.bf16.mxu0 0
    %3017 = vmatpush1.bf16.msra.mxu0 0
    %3018 = vmatprep.subr.bf16.mxu0 0
    %3019 = vmatpush1.bf16.msra.mxu0 0
    %3020 = vmatprep.subr.bf16.mxu0 0
    %3021 = vmatpush1.bf16.msra.mxu0 0
    %3022 = vmatprep.subr.bf16.mxu0 0
    %3023 = vmatpush1.bf16.msra.mxu0 0
    %3024 = vmatprep.subr.bf16.mxu0 0
    %3025 = vmatpush1.bf16.msra.mxu0 0
    %3026 = vmatprep.subr.bf16.mxu0 0
    %3027 = vmatpush1.bf16.msra.mxu0 0
    %3028 = vmatprep.subr.bf16.mxu0 0
    %3029 = vmatpush1.bf16.msra.mxu0 0
    %3030 = vmatprep.subr.bf16.mxu0 0
    %3031 = vmatpush1.bf16.msra.mxu0 0
    %3032 = vmatprep.subr.bf16.mxu0 0
    %3033 = vmatpush1.bf16.msra.mxu0 0
    %3034 = vmatprep.subr.bf16.mxu0 0
    %3035 = vmatpush1.bf16.msra.mxu0 0
    %3036 = vmatprep.subr.bf16.mxu0 0
    %3037 = vmatpush1.bf16.msra.mxu0 0
    %3038 = vmatprep.subr.bf16.mxu0 0
    %3039 = vmatpush1.bf16.msra.mxu0 0
    %3040 = vmatprep.subr.bf16.mxu0 0
    %3041 = vmatpush1.bf16.msra.mxu0 0
    %3042 = vmatprep.subr.bf16.mxu0 0
    %3043 = vmatpush1.bf16.msra.mxu0 0
    %3044 = vmatprep.mubr.bf16.mxu0 0
    %3045 = vmatmul.mubr.bf16.gmra.mrb[0].mxu0 %v3010
    %v3046 = vpop.f32.mrb[0].mxu0
    %v3047 = vadd.f32 0.0, %v3046
    %v3048 = vpop.f32.mrb[0].mxu0
    %v3049 = vpop.f32.mrb[0].mxu0
    %v3050 = vpop.f32.mrb[0].mxu0
    %3051 = vdwg.mxu0
    %v3052 = vadd.f32 %v2885, %v3047
    %s3053 = scalar_lea.vmem %s10, 1
    %v3054 = vld [vmem:[%s3053] sm:$0x1]
    %v3056 = vlaneseq
    %v3057 = vshrl.u32 %v3056, 7
    %v3058 = vsub.s32 0, %v3057
    %v3059 = vrot.slane %v3054, %v3058
    %v3061 = vadd.f32 %v3052, %v3059
    %v3062 = vadd.f32 %v3061, %v3061
    %v3063 = vpack.c.bf16 %v3062, %v3062
    %s3064 = scalar_lea.vmem %s12, 4
    %v3065 = vld [vmem:[%s3064] sm:$0xf]
    %v3067 = vlaneseq
    %v3068 = vshrl.u32 %v3067, 7
    %v3069 = vsub.s32 0, %v3068
    %v3070 = vrot.slane %v3065, %v3069
    %v3071 = vlaneseq
    %v3072 = vshrl.u32 %v3071, 7
    %v3073 = vsub.s32 1, %v3072
    %v3074 = vrot.slane %v3065, %v3073
    %v3075 = vlaneseq
    %v3076 = vshrl.u32 %v3075, 7
    %v3077 = vsub.s32 2, %v3076
    %v3078 = vrot.slane %v3065, %v3077
    %v3079 = vlaneseq
    %v3080 = vshrl.u32 %v3079, 7
    %v3081 = vsub.s32 3, %v3080
    %v3082 = vrot.slane %v3065, %v3081
    %v3119 = vunpack.c.l.b16 %v2061
    %v3120 = vunpack.c.h.b16 %v2061
    %v3121 = vunpack.c.l.b16 %v2062
    %v3122 = vunpack.c.h.b16 %v2062
    %v3123 = vunpack.c.l.b16 %v2063
    %v3124 = vunpack.c.h.b16 %v2063
    %v3125 = vunpack.c.l.b16 %v2064
    %v3126 = vunpack.c.h.b16 %v2064
    %v3127 = vunpack.c.l.b16 %v2065
    %v3128 = vunpack.c.h.b16 %v2065
    %v3129 = vunpack.c.l.b16 %v2066
    %v3130 = vunpack.c.h.b16 %v2066
    %v3131 = vunpack.c.l.b16 %v2067
    %v3132 = vunpack.c.h.b16 %v2067
    %v3133 = vunpack.c.l.b16 %v2068
    %v3134 = vunpack.c.h.b16 %v2068
    %v3135 = vunpack.c.l.b16 %v2069
    %v3136 = vunpack.c.h.b16 %v2069
    %v3137 = vunpack.c.l.b16 %v2070
    %v3138 = vunpack.c.h.b16 %v2070
    %v3139 = vunpack.c.l.b16 %v2071
    %v3140 = vunpack.c.h.b16 %v2071
    %v3141 = vunpack.c.l.b16 %v2072
    %v3142 = vunpack.c.h.b16 %v2072
    %v3143 = vunpack.c.l.b16 %v2073
    %v3144 = vunpack.c.h.b16 %v2073
    %v3145 = vunpack.c.l.b16 %v2074
    %v3146 = vunpack.c.h.b16 %v2074
    %v3147 = vunpack.c.l.b16 %v2075
    %v3148 = vunpack.c.h.b16 %v2075
    %v3149 = vunpack.c.l.b16 %v2076
    %v3150 = vunpack.c.h.b16 %v2076
    %v3151 = vunpack.c.l.b16 %v2077
    %v3152 = vunpack.c.h.b16 %v2077
    %v3153 = vunpack.c.l.b16 %v2078
    %v3154 = vunpack.c.h.b16 %v2078
    %v3155 = vunpack.c.l.b16 %v2079
    %v3156 = vunpack.c.h.b16 %v2079
    %v3157 = vunpack.c.l.b16 %v2080
    %v3158 = vunpack.c.h.b16 %v2080
    %v3159 = vunpack.c.l.b16 %v2081
    %v3160 = vunpack.c.h.b16 %v2081
    %v3161 = vunpack.c.l.b16 %v2082
    %v3162 = vunpack.c.h.b16 %v2082
    %v3163 = vunpack.c.l.b16 %v2083
    %v3164 = vunpack.c.h.b16 %v2083
    %v3165 = vunpack.c.l.b16 %v2084
    %v3166 = vunpack.c.h.b16 %v2084
    %v3167 = vunpack.c.l.b16 %v2085
    %v3168 = vunpack.c.h.b16 %v2085
    %v3169 = vunpack.c.l.b16 %v2086
    %v3170 = vunpack.c.h.b16 %v2086
    %v3171 = vunpack.c.l.b16 %v2087
    %v3172 = vunpack.c.h.b16 %v2087
    %v3173 = vunpack.c.l.b16 %v2088
    %v3174 = vunpack.c.h.b16 %v2088
    %v3175 = vunpack.c.l.b16 %v2089
    %v3176 = vunpack.c.h.b16 %v2089
    %v3177 = vunpack.c.l.b16 %v2090
    %v3178 = vunpack.c.h.b16 %v2090
    %v3179 = vunpack.c.l.b16 %v2091
    %v3180 = vunpack.c.h.b16 %v2091
    %v3181 = vunpack.c.l.b16 %v2092
    %v3182 = vunpack.c.h.b16 %v2092
    %v3183 = vpack.c.b16 %v3123, %v3119
    %v3184 = vpack.c.b16 %v3124, %v3120
    %v3185 = vpack.c.b16 %v3125, %v3121
    %v3186 = vpack.c.b16 %v3126, %v3122
    %v3187 = vpack.c.b16 %v3131, %v3127
    %v3188 = vpack.c.b16 %v3132, %v3128
    %v3189 = vpack.c.b16 %v3133, %v3129
    %v3190 = vpack.c.b16 %v3134, %v3130
    %v3191 = vpack.c.b16 %v3139, %v3135
    %v3192 = vpack.c.b16 %v3140, %v3136
    %v3193 = vpack.c.b16 %v3141, %v3137
    %v3194 = vpack.c.b16 %v3142, %v3138
    %v3195 = vpack.c.b16 %v3147, %v3143
    %v3196 = vpack.c.b16 %v3148, %v3144
    %v3197 = vpack.c.b16 %v3149, %v3145
    %v3198 = vpack.c.b16 %v3150, %v3146
    %v3199 = vpack.c.b16 %v3155, %v3151
    %v3200 = vpack.c.b16 %v3156, %v3152
    %v3201 = vpack.c.b16 %v3157, %v3153
    %v3202 = vpack.c.b16 %v3158, %v3154
    %v3203 = vpack.c.b16 %v3163, %v3159
    %v3204 = vpack.c.b16 %v3164, %v3160
    %v3205 = vpack.c.b16 %v3165, %v3161
    %v3206 = vpack.c.b16 %v3166, %v3162
    %v3207 = vpack.c.b16 %v3171, %v3167
    %v3208 = vpack.c.b16 %v3172, %v3168
    %v3209 = vpack.c.b16 %v3173, %v3169
    %v3210 = vpack.c.b16 %v3174, %v3170
    %v3211 = vpack.c.b16 %v3179, %v3175
    %v3212 = vpack.c.b16 %v3180, %v3176
    %v3213 = vpack.c.b16 %v3181, %v3177
    %v3214 = vpack.c.b16 %v3182, %v3178
    %3247 = vmatprep.subr.bf16.mxu0 %v3184
    %3248 = vmatpush1.bf16.msra.mxu0 %v3183
    %3249 = vmatprep.subr.bf16.mxu0 %v3188
    %3250 = vmatpush1.bf16.msra.mxu0 %v3187
    %3251 = vmatprep.subr.bf16.mxu0 %v3192
    %3252 = vmatpush1.bf16.msra.mxu0 %v3191
    %3253 = vmatprep.subr.bf16.mxu0 %v3196
    %3254 = vmatpush1.bf16.msra.mxu0 %v3195
    %3255 = vmatprep.subr.bf16.mxu0 %v3200
    %3256 = vmatpush1.bf16.msra.mxu0 %v3199
    %3257 = vmatprep.subr.bf16.mxu0 %v3204
    %3258 = vmatpush1.bf16.msra.mxu0 %v3203
    %3259 = vmatprep.subr.bf16.mxu0 %v3208
    %3260 = vmatpush1.bf16.msra.mxu0 %v3207
    %3261 = vmatprep.subr.bf16.mxu0 %v3212
    %3262 = vmatpush1.bf16.msra.mxu0 %v3211
    %3263 = vmatprep.subr.bf16.mxu0 0
    %3264 = vmatpush1.bf16.msra.mxu0 0
    %3265 = vmatprep.subr.bf16.mxu0 0
    %3266 = vmatpush1.bf16.msra.mxu0 0
    %3267 = vmatprep.subr.bf16.mxu0 0
    %3268 = vmatpush1.bf16.msra.mxu0 0
    %3269 = vmatprep.subr.bf16.mxu0 0
    %3270 = vmatpush1.bf16.msra.mxu0 0
    %3271 = vmatprep.subr.bf16.mxu0 0
    %3272 = vmatpush1.bf16.msra.mxu0 0
    %3273 = vmatprep.subr.bf16.mxu0 0
    %3274 = vmatpush1.bf16.msra.mxu0 0
    %3275 = vmatprep.subr.bf16.mxu0 0
    %3276 = vmatpush1.bf16.msra.mxu0 0
    %3277 = vmatprep.subr.bf16.mxu0 0
    %3278 = vmatpush1.bf16.msra.mxu0 0
    %3279 = vmatprep.mubr.bf16.mxu0 0
    %3280 = vmatmul.mubr.bf16.gmra.mrb[0].mxu0 %v3063
    %v3281 = vpop.f32.mrb[0].mxu0
    %v3282 = vadd.f32 %v3070, %v3281
    %v3283 = vpop.f32.mrb[0].mxu0
    %v3284 = vadd.f32 %v3074, %v3283
    %v3285 = vpop.f32.mrb[0].mxu0
    %v3286 = vpop.f32.mrb[0].mxu0
    %3287 = vdwg.mxu0
    %3288 = vmatprep.subr.bf16.mxu0 %v3186
    %3289 = vmatpush1.bf16.msra.mxu0 %v3185
    %3290 = vmatprep.subr.bf16.mxu0 %v3190
    %3291 = vmatpush1.bf16.msra.mxu0 %v3189
    %3292 = vmatprep.subr.bf16.mxu0 %v3194
    %3293 = vmatpush1.bf16.msra.mxu0 %v3193
    %3294 = vmatprep.subr.bf16.mxu0 %v3198
    %3295 = vmatpush1.bf16.msra.mxu0 %v3197
    %3296 = vmatprep.subr.bf16.mxu0 %v3202
    %3297 = vmatpush1.bf16.msra.mxu0 %v3201
    %3298 = vmatprep.subr.bf16.mxu0 %v3206
    %3299 = vmatpush1.bf16.msra.mxu0 %v3205
    %3300 = vmatprep.subr.bf16.mxu0 %v3210
    %3301 = vmatpush1.bf16.msra.mxu0 %v3209
    %3302 = vmatprep.subr.bf16.mxu0 %v3214
    %3303 = vmatpush1.bf16.msra.mxu0 %v3213
    %3304 = vmatprep.subr.bf16.mxu0 0
    %3305 = vmatpush1.bf16.msra.mxu0 0
    %3306 = vmatprep.subr.bf16.mxu0 0
    %3307 = vmatpush1.bf16.msra.mxu0 0
    %3308 = vmatprep.subr.bf16.mxu0 0
    %3309 = vmatpush1.bf16.msra.mxu0 0
    %3310 = vmatprep.subr.bf16.mxu0 0
    %3311 = vmatpush1.bf16.msra.mxu0 0
    %3312 = vmatprep.subr.bf16.mxu0 0
    %3313 = vmatpush1.bf16.msra.mxu0 0
    %3314 = vmatprep.subr.bf16.mxu0 0
    %3315 = vmatpush1.bf16.msra.mxu0 0
    %3316 = vmatprep.subr.bf16.mxu0 0
    %3317 = vmatpush1.bf16.msra.mxu0 0
    %3318 = vmatprep.subr.bf16.mxu0 0
    %3319 = vmatpush1.bf16.msra.mxu0 0
    %3320 = vmatprep.mubr.bf16.mxu0 0
    %3321 = vmatmul.mubr.bf16.gmra.mrb[0].mxu0 %v3063
    %v3322 = vpop.f32.mrb[0].mxu0
    %v3323 = vadd.f32 %v3078, %v3322
    %v3324 = vpop.f32.mrb[0].mxu0
    %v3325 = vadd.f32 %v3082, %v3324
    %v3326 = vpop.f32.mrb[0].mxu0
    %v3327 = vpop.f32.mrb[0].mxu0
    %3328 = vdwg.mxu0
    %v3329 = vmax.f32 %v3282, 0.0
    %v3330 = vmax.f32 %v3284, 0.0
    %v3331 = vmax.f32 %v3323, 0.0
    %v3332 = vmax.f32 %v3325, 0.0
    %v3333 = vpack.c.bf16 %v3329, %v3329
    %v3334 = vpack.c.bf16 %v3330, %v3330
    %v3335 = vpack.c.bf16 %v3331, %v3331
    %v3336 = vpack.c.bf16 %v3332, %v3332
    %s3337 = scalar_lea.vmem [#allocation19], 1
    %v3338 = vld [vmem:[%s3337] sm:$0x1]
    %v3340 = vlaneseq
    %v3341 = vshrl.u32 %v3340, 7
    %v3342 = vsub.s32 0, %v3341
    %v3343 = vrot.slane %v3338, %v3342
    %v3409 = vunpack.c.l.b16 %v2094
    %v3410 = vunpack.c.l.b16 %v2095
    %v3411 = vunpack.c.l.b16 %v2096
    %v3412 = vunpack.c.l.b16 %v2097
    %v3413 = vunpack.c.l.b16 %v2098
    %v3414 = vunpack.c.l.b16 %v2099
    %v3415 = vunpack.c.l.b16 %v2100
    %v3416 = vunpack.c.l.b16 %v2101
    %v3417 = vunpack.c.l.b16 %v2102
    %v3418 = vunpack.c.l.b16 %v2103
    %v3419 = vunpack.c.l.b16 %v2104
    %v3420 = vunpack.c.l.b16 %v2105
    %v3421 = vunpack.c.l.b16 %v2106
    %v3422 = vunpack.c.l.b16 %v2107
    %v3423 = vunpack.c.l.b16 %v2108
    %v3424 = vunpack.c.l.b16 %v2109
    %v3425 = vunpack.c.l.b16 %v2110
    %v3426 = vunpack.c.l.b16 %v2111
    %v3427 = vunpack.c.l.b16 %v2112
    %v3428 = vunpack.c.l.b16 %v2113
    %v3429 = vunpack.c.l.b16 %v2114
    %v3430 = vunpack.c.l.b16 %v2115
    %v3431 = vunpack.c.l.b16 %v2116
    %v3432 = vunpack.c.l.b16 %v2117
    %v3433 = vunpack.c.l.b16 %v2118
    %v3434 = vunpack.c.l.b16 %v2119
    %v3435 = vunpack.c.l.b16 %v2120
    %v3436 = vunpack.c.l.b16 %v2121
    %v3437 = vunpack.c.l.b16 %v2122
    %v3438 = vunpack.c.l.b16 %v2123
    %v3439 = vunpack.c.l.b16 %v2124
    %v3440 = vunpack.c.l.b16 %v2125
    %v3441 = vunpack.c.l.b16 %v2126
    %v3442 = vunpack.c.l.b16 %v2127
    %v3443 = vunpack.c.l.b16 %v2128
    %v3444 = vunpack.c.l.b16 %v2129
    %v3445 = vunpack.c.l.b16 %v2130
    %v3446 = vunpack.c.l.b16 %v2131
    %v3447 = vunpack.c.l.b16 %v2132
    %v3448 = vunpack.c.l.b16 %v2133
    %v3449 = vunpack.c.l.b16 %v2134
    %v3450 = vunpack.c.l.b16 %v2135
    %v3451 = vunpack.c.l.b16 %v2136
    %v3452 = vunpack.c.l.b16 %v2137
    %v3453 = vunpack.c.l.b16 %v2138
    %v3454 = vunpack.c.l.b16 %v2139
    %v3455 = vunpack.c.l.b16 %v2140
    %v3456 = vunpack.c.l.b16 %v2141
    %v3457 = vunpack.c.l.b16 %v2142
    %v3458 = vunpack.c.l.b16 %v2143
    %v3459 = vunpack.c.l.b16 %v2144
    %v3460 = vunpack.c.l.b16 %v2145
    %v3461 = vunpack.c.l.b16 %v2146
    %v3462 = vunpack.c.l.b16 %v2147
    %v3463 = vunpack.c.l.b16 %v2148
    %v3464 = vunpack.c.l.b16 %v2149
    %v3465 = vunpack.c.l.b16 %v2150
    %v3466 = vunpack.c.l.b16 %v2151
    %v3467 = vunpack.c.l.b16 %v2152
    %v3468 = vunpack.c.l.b16 %v2153
    %v3469 = vunpack.c.l.b16 %v2154
    %v3470 = vunpack.c.l.b16 %v2155
    %v3471 = vunpack.c.l.b16 %v2156
    %v3472 = vunpack.c.l.b16 %v2157
    %v3473 = vpack.c.b16 %v3410, %v3409
    %v3474 = vpack.c.b16 %v3412, %v3411
    %v3475 = vpack.c.b16 %v3414, %v3413
    %v3476 = vpack.c.b16 %v3416, %v3415
    %v3477 = vpack.c.b16 %v3418, %v3417
    %v3478 = vpack.c.b16 %v3420, %v3419
    %v3479 = vpack.c.b16 %v3422, %v3421
    %v3480 = vpack.c.b16 %v3424, %v3423
    %v3481 = vpack.c.b16 %v3426, %v3425
    %v3482 = vpack.c.b16 %v3428, %v3427
    %v3483 = vpack.c.b16 %v3430, %v3429
    %v3484 = vpack.c.b16 %v3432, %v3431
    %v3485 = vpack.c.b16 %v3434, %v3433
    %v3486 = vpack.c.b16 %v3436, %v3435
    %v3487 = vpack.c.b16 %v3438, %v3437
    %v3488 = vpack.c.b16 %v3440, %v3439
    %v3489 = vpack.c.b16 %v3442, %v3441
    %v3490 = vpack.c.b16 %v3444, %v3443
    %v3491 = vpack.c.b16 %v3446, %v3445
    %v3492 = vpack.c.b16 %v3448, %v3447
    %v3493 = vpack.c.b16 %v3450, %v3449
    %v3494 = vpack.c.b16 %v3452, %v3451
    %v3495 = vpack.c.b16 %v3454, %v3453
    %v3496 = vpack.c.b16 %v3456, %v3455
    %v3497 = vpack.c.b16 %v3458, %v3457
    %v3498 = vpack.c.b16 %v3460, %v3459
    %v3499 = vpack.c.b16 %v3462, %v3461
    %v3500 = vpack.c.b16 %v3464, %v3463
    %v3501 = vpack.c.b16 %v3466, %v3465
    %v3502 = vpack.c.b16 %v3468, %v3467
    %v3503 = vpack.c.b16 %v3470, %v3469
    %v3504 = vpack.c.b16 %v3472, %v3471
    %3537 = vmatprep.subr.bf16.mxu0 0
    %3538 = vmatpush1.bf16.msra.mxu0 %v3473
    %3539 = vmatprep.subr.bf16.mxu0 0
    %3540 = vmatpush1.bf16.msra.mxu0 %v3474
    %3541 = vmatprep.subr.bf16.mxu0 0
    %3542 = vmatpush1.bf16.msra.mxu0 %v3475
    %3543 = vmatprep.subr.bf16.mxu0 0
    %3544 = vmatpush1.bf16.msra.mxu0 %v3476
    %3545 = vmatprep.subr.bf16.mxu0 0
    %3546 = vmatpush1.bf16.msra.mxu0 %v3477
    %3547 = vmatprep.subr.bf16.mxu0 0
    %3548 = vmatpush1.bf16.msra.mxu0 %v3478
    %3549 = vmatprep.subr.bf16.mxu0 0
    %3550 = vmatpush1.bf16.msra.mxu0 %v3479
    %3551 = vmatprep.subr.bf16.mxu0 0
    %3552 = vmatpush1.bf16.msra.mxu0 %v3480
    %3553 = vmatprep.subr.bf16.mxu0 0
    %3554 = vmatpush1.bf16.msra.mxu0 %v3481
    %3555 = vmatprep.subr.bf16.mxu0 0
    %3556 = vmatpush1.bf16.msra.mxu0 %v3482
    %3557 = vmatprep.subr.bf16.mxu0 0
    %3558 = vmatpush1.bf16.msra.mxu0 %v3483
    %3559 = vmatprep.subr.bf16.mxu0 0
    %3560 = vmatpush1.bf16.msra.mxu0 %v3484
    %3561 = vmatprep.subr.bf16.mxu0 0
    %3562 = vmatpush1.bf16.msra.mxu0 %v3485
    %3563 = vmatprep.subr.bf16.mxu0 0
    %3564 = vmatpush1.bf16.msra.mxu0 %v3486
    %3565 = vmatprep.subr.bf16.mxu0 0
    %3566 = vmatpush1.bf16.msra.mxu0 %v3487
    %3567 = vmatprep.subr.bf16.mxu0 0
    %3568 = vmatpush1.bf16.msra.mxu0 %v3488
    %3569 = vmatprep.mubr.bf16.mxu0 %v3334
    %3570 = vmatmul.mubr.bf16.gmra.mrb[0].mxu0 %v3333
    %v3571 = vpop.f32.mrb[0].mxu0
    %v3572 = vadd.f32 %v3343, %v3571
    %v3573 = vpop.f32.mrb[0].mxu0
    %v3574 = vpop.f32.mrb[0].mxu0
    %v3575 = vpop.f32.mrb[0].mxu0
    %3576 = vdwg.mxu0
    %3577 = vmatprep.subr.bf16.mxu0 0
    %3578 = vmatpush1.bf16.msra.mxu0 %v3489
    %3579 = vmatprep.subr.bf16.mxu0 0
    %3580 = vmatpush1.bf16.msra.mxu0 %v3490
    %3581 = vmatprep.subr.bf16.mxu0 0
    %3582 = vmatpush1.bf16.msra.mxu0 %v3491
    %3583 = vmatprep.subr.bf16.mxu0 0
    %3584 = vmatpush1.bf16.msra.mxu0 %v3492
    %3585 = vmatprep.subr.bf16.mxu0 0
    %3586 = vmatpush1.bf16.msra.mxu0 %v3493
    %3587 = vmatprep.subr.bf16.mxu0 0
    %3588 = vmatpush1.bf16.msra.mxu0 %v3494
    %3589 = vmatprep.subr.bf16.mxu0 0
    %3590 = vmatpush1.bf16.msra.mxu0 %v3495
    %3591 = vmatprep.subr.bf16.mxu0 0
    %3592 = vmatpush1.bf16.msra.mxu0 %v3496
    %3593 = vmatprep.subr.bf16.mxu0 0
    %3594 = vmatpush1.bf16.msra.mxu0 %v3497
    %3595 = vmatprep.subr.bf16.mxu0 0
    %3596 = vmatpush1.bf16.msra.mxu0 %v3498
    %3597 = vmatprep.subr.bf16.mxu0 0
    %3598 = vmatpush1.bf16.msra.mxu0 %v3499
    %3599 = vmatprep.subr.bf16.mxu0 0
    %3600 = vmatpush1.bf16.msra.mxu0 %v3500
    %3601 = vmatprep.subr.bf16.mxu0 0
    %3602 = vmatpush1.bf16.msra.mxu0 %v3501
    %3603 = vmatprep.subr.bf16.mxu0 0
    %3604 = vmatpush1.bf16.msra.mxu0 %v3502
    %3605 = vmatprep.subr.bf16.mxu0 0
    %3606 = vmatpush1.bf16.msra.mxu0 %v3503
    %3607 = vmatprep.subr.bf16.mxu0 0
    %3608 = vmatpush1.bf16.msra.mxu0 %v3504
    %3609 = vmatprep.mubr.bf16.mxu0 %v3336
    %3610 = vmatmul.mubr.bf16.gmra.mrb[0].mxu0 %v3335
    %v3611 = vpop.f32.mrb[0].mxu0
    %v3612 = vadd.f32 %v3572, %v3611
    %v3613 = vpop.f32.mrb[0].mxu0
    %v3614 = vpop.f32.mrb[0].mxu0
    %v3615 = vpop.f32.mrb[0].mxu0
    %3616 = vdwg.mxu0
    %s3617 = scalar_lea.vmem [#allocation13], 384
    %v3618 = vld [vmem:[%s3617] sm:$0xff]
    %v3619 = vld [vmem:[%s3617 + $0x8] sm:$0xf]
    %v3620 = vld [vmem:[%s3617 + $0xc] sm:$0xff]
    %v3621 = vld [vmem:[%s3617 + $0x14] sm:$0xf]
    %v3622 = vld [vmem:[%s3617 + $0x18] sm:$0xff]
    %v3623 = vld [vmem:[%s3617 + $0x20] sm:$0xf]
    %v3624 = vld [vmem:[%s3617 + $0x24] sm:$0xff]
    %v3625 = vld [vmem:[%s3617 + $0x2c] sm:$0xf]
    %v3626 = vld [vmem:[%s3617 + $0x30] sm:$0xff]
    %v3627 = vld [vmem:[%s3617 + $0x38] sm:$0xf]
    %v3628 = vld [vmem:[%s3617 + $0x3c] sm:$0xff]
    %v3629 = vld [vmem:[%s3617 + $0x44] sm:$0xf]
    %v3630 = vld [vmem:[%s3617 + $0x48] sm:$0xff]
    %v3631 = vld [vmem:[%s3617 + $0x50] sm:$0xf]
    %v3632 = vld [vmem:[%s3617 + $0x54] sm:$0xff]
    %v3633 = vld [vmem:[%s3617 + $0x5c] sm:$0xf]
    %v3634 = vld [vmem:[%s3617 + $0x60] sm:$0xff]
    %v3635 = vld [vmem:[%s3617 + $0x68] sm:$0xf]
    %v3636 = vld [vmem:[%s3617 + $0x6c] sm:$0xff]
    %v3637 = vld [vmem:[%s3617 + $0x74] sm:$0xf]
    %v3638 = vld [vmem:[%s3617 + $0x78] sm:$0xff]
    %v3639 = vld [vmem:[%s3617 + $0x80] sm:$0xf]
    %v3640 = vld [vmem:[%s3617 + $0x84] sm:$0xff]
    %v3641 = vld [vmem:[%s3617 + $0x8c] sm:$0xf]
    %v3642 = vld [vmem:[%s3617 + $0x90] sm:$0xff]
    %v3643 = vld [vmem:[%s3617 + $0x98] sm:$0xf]
    %v3644 = vld [vmem:[%s3617 + $0x9c] sm:$0xff]
    %v3645 = vld [vmem:[%s3617 + $0xa4] sm:$0xf]
    %v3646 = vld [vmem:[%s3617 + $0xa8] sm:$0xff]
    %v3647 = vld [vmem:[%s3617 + $0xb0] sm:$0xf]
    %v3648 = vld [vmem:[%s3617 + $0xb4] sm:$0xff]
    %v3649 = vld [vmem:[%s3617 + $0xbc] sm:$0xf]
    %s3650 = scalar_lea.vmem [#allocation14], 128
    %v3651 = vld [vmem:[%s3650] sm:$0xf]
    %v3652 = vld [vmem:[%s3650 + $0x4] sm:$0xf]
    %v3653 = vld [vmem:[%s3650 + $0x8] sm:$0xf]
    %v3654 = vld [vmem:[%s3650 + $0xc] sm:$0xf]
    %v3655 = vld [vmem:[%s3650 + $0x10] sm:$0xf]
    %v3656 = vld [vmem:[%s3650 + $0x14] sm:$0xf]
    %v3657 = vld [vmem:[%s3650 + $0x18] sm:$0xf]
    %v3658 = vld [vmem:[%s3650 + $0x1c] sm:$0xf]
    %v3659 = vld [vmem:[%s3650 + $0x20] sm:$0xf]
    %v3660 = vld [vmem:[%s3650 + $0x24] sm:$0xf]
    %v3661 = vld [vmem:[%s3650 + $0x28] sm:$0xf]
    %v3662 = vld [vmem:[%s3650 + $0x2c] sm:$0xf]
    %v3663 = vld [vmem:[%s3650 + $0x30] sm:$0xf]
    %v3664 = vld [vmem:[%s3650 + $0x34] sm:$0xf]
    %v3665 = vld [vmem:[%s3650 + $0x38] sm:$0xf]
    %v3666 = vld [vmem:[%s3650 + $0x3c] sm:$0xf]
    %s3667 = scalar_lea.vmem [#allocation16], 512
    %v3668 = vld [vmem:[%s3667] sm:$0xff]
    %v3669 = vld [vmem:[%s3667 + $0x8] sm:$0xff]
    %v3670 = vld [vmem:[%s3667 + $0x10] sm:$0xff]
    %v3671 = vld [vmem:[%s3667 + $0x18] sm:$0xff]
    %v3672 = vld [vmem:[%s3667 + $0x20] sm:$0xff]
    %v3673 = vld [vmem:[%s3667 + $0x28] sm:$0xff]
    %v3674 = vld [vmem:[%s3667 + $0x30] sm:$0xff]
    %v3675 = vld [vmem:[%s3667 + $0x38] sm:$0xff]
    %v3676 = vld [vmem:[%s3667 + $0x40] sm:$0xff]
    %v3677 = vld [vmem:[%s3667 + $0x48] sm:$0xff]
    %v3678 = vld [vmem:[%s3667 + $0x50] sm:$0xff]
    %v3679 = vld [vmem:[%s3667 + $0x58] sm:$0xff]
    %v3680 = vld [vmem:[%s3667 + $0x60] sm:$0xff]
    %v3681 = vld [vmem:[%s3667 + $0x68] sm:$0xff]
    %v3682 = vld [vmem:[%s3667 + $0x70] sm:$0xff]
    %v3683 = vld [vmem:[%s3667 + $0x78] sm:$0xff]
    %v3684 = vld [vmem:[%s3667 + $0x80] sm:$0xff]
    %v3685 = vld [vmem:[%s3667 + $0x88] sm:$0xff]
    %v3686 = vld [vmem:[%s3667 + $0x90] sm:$0xff]
    %v3687 = vld [vmem:[%s3667 + $0x98] sm:$0xff]
    %v3688 = vld [vmem:[%s3667 + $0xa0] sm:$0xff]
    %v3689 = vld [vmem:[%s3667 + $0xa8] sm:$0xff]
    %v3690 = vld [vmem:[%s3667 + $0xb0] sm:$0xff]
    %v3691 = vld [vmem:[%s3667 + $0xb8] sm:$0xff]
    %v3692 = vld [vmem:[%s3667 + $0xc0] sm:$0xff]
    %v3693 = vld [vmem:[%s3667 + $0xc8] sm:$0xff]
    %v3694 = vld [vmem:[%s3667 + $0xd0] sm:$0xff]
    %v3695 = vld [vmem:[%s3667 + $0xd8] sm:$0xff]
    %v3696 = vld [vmem:[%s3667 + $0xe0] sm:$0xff]
    %v3697 = vld [vmem:[%s3667 + $0xe8] sm:$0xff]
    %v3698 = vld [vmem:[%s3667 + $0xf0] sm:$0xff]
    %v3699 = vld [vmem:[%s3667 + $0xf8] sm:$0xff]
    %s3700 = scalar_lea.vmem [#allocation17], 512
    %v3701 = vld [vmem:[%s3700] sm:$0xf]
    %v3702 = vld [vmem:[%s3700 + $0x4] sm:$0xf]
    %v3703 = vld [vmem:[%s3700 + $0x8] sm:$0xf]
    %v3704 = vld [vmem:[%s3700 + $0xc] sm:$0xf]
    %v3705 = vld [vmem:[%s3700 + $0x10] sm:$0xf]
    %v3706 = vld [vmem:[%s3700 + $0x14] sm:$0xf]
    %v3707 = vld [vmem:[%s3700 + $0x18] sm:$0xf]
    %v3708 = vld [vmem:[%s3700 + $0x1c] sm:$0xf]
    %v3709 = vld [vmem:[%s3700 + $0x20] sm:$0xf]
    %v3710 = vld [vmem:[%s3700 + $0x24] sm:$0xf]
    %v3711 = vld [vmem:[%s3700 + $0x28] sm:$0xf]
    %v3712 = vld [vmem:[%s3700 + $0x2c] sm:$0xf]
    %v3713 = vld [vmem:[%s3700 + $0x30] sm:$0xf]
    %v3714 = vld [vmem:[%s3700 + $0x34] sm:$0xf]
    %v3715 = vld [vmem:[%s3700 + $0x38] sm:$0xf]
    %v3716 = vld [vmem:[%s3700 + $0x3c] sm:$0xf]
    %v3717 = vld [vmem:[%s3700 + $0x40] sm:$0xf]
    %v3718 = vld [vmem:[%s3700 + $0x44] sm:$0xf]
    %v3719 = vld [vmem:[%s3700 + $0x48] sm:$0xf]
    %v3720 = vld [vmem:[%s3700 + $0x4c] sm:$0xf]
    %v3721 = vld [vmem:[%s3700 + $0x50] sm:$0xf]
    %v3722 = vld [vmem:[%s3700 + $0x54] sm:$0xf]
    %v3723 = vld [vmem:[%s3700 + $0x58] sm:$0xf]
    %v3724 = vld [vmem:[%s3700 + $0x5c] sm:$0xf]
    %v3725 = vld [vmem:[%s3700 + $0x60] sm:$0xf]
    %v3726 = vld [vmem:[%s3700 + $0x64] sm:$0xf]
    %v3727 = vld [vmem:[%s3700 + $0x68] sm:$0xf]
    %v3728 = vld [vmem:[%s3700 + $0x6c] sm:$0xf]
    %v3729 = vld [vmem:[%s3700 + $0x70] sm:$0xf]
    %v3730 = vld [vmem:[%s3700 + $0x74] sm:$0xf]
    %v3731 = vld [vmem:[%s3700 + $0x78] sm:$0xf]
    %v3732 = vld [vmem:[%s3700 + $0x7c] sm:$0xf]
    %v3733 = vld [vmem:[%s3700 + $0x80] sm:$0xf]
    %v3734 = vld [vmem:[%s3700 + $0x84] sm:$0xf]
    %v3735 = vld [vmem:[%s3700 + $0x88] sm:$0xf]
    %v3736 = vld [vmem:[%s3700 + $0x8c] sm:$0xf]
    %v3737 = vld [vmem:[%s3700 + $0x90] sm:$0xf]
    %v3738 = vld [vmem:[%s3700 + $0x94] sm:$0xf]
    %v3739 = vld [vmem:[%s3700 + $0x98] sm:$0xf]
    %v3740 = vld [vmem:[%s3700 + $0x9c] sm:$0xf]
    %v3741 = vld [vmem:[%s3700 + $0xa0] sm:$0xf]
    %v3742 = vld [vmem:[%s3700 + $0xa4] sm:$0xf]
    %v3743 = vld [vmem:[%s3700 + $0xa8] sm:$0xf]
    %v3744 = vld [vmem:[%s3700 + $0xac] sm:$0xf]
    %v3745 = vld [vmem:[%s3700 + $0xb0] sm:$0xf]
    %v3746 = vld [vmem:[%s3700 + $0xb4] sm:$0xf]
    %v3747 = vld [vmem:[%s3700 + $0xb8] sm:$0xf]
    %v3748 = vld [vmem:[%s3700 + $0xbc] sm:$0xf]
    %v3749 = vld [vmem:[%s3700 + $0xc0] sm:$0xf]
    %v3750 = vld [vmem:[%s3700 + $0xc4] sm:$0xf]
    %v3751 = vld [vmem:[%s3700 + $0xc8] sm:$0xf]
    %v3752 = vld [vmem:[%s3700 + $0xcc] sm:$0xf]
    %v3753 = vld [vmem:[%s3700 + $0xd0] sm:$0xf]
    %v3754 = vld [vmem:[%s3700 + $0xd4] sm:$0xf]
    %v3755 = vld [vmem:[%s3700 + $0xd8] sm:$0xf]
    %v3756 = vld [vmem:[%s3700 + $0xdc] sm:$0xf]
    %v3757 = vld [vmem:[%s3700 + $0xe0] sm:$0xf]
    %v3758 = vld [vmem:[%s3700 + $0xe4] sm:$0xf]
    %v3759 = vld [vmem:[%s3700 + $0xe8] sm:$0xf]
    %v3760 = vld [vmem:[%s3700 + $0xec] sm:$0xf]
    %v3761 = vld [vmem:[%s3700 + $0xf0] sm:$0xf]
    %v3762 = vld [vmem:[%s3700 + $0xf4] sm:$0xf]
    %v3763 = vld [vmem:[%s3700 + $0xf8] sm:$0xf]
    %v3764 = vld [vmem:[%s3700 + $0xfc] sm:$0xf]
    %v3765 = vpack.c.bf16 %v3612, %v3612
    %s3766 = scalar_lea.vmem %s8, 6
    %v3767 = vld [vmem:[%s3766] sm:$0x7]
    %v3769 = vlaneseq
    %v3770 = vshrl.u32 %v3769, 7
    %v3771 = vsub.s32 0, %v3770
    %v3772 = vrot.slane %v3767, %v3771
    %v3773 = vlaneseq
    %v3774 = vshrl.u32 %v3773, 7
    %v3775 = vsub.s32 1, %v3774
    %v3776 = vrot.slane %v3767, %v3775
    %v3777 = vlaneseq
    %v3778 = vshrl.u32 %v3777, 7
    %v3779 = vsub.s32 2, %v3778
    %v3780 = vrot.slane %v3767, %v3779
    %v3816 = vunpack.c.l.b16 %v3618
    %v3817 = vunpack.c.h.b16 %v3618
    %v3818 = vunpack.c.l.b16 %v3619
    %v3819 = vunpack.c.l.b16 %v3620
    %v3820 = vunpack.c.h.b16 %v3620
    %v3821 = vunpack.c.l.b16 %v3621
    %v3822 = vunpack.c.l.b16 %v3622
    %v3823 = vunpack.c.h.b16 %v3622
    %v3824 = vunpack.c.l.b16 %v3623
    %v3825 = vunpack.c.l.b16 %v3624
    %v3826 = vunpack.c.h.b16 %v3624
    %v3827 = vunpack.c.l.b16 %v3625
    %v3828 = vunpack.c.l.b16 %v3626
    %v3829 = vunpack.c.h.b16 %v3626
    %v3830 = vunpack.c.l.b16 %v3627
    %v3831 = vunpack.c.l.b16 %v3628
    %v3832 = vunpack.c.h.b16 %v3628
    %v3833 = vunpack.c.l.b16 %v3629
    %v3834 = vunpack.c.l.b16 %v3630
    %v3835 = vunpack.c.h.b16 %v3630
    %v3836 = vunpack.c.l.b16 %v3631
    %v3837 = vunpack.c.l.b16 %v3632
    %v3838 = vunpack.c.h.b16 %v3632
    %v3839 = vunpack.c.l.b16 %v3633
    %v3840 = vunpack.c.l.b16 %v3634
    %v3841 = vunpack.c.h.b16 %v3634
    %v3842 = vunpack.c.l.b16 %v3635
    %v3843 = vunpack.c.l.b16 %v3636
    %v3844 = vunpack.c.h.b16 %v3636
    %v3845 = vunpack.c.l.b16 %v3637
    %v3846 = vunpack.c.l.b16 %v3638
    %v3847 = vunpack.c.h.b16 %v3638
    %v3848 = vunpack.c.l.b16 %v3639
    %v3849 = vunpack.c.l.b16 %v3640
    %v3850 = vunpack.c.h.b16 %v3640
    %v3851 = vunpack.c.l.b16 %v3641
    %v3852 = vunpack.c.l.b16 %v3642
    %v3853 = vunpack.c.h.b16 %v3642
    %v3854 = vunpack.c.l.b16 %v3643
    %v3855 = vunpack.c.l.b16 %v3644
    %v3856 = vunpack.c.h.b16 %v3644
    %v3857 = vunpack.c.l.b16 %v3645
    %v3858 = vunpack.c.l.b16 %v3646
    %v3859 = vunpack.c.h.b16 %v3646
    %v3860 = vunpack.c.l.b16 %v3647
    %v3861 = vunpack.c.l.b16 %v3648
    %v3862 = vunpack.c.h.b16 %v3648
    %v3863 = vunpack.c.l.b16 %v3649
    %v3864 = vpack.c.b16 %v3819, %v3816
    %v3865 = vpack.c.b16 %v3820, %v3817
    %v3866 = vpack.c.b16 %v3821, %v3818
    %v3867 = vpack.c.b16 %v3825, %v3822
    %v3868 = vpack.c.b16 %v3826, %v3823
    %v3869 = vpack.c.b16 %v3827, %v3824
    %v3870 = vpack.c.b16 %v3831, %v3828
    %v3871 = vpack.c.b16 %v3832, %v3829
    %v3872 = vpack.c.b16 %v3833, %v3830
    %v3873 = vpack.c.b16 %v3837, %v3834
    %v3874 = vpack.c.b16 %v3838, %v3835
    %v3875 = vpack.c.b16 %v3839, %v3836
    %v3876 = vpack.c.b16 %v3843, %v3840
    %v3877 = vpack.c.b16 %v3844, %v3841
    %v3878 = vpack.c.b16 %v3845, %v3842
    %v3879 = vpack.c.b16 %v3849, %v3846
    %v3880 = vpack.c.b16 %v3850, %v3847
    %v3881 = vpack.c.b16 %v3851, %v3848
    %v3882 = vpack.c.b16 %v3855, %v3852
    %v3883 = vpack.c.b16 %v3856, %v3853
    %v3884 = vpack.c.b16 %v3857, %v3854
    %v3885 = vpack.c.b16 %v3861, %v3858
    %v3886 = vpack.c.b16 %v3862, %v3859
    %v3887 = vpack.c.b16 %v3863, %v3860
    %3912 = vmatprep.subr.bf16.mxu0 %v3865
    %3913 = vmatpush1.bf16.msra.mxu0 %v3864
    %3914 = vmatprep.subr.bf16.mxu0 %v3868
    %3915 = vmatpush1.bf16.msra.mxu0 %v3867
    %3916 = vmatprep.subr.bf16.mxu0 %v3871
    %3917 = vmatpush1.bf16.msra.mxu0 %v3870
    %3918 = vmatprep.subr.bf16.mxu0 %v3874
    %3919 = vmatpush1.bf16.msra.mxu0 %v3873
    %3920 = vmatprep.subr.bf16.mxu0 %v3877
    %3921 = vmatpush1.bf16.msra.mxu0 %v3876
    %3922 = vmatprep.subr.bf16.mxu0 %v3880
    %3923 = vmatpush1.bf16.msra.mxu0 %v3879
    %3924 = vmatprep.subr.bf16.mxu0 %v3883
    %3925 = vmatpush1.bf16.msra.mxu0 %v3882
    %3926 = vmatprep.subr.bf16.mxu0 %v3886
    %3927 = vmatpush1.bf16.msra.mxu0 %v3885
    %3928 = vmatprep.subr.bf16.mxu0 0
    %3929 = vmatpush1.bf16.msra.mxu0 0
    %3930 = vmatprep.subr.bf16.mxu0 0
    %3931 = vmatpush1.bf16.msra.mxu0 0
    %3932 = vmatprep.subr.bf16.mxu0 0
    %3933 = vmatpush1.bf16.msra.mxu0 0
    %3934 = vmatprep.subr.bf16.mxu0 0
    %3935 = vmatpush1.bf16.msra.mxu0 0
    %3936 = vmatprep.subr.bf16.mxu0 0
    %3937 = vmatpush1.bf16.msra.mxu0 0
    %3938 = vmatprep.subr.bf16.mxu0 0
    %3939 = vmatpush1.bf16.msra.mxu0 0
    %3940 = vmatprep.subr.bf16.mxu0 0
    %3941 = vmatpush1.bf16.msra.mxu0 0
    %3942 = vmatprep.subr.bf16.mxu0 0
    %3943 = vmatpush1.bf16.msra.mxu0 0
    %3944 = vmatprep.mubr.bf16.mxu0 0
    %3945 = vmatmul.mubr.bf16.gmra.mrb[0].mxu0 %v3765
    %v3946 = vpop.f32.mrb[0].mxu0
    %v3947 = vadd.f32 %v3772, %v3946
    %v3948 = vpop.f32.mrb[0].mxu0
    %v3949 = vadd.f32 %v3776, %v3948
    %v3950 = vpop.f32.mrb[0].mxu0
    %v3951 = vpop.f32.mrb[0].mxu0
    %3952 = vdwg.mxu0
    %3953 = vmatprep.subr.bf16.mxu0 0
    %3954 = vmatpush1.bf16.msra.mxu0 %v3866
    %3955 = vmatprep.subr.bf16.mxu0 0
    %3956 = vmatpush1.bf16.msra.mxu0 %v3869
    %3957 = vmatprep.subr.bf16.mxu0 0
    %3958 = vmatpush1.bf16.msra.mxu0 %v3872
    %3959 = vmatprep.subr.bf16.mxu0 0
    %3960 = vmatpush1.bf16.msra.mxu0 %v3875
    %3961 = vmatprep.subr.bf16.mxu0 0
    %3962 = vmatpush1.bf16.msra.mxu0 %v3878
    %3963 = vmatprep.subr.bf16.mxu0 0
    %3964 = vmatpush1.bf16.msra.mxu0 %v3881
    %3965 = vmatprep.subr.bf16.mxu0 0
    %3966 = vmatpush1.bf16.msra.mxu0 %v3884
    %3967 = vmatprep.subr.bf16.mxu0 0
    %3968 = vmatpush1.bf16.msra.mxu0 %v3887
    %3969 = vmatprep.subr.bf16.mxu0 0
    %3970 = vmatpush1.bf16.msra.mxu0 0
    %3971 = vmatprep.subr.bf16.mxu0 0
    %3972 = vmatpush1.bf16.msra.mxu0 0
    %3973 = vmatprep.subr.bf16.mxu0 0
    %3974 = vmatpush1.bf16.msra.mxu0 0
    %3975 = vmatprep.subr.bf16.mxu0 0
    %3976 = vmatpush1.bf16.msra.mxu0 0
    %3977 = vmatprep.subr.bf16.mxu0 0
    %3978 = vmatpush1.bf16.msra.mxu0 0
    %3979 = vmatprep.subr.bf16.mxu0 0
    %3980 = vmatpush1.bf16.msra.mxu0 0
    %3981 = vmatprep.subr.bf16.mxu0 0
    %3982 = vmatpush1.bf16.msra.mxu0 0
    %3983 = vmatprep.subr.bf16.mxu0 0
    %3984 = vmatpush1.bf16.msra.mxu0 0
    %3985 = vmatprep.mubr.bf16.mxu0 0
    %3986 = vmatmul.mubr.bf16.gmra.mrb[0].mxu0 %v3765
    %v3987 = vpop.f32.mrb[0].mxu0
    %v3988 = vadd.f32 %v3780, %v3987
    %v3989 = vpop.f32.mrb[0].mxu0
    %v3990 = vpop.f32.mrb[0].mxu0
    %v3991 = vpop.f32.mrb[0].mxu0
    %3992 = vdwg.mxu0
    %v3993 = vmul.f32 %v3947, 0.17677669
    %v3994 = vpack.c.bf16 %v3993, %v3993
    %v3995 = vpack.c.bf16 %v3949, %v3949
    %v3996 = vpack.c.bf16 %v3988, %v3988
    %v3998 = vsel %vm279, %v3994, 0
    %v4001 = vsel %vm279, %v3995, 0
    %4003 = vmatprep.subr.bf16.mxu0 0
    %4004 = vmatpush1.bf16.xpose.msra.mxu0 %v4001
    %4005 = vmatprep.subr.bf16.mxu0 0
    %4006 = vmatpush1.bf16.xpose.msra.mxu0 0
    %4007 = vmatprep.subr.bf16.mxu0 0
    %4008 = vmatpush1.bf16.xpose.msra.mxu0 0
    %4009 = vmatprep.subr.bf16.mxu0 0
    %4010 = vmatpush1.bf16.xpose.msra.mxu0 0
    %4011 = vmatprep.subr.bf16.mxu0 0
    %4012 = vmatpush1.bf16.xpose.msra.mxu0 0
    %4013 = vmatprep.subr.bf16.mxu0 0
    %4014 = vmatpush1.bf16.xpose.msra.mxu0 0
    %4015 = vmatprep.subr.bf16.mxu0 0
    %4016 = vmatpush1.bf16.xpose.msra.mxu0 0
    %4017 = vmatprep.subr.bf16.mxu0 0
    %4018 = vmatpush1.bf16.xpose.msra.mxu0 0
    %4019 = vmatprep.subr.bf16.mxu0 0
    %4020 = vmatpush1.bf16.xpose.msra.mxu0 0
    %4021 = vmatprep.subr.bf16.mxu0 0
    %4022 = vmatpush1.bf16.xpose.msra.mxu0 0
    %4023 = vmatprep.subr.bf16.mxu0 0
    %4024 = vmatpush1.bf16.xpose.msra.mxu0 0
    %4025 = vmatprep.subr.bf16.mxu0 0
    %4026 = vmatpush1.bf16.xpose.msra.mxu0 0
    %4027 = vmatprep.subr.bf16.mxu0 0
    %4028 = vmatpush1.bf16.xpose.msra.mxu0 0
    %4029 = vmatprep.subr.bf16.mxu0 0
    %4030 = vmatpush1.bf16.xpose.msra.mxu0 0
    %4031 = vmatprep.subr.bf16.mxu0 0
    %4032 = vmatpush1.bf16.xpose.msra.mxu0 0
    %4033 = vmatprep.subr.bf16.mxu0 0
    %4034 = vmatpush1.bf16.xpose.msra.mxu0 0
    %4035 = vmatprep.mubr.bf16.mxu0 0
    %4036 = vmatmul.mubr.bf16.gmra.mrb[0].mxu0 %v3998
    %v4037 = vpop.f32.mrb[0].mxu0
    %v4038 = vadd.f32 0.0, %v4037
    %v4039 = vpop.f32.mrb[0].mxu0
    %v4040 = vpop.f32.mrb[0].mxu0
    %v4041 = vpop.f32.mrb[0].mxu0
    %4042 = vdwg.mxu0
    %v4043 = vsel %vm830, %v4038, -inf
    %4044 = vmax.xlane.f32.xlu0 %v4043
    %v4045 = vpop.xlane.xlu0 %4044
    %v4046 = vsub.f32 %v4038, %v4045
    %v4047 = vmul.f32 %v4046, 1.442695
    %v4048 = vpow.pop %v4047
    %v4049 = vsel %vm830, %v4048, 0.0
    %4050 = vadd.xlane.f32.xlu0 %v4049
    %v4051 = vpop.xlane.xlu0 %4050
    %v4052 = vrcp.pop %v4051
    %v4053 = vmul.f32 %v4048, %v4052
    %v4054 = vpack.c.bf16 %v4053, %v4053
    %v4056 = vsel %vm843, %v4054, 0
    %v4059 = vsel %vm207, %v3996, 0
    %4061 = vmatprep.subr.bf16.mxu0 0
    %4062 = vmatpush1.bf16.msra.mxu0 %v4059
    %4063 = vmatprep.subr.bf16.mxu0 0
    %4064 = vmatpush1.bf16.msra.mxu0 0
    %4065 = vmatprep.subr.bf16.mxu0 0
    %4066 = vmatpush1.bf16.msra.mxu0 0
    %4067 = vmatprep.subr.bf16.mxu0 0
    %4068 = vmatpush1.bf16.msra.mxu0 0
    %4069 = vmatprep.subr.bf16.mxu0 0
    %4070 = vmatpush1.bf16.msra.mxu0 0
    %4071 = vmatprep.subr.bf16.mxu0 0
    %4072 = vmatpush1.bf16.msra.mxu0 0
    %4073 = vmatprep.subr.bf16.mxu0 0
    %4074 = vmatpush1.bf16.msra.mxu0 0
    %4075 = vmatprep.subr.bf16.mxu0 0
    %4076 = vmatpush1.bf16.msra.mxu0 0
    %4077 = vmatprep.subr.bf16.mxu0 0
    %4078 = vmatpush1.bf16.msra.mxu0 0
    %4079 = vmatprep.subr.bf16.mxu0 0
    %4080 = vmatpush1.bf16.msra.mxu0 0
    %4081 = vmatprep.subr.bf16.mxu0 0
    %4082 = vmatpush1.bf16.msra.mxu0 0
    %4083 = vmatprep.subr.bf16.mxu0 0
    %4084 = vmatpush1.bf16.msra.mxu0 0
    %4085 = vmatprep.subr.bf16.mxu0 0
    %4086 = vmatpush1.bf16.msra.mxu0 0
    %4087 = vmatprep.subr.bf16.mxu0 0
    %4088 = vmatpush1.bf16.msra.mxu0 0
    %4089 = vmatprep.subr.bf16.mxu0 0
    %4090 = vmatpush1.bf16.msra.mxu0 0
    %4091 = vmatprep.subr.bf16.mxu0 0
    %4092 = vmatpush1.bf16.msra.mxu0 0
    %4093 = vmatprep.mubr.bf16.mxu0 0
    %4094 = vmatmul.mubr.bf16.gmra.mrb[0].mxu0 %v4056
    %v4095 = vpop.f32.mrb[0].mxu0
    %v4096 = vadd.f32 0.0, %v4095
    %v4097 = vpop.f32.mrb[0].mxu0
    %v4098 = vpop.f32.mrb[0].mxu0
    %v4099 = vpop.f32.mrb[0].mxu0
    %4100 = vdwg.mxu0
    %v4101 = vpack.c.bf16 %v4096, %v4096
    %4103 = vrot.lane.b32.xlu0 %v3994, 96
    %v4104 = vpop.permute.xlu0 %4103
    %4106 = vrot.lane.b32.xlu0 %v3995, 96
    %v4107 = vpop.permute.xlu0 %4106
    %v4109 = vsel %vm279, %v4104, 0
    %v4112 = vsel %vm279, %v4107, 0
    %4114 = vmatprep.subr.bf16.mxu0 0
    %4115 = vmatpush1.bf16.xpose.msra.mxu0 %v4112
    %4116 = vmatprep.subr.bf16.mxu0 0
    %4117 = vmatpush1.bf16.xpose.msra.mxu0 0
    %4118 = vmatprep.subr.bf16.mxu0 0
    %4119 = vmatpush1.bf16.xpose.msra.mxu0 0
    %4120 = vmatprep.subr.bf16.mxu0 0
    %4121 = vmatpush1.bf16.xpose.msra.mxu0 0
    %4122 = vmatprep.subr.bf16.mxu0 0
    %4123 = vmatpush1.bf16.xpose.msra.mxu0 0
    %4124 = vmatprep.subr.bf16.mxu0 0
    %4125 = vmatpush1.bf16.xpose.msra.mxu0 0
    %4126 = vmatprep.subr.bf16.mxu0 0
    %4127 = vmatpush1.bf16.xpose.msra.mxu0 0
    %4128 = vmatprep.subr.bf16.mxu0 0
    %4129 = vmatpush1.bf16.xpose.msra.mxu0 0
    %4130 = vmatprep.subr.bf16.mxu0 0
    %4131 = vmatpush1.bf16.xpose.msra.mxu0 0
    %4132 = vmatprep.subr.bf16.mxu0 0
    %4133 = vmatpush1.bf16.xpose.msra.mxu0 0
    %4134 = vmatprep.subr.bf16.mxu0 0
    %4135 = vmatpush1.bf16.xpose.msra.mxu0 0
    %4136 = vmatprep.subr.bf16.mxu0 0
    %4137 = vmatpush1.bf16.xpose.msra.mxu0 0
    %4138 = vmatprep.subr.bf16.mxu0 0
    %4139 = vmatpush1.bf16.xpose.msra.mxu0 0
    %4140 = vmatprep.subr.bf16.mxu0 0
    %4141 = vmatpush1.bf16.xpose.msra.mxu0 0
    %4142 = vmatprep.subr.bf16.mxu0 0
    %4143 = vmatpush1.bf16.xpose.msra.mxu0 0
    %4144 = vmatprep.subr.bf16.mxu0 0
    %4145 = vmatpush1.bf16.xpose.msra.mxu0 0
    %4146 = vmatprep.mubr.bf16.mxu0 0
    %4147 = vmatmul.mubr.bf16.gmra.mrb[0].mxu0 %v4109
    %v4148 = vpop.f32.mrb[0].mxu0
    %v4149 = vadd.f32 0.0, %v4148
    %v4150 = vpop.f32.mrb[0].mxu0
    %v4151 = vpop.f32.mrb[0].mxu0
    %v4152 = vpop.f32.mrb[0].mxu0
    %4153 = vdwg.mxu0
    %v4154 = vsel %vm830, %v4149, -inf
    %4155 = vmax.xlane.f32.xlu0 %v4154
    %v4156 = vpop.xlane.xlu0 %4155
    %v4157 = vsub.f32 %v4149, %v4156
    %v4158 = vmul.f32 %v4157, 1.442695
    %v4159 = vpow.pop %v4158
    %v4160 = vsel %vm830, %v4159, 0.0
    %4161 = vadd.xlane.f32.xlu0 %v4160
    %v4162 = vpop.xlane.xlu0 %4161
    %v4163 = vrcp.pop %v4162
    %v4164 = vmul.f32 %v4159, %v4163
    %v4165 = vpack.c.bf16 %v4164, %v4164
    %4167 = vrot.lane.b32.xlu0 %v3996, 96
    %v4168 = vpop.permute.xlu0 %4167
    %v4170 = vsel %vm843, %v4165, 0
    %v4173 = vsel %vm207, %v4168, 0
    %4175 = vmatprep.subr.bf16.mxu0 0
    %4176 = vmatpush1.bf16.msra.mxu0 %v4173
    %4177 = vmatprep.subr.bf16.mxu0 0
    %4178 = vmatpush1.bf16.msra.mxu0 0
    %4179 = vmatprep.subr.bf16.mxu0 0
    %4180 = vmatpush1.bf16.msra.mxu0 0
    %4181 = vmatprep.subr.bf16.mxu0 0
    %4182 = vmatpush1.bf16.msra.mxu0 0
    %4183 = vmatprep.subr.bf16.mxu0 0
    %4184 = vmatpush1.bf16.msra.mxu0 0
    %4185 = vmatprep.subr.bf16.mxu0 0
    %4186 = vmatpush1.bf16.msra.mxu0 0
    %4187 = vmatprep.subr.bf16.mxu0 0
    %4188 = vmatpush1.bf16.msra.mxu0 0
    %4189 = vmatprep.subr.bf16.mxu0 0
    %4190 = vmatpush1.bf16.msra.mxu0 0
    %4191 = vmatprep.subr.bf16.mxu0 0
    %4192 = vmatpush1.bf16.msra.mxu0 0
    %4193 = vmatprep.subr.bf16.mxu0 0
    %4194 = vmatpush1.bf16.msra.mxu0 0
    %4195 = vmatprep.subr.bf16.mxu0 0
    %4196 = vmatpush1.bf16.msra.mxu0 0
    %4197 = vmatprep.subr.bf16.mxu0 0
    %4198 = vmatpush1.bf16.msra.mxu0 0
    %4199 = vmatprep.subr.bf16.mxu0 0
    %4200 = vmatpush1.bf16.msra.mxu0 0
    %4201 = vmatprep.subr.bf16.mxu0 0
    %4202 = vmatpush1.bf16.msra.mxu0 0
    %4203 = vmatprep.subr.bf16.mxu0 0
    %4204 = vmatpush1.bf16.msra.mxu0 0
    %4205 = vmatprep.subr.bf16.mxu0 0
    %4206 = vmatpush1.bf16.msra.mxu0 0
    %4207 = vmatprep.mubr.bf16.mxu0 0
    %4208 = vmatmul.mubr.bf16.gmra.mrb[0].mxu0 %v4170
    %v4209 = vpop.f32.mrb[0].mxu0
    %v4210 = vadd.f32 0.0, %v4209
    %v4211 = vpop.f32.mrb[0].mxu0
    %v4212 = vpop.f32.mrb[0].mxu0
    %v4213 = vpop.f32.mrb[0].mxu0
    %4214 = vdwg.mxu0
    %v4215 = vpack.c.bf16 %v4210, %v4210
    %v4220 = vunpack.c.l.b16 %v3655
    %v4221 = vunpack.c.l.b16 %v3656
    %v4222 = vunpack.c.l.b16 %v3657
    %v4223 = vunpack.c.l.b16 %v3658
    %v4224 = vpack.c.b16 %v4221, %v4220
    %v4225 = vpack.c.b16 %v4223, %v4222
    %v4229 = vsel %vm279, %v4215, 0
    %4231 = vmatprep.subr.bf16.mxu0 0
    %4232 = vmatpush1.bf16.msra.mxu0 %v4224
    %4233 = vmatprep.subr.bf16.mxu0 0
    %4234 = vmatpush1.bf16.msra.mxu0 %v4225
    %4235 = vmatprep.subr.bf16.mxu0 0
    %4236 = vmatpush1.bf16.msra.mxu0 0
    %4237 = vmatprep.subr.bf16.mxu0 0
    %4238 = vmatpush1.bf16.msra.mxu0 0
    %4239 = vmatprep.subr.bf16.mxu0 0
    %4240 = vmatpush1.bf16.msra.mxu0 0
    %4241 = vmatprep.subr.bf16.mxu0 0
    %4242 = vmatpush1.bf16.msra.mxu0 0
    %4243 = vmatprep.subr.bf16.mxu0 0
    %4244 = vmatpush1.bf16.msra.mxu0 0
    %4245 = vmatprep.subr.bf16.mxu0 0
    %4246 = vmatpush1.bf16.msra.mxu0 0
    %4247 = vmatprep.subr.bf16.mxu0 0
    %4248 = vmatpush1.bf16.msra.mxu0 0
    %4249 = vmatprep.subr.bf16.mxu0 0
    %4250 = vmatpush1.bf16.msra.mxu0 0
    %4251 = vmatprep.subr.bf16.mxu0 0
    %4252 = vmatpush1.bf16.msra.mxu0 0
    %4253 = vmatprep.subr.bf16.mxu0 0
    %4254 = vmatpush1.bf16.msra.mxu0 0
    %4255 = vmatprep.subr.bf16.mxu0 0
    %4256 = vmatpush1.bf16.msra.mxu0 0
    %4257 = vmatprep.subr.bf16.mxu0 0
    %4258 = vmatpush1.bf16.msra.mxu0 0
    %4259 = vmatprep.subr.bf16.mxu0 0
    %4260 = vmatpush1.bf16.msra.mxu0 0
    %4261 = vmatprep.subr.bf16.mxu0 0
    %4262 = vmatpush1.bf16.msra.mxu0 0
    %4263 = vmatprep.mubr.bf16.mxu0 0
    %4264 = vmatmul.mubr.bf16.gmra.mrb[0].mxu0 %v4229
    %v4265 = vpop.f32.mrb[0].mxu0
    %v4266 = vadd.f32 0.0, %v4265
    %v4267 = vpop.f32.mrb[0].mxu0
    %v4268 = vpop.f32.mrb[0].mxu0
    %v4269 = vpop.f32.mrb[0].mxu0
    %4270 = vdwg.mxu0
    %v4275 = vunpack.c.l.b16 %v3651
    %v4276 = vunpack.c.l.b16 %v3652
    %v4277 = vunpack.c.l.b16 %v3653
    %v4278 = vunpack.c.l.b16 %v3654
    %v4279 = vpack.c.b16 %v4276, %v4275
    %v4280 = vpack.c.b16 %v4278, %v4277
    %v4284 = vsel %vm279, %v4101, 0
    %4286 = vmatprep.subr.bf16.mxu0 0
    %4287 = vmatpush1.bf16.msra.mxu0 %v4279
    %4288 = vmatprep.subr.bf16.mxu0 0
    %4289 = vmatpush1.bf16.msra.mxu0 %v4280
    %4290 = vmatprep.subr.bf16.mxu0 0
    %4291 = vmatpush1.bf16.msra.mxu0 0
    %4292 = vmatprep.subr.bf16.mxu0 0
    %4293 = vmatpush1.bf16.msra.mxu0 0
    %4294 = vmatprep.subr.bf16.mxu0 0
    %4295 = vmatpush1.bf16.msra.mxu0 0
    %4296 = vmatprep.subr.bf16.mxu0 0
    %4297 = vmatpush1.bf16.msra.mxu0 0
    %4298 = vmatprep.subr.bf16.mxu0 0
    %4299 = vmatpush1.bf16.msra.mxu0 0
    %4300 = vmatprep.subr.bf16.mxu0 0
    %4301 = vmatpush1.bf16.msra.mxu0 0
    %4302 = vmatprep.subr.bf16.mxu0 0
    %4303 = vmatpush1.bf16.msra.mxu0 0
    %4304 = vmatprep.subr.bf16.mxu0 0
    %4305 = vmatpush1.bf16.msra.mxu0 0
    %4306 = vmatprep.subr.bf16.mxu0 0
    %4307 = vmatpush1.bf16.msra.mxu0 0
    %4308 = vmatprep.subr.bf16.mxu0 0
    %4309 = vmatpush1.bf16.msra.mxu0 0
    %4310 = vmatprep.subr.bf16.mxu0 0
    %4311 = vmatpush1.bf16.msra.mxu0 0
    %4312 = vmatprep.subr.bf16.mxu0 0
    %4313 = vmatpush1.bf16.msra.mxu0 0
    %4314 = vmatprep.subr.bf16.mxu0 0
    %4315 = vmatpush1.bf16.msra.mxu0 0
    %4316 = vmatprep.subr.bf16.mxu0 0
    %4317 = vmatpush1.bf16.msra.mxu0 0
    %4318 = vmatprep.mubr.bf16.mxu0 0
    %4319 = vmatmul.mubr.bf16.gmra.mrb[0].mxu0 %v4284
    %v4320 = vpop.f32.mrb[0].mxu0
    %v4321 = vadd.f32 %v4266, %v4320
    %v4322 = vpop.f32.mrb[0].mxu0
    %v4323 = vpop.f32.mrb[0].mxu0
    %v4324 = vpop.f32.mrb[0].mxu0
    %4325 = vdwg.mxu0
    %4326 = vrot.lane.b32.xlu0 %v3994, 64
    %v4327 = vpop.permute.xlu0 %4326
    %4328 = vrot.lane.b32.xlu0 %v3995, 64
    %v4329 = vpop.permute.xlu0 %4328
    %v4331 = vsel %vm279, %v4327, 0
    %v4334 = vsel %vm279, %v4329, 0
    %4336 = vmatprep.subr.bf16.mxu0 0
    %4337 = vmatpush1.bf16.xpose.msra.mxu0 %v4334
    %4338 = vmatprep.subr.bf16.mxu0 0
    %4339 = vmatpush1.bf16.xpose.msra.mxu0 0
    %4340 = vmatprep.subr.bf16.mxu0 0
    %4341 = vmatpush1.bf16.xpose.msra.mxu0 0
    %4342 = vmatprep.subr.bf16.mxu0 0
    %4343 = vmatpush1.bf16.xpose.msra.mxu0 0
    %4344 = vmatprep.subr.bf16.mxu0 0
    %4345 = vmatpush1.bf16.xpose.msra.mxu0 0
    %4346 = vmatprep.subr.bf16.mxu0 0
    %4347 = vmatpush1.bf16.xpose.msra.mxu0 0
    %4348 = vmatprep.subr.bf16.mxu0 0
    %4349 = vmatpush1.bf16.xpose.msra.mxu0 0
    %4350 = vmatprep.subr.bf16.mxu0 0
    %4351 = vmatpush1.bf16.xpose.msra.mxu0 0
    %4352 = vmatprep.subr.bf16.mxu0 0
    %4353 = vmatpush1.bf16.xpose.msra.mxu0 0
    %4354 = vmatprep.subr.bf16.mxu0 0
    %4355 = vmatpush1.bf16.xpose.msra.mxu0 0
    %4356 = vmatprep.subr.bf16.mxu0 0
    %4357 = vmatpush1.bf16.xpose.msra.mxu0 0
    %4358 = vmatprep.subr.bf16.mxu0 0
    %4359 = vmatpush1.bf16.xpose.msra.mxu0 0
    %4360 = vmatprep.subr.bf16.mxu0 0
    %4361 = vmatpush1.bf16.xpose.msra.mxu0 0
    %4362 = vmatprep.subr.bf16.mxu0 0
    %4363 = vmatpush1.bf16.xpose.msra.mxu0 0
    %4364 = vmatprep.subr.bf16.mxu0 0
    %4365 = vmatpush1.bf16.xpose.msra.mxu0 0
    %4366 = vmatprep.subr.bf16.mxu0 0
    %4367 = vmatpush1.bf16.xpose.msra.mxu0 0
    %4368 = vmatprep.mubr.bf16.mxu0 0
    %4369 = vmatmul.mubr.bf16.gmra.mrb[0].mxu0 %v4331
    %v4370 = vpop.f32.mrb[0].mxu0
    %v4371 = vadd.f32 0.0, %v4370
    %v4372 = vpop.f32.mrb[0].mxu0
    %v4373 = vpop.f32.mrb[0].mxu0
    %v4374 = vpop.f32.mrb[0].mxu0
    %4375 = vdwg.mxu0
    %v4376 = vsel %vm830, %v4371, -inf
    %4377 = vmax.xlane.f32.xlu0 %v4376
    %v4378 = vpop.xlane.xlu0 %4377
    %v4379 = vsub.f32 %v4371, %v4378
    %v4380 = vmul.f32 %v4379, 1.442695
    %v4381 = vpow.pop %v4380
    %v4382 = vsel %vm830, %v4381, 0.0
    %4383 = vadd.xlane.f32.xlu0 %v4382
    %v4384 = vpop.xlane.xlu0 %4383
    %v4385 = vrcp.pop %v4384
    %v4386 = vmul.f32 %v4381, %v4385
    %v4387 = vpack.c.bf16 %v4386, %v4386
    %4388 = vrot.lane.b32.xlu0 %v3996, 64
    %v4389 = vpop.permute.xlu0 %4388
    %v4391 = vsel %vm843, %v4387, 0
    %v4394 = vsel %vm207, %v4389, 0
    %4396 = vmatprep.subr.bf16.mxu0 0
    %4397 = vmatpush1.bf16.msra.mxu0 %v4394
    %4398 = vmatprep.subr.bf16.mxu0 0
    %4399 = vmatpush1.bf16.msra.mxu0 0
    %4400 = vmatprep.subr.bf16.mxu0 0
    %4401 = vmatpush1.bf16.msra.mxu0 0
    %4402 = vmatprep.subr.bf16.mxu0 0
    %4403 = vmatpush1.bf16.msra.mxu0 0
    %4404 = vmatprep.subr.bf16.mxu0 0
    %4405 = vmatpush1.bf16.msra.mxu0 0
    %4406 = vmatprep.subr.bf16.mxu0 0
    %4407 = vmatpush1.bf16.msra.mxu0 0
    %4408 = vmatprep.subr.bf16.mxu0 0
    %4409 = vmatpush1.bf16.msra.mxu0 0
    %4410 = vmatprep.subr.bf16.mxu0 0
    %4411 = vmatpush1.bf16.msra.mxu0 0
    %4412 = vmatprep.subr.bf16.mxu0 0
    %4413 = vmatpush1.bf16.msra.mxu0 0
    %4414 = vmatprep.subr.bf16.mxu0 0
    %4415 = vmatpush1.bf16.msra.mxu0 0
    %4416 = vmatprep.subr.bf16.mxu0 0
    %4417 = vmatpush1.bf16.msra.mxu0 0
    %4418 = vmatprep.subr.bf16.mxu0 0
    %4419 = vmatpush1.bf16.msra.mxu0 0
    %4420 = vmatprep.subr.bf16.mxu0 0
    %4421 = vmatpush1.bf16.msra.mxu0 0
    %4422 = vmatprep.subr.bf16.mxu0 0
    %4423 = vmatpush1.bf16.msra.mxu0 0
    %4424 = vmatprep.subr.bf16.mxu0 0
    %4425 = vmatpush1.bf16.msra.mxu0 0
    %4426 = vmatprep.subr.bf16.mxu0 0
    %4427 = vmatpush1.bf16.msra.mxu0 0
    %4428 = vmatprep.mubr.bf16.mxu0 0
    %4429 = vmatmul.mubr.bf16.gmra.mrb[0].mxu0 %v4391
    %v4430 = vpop.f32.mrb[0].mxu0
    %v4431 = vadd.f32 0.0, %v4430
    %v4432 = vpop.f32.mrb[0].mxu0
    %v4433 = vpop.f32.mrb[0].mxu0
    %v4434 = vpop.f32.mrb[0].mxu0
    %4435 = vdwg.mxu0
    %v4436 = vpack.c.bf16 %v4431, %v4431
    %v4441 = vunpack.c.l.b16 %v3659
    %v4442 = vunpack.c.l.b16 %v3660
    %v4443 = vunpack.c.l.b16 %v3661
    %v4444 = vunpack.c.l.b16 %v3662
    %v4445 = vpack.c.b16 %v4442, %v4441
    %v4446 = vpack.c.b16 %v4444, %v4443
    %v4450 = vsel %vm279, %v4436, 0
    %4452 = vmatprep.subr.bf16.mxu0 0
    %4453 = vmatpush1.bf16.msra.mxu0 %v4445
    %4454 = vmatprep.subr.bf16.mxu0 0
    %4455 = vmatpush1.bf16.msra.mxu0 %v4446
    %4456 = vmatprep.subr.bf16.mxu0 0
    %4457 = vmatpush1.bf16.msra.mxu0 0
    %4458 = vmatprep.subr.bf16.mxu0 0
    %4459 = vmatpush1.bf16.msra.mxu0 0
    %4460 = vmatprep.subr.bf16.mxu0 0
    %4461 = vmatpush1.bf16.msra.mxu0 0
    %4462 = vmatprep.subr.bf16.mxu0 0
    %4463 = vmatpush1.bf16.msra.mxu0 0
    %4464 = vmatprep.subr.bf16.mxu0 0
    %4465 = vmatpush1.bf16.msra.mxu0 0
    %4466 = vmatprep.subr.bf16.mxu0 0
    %4467 = vmatpush1.bf16.msra.mxu0 0
    %4468 = vmatprep.subr.bf16.mxu0 0
    %4469 = vmatpush1.bf16.msra.mxu0 0
    %4470 = vmatprep.subr.bf16.mxu0 0
    %4471 = vmatpush1.bf16.msra.mxu0 0
    %4472 = vmatprep.subr.bf16.mxu0 0
    %4473 = vmatpush1.bf16.msra.mxu0 0
    %4474 = vmatprep.subr.bf16.mxu0 0
    %4475 = vmatpush1.bf16.msra.mxu0 0
    %4476 = vmatprep.subr.bf16.mxu0 0
    %4477 = vmatpush1.bf16.msra.mxu0 0
    %4478 = vmatprep.subr.bf16.mxu0 0
    %4479 = vmatpush1.bf16.msra.mxu0 0
    %4480 = vmatprep.subr.bf16.mxu0 0
    %4481 = vmatpush1.bf16.msra.mxu0 0
    %4482 = vmatprep.subr.bf16.mxu0 0
    %4483 = vmatpush1.bf16.msra.mxu0 0
    %4484 = vmatprep.mubr.bf16.mxu0 0
    %4485 = vmatmul.mubr.bf16.gmra.mrb[0].mxu0 %v4450
    %v4486 = vpop.f32.mrb[0].mxu0
    %v4487 = vadd.f32 0.0, %v4486
    %v4488 = vpop.f32.mrb[0].mxu0
    %v4489 = vpop.f32.mrb[0].mxu0
    %v4490 = vpop.f32.mrb[0].mxu0
    %4491 = vdwg.mxu0
    %v4492 = vadd.f32 %v4321, %v4487
    %4493 = vrot.lane.b32.xlu0 %v3994, 32
    %v4494 = vpop.permute.xlu0 %4493
    %4495 = vrot.lane.b32.xlu0 %v3995, 32
    %v4496 = vpop.permute.xlu0 %4495
    %v4498 = vsel %vm279, %v4494, 0
    %v4501 = vsel %vm279, %v4496, 0
    %4503 = vmatprep.subr.bf16.mxu0 0
    %4504 = vmatpush1.bf16.xpose.msra.mxu0 %v4501
    %4505 = vmatprep.subr.bf16.mxu0 0
    %4506 = vmatpush1.bf16.xpose.msra.mxu0 0
    %4507 = vmatprep.subr.bf16.mxu0 0
    %4508 = vmatpush1.bf16.xpose.msra.mxu0 0
    %4509 = vmatprep.subr.bf16.mxu0 0
    %4510 = vmatpush1.bf16.xpose.msra.mxu0 0
    %4511 = vmatprep.subr.bf16.mxu0 0
    %4512 = vmatpush1.bf16.xpose.msra.mxu0 0
    %4513 = vmatprep.subr.bf16.mxu0 0
    %4514 = vmatpush1.bf16.xpose.msra.mxu0 0
    %4515 = vmatprep.subr.bf16.mxu0 0
    %4516 = vmatpush1.bf16.xpose.msra.mxu0 0
    %4517 = vmatprep.subr.bf16.mxu0 0
    %4518 = vmatpush1.bf16.xpose.msra.mxu0 0
    %4519 = vmatprep.subr.bf16.mxu0 0
    %4520 = vmatpush1.bf16.xpose.msra.mxu0 0
    %4521 = vmatprep.subr.bf16.mxu0 0
    %4522 = vmatpush1.bf16.xpose.msra.mxu0 0
    %4523 = vmatprep.subr.bf16.mxu0 0
    %4524 = vmatpush1.bf16.xpose.msra.mxu0 0
    %4525 = vmatprep.subr.bf16.mxu0 0
    %4526 = vmatpush1.bf16.xpose.msra.mxu0 0
    %4527 = vmatprep.subr.bf16.mxu0 0
    %4528 = vmatpush1.bf16.xpose.msra.mxu0 0
    %4529 = vmatprep.subr.bf16.mxu0 0
    %4530 = vmatpush1.bf16.xpose.msra.mxu0 0
    %4531 = vmatprep.subr.bf16.mxu0 0
    %4532 = vmatpush1.bf16.xpose.msra.mxu0 0
    %4533 = vmatprep.subr.bf16.mxu0 0
    %4534 = vmatpush1.bf16.xpose.msra.mxu0 0
    %4535 = vmatprep.mubr.bf16.mxu0 0
    %4536 = vmatmul.mubr.bf16.gmra.mrb[0].mxu0 %v4498
    %v4537 = vpop.f32.mrb[0].mxu0
    %v4538 = vadd.f32 0.0, %v4537
    %v4539 = vpop.f32.mrb[0].mxu0
    %v4540 = vpop.f32.mrb[0].mxu0
    %v4541 = vpop.f32.mrb[0].mxu0
    %4542 = vdwg.mxu0
    %v4543 = vsel %vm830, %v4538, -inf
    %4544 = vmax.xlane.f32.xlu0 %v4543
    %v4545 = vpop.xlane.xlu0 %4544
    %v4546 = vsub.f32 %v4538, %v4545
    %v4547 = vmul.f32 %v4546, 1.442695
    %v4548 = vpow.pop %v4547
    %v4549 = vsel %vm830, %v4548, 0.0
    %4550 = vadd.xlane.f32.xlu0 %v4549
    %v4551 = vpop.xlane.xlu0 %4550
    %v4552 = vrcp.pop %v4551
    %v4553 = vmul.f32 %v4548, %v4552
    %v4554 = vpack.c.bf16 %v4553, %v4553
    %4555 = vrot.lane.b32.xlu0 %v3996, 32
    %v4556 = vpop.permute.xlu0 %4555
    %v4558 = vsel %vm843, %v4554, 0
    %v4561 = vsel %vm207, %v4556, 0
    %4563 = vmatprep.subr.bf16.mxu0 0
    %4564 = vmatpush1.bf16.msra.mxu0 %v4561
    %4565 = vmatprep.subr.bf16.mxu0 0
    %4566 = vmatpush1.bf16.msra.mxu0 0
    %4567 = vmatprep.subr.bf16.mxu0 0
    %4568 = vmatpush1.bf16.msra.mxu0 0
    %4569 = vmatprep.subr.bf16.mxu0 0
    %4570 = vmatpush1.bf16.msra.mxu0 0
    %4571 = vmatprep.subr.bf16.mxu0 0
    %4572 = vmatpush1.bf16.msra.mxu0 0
    %4573 = vmatprep.subr.bf16.mxu0 0
    %4574 = vmatpush1.bf16.msra.mxu0 0
    %4575 = vmatprep.subr.bf16.mxu0 0
    %4576 = vmatpush1.bf16.msra.mxu0 0
    %4577 = vmatprep.subr.bf16.mxu0 0
    %4578 = vmatpush1.bf16.msra.mxu0 0
    %4579 = vmatprep.subr.bf16.mxu0 0
    %4580 = vmatpush1.bf16.msra.mxu0 0
    %4581 = vmatprep.subr.bf16.mxu0 0
    %4582 = vmatpush1.bf16.msra.mxu0 0
    %4583 = vmatprep.subr.bf16.mxu0 0
    %4584 = vmatpush1.bf16.msra.mxu0 0
    %4585 = vmatprep.subr.bf16.mxu0 0
    %4586 = vmatpush1.bf16.msra.mxu0 0
    %4587 = vmatprep.subr.bf16.mxu0 0
    %4588 = vmatpush1.bf16.msra.mxu0 0
    %4589 = vmatprep.subr.bf16.mxu0 0
    %4590 = vmatpush1.bf16.msra.mxu0 0
    %4591 = vmatprep.subr.bf16.mxu0 0
    %4592 = vmatpush1.bf16.msra.mxu0 0
    %4593 = vmatprep.subr.bf16.mxu0 0
    %4594 = vmatpush1.bf16.msra.mxu0 0
    %4595 = vmatprep.mubr.bf16.mxu0 0
    %4596 = vmatmul.mubr.bf16.gmra.mrb[0].mxu0 %v4558
    %v4597 = vpop.f32.mrb[0].mxu0
    %v4598 = vadd.f32 0.0, %v4597
    %v4599 = vpop.f32.mrb[0].mxu0
    %v4600 = vpop.f32.mrb[0].mxu0
    %v4601 = vpop.f32.mrb[0].mxu0
    %4602 = vdwg.mxu0
    %v4603 = vpack.c.bf16 %v4598, %v4598
    %v4608 = vunpack.c.l.b16 %v3663
    %v4609 = vunpack.c.l.b16 %v3664
    %v4610 = vunpack.c.l.b16 %v3665
    %v4611 = vunpack.c.l.b16 %v3666
    %v4612 = vpack.c.b16 %v4609, %v4608
    %v4613 = vpack.c.b16 %v4611, %v4610
    %v4617 = vsel %vm279, %v4603, 0
    %4619 = vmatprep.subr.bf16.mxu0 0
    %4620 = vmatpush1.bf16.msra.mxu0 %v4612
    %4621 = vmatprep.subr.bf16.mxu0 0
    %4622 = vmatpush1.bf16.msra.mxu0 %v4613
    %4623 = vmatprep.subr.bf16.mxu0 0
    %4624 = vmatpush1.bf16.msra.mxu0 0
    %4625 = vmatprep.subr.bf16.mxu0 0
    %4626 = vmatpush1.bf16.msra.mxu0 0
    %4627 = vmatprep.subr.bf16.mxu0 0
    %4628 = vmatpush1.bf16.msra.mxu0 0
    %4629 = vmatprep.subr.bf16.mxu0 0
    %4630 = vmatpush1.bf16.msra.mxu0 0
    %4631 = vmatprep.subr.bf16.mxu0 0
    %4632 = vmatpush1.bf16.msra.mxu0 0
    %4633 = vmatprep.subr.bf16.mxu0 0
    %4634 = vmatpush1.bf16.msra.mxu0 0
    %4635 = vmatprep.subr.bf16.mxu0 0
    %4636 = vmatpush1.bf16.msra.mxu0 0
    %4637 = vmatprep.subr.bf16.mxu0 0
    %4638 = vmatpush1.bf16.msra.mxu0 0
    %4639 = vmatprep.subr.bf16.mxu0 0
    %4640 = vmatpush1.bf16.msra.mxu0 0
    %4641 = vmatprep.subr.bf16.mxu0 0
    %4642 = vmatpush1.bf16.msra.mxu0 0
    %4643 = vmatprep.subr.bf16.mxu0 0
    %4644 = vmatpush1.bf16.msra.mxu0 0
    %4645 = vmatprep.subr.bf16.mxu0 0
    %4646 = vmatpush1.bf16.msra.mxu0 0
    %4647 = vmatprep.subr.bf16.mxu0 0
    %4648 = vmatpush1.bf16.msra.mxu0 0
    %4649 = vmatprep.subr.bf16.mxu0 0
    %4650 = vmatpush1.bf16.msra.mxu0 0
    %4651 = vmatprep.mubr.bf16.mxu0 0
    %4652 = vmatmul.mubr.bf16.gmra.mrb[0].mxu0 %v4617
    %v4653 = vpop.f32.mrb[0].mxu0
    %v4654 = vadd.f32 0.0, %v4653
    %v4655 = vpop.f32.mrb[0].mxu0
    %v4656 = vpop.f32.mrb[0].mxu0
    %v4657 = vpop.f32.mrb[0].mxu0
    %4658 = vdwg.mxu0
    %v4659 = vadd.f32 %v4492, %v4654
    %s4660 = scalar_lea.vmem %s10, 2
    %v4661 = vld [vmem:[%s4660] sm:$0x1]
    %v4663 = vlaneseq
    %v4664 = vshrl.u32 %v4663, 7
    %v4665 = vsub.s32 0, %v4664
    %v4666 = vrot.slane %v4661, %v4665
    %v4668 = vadd.f32 %v4659, %v4666
    %v4669 = vadd.f32 %v4668, %v4668
    %v4670 = vpack.c.bf16 %v4669, %v4669
    %s4671 = scalar_lea.vmem %s12, 8
    %v4672 = vld [vmem:[%s4671] sm:$0xf]
    %v4674 = vlaneseq
    %v4675 = vshrl.u32 %v4674, 7
    %v4676 = vsub.s32 0, %v4675
    %v4677 = vrot.slane %v4672, %v4676
    %v4678 = vlaneseq
    %v4679 = vshrl.u32 %v4678, 7
    %v4680 = vsub.s32 1, %v4679
    %v4681 = vrot.slane %v4672, %v4680
    %v4682 = vlaneseq
    %v4683 = vshrl.u32 %v4682, 7
    %v4684 = vsub.s32 2, %v4683
    %v4685 = vrot.slane %v4672, %v4684
    %v4686 = vlaneseq
    %v4687 = vshrl.u32 %v4686, 7
    %v4688 = vsub.s32 3, %v4687
    %v4689 = vrot.slane %v4672, %v4688
    %v4726 = vunpack.c.l.b16 %v3668
    %v4727 = vunpack.c.h.b16 %v3668
    %v4728 = vunpack.c.l.b16 %v3669
    %v4729 = vunpack.c.h.b16 %v3669
    %v4730 = vunpack.c.l.b16 %v3670
    %v4731 = vunpack.c.h.b16 %v3670
    %v4732 = vunpack.c.l.b16 %v3671
    %v4733 = vunpack.c.h.b16 %v3671
    %v4734 = vunpack.c.l.b16 %v3672
    %v4735 = vunpack.c.h.b16 %v3672
    %v4736 = vunpack.c.l.b16 %v3673
    %v4737 = vunpack.c.h.b16 %v3673
    %v4738 = vunpack.c.l.b16 %v3674
    %v4739 = vunpack.c.h.b16 %v3674
    %v4740 = vunpack.c.l.b16 %v3675
    %v4741 = vunpack.c.h.b16 %v3675
    %v4742 = vunpack.c.l.b16 %v3676
    %v4743 = vunpack.c.h.b16 %v3676
    %v4744 = vunpack.c.l.b16 %v3677
    %v4745 = vunpack.c.h.b16 %v3677
    %v4746 = vunpack.c.l.b16 %v3678
    %v4747 = vunpack.c.h.b16 %v3678
    %v4748 = vunpack.c.l.b16 %v3679
    %v4749 = vunpack.c.h.b16 %v3679
    %v4750 = vunpack.c.l.b16 %v3680
    %v4751 = vunpack.c.h.b16 %v3680
    %v4752 = vunpack.c.l.b16 %v3681
    %v4753 = vunpack.c.h.b16 %v3681
    %v4754 = vunpack.c.l.b16 %v3682
    %v4755 = vunpack.c.h.b16 %v3682
    %v4756 = vunpack.c.l.b16 %v3683
    %v4757 = vunpack.c.h.b16 %v3683
    %v4758 = vunpack.c.l.b16 %v3684
    %v4759 = vunpack.c.h.b16 %v3684
    %v4760 = vunpack.c.l.b16 %v3685
    %v4761 = vunpack.c.h.b16 %v3685
    %v4762 = vunpack.c.l.b16 %v3686
    %v4763 = vunpack.c.h.b16 %v3686
    %v4764 = vunpack.c.l.b16 %v3687
    %v4765 = vunpack.c.h.b16 %v3687
    %v4766 = vunpack.c.l.b16 %v3688
    %v4767 = vunpack.c.h.b16 %v3688
    %v4768 = vunpack.c.l.b16 %v3689
    %v4769 = vunpack.c.h.b16 %v3689
    %v4770 = vunpack.c.l.b16 %v3690
    %v4771 = vunpack.c.h.b16 %v3690
    %v4772 = vunpack.c.l.b16 %v3691
    %v4773 = vunpack.c.h.b16 %v3691
    %v4774 = vunpack.c.l.b16 %v3692
    %v4775 = vunpack.c.h.b16 %v3692
    %v4776 = vunpack.c.l.b16 %v3693
    %v4777 = vunpack.c.h.b16 %v3693
    %v4778 = vunpack.c.l.b16 %v3694
    %v4779 = vunpack.c.h.b16 %v3694
    %v4780 = vunpack.c.l.b16 %v3695
    %v4781 = vunpack.c.h.b16 %v3695
    %v4782 = vunpack.c.l.b16 %v3696
    %v4783 = vunpack.c.h.b16 %v3696
    %v4784 = vunpack.c.l.b16 %v3697
    %v4785 = vunpack.c.h.b16 %v3697
    %v4786 = vunpack.c.l.b16 %v3698
    %v4787 = vunpack.c.h.b16 %v3698
    %v4788 = vunpack.c.l.b16 %v3699
    %v4789 = vunpack.c.h.b16 %v3699
    %v4790 = vpack.c.b16 %v4730, %v4726
    %v4791 = vpack.c.b16 %v4731, %v4727
    %v4792 = vpack.c.b16 %v4732, %v4728
    %v4793 = vpack.c.b16 %v4733, %v4729
    %v4794 = vpack.c.b16 %v4738, %v4734
    %v4795 = vpack.c.b16 %v4739, %v4735
    %v4796 = vpack.c.b16 %v4740, %v4736
    %v4797 = vpack.c.b16 %v4741, %v4737
    %v4798 = vpack.c.b16 %v4746, %v4742
    %v4799 = vpack.c.b16 %v4747, %v4743
    %v4800 = vpack.c.b16 %v4748, %v4744
    %v4801 = vpack.c.b16 %v4749, %v4745
    %v4802 = vpack.c.b16 %v4754, %v4750
    %v4803 = vpack.c.b16 %v4755, %v4751
    %v4804 = vpack.c.b16 %v4756, %v4752
    %v4805 = vpack.c.b16 %v4757, %v4753
    %v4806 = vpack.c.b16 %v4762, %v4758
    %v4807 = vpack.c.b16 %v4763, %v4759
    %v4808 = vpack.c.b16 %v4764, %v4760
    %v4809 = vpack.c.b16 %v4765, %v4761
    %v4810 = vpack.c.b16 %v4770, %v4766
    %v4811 = vpack.c.b16 %v4771, %v4767
    %v4812 = vpack.c.b16 %v4772, %v4768
    %v4813 = vpack.c.b16 %v4773, %v4769
    %v4814 = vpack.c.b16 %v4778, %v4774
    %v4815 = vpack.c.b16 %v4779, %v4775
    %v4816 = vpack.c.b16 %v4780, %v4776
    %v4817 = vpack.c.b16 %v4781, %v4777
    %v4818 = vpack.c.b16 %v4786, %v4782
    %v4819 = vpack.c.b16 %v4787, %v4783
    %v4820 = vpack.c.b16 %v4788, %v4784
    %v4821 = vpack.c.b16 %v4789, %v4785
    %4854 = vmatprep.subr.bf16.mxu0 %v4791
    %4855 = vmatpush1.bf16.msra.mxu0 %v4790
    %4856 = vmatprep.subr.bf16.mxu0 %v4795
    %4857 = vmatpush1.bf16.msra.mxu0 %v4794
    %4858 = vmatprep.subr.bf16.mxu0 %v4799
    %4859 = vmatpush1.bf16.msra.mxu0 %v4798
    %4860 = vmatprep.subr.bf16.mxu0 %v4803
    %4861 = vmatpush1.bf16.msra.mxu0 %v4802
    %4862 = vmatprep.subr.bf16.mxu0 %v4807
    %4863 = vmatpush1.bf16.msra.mxu0 %v4806
    %4864 = vmatprep.subr.bf16.mxu0 %v4811
    %4865 = vmatpush1.bf16.msra.mxu0 %v4810
    %4866 = vmatprep.subr.bf16.mxu0 %v4815
    %4867 = vmatpush1.bf16.msra.mxu0 %v4814
    %4868 = vmatprep.subr.bf16.mxu0 %v4819
    %4869 = vmatpush1.bf16.msra.mxu0 %v4818
    %4870 = vmatprep.subr.bf16.mxu0 0
    %4871 = vmatpush1.bf16.msra.mxu0 0
    %4872 = vmatprep.subr.bf16.mxu0 0
    %4873 = vmatpush1.bf16.msra.mxu0 0
    %4874 = vmatprep.subr.bf16.mxu0 0
    %4875 = vmatpush1.bf16.msra.mxu0 0
    %4876 = vmatprep.subr.bf16.mxu0 0
    %4877 = vmatpush1.bf16.msra.mxu0 0
    %4878 = vmatprep.subr.bf16.mxu0 0
    %4879 = vmatpush1.bf16.msra.mxu0 0
    %4880 = vmatprep.subr.bf16.mxu0 0
    %4881 = vmatpush1.bf16.msra.mxu0 0
    %4882 = vmatprep.subr.bf16.mxu0 0
    %4883 = vmatpush1.bf16.msra.mxu0 0
    %4884 = vmatprep.subr.bf16.mxu0 0
    %4885 = vmatpush1.bf16.msra.mxu0 0
    %4886 = vmatprep.mubr.bf16.mxu0 0
    %4887 = vmatmul.mubr.bf16.gmra.mrb[0].mxu0 %v4670
    %v4888 = vpop.f32.mrb[0].mxu0
    %v4889 = vadd.f32 %v4677, %v4888
    %v4890 = vpop.f32.mrb[0].mxu0
    %v4891 = vadd.f32 %v4681, %v4890
    %v4892 = vpop.f32.mrb[0].mxu0
    %v4893 = vpop.f32.mrb[0].mxu0
    %4894 = vdwg.mxu0
    %4895 = vmatprep.subr.bf16.mxu0 %v4793
    %4896 = vmatpush1.bf16.msra.mxu0 %v4792
    %4897 = vmatprep.subr.bf16.mxu0 %v4797
    %4898 = vmatpush1.bf16.msra.mxu0 %v4796
    %4899 = vmatprep.subr.bf16.mxu0 %v4801
    %4900 = vmatpush1.bf16.msra.mxu0 %v4800
    %4901 = vmatprep.subr.bf16.mxu0 %v4805
    %4902 = vmatpush1.bf16.msra.mxu0 %v4804
    %4903 = vmatprep.subr.bf16.mxu0 %v4809
    %4904 = vmatpush1.bf16.msra.mxu0 %v4808
    %4905 = vmatprep.subr.bf16.mxu0 %v4813
    %4906 = vmatpush1.bf16.msra.mxu0 %v4812
    %4907 = vmatprep.subr.bf16.mxu0 %v4817
    %4908 = vmatpush1.bf16.msra.mxu0 %v4816
    %4909 = vmatprep.subr.bf16.mxu0 %v4821
    %4910 = vmatpush1.bf16.msra.mxu0 %v4820
    %4911 = vmatprep.subr.bf16.mxu0 0
    %4912 = vmatpush1.bf16.msra.mxu0 0
    %4913 = vmatprep.subr.bf16.mxu0 0
    %4914 = vmatpush1.bf16.msra.mxu0 0
    %4915 = vmatprep.subr.bf16.mxu0 0
    %4916 = vmatpush1.bf16.msra.mxu0 0
    %4917 = vmatprep.subr.bf16.mxu0 0
    %4918 = vmatpush1.bf16.msra.mxu0 0
    %4919 = vmatprep.subr.bf16.mxu0 0
    %4920 = vmatpush1.bf16.msra.mxu0 0
    %4921 = vmatprep.subr.bf16.mxu0 0
    %4922 = vmatpush1.bf16.msra.mxu0 0
    %4923 = vmatprep.subr.bf16.mxu0 0
    %4924 = vmatpush1.bf16.msra.mxu0 0
    %4925 = vmatprep.subr.bf16.mxu0 0
    %4926 = vmatpush1.bf16.msra.mxu0 0
    %4927 = vmatprep.mubr.bf16.mxu0 0
    %4928 = vmatmul.mubr.bf16.gmra.mrb[0].mxu0 %v4670
    %v4929 = vpop.f32.mrb[0].mxu0
    %v4930 = vadd.f32 %v4685, %v4929
    %v4931 = vpop.f32.mrb[0].mxu0
    %v4932 = vadd.f32 %v4689, %v4931
    %v4933 = vpop.f32.mrb[0].mxu0
    %v4934 = vpop.f32.mrb[0].mxu0
    %4935 = vdwg.mxu0
    %v4936 = vmax.f32 %v4889, 0.0
    %v4937 = vmax.f32 %v4891, 0.0
    %v4938 = vmax.f32 %v4930, 0.0
    %v4939 = vmax.f32 %v4932, 0.0
    %v4940 = vpack.c.bf16 %v4936, %v4936
    %v4941 = vpack.c.bf16 %v4937, %v4937
    %v4942 = vpack.c.bf16 %v4938, %v4938
    %v4943 = vpack.c.bf16 %v4939, %v4939
    %s4944 = scalar_lea.vmem [#allocation19], 2
    %v4945 = vld [vmem:[%s4944] sm:$0x1]
    %v4947 = vlaneseq
    %v4948 = vshrl.u32 %v4947, 7
    %v4949 = vsub.s32 0, %v4948
    %v4950 = vrot.slane %v4945, %v4949
    %v5016 = vunpack.c.l.b16 %v3701
    %v5017 = vunpack.c.l.b16 %v3702
    %v5018 = vunpack.c.l.b16 %v3703
    %v5019 = vunpack.c.l.b16 %v3704
    %v5020 = vunpack.c.l.b16 %v3705
    %v5021 = vunpack.c.l.b16 %v3706
    %v5022 = vunpack.c.l.b16 %v3707
    %v5023 = vunpack.c.l.b16 %v3708
    %v5024 = vunpack.c.l.b16 %v3709
    %v5025 = vunpack.c.l.b16 %v3710
    %v5026 = vunpack.c.l.b16 %v3711
    %v5027 = vunpack.c.l.b16 %v3712
    %v5028 = vunpack.c.l.b16 %v3713
    %v5029 = vunpack.c.l.b16 %v3714
    %v5030 = vunpack.c.l.b16 %v3715
    %v5031 = vunpack.c.l.b16 %v3716
    %v5032 = vunpack.c.l.b16 %v3717
    %v5033 = vunpack.c.l.b16 %v3718
    %v5034 = vunpack.c.l.b16 %v3719
    %v5035 = vunpack.c.l.b16 %v3720
    %v5036 = vunpack.c.l.b16 %v3721
    %v5037 = vunpack.c.l.b16 %v3722
    %v5038 = vunpack.c.l.b16 %v3723
    %v5039 = vunpack.c.l.b16 %v3724
    %v5040 = vunpack.c.l.b16 %v3725
    %v5041 = vunpack.c.l.b16 %v3726
    %v5042 = vunpack.c.l.b16 %v3727
    %v5043 = vunpack.c.l.b16 %v3728
    %v5044 = vunpack.c.l.b16 %v3729
    %v5045 = vunpack.c.l.b16 %v3730
    %v5046 = vunpack.c.l.b16 %v3731
    %v5047 = vunpack.c.l.b16 %v3732
    %v5048 = vunpack.c.l.b16 %v3733
    %v5049 = vunpack.c.l.b16 %v3734
    %v5050 = vunpack.c.l.b16 %v3735
    %v5051 = vunpack.c.l.b16 %v3736
    %v5052 = vunpack.c.l.b16 %v3737
    %v5053 = vunpack.c.l.b16 %v3738
    %v5054 = vunpack.c.l.b16 %v3739
    %v5055 = vunpack.c.l.b16 %v3740
    %v5056 = vunpack.c.l.b16 %v3741
    %v5057 = vunpack.c.l.b16 %v3742
    %v5058 = vunpack.c.l.b16 %v3743
    %v5059 = vunpack.c.l.b16 %v3744
    %v5060 = vunpack.c.l.b16 %v3745
    %v5061 = vunpack.c.l.b16 %v3746
    %v5062 = vunpack.c.l.b16 %v3747
    %v5063 = vunpack.c.l.b16 %v3748
    %v5064 = vunpack.c.l.b16 %v3749
    %v5065 = vunpack.c.l.b16 %v3750
    %v5066 = vunpack.c.l.b16 %v3751
    %v5067 = vunpack.c.l.b16 %v3752
    %v5068 = vunpack.c.l.b16 %v3753
    %v5069 = vunpack.c.l.b16 %v3754
    %v5070 = vunpack.c.l.b16 %v3755
    %v5071 = vunpack.c.l.b16 %v3756
    %v5072 = vunpack.c.l.b16 %v3757
    %v5073 = vunpack.c.l.b16 %v3758
    %v5074 = vunpack.c.l.b16 %v3759
    %v5075 = vunpack.c.l.b16 %v3760
    %v5076 = vunpack.c.l.b16 %v3761
    %v5077 = vunpack.c.l.b16 %v3762
    %v5078 = vunpack.c.l.b16 %v3763
    %v5079 = vunpack.c.l.b16 %v3764
    %v5080 = vpack.c.b16 %v5017, %v5016
    %v5081 = vpack.c.b16 %v5019, %v5018
    %v5082 = vpack.c.b16 %v5021, %v5020
    %v5083 = vpack.c.b16 %v5023, %v5022
    %v5084 = vpack.c.b16 %v5025, %v5024
    %v5085 = vpack.c.b16 %v5027, %v5026
    %v5086 = vpack.c.b16 %v5029, %v5028
    %v5087 = vpack.c.b16 %v5031, %v5030
    %v5088 = vpack.c.b16 %v5033, %v5032
    %v5089 = vpack.c.b16 %v5035, %v5034
    %v5090 = vpack.c.b16 %v5037, %v5036
    %v5091 = vpack.c.b16 %v5039, %v5038
    %v5092 = vpack.c.b16 %v5041, %v5040
    %v5093 = vpack.c.b16 %v5043, %v5042
    %v5094 = vpack.c.b16 %v5045, %v5044
    %v5095 = vpack.c.b16 %v5047, %v5046
    %v5096 = vpack.c.b16 %v5049, %v5048
    %v5097 = vpack.c.b16 %v5051, %v5050
    %v5098 = vpack.c.b16 %v5053, %v5052
    %v5099 = vpack.c.b16 %v5055, %v5054
    %v5100 = vpack.c.b16 %v5057, %v5056
    %v5101 = vpack.c.b16 %v5059, %v5058
    %v5102 = vpack.c.b16 %v5061, %v5060
    %v5103 = vpack.c.b16 %v5063, %v5062
    %v5104 = vpack.c.b16 %v5065, %v5064
    %v5105 = vpack.c.b16 %v5067, %v5066
    %v5106 = vpack.c.b16 %v5069, %v5068
    %v5107 = vpack.c.b16 %v5071, %v5070
    %v5108 = vpack.c.b16 %v5073, %v5072
    %v5109 = vpack.c.b16 %v5075, %v5074
    %v5110 = vpack.c.b16 %v5077, %v5076
    %v5111 = vpack.c.b16 %v5079, %v5078
    %5144 = vmatprep.subr.bf16.mxu0 0
    %5145 = vmatpush1.bf16.msra.mxu0 %v5080
    %5146 = vmatprep.subr.bf16.mxu0 0
    %5147 = vmatpush1.bf16.msra.mxu0 %v5081
    %5148 = vmatprep.subr.bf16.mxu0 0
    %5149 = vmatpush1.bf16.msra.mxu0 %v5082
    %5150 = vmatprep.subr.bf16.mxu0 0
    %5151 = vmatpush1.bf16.msra.mxu0 %v5083
    %5152 = vmatprep.subr.bf16.mxu0 0
    %5153 = vmatpush1.bf16.msra.mxu0 %v5084
    %5154 = vmatprep.subr.bf16.mxu0 0
    %5155 = vmatpush1.bf16.msra.mxu0 %v5085
    %5156 = vmatprep.subr.bf16.mxu0 0
    %5157 = vmatpush1.bf16.msra.mxu0 %v5086
    %5158 = vmatprep.subr.bf16.mxu0 0
    %5159 = vmatpush1.bf16.msra.mxu0 %v5087
    %5160 = vmatprep.subr.bf16.mxu0 0
    %5161 = vmatpush1.bf16.msra.mxu0 %v5088
    %5162 = vmatprep.subr.bf16.mxu0 0
    %5163 = vmatpush1.bf16.msra.mxu0 %v5089
    %5164 = vmatprep.subr.bf16.mxu0 0
    %5165 = vmatpush1.bf16.msra.mxu0 %v5090
    %5166 = vmatprep.subr.bf16.mxu0 0
    %5167 = vmatpush1.bf16.msra.mxu0 %v5091
    %5168 = vmatprep.subr.bf16.mxu0 0
    %5169 = vmatpush1.bf16.msra.mxu0 %v5092
    %5170 = vmatprep.subr.bf16.mxu0 0
    %5171 = vmatpush1.bf16.msra.mxu0 %v5093
    %5172 = vmatprep.subr.bf16.mxu0 0
    %5173 = vmatpush1.bf16.msra.mxu0 %v5094
    %5174 = vmatprep.subr.bf16.mxu0 0
    %5175 = vmatpush1.bf16.msra.mxu0 %v5095
    %5176 = vmatprep.mubr.bf16.mxu0 %v4941
    %5177 = vmatmul.mubr.bf16.gmra.mrb[0].mxu0 %v4940
    %v5178 = vpop.f32.mrb[0].mxu0
    %v5179 = vadd.f32 %v4950, %v5178
    %v5180 = vpop.f32.mrb[0].mxu0
    %v5181 = vpop.f32.mrb[0].mxu0
    %v5182 = vpop.f32.mrb[0].mxu0
    %5183 = vdwg.mxu0
    %5184 = vmatprep.subr.bf16.mxu0 0
    %5185 = vmatpush1.bf16.msra.mxu0 %v5096
    %5186 = vmatprep.subr.bf16.mxu0 0
    %5187 = vmatpush1.bf16.msra.mxu0 %v5097
    %5188 = vmatprep.subr.bf16.mxu0 0
    %5189 = vmatpush1.bf16.msra.mxu0 %v5098
    %5190 = vmatprep.subr.bf16.mxu0 0
    %5191 = vmatpush1.bf16.msra.mxu0 %v5099
    %5192 = vmatprep.subr.bf16.mxu0 0
    %5193 = vmatpush1.bf16.msra.mxu0 %v5100
    %5194 = vmatprep.subr.bf16.mxu0 0
    %5195 = vmatpush1.bf16.msra.mxu0 %v5101
    %5196 = vmatprep.subr.bf16.mxu0 0
    %5197 = vmatpush1.bf16.msra.mxu0 %v5102
    %5198 = vmatprep.subr.bf16.mxu0 0
    %5199 = vmatpush1.bf16.msra.mxu0 %v5103
    %5200 = vmatprep.subr.bf16.mxu0 0
    %5201 = vmatpush1.bf16.msra.mxu0 %v5104
    %5202 = vmatprep.subr.bf16.mxu0 0
    %5203 = vmatpush1.bf16.msra.mxu0 %v5105
    %5204 = vmatprep.subr.bf16.mxu0 0
    %5205 = vmatpush1.bf16.msra.mxu0 %v5106
    %5206 = vmatprep.subr.bf16.mxu0 0
    %5207 = vmatpush1.bf16.msra.mxu0 %v5107
    %5208 = vmatprep.subr.bf16.mxu0 0
    %5209 = vmatpush1.bf16.msra.mxu0 %v5108
    %5210 = vmatprep.subr.bf16.mxu0 0
    %5211 = vmatpush1.bf16.msra.mxu0 %v5109
    %5212 = vmatprep.subr.bf16.mxu0 0
    %5213 = vmatpush1.bf16.msra.mxu0 %v5110
    %5214 = vmatprep.subr.bf16.mxu0 0
    %5215 = vmatpush1.bf16.msra.mxu0 %v5111
    %5216 = vmatprep.mubr.bf16.mxu0 %v4943
    %5217 = vmatmul.mubr.bf16.gmra.mrb[0].mxu0 %v4942
    %v5218 = vpop.f32.mrb[0].mxu0
    %v5219 = vadd.f32 %v5179, %v5218
    %v5220 = vpop.f32.mrb[0].mxu0
    %v5221 = vpop.f32.mrb[0].mxu0
    %v5222 = vpop.f32.mrb[0].mxu0
    %5223 = vdwg.mxu0
    %s5224 = scalar_lea.vmem [#allocation13], 576
    %v5225 = vld [vmem:[%s5224] sm:$0xff]
    %v5226 = vld [vmem:[%s5224 + $0x8] sm:$0xf]
    %v5227 = vld [vmem:[%s5224 + $0xc] sm:$0xff]
    %v5228 = vld [vmem:[%s5224 + $0x14] sm:$0xf]
    %v5229 = vld [vmem:[%s5224 + $0x18] sm:$0xff]
    %v5230 = vld [vmem:[%s5224 + $0x20] sm:$0xf]
    %v5231 = vld [vmem:[%s5224 + $0x24] sm:$0xff]
    %v5232 = vld [vmem:[%s5224 + $0x2c] sm:$0xf]
    %v5233 = vld [vmem:[%s5224 + $0x30] sm:$0xff]
    %v5234 = vld [vmem:[%s5224 + $0x38] sm:$0xf]
    %v5235 = vld [vmem:[%s5224 + $0x3c] sm:$0xff]
    %v5236 = vld [vmem:[%s5224 + $0x44] sm:$0xf]
    %v5237 = vld [vmem:[%s5224 + $0x48] sm:$0xff]
    %v5238 = vld [vmem:[%s5224 + $0x50] sm:$0xf]
    %v5239 = vld [vmem:[%s5224 + $0x54] sm:$0xff]
    %v5240 = vld [vmem:[%s5224 + $0x5c] sm:$0xf]
    %v5241 = vld [vmem:[%s5224 + $0x60] sm:$0xff]
    %v5242 = vld [vmem:[%s5224 + $0x68] sm:$0xf]
    %v5243 = vld [vmem:[%s5224 + $0x6c] sm:$0xff]
    %v5244 = vld [vmem:[%s5224 + $0x74] sm:$0xf]
    %v5245 = vld [vmem:[%s5224 + $0x78] sm:$0xff]
    %v5246 = vld [vmem:[%s5224 + $0x80] sm:$0xf]
    %v5247 = vld [vmem:[%s5224 + $0x84] sm:$0xff]
    %v5248 = vld [vmem:[%s5224 + $0x8c] sm:$0xf]
    %v5249 = vld [vmem:[%s5224 + $0x90] sm:$0xff]
    %v5250 = vld [vmem:[%s5224 + $0x98] sm:$0xf]
    %v5251 = vld [vmem:[%s5224 + $0x9c] sm:$0xff]
    %v5252 = vld [vmem:[%s5224 + $0xa4] sm:$0xf]
    %v5253 = vld [vmem:[%s5224 + $0xa8] sm:$0xff]
    %v5254 = vld [vmem:[%s5224 + $0xb0] sm:$0xf]
    %v5255 = vld [vmem:[%s5224 + $0xb4] sm:$0xff]
    %v5256 = vld [vmem:[%s5224 + $0xbc] sm:$0xf]
    %s5257 = scalar_lea.vmem [#allocation14], 192
    %v5258 = vld [vmem:[%s5257] sm:$0xf]
    %v5259 = vld [vmem:[%s5257 + $0x4] sm:$0xf]
    %v5260 = vld [vmem:[%s5257 + $0x8] sm:$0xf]
    %v5261 = vld [vmem:[%s5257 + $0xc] sm:$0xf]
    %v5262 = vld [vmem:[%s5257 + $0x10] sm:$0xf]
    %v5263 = vld [vmem:[%s5257 + $0x14] sm:$0xf]
    %v5264 = vld [vmem:[%s5257 + $0x18] sm:$0xf]
    %v5265 = vld [vmem:[%s5257 + $0x1c] sm:$0xf]
    %v5266 = vld [vmem:[%s5257 + $0x20] sm:$0xf]
    %v5267 = vld [vmem:[%s5257 + $0x24] sm:$0xf]
    %v5268 = vld [vmem:[%s5257 + $0x28] sm:$0xf]
    %v5269 = vld [vmem:[%s5257 + $0x2c] sm:$0xf]
    %v5270 = vld [vmem:[%s5257 + $0x30] sm:$0xf]
    %v5271 = vld [vmem:[%s5257 + $0x34] sm:$0xf]
    %v5272 = vld [vmem:[%s5257 + $0x38] sm:$0xf]
    %v5273 = vld [vmem:[%s5257 + $0x3c] sm:$0xf]
    %s5274 = scalar_lea.vmem [#allocation16], 768
    %v5275 = vld [vmem:[%s5274] sm:$0xff]
    %v5276 = vld [vmem:[%s5274 + $0x8] sm:$0xff]
    %v5277 = vld [vmem:[%s5274 + $0x10] sm:$0xff]
    %v5278 = vld [vmem:[%s5274 + $0x18] sm:$0xff]
    %v5279 = vld [vmem:[%s5274 + $0x20] sm:$0xff]
    %v5280 = vld [vmem:[%s5274 + $0x28] sm:$0xff]
    %v5281 = vld [vmem:[%s5274 + $0x30] sm:$0xff]
    %v5282 = vld [vmem:[%s5274 + $0x38] sm:$0xff]
    %v5283 = vld [vmem:[%s5274 + $0x40] sm:$0xff]
    %v5284 = vld [vmem:[%s5274 + $0x48] sm:$0xff]
    %v5285 = vld [vmem:[%s5274 + $0x50] sm:$0xff]
    %v5286 = vld [vmem:[%s5274 + $0x58] sm:$0xff]
    %v5287 = vld [vmem:[%s5274 + $0x60] sm:$0xff]
    %v5288 = vld [vmem:[%s5274 + $0x68] sm:$0xff]
    %v5289 = vld [vmem:[%s5274 + $0x70] sm:$0xff]
    %v5290 = vld [vmem:[%s5274 + $0x78] sm:$0xff]
    %v5291 = vld [vmem:[%s5274 + $0x80] sm:$0xff]
    %v5292 = vld [vmem:[%s5274 + $0x88] sm:$0xff]
    %v5293 = vld [vmem:[%s5274 + $0x90] sm:$0xff]
    %v5294 = vld [vmem:[%s5274 + $0x98] sm:$0xff]
    %v5295 = vld [vmem:[%s5274 + $0xa0] sm:$0xff]
    %v5296 = vld [vmem:[%s5274 + $0xa8] sm:$0xff]
    %v5297 = vld [vmem:[%s5274 + $0xb0] sm:$0xff]
    %v5298 = vld [vmem:[%s5274 + $0xb8] sm:$0xff]
    %v5299 = vld [vmem:[%s5274 + $0xc0] sm:$0xff]
    %v5300 = vld [vmem:[%s5274 + $0xc8] sm:$0xff]
    %v5301 = vld [vmem:[%s5274 + $0xd0] sm:$0xff]
    %v5302 = vld [vmem:[%s5274 + $0xd8] sm:$0xff]
    %v5303 = vld [vmem:[%s5274 + $0xe0] sm:$0xff]
    %v5304 = vld [vmem:[%s5274 + $0xe8] sm:$0xff]
    %v5305 = vld [vmem:[%s5274 + $0xf0] sm:$0xff]
    %v5306 = vld [vmem:[%s5274 + $0xf8] sm:$0xff]
    %s5307 = scalar_lea.vmem [#allocation17], 768
    %v5308 = vld [vmem:[%s5307] sm:$0xf]
    %v5309 = vld [vmem:[%s5307 + $0x4] sm:$0xf]
    %v5310 = vld [vmem:[%s5307 + $0x8] sm:$0xf]
    %v5311 = vld [vmem:[%s5307 + $0xc] sm:$0xf]
    %v5312 = vld [vmem:[%s5307 + $0x10] sm:$0xf]
    %v5313 = vld [vmem:[%s5307 + $0x14] sm:$0xf]
    %v5314 = vld [vmem:[%s5307 + $0x18] sm:$0xf]
    %v5315 = vld [vmem:[%s5307 + $0x1c] sm:$0xf]
    %v5316 = vld [vmem:[%s5307 + $0x20] sm:$0xf]
    %v5317 = vld [vmem:[%s5307 + $0x24] sm:$0xf]
    %v5318 = vld [vmem:[%s5307 + $0x28] sm:$0xf]
    %v5319 = vld [vmem:[%s5307 + $0x2c] sm:$0xf]
    %v5320 = vld [vmem:[%s5307 + $0x30] sm:$0xf]
    %v5321 = vld [vmem:[%s5307 + $0x34] sm:$0xf]
    %v5322 = vld [vmem:[%s5307 + $0x38] sm:$0xf]
    %v5323 = vld [vmem:[%s5307 + $0x3c] sm:$0xf]
    %v5324 = vld [vmem:[%s5307 + $0x40] sm:$0xf]
    %v5325 = vld [vmem:[%s5307 + $0x44] sm:$0xf]
    %v5326 = vld [vmem:[%s5307 + $0x48] sm:$0xf]
    %v5327 = vld [vmem:[%s5307 + $0x4c] sm:$0xf]
    %v5328 = vld [vmem:[%s5307 + $0x50] sm:$0xf]
    %v5329 = vld [vmem:[%s5307 + $0x54] sm:$0xf]
    %v5330 = vld [vmem:[%s5307 + $0x58] sm:$0xf]
    %v5331 = vld [vmem:[%s5307 + $0x5c] sm:$0xf]
    %v5332 = vld [vmem:[%s5307 + $0x60] sm:$0xf]
    %v5333 = vld [vmem:[%s5307 + $0x64] sm:$0xf]
    %v5334 = vld [vmem:[%s5307 + $0x68] sm:$0xf]
    %v5335 = vld [vmem:[%s5307 + $0x6c] sm:$0xf]
    %v5336 = vld [vmem:[%s5307 + $0x70] sm:$0xf]
    %v5337 = vld [vmem:[%s5307 + $0x74] sm:$0xf]
    %v5338 = vld [vmem:[%s5307 + $0x78] sm:$0xf]
    %v5339 = vld [vmem:[%s5307 + $0x7c] sm:$0xf]
    %v5340 = vld [vmem:[%s5307 + $0x80] sm:$0xf]
    %v5341 = vld [vmem:[%s5307 + $0x84] sm:$0xf]
    %v5342 = vld [vmem:[%s5307 + $0x88] sm:$0xf]
    %v5343 = vld [vmem:[%s5307 + $0x8c] sm:$0xf]
    %v5344 = vld [vmem:[%s5307 + $0x90] sm:$0xf]
    %v5345 = vld [vmem:[%s5307 + $0x94] sm:$0xf]
    %v5346 = vld [vmem:[%s5307 + $0x98] sm:$0xf]
    %v5347 = vld [vmem:[%s5307 + $0x9c] sm:$0xf]
    %v5348 = vld [vmem:[%s5307 + $0xa0] sm:$0xf]
    %v5349 = vld [vmem:[%s5307 + $0xa4] sm:$0xf]
    %v5350 = vld [vmem:[%s5307 + $0xa8] sm:$0xf]
    %v5351 = vld [vmem:[%s5307 + $0xac] sm:$0xf]
    %v5352 = vld [vmem:[%s5307 + $0xb0] sm:$0xf]
    %v5353 = vld [vmem:[%s5307 + $0xb4] sm:$0xf]
    %v5354 = vld [vmem:[%s5307 + $0xb8] sm:$0xf]
    %v5355 = vld [vmem:[%s5307 + $0xbc] sm:$0xf]
    %v5356 = vld [vmem:[%s5307 + $0xc0] sm:$0xf]
    %v5357 = vld [vmem:[%s5307 + $0xc4] sm:$0xf]
    %v5358 = vld [vmem:[%s5307 + $0xc8] sm:$0xf]
    %v5359 = vld [vmem:[%s5307 + $0xcc] sm:$0xf]
    %v5360 = vld [vmem:[%s5307 + $0xd0] sm:$0xf]
    %v5361 = vld [vmem:[%s5307 + $0xd4] sm:$0xf]
    %v5362 = vld [vmem:[%s5307 + $0xd8] sm:$0xf]
    %v5363 = vld [vmem:[%s5307 + $0xdc] sm:$0xf]
    %v5364 = vld [vmem:[%s5307 + $0xe0] sm:$0xf]
    %v5365 = vld [vmem:[%s5307 + $0xe4] sm:$0xf]
    %v5366 = vld [vmem:[%s5307 + $0xe8] sm:$0xf]
    %v5367 = vld [vmem:[%s5307 + $0xec] sm:$0xf]
    %v5368 = vld [vmem:[%s5307 + $0xf0] sm:$0xf]
    %v5369 = vld [vmem:[%s5307 + $0xf4] sm:$0xf]
    %v5370 = vld [vmem:[%s5307 + $0xf8] sm:$0xf]
    %v5371 = vld [vmem:[%s5307 + $0xfc] sm:$0xf]
    %v5372 = vpack.c.bf16 %v5219, %v5219
    %s5373 = scalar_lea.vmem %s8, 9
    %v5374 = vld [vmem:[%s5373] sm:$0x7]
    %v5376 = vlaneseq
    %v5377 = vshrl.u32 %v5376, 7
    %v5378 = vsub.s32 0, %v5377
    %v5379 = vrot.slane %v5374, %v5378
    %v5380 = vlaneseq
    %v5381 = vshrl.u32 %v5380, 7
    %v5382 = vsub.s32 1, %v5381
    %v5383 = vrot.slane %v5374, %v5382
    %v5384 = vlaneseq
    %v5385 = vshrl.u32 %v5384, 7
    %v5386 = vsub.s32 2, %v5385
    %v5387 = vrot.slane %v5374, %v5386
    %v5423 = vunpack.c.l.b16 %v5225
    %v5424 = vunpack.c.h.b16 %v5225
    %v5425 = vunpack.c.l.b16 %v5226
    %v5426 = vunpack.c.l.b16 %v5227
    %v5427 = vunpack.c.h.b16 %v5227
    %v5428 = vunpack.c.l.b16 %v5228
    %v5429 = vunpack.c.l.b16 %v5229
    %v5430 = vunpack.c.h.b16 %v5229
    %v5431 = vunpack.c.l.b16 %v5230
    %v5432 = vunpack.c.l.b16 %v5231
    %v5433 = vunpack.c.h.b16 %v5231
    %v5434 = vunpack.c.l.b16 %v5232
    %v5435 = vunpack.c.l.b16 %v5233
    %v5436 = vunpack.c.h.b16 %v5233
    %v5437 = vunpack.c.l.b16 %v5234
    %v5438 = vunpack.c.l.b16 %v5235
    %v5439 = vunpack.c.h.b16 %v5235
    %v5440 = vunpack.c.l.b16 %v5236
    %v5441 = vunpack.c.l.b16 %v5237
    %v5442 = vunpack.c.h.b16 %v5237
    %v5443 = vunpack.c.l.b16 %v5238
    %v5444 = vunpack.c.l.b16 %v5239
    %v5445 = vunpack.c.h.b16 %v5239
    %v5446 = vunpack.c.l.b16 %v5240
    %v5447 = vunpack.c.l.b16 %v5241
    %v5448 = vunpack.c.h.b16 %v5241
    %v5449 = vunpack.c.l.b16 %v5242
    %v5450 = vunpack.c.l.b16 %v5243
    %v5451 = vunpack.c.h.b16 %v5243
    %v5452 = vunpack.c.l.b16 %v5244
    %v5453 = vunpack.c.l.b16 %v5245
    %v5454 = vunpack.c.h.b16 %v5245
    %v5455 = vunpack.c.l.b16 %v5246
    %v5456 = vunpack.c.l.b16 %v5247
    %v5457 = vunpack.c.h.b16 %v5247
    %v5458 = vunpack.c.l.b16 %v5248
    %v5459 = vunpack.c.l.b16 %v5249
    %v5460 = vunpack.c.h.b16 %v5249
    %v5461 = vunpack.c.l.b16 %v5250
    %v5462 = vunpack.c.l.b16 %v5251
    %v5463 = vunpack.c.h.b16 %v5251
    %v5464 = vunpack.c.l.b16 %v5252
    %v5465 = vunpack.c.l.b16 %v5253
    %v5466 = vunpack.c.h.b16 %v5253
    %v5467 = vunpack.c.l.b16 %v5254
    %v5468 = vunpack.c.l.b16 %v5255
    %v5469 = vunpack.c.h.b16 %v5255
    %v5470 = vunpack.c.l.b16 %v5256
    %v5471 = vpack.c.b16 %v5426, %v5423
    %v5472 = vpack.c.b16 %v5427, %v5424
    %v5473 = vpack.c.b16 %v5428, %v5425
    %v5474 = vpack.c.b16 %v5432, %v5429
    %v5475 = vpack.c.b16 %v5433, %v5430
    %v5476 = vpack.c.b16 %v5434, %v5431
    %v5477 = vpack.c.b16 %v5438, %v5435
    %v5478 = vpack.c.b16 %v5439, %v5436
    %v5479 = vpack.c.b16 %v5440, %v5437
    %v5480 = vpack.c.b16 %v5444, %v5441
    %v5481 = vpack.c.b16 %v5445, %v5442
    %v5482 = vpack.c.b16 %v5446, %v5443
    %v5483 = vpack.c.b16 %v5450, %v5447
    %v5484 = vpack.c.b16 %v5451, %v5448
    %v5485 = vpack.c.b16 %v5452, %v5449
    %v5486 = vpack.c.b16 %v5456, %v5453
    %v5487 = vpack.c.b16 %v5457, %v5454
    %v5488 = vpack.c.b16 %v5458, %v5455
    %v5489 = vpack.c.b16 %v5462, %v5459
    %v5490 = vpack.c.b16 %v5463, %v5460
    %v5491 = vpack.c.b16 %v5464, %v5461
    %v5492 = vpack.c.b16 %v5468, %v5465
    %v5493 = vpack.c.b16 %v5469, %v5466
    %v5494 = vpack.c.b16 %v5470, %v5467
    %5519 = vmatprep.subr.bf16.mxu0 %v5472
    %5520 = vmatpush1.bf16.msra.mxu0 %v5471
    %5521 = vmatprep.subr.bf16.mxu0 %v5475
    %5522 = vmatpush1.bf16.msra.mxu0 %v5474
    %5523 = vmatprep.subr.bf16.mxu0 %v5478
    %5524 = vmatpush1.bf16.msra.mxu0 %v5477
    %5525 = vmatprep.subr.bf16.mxu0 %v5481
    %5526 = vmatpush1.bf16.msra.mxu0 %v5480
    %5527 = vmatprep.subr.bf16.mxu0 %v5484
    %5528 = vmatpush1.bf16.msra.mxu0 %v5483
    %5529 = vmatprep.subr.bf16.mxu0 %v5487
    %5530 = vmatpush1.bf16.msra.mxu0 %v5486
    %5531 = vmatprep.subr.bf16.mxu0 %v5490
    %5532 = vmatpush1.bf16.msra.mxu0 %v5489
    %5533 = vmatprep.subr.bf16.mxu0 %v5493
    %5534 = vmatpush1.bf16.msra.mxu0 %v5492
    %5535 = vmatprep.subr.bf16.mxu0 0
    %5536 = vmatpush1.bf16.msra.mxu0 0
    %5537 = vmatprep.subr.bf16.mxu0 0
    %5538 = vmatpush1.bf16.msra.mxu0 0
    %5539 = vmatprep.subr.bf16.mxu0 0
    %5540 = vmatpush1.bf16.msra.mxu0 0
    %5541 = vmatprep.subr.bf16.mxu0 0
    %5542 = vmatpush1.bf16.msra.mxu0 0
    %5543 = vmatprep.subr.bf16.mxu0 0
    %5544 = vmatpush1.bf16.msra.mxu0 0
    %5545 = vmatprep.subr.bf16.mxu0 0
    %5546 = vmatpush1.bf16.msra.mxu0 0
    %5547 = vmatprep.subr.bf16.mxu0 0
    %5548 = vmatpush1.bf16.msra.mxu0 0
    %5549 = vmatprep.subr.bf16.mxu0 0
    %5550 = vmatpush1.bf16.msra.mxu0 0
    %5551 = vmatprep.mubr.bf16.mxu0 0
    %5552 = vmatmul.mubr.bf16.gmra.mrb[0].mxu0 %v5372
    %v5553 = vpop.f32.mrb[0].mxu0
    %v5554 = vadd.f32 %v5379, %v5553
    %v5555 = vpop.f32.mrb[0].mxu0
    %v5556 = vadd.f32 %v5383, %v5555
    %v5557 = vpop.f32.mrb[0].mxu0
    %v5558 = vpop.f32.mrb[0].mxu0
    %5559 = vdwg.mxu0
    %5560 = vmatprep.subr.bf16.mxu0 0
    %5561 = vmatpush1.bf16.msra.mxu0 %v5473
    %5562 = vmatprep.subr.bf16.mxu0 0
    %5563 = vmatpush1.bf16.msra.mxu0 %v5476
    %5564 = vmatprep.subr.bf16.mxu0 0
    %5565 = vmatpush1.bf16.msra.mxu0 %v5479
    %5566 = vmatprep.subr.bf16.mxu0 0
    %5567 = vmatpush1.bf16.msra.mxu0 %v5482
    %5568 = vmatprep.subr.bf16.mxu0 0
    %5569 = vmatpush1.bf16.msra.mxu0 %v5485
    %5570 = vmatprep.subr.bf16.mxu0 0
    %5571 = vmatpush1.bf16.msra.mxu0 %v5488
    %5572 = vmatprep.subr.bf16.mxu0 0
    %5573 = vmatpush1.bf16.msra.mxu0 %v5491
    %5574 = vmatprep.subr.bf16.mxu0 0
    %5575 = vmatpush1.bf16.msra.mxu0 %v5494
    %5576 = vmatprep.subr.bf16.mxu0 0
    %5577 = vmatpush1.bf16.msra.mxu0 0
    %5578 = vmatprep.subr.bf16.mxu0 0
    %5579 = vmatpush1.bf16.msra.mxu0 0
    %5580 = vmatprep.subr.bf16.mxu0 0
    %5581 = vmatpush1.bf16.msra.mxu0 0
    %5582 = vmatprep.subr.bf16.mxu0 0
    %5583 = vmatpush1.bf16.msra.mxu0 0
    %5584 = vmatprep.subr.bf16.mxu0 0
    %5585 = vmatpush1.bf16.msra.mxu0 0
    %5586 = vmatprep.subr.bf16.mxu0 0
    %5587 = vmatpush1.bf16.msra.mxu0 0
    %5588 = vmatprep.subr.bf16.mxu0 0
    %5589 = vmatpush1.bf16.msra.mxu0 0
    %5590 = vmatprep.subr.bf16.mxu0 0
    %5591 = vmatpush1.bf16.msra.mxu0 0
    %5592 = vmatprep.mubr.bf16.mxu0 0
    %5593 = vmatmul.mubr.bf16.gmra.mrb[0].mxu0 %v5372
    %v5594 = vpop.f32.mrb[0].mxu0
    %v5595 = vadd.f32 %v5387, %v5594
    %v5596 = vpop.f32.mrb[0].mxu0
    %v5597 = vpop.f32.mrb[0].mxu0
    %v5598 = vpop.f32.mrb[0].mxu0
    %5599 = vdwg.mxu0
    %v5600 = vmul.f32 %v5554, 0.17677669
    %v5601 = vpack.c.bf16 %v5600, %v5600
    %v5602 = vpack.c.bf16 %v5556, %v5556
    %v5603 = vpack.c.bf16 %v5595, %v5595
    %v5605 = vsel %vm279, %v5601, 0
    %v5608 = vsel %vm279, %v5602, 0
    %5610 = vmatprep.subr.bf16.mxu0 0
    %5611 = vmatpush1.bf16.xpose.msra.mxu0 %v5608
    %5612 = vmatprep.subr.bf16.mxu0 0
    %5613 = vmatpush1.bf16.xpose.msra.mxu0 0
    %5614 = vmatprep.subr.bf16.mxu0 0
    %5615 = vmatpush1.bf16.xpose.msra.mxu0 0
    %5616 = vmatprep.subr.bf16.mxu0 0
    %5617 = vmatpush1.bf16.xpose.msra.mxu0 0
    %5618 = vmatprep.subr.bf16.mxu0 0
    %5619 = vmatpush1.bf16.xpose.msra.mxu0 0
    %5620 = vmatprep.subr.bf16.mxu0 0
    %5621 = vmatpush1.bf16.xpose.msra.mxu0 0
    %5622 = vmatprep.subr.bf16.mxu0 0
    %5623 = vmatpush1.bf16.xpose.msra.mxu0 0
    %5624 = vmatprep.subr.bf16.mxu0 0
    %5625 = vmatpush1.bf16.xpose.msra.mxu0 0
    %5626 = vmatprep.subr.bf16.mxu0 0
    %5627 = vmatpush1.bf16.xpose.msra.mxu0 0
    %5628 = vmatprep.subr.bf16.mxu0 0
    %5629 = vmatpush1.bf16.xpose.msra.mxu0 0
    %5630 = vmatprep.subr.bf16.mxu0 0
    %5631 = vmatpush1.bf16.xpose.msra.mxu0 0
    %5632 = vmatprep.subr.bf16.mxu0 0
    %5633 = vmatpush1.bf16.xpose.msra.mxu0 0
    %5634 = vmatprep.subr.bf16.mxu0 0
    %5635 = vmatpush1.bf16.xpose.msra.mxu0 0
    %5636 = vmatprep.subr.bf16.mxu0 0
    %5637 = vmatpush1.bf16.xpose.msra.mxu0 0
    %5638 = vmatprep.subr.bf16.mxu0 0
    %5639 = vmatpush1.bf16.xpose.msra.mxu0 0
    %5640 = vmatprep.subr.bf16.mxu0 0
    %5641 = vmatpush1.bf16.xpose.msra.mxu0 0
    %5642 = vmatprep.mubr.bf16.mxu0 0
    %5643 = vmatmul.mubr.bf16.gmra.mrb[0].mxu0 %v5605
    %v5644 = vpop.f32.mrb[0].mxu0
    %v5645 = vadd.f32 0.0, %v5644
    %v5646 = vpop.f32.mrb[0].mxu0
    %v5647 = vpop.f32.mrb[0].mxu0
    %v5648 = vpop.f32.mrb[0].mxu0
    %5649 = vdwg.mxu0
    %v5650 = vsel %vm830, %v5645, -inf
    %5651 = vmax.xlane.f32.xlu0 %v5650
    %v5652 = vpop.xlane.xlu0 %5651
    %v5653 = vsub.f32 %v5645, %v5652
    %v5654 = vmul.f32 %v5653, 1.442695
    %v5655 = vpow.pop %v5654
    %v5656 = vsel %vm830, %v5655, 0.0
    %5657 = vadd.xlane.f32.xlu0 %v5656
    %v5658 = vpop.xlane.xlu0 %5657
    %v5659 = vrcp.pop %v5658
    %v5660 = vmul.f32 %v5655, %v5659
    %v5661 = vpack.c.bf16 %v5660, %v5660
    %v5663 = vsel %vm843, %v5661, 0
    %v5666 = vsel %vm207, %v5603, 0
    %5668 = vmatprep.subr.bf16.mxu0 0
    %5669 = vmatpush1.bf16.msra.mxu0 %v5666
    %5670 = vmatprep.subr.bf16.mxu0 0
    %5671 = vmatpush1.bf16.msra.mxu0 0
    %5672 = vmatprep.subr.bf16.mxu0 0
    %5673 = vmatpush1.bf16.msra.mxu0 0
    %5674 = vmatprep.subr.bf16.mxu0 0
    %5675 = vmatpush1.bf16.msra.mxu0 0
    %5676 = vmatprep.subr.bf16.mxu0 0
    %5677 = vmatpush1.bf16.msra.mxu0 0
    %5678 = vmatprep.subr.bf16.mxu0 0
    %5679 = vmatpush1.bf16.msra.mxu0 0
    %5680 = vmatprep.subr.bf16.mxu0 0
    %5681 = vmatpush1.bf16.msra.mxu0 0
    %5682 = vmatprep.subr.bf16.mxu0 0
    %5683 = vmatpush1.bf16.msra.mxu0 0
    %5684 = vmatprep.subr.bf16.mxu0 0
    %5685 = vmatpush1.bf16.msra.mxu0 0
    %5686 = vmatprep.subr.bf16.mxu0 0
    %5687 = vmatpush1.bf16.msra.mxu0 0
    %5688 = vmatprep.subr.bf16.mxu0 0
    %5689 = vmatpush1.bf16.msra.mxu0 0
    %5690 = vmatprep.subr.bf16.mxu0 0
    %5691 = vmatpush1.bf16.msra.mxu0 0
    %5692 = vmatprep.subr.bf16.mxu0 0
    %5693 = vmatpush1.bf16.msra.mxu0 0
    %5694 = vmatprep.subr.bf16.mxu0 0
    %5695 = vmatpush1.bf16.msra.mxu0 0
    %5696 = vmatprep.subr.bf16.mxu0 0
    %5697 = vmatpush1.bf16.msra.mxu0 0
    %5698 = vmatprep.subr.bf16.mxu0 0
    %5699 = vmatpush1.bf16.msra.mxu0 0
    %5700 = vmatprep.mubr.bf16.mxu0 0
    %5701 = vmatmul.mubr.bf16.gmra.mrb[0].mxu0 %v5663
    %v5702 = vpop.f32.mrb[0].mxu0
    %v5703 = vadd.f32 0.0, %v5702
    %v5704 = vpop.f32.mrb[0].mxu0
    %v5705 = vpop.f32.mrb[0].mxu0
    %v5706 = vpop.f32.mrb[0].mxu0
    %5707 = vdwg.mxu0
    %v5708 = vpack.c.bf16 %v5703, %v5703
    %5710 = vrot.lane.b32.xlu0 %v5601, 96
    %v5711 = vpop.permute.xlu0 %5710
    %5713 = vrot.lane.b32.xlu0 %v5602, 96
    %v5714 = vpop.permute.xlu0 %5713
    %v5716 = vsel %vm279, %v5711, 0
    %v5719 = vsel %vm279, %v5714, 0
    %5721 = vmatprep.subr.bf16.mxu0 0
    %5722 = vmatpush1.bf16.xpose.msra.mxu0 %v5719
    %5723 = vmatprep.subr.bf16.mxu0 0
    %5724 = vmatpush1.bf16.xpose.msra.mxu0 0
    %5725 = vmatprep.subr.bf16.mxu0 0
    %5726 = vmatpush1.bf16.xpose.msra.mxu0 0
    %5727 = vmatprep.subr.bf16.mxu0 0
    %5728 = vmatpush1.bf16.xpose.msra.mxu0 0
    %5729 = vmatprep.subr.bf16.mxu0 0
    %5730 = vmatpush1.bf16.xpose.msra.mxu0 0
    %5731 = vmatprep.subr.bf16.mxu0 0
    %5732 = vmatpush1.bf16.xpose.msra.mxu0 0
    %5733 = vmatprep.subr.bf16.mxu0 0
    %5734 = vmatpush1.bf16.xpose.msra.mxu0 0
    %5735 = vmatprep.subr.bf16.mxu0 0
    %5736 = vmatpush1.bf16.xpose.msra.mxu0 0
    %5737 = vmatprep.subr.bf16.mxu0 0
    %5738 = vmatpush1.bf16.xpose.msra.mxu0 0
    %5739 = vmatprep.subr.bf16.mxu0 0
    %5740 = vmatpush1.bf16.xpose.msra.mxu0 0
    %5741 = vmatprep.subr.bf16.mxu0 0
    %5742 = vmatpush1.bf16.xpose.msra.mxu0 0
    %5743 = vmatprep.subr.bf16.mxu0 0
    %5744 = vmatpush1.bf16.xpose.msra.mxu0 0
    %5745 = vmatprep.subr.bf16.mxu0 0
    %5746 = vmatpush1.bf16.xpose.msra.mxu0 0
    %5747 = vmatprep.subr.bf16.mxu0 0
    %5748 = vmatpush1.bf16.xpose.msra.mxu0 0
    %5749 = vmatprep.subr.bf16.mxu0 0
    %5750 = vmatpush1.bf16.xpose.msra.mxu0 0
    %5751 = vmatprep.subr.bf16.mxu0 0
    %5752 = vmatpush1.bf16.xpose.msra.mxu0 0
    %5753 = vmatprep.mubr.bf16.mxu0 0
    %5754 = vmatmul.mubr.bf16.gmra.mrb[0].mxu0 %v5716
    %v5755 = vpop.f32.mrb[0].mxu0
    %v5756 = vadd.f32 0.0, %v5755
    %v5757 = vpop.f32.mrb[0].mxu0
    %v5758 = vpop.f32.mrb[0].mxu0
    %v5759 = vpop.f32.mrb[0].mxu0
    %5760 = vdwg.mxu0
    %v5761 = vsel %vm830, %v5756, -inf
    %5762 = vmax.xlane.f32.xlu0 %v5761
    %v5763 = vpop.xlane.xlu0 %5762
    %v5764 = vsub.f32 %v5756, %v5763
    %v5765 = vmul.f32 %v5764, 1.442695
    %v5766 = vpow.pop %v5765
    %v5767 = vsel %vm830, %v5766, 0.0
    %5768 = vadd.xlane.f32.xlu0 %v5767
    %v5769 = vpop.xlane.xlu0 %5768
    %v5770 = vrcp.pop %v5769
    %v5771 = vmul.f32 %v5766, %v5770
    %v5772 = vpack.c.bf16 %v5771, %v5771
    %5774 = vrot.lane.b32.xlu0 %v5603, 96
    %v5775 = vpop.permute.xlu0 %5774
    %v5777 = vsel %vm843, %v5772, 0
    %v5780 = vsel %vm207, %v5775, 0
    %5782 = vmatprep.subr.bf16.mxu0 0
    %5783 = vmatpush1.bf16.msra.mxu0 %v5780
    %5784 = vmatprep.subr.bf16.mxu0 0
    %5785 = vmatpush1.bf16.msra.mxu0 0
    %5786 = vmatprep.subr.bf16.mxu0 0
    %5787 = vmatpush1.bf16.msra.mxu0 0
    %5788 = vmatprep.subr.bf16.mxu0 0
    %5789 = vmatpush1.bf16.msra.mxu0 0
    %5790 = vmatprep.subr.bf16.mxu0 0
    %5791 = vmatpush1.bf16.msra.mxu0 0
    %5792 = vmatprep.subr.bf16.mxu0 0
    %5793 = vmatpush1.bf16.msra.mxu0 0
    %5794 = vmatprep.subr.bf16.mxu0 0
    %5795 = vmatpush1.bf16.msra.mxu0 0
    %5796 = vmatprep.subr.bf16.mxu0 0
    %5797 = vmatpush1.bf16.msra.mxu0 0
    %5798 = vmatprep.subr.bf16.mxu0 0
    %5799 = vmatpush1.bf16.msra.mxu0 0
    %5800 = vmatprep.subr.bf16.mxu0 0
    %5801 = vmatpush1.bf16.msra.mxu0 0
    %5802 = vmatprep.subr.bf16.mxu0 0
    %5803 = vmatpush1.bf16.msra.mxu0 0
    %5804 = vmatprep.subr.bf16.mxu0 0
    %5805 = vmatpush1.bf16.msra.mxu0 0
    %5806 = vmatprep.subr.bf16.mxu0 0
    %5807 = vmatpush1.bf16.msra.mxu0 0
    %5808 = vmatprep.subr.bf16.mxu0 0
    %5809 = vmatpush1.bf16.msra.mxu0 0
    %5810 = vmatprep.subr.bf16.mxu0 0
    %5811 = vmatpush1.bf16.msra.mxu0 0
    %5812 = vmatprep.subr.bf16.mxu0 0
    %5813 = vmatpush1.bf16.msra.mxu0 0
    %5814 = vmatprep.mubr.bf16.mxu0 0
    %5815 = vmatmul.mubr.bf16.gmra.mrb[0].mxu0 %v5777
    %v5816 = vpop.f32.mrb[0].mxu0
    %v5817 = vadd.f32 0.0, %v5816
    %v5818 = vpop.f32.mrb[0].mxu0
    %v5819 = vpop.f32.mrb[0].mxu0
    %v5820 = vpop.f32.mrb[0].mxu0
    %5821 = vdwg.mxu0
    %v5822 = vpack.c.bf16 %v5817, %v5817
    %v5827 = vunpack.c.l.b16 %v5262
    %v5828 = vunpack.c.l.b16 %v5263
    %v5829 = vunpack.c.l.b16 %v5264
    %v5830 = vunpack.c.l.b16 %v5265
    %v5831 = vpack.c.b16 %v5828, %v5827
    %v5832 = vpack.c.b16 %v5830, %v5829
    %v5836 = vsel %vm279, %v5822, 0
    %5838 = vmatprep.subr.bf16.mxu0 0
    %5839 = vmatpush1.bf16.msra.mxu0 %v5831
    %5840 = vmatprep.subr.bf16.mxu0 0
    %5841 = vmatpush1.bf16.msra.mxu0 %v5832
    %5842 = vmatprep.subr.bf16.mxu0 0
    %5843 = vmatpush1.bf16.msra.mxu0 0
    %5844 = vmatprep.subr.bf16.mxu0 0
    %5845 = vmatpush1.bf16.msra.mxu0 0
    %5846 = vmatprep.subr.bf16.mxu0 0
    %5847 = vmatpush1.bf16.msra.mxu0 0
    %5848 = vmatprep.subr.bf16.mxu0 0
    %5849 = vmatpush1.bf16.msra.mxu0 0
    %5850 = vmatprep.subr.bf16.mxu0 0
    %5851 = vmatpush1.bf16.msra.mxu0 0
    %5852 = vmatprep.subr.bf16.mxu0 0
    %5853 = vmatpush1.bf16.msra.mxu0 0
    %5854 = vmatprep.subr.bf16.mxu0 0
    %5855 = vmatpush1.bf16.msra.mxu0 0
    %5856 = vmatprep.subr.bf16.mxu0 0
    %5857 = vmatpush1.bf16.msra.mxu0 0
    %5858 = vmatprep.subr.bf16.mxu0 0
    %5859 = vmatpush1.bf16.msra.mxu0 0
    %5860 = vmatprep.subr.bf16.mxu0 0
    %5861 = vmatpush1.bf16.msra.mxu0 0
    %5862 = vmatprep.subr.bf16.mxu0 0
    %5863 = vmatpush1.bf16.msra.mxu0 0
    %5864 = vmatprep.subr.bf16.mxu0 0
    %5865 = vmatpush1.bf16.msra.mxu0 0
    %5866 = vmatprep.subr.bf16.mxu0 0
    %5867 = vmatpush1.bf16.msra.mxu0 0
    %5868 = vmatprep.subr.bf16.mxu0 0
    %5869 = vmatpush1.bf16.msra.mxu0 0
    %5870 = vmatprep.mubr.bf16.mxu0 0
    %5871 = vmatmul.mubr.bf16.gmra.mrb[0].mxu0 %v5836
    %v5872 = vpop.f32.mrb[0].mxu0
    %v5873 = vadd.f32 0.0, %v5872
    %v5874 = vpop.f32.mrb[0].mxu0
    %v5875 = vpop.f32.mrb[0].mxu0
    %v5876 = vpop.f32.mrb[0].mxu0
    %5877 = vdwg.mxu0
    %v5882 = vunpack.c.l.b16 %v5258
    %v5883 = vunpack.c.l.b16 %v5259
    %v5884 = vunpack.c.l.b16 %v5260
    %v5885 = vunpack.c.l.b16 %v5261
    %v5886 = vpack.c.b16 %v5883, %v5882
    %v5887 = vpack.c.b16 %v5885, %v5884
    %v5891 = vsel %vm279, %v5708, 0
    %5893 = vmatprep.subr.bf16.mxu0 0
    %5894 = vmatpush1.bf16.msra.mxu0 %v5886
    %5895 = vmatprep.subr.bf16.mxu0 0
    %5896 = vmatpush1.bf16.msra.mxu0 %v5887
    %5897 = vmatprep.subr.bf16.mxu0 0
    %5898 = vmatpush1.bf16.msra.mxu0 0
    %5899 = vmatprep.subr.bf16.mxu0 0
    %5900 = vmatpush1.bf16.msra.mxu0 0
    %5901 = vmatprep.subr.bf16.mxu0 0
    %5902 = vmatpush1.bf16.msra.mxu0 0
    %5903 = vmatprep.subr.bf16.mxu0 0
    %5904 = vmatpush1.bf16.msra.mxu0 0
    %5905 = vmatprep.subr.bf16.mxu0 0
    %5906 = vmatpush1.bf16.msra.mxu0 0
    %5907 = vmatprep.subr.bf16.mxu0 0
    %5908 = vmatpush1.bf16.msra.mxu0 0
    %5909 = vmatprep.subr.bf16.mxu0 0
    %5910 = vmatpush1.bf16.msra.mxu0 0
    %5911 = vmatprep.subr.bf16.mxu0 0
    %5912 = vmatpush1.bf16.msra.mxu0 0
    %5913 = vmatprep.subr.bf16.mxu0 0
    %5914 = vmatpush1.bf16.msra.mxu0 0
    %5915 = vmatprep.subr.bf16.mxu0 0
    %5916 = vmatpush1.bf16.msra.mxu0 0
    %5917 = vmatprep.subr.bf16.mxu0 0
    %5918 = vmatpush1.bf16.msra.mxu0 0
    %5919 = vmatprep.subr.bf16.mxu0 0
    %5920 = vmatpush1.bf16.msra.mxu0 0
    %5921 = vmatprep.subr.bf16.mxu0 0
    %5922 = vmatpush1.bf16.msra.mxu0 0
    %5923 = vmatprep.subr.bf16.mxu0 0
    %5924 = vmatpush1.bf16.msra.mxu0 0
    %5925 = vmatprep.mubr.bf16.mxu0 0
    %5926 = vmatmul.mubr.bf16.gmra.mrb[0].mxu0 %v5891
    %v5927 = vpop.f32.mrb[0].mxu0
    %v5928 = vadd.f32 %v5873, %v5927
    %v5929 = vpop.f32.mrb[0].mxu0
    %v5930 = vpop.f32.mrb[0].mxu0
    %v5931 = vpop.f32.mrb[0].mxu0
    %5932 = vdwg.mxu0
    %5933 = vrot.lane.b32.xlu0 %v5601, 64
    %v5934 = vpop.permute.xlu0 %5933
    %5935 = vrot.lane.b32.xlu0 %v5602, 64
    %v5936 = vpop.permute.xlu0 %5935
    %v5938 = vsel %vm279, %v5934, 0
    %v5941 = vsel %vm279, %v5936, 0
    %5943 = vmatprep.subr.bf16.mxu0 0
    %5944 = vmatpush1.bf16.xpose.msra.mxu0 %v5941
    %5945 = vmatprep.subr.bf16.mxu0 0
    %5946 = vmatpush1.bf16.xpose.msra.mxu0 0
    %5947 = vmatprep.subr.bf16.mxu0 0
    %5948 = vmatpush1.bf16.xpose.msra.mxu0 0
    %5949 = vmatprep.subr.bf16.mxu0 0
    %5950 = vmatpush1.bf16.xpose.msra.mxu0 0
    %5951 = vmatprep.subr.bf16.mxu0 0
    %5952 = vmatpush1.bf16.xpose.msra.mxu0 0
    %5953 = vmatprep.subr.bf16.mxu0 0
    %5954 = vmatpush1.bf16.xpose.msra.mxu0 0
    %5955 = vmatprep.subr.bf16.mxu0 0
    %5956 = vmatpush1.bf16.xpose.msra.mxu0 0
    %5957 = vmatprep.subr.bf16.mxu0 0
    %5958 = vmatpush1.bf16.xpose.msra.mxu0 0
    %5959 = vmatprep.subr.bf16.mxu0 0
    %5960 = vmatpush1.bf16.xpose.msra.mxu0 0
    %5961 = vmatprep.subr.bf16.mxu0 0
    %5962 = vmatpush1.bf16.xpose.msra.mxu0 0
    %5963 = vmatprep.subr.bf16.mxu0 0
    %5964 = vmatpush1.bf16.xpose.msra.mxu0 0
    %5965 = vmatprep.subr.bf16.mxu0 0
    %5966 = vmatpush1.bf16.xpose.msra.mxu0 0
    %5967 = vmatprep.subr.bf16.mxu0 0
    %5968 = vmatpush1.bf16.xpose.msra.mxu0 0
    %5969 = vmatprep.subr.bf16.mxu0 0
    %5970 = vmatpush1.bf16.xpose.msra.mxu0 0
    %5971 = vmatprep.subr.bf16.mxu0 0
    %5972 = vmatpush1.bf16.xpose.msra.mxu0 0
    %5973 = vmatprep.subr.bf16.mxu0 0
    %5974 = vmatpush1.bf16.xpose.msra.mxu0 0
    %5975 = vmatprep.mubr.bf16.mxu0 0
    %5976 = vmatmul.mubr.bf16.gmra.mrb[0].mxu0 %v5938
    %v5977 = vpop.f32.mrb[0].mxu0
    %v5978 = vadd.f32 0.0, %v5977
    %v5979 = vpop.f32.mrb[0].mxu0
    %v5980 = vpop.f32.mrb[0].mxu0
    %v5981 = vpop.f32.mrb[0].mxu0
    %5982 = vdwg.mxu0
    %v5983 = vsel %vm830, %v5978, -inf
    %5984 = vmax.xlane.f32.xlu0 %v5983
    %v5985 = vpop.xlane.xlu0 %5984
    %v5986 = vsub.f32 %v5978, %v5985
    %v5987 = vmul.f32 %v5986, 1.442695
    %v5988 = vpow.pop %v5987
    %v5989 = vsel %vm830, %v5988, 0.0
    %5990 = vadd.xlane.f32.xlu0 %v5989
    %v5991 = vpop.xlane.xlu0 %5990
    %v5992 = vrcp.pop %v5991
    %v5993 = vmul.f32 %v5988, %v5992
    %v5994 = vpack.c.bf16 %v5993, %v5993
    %5995 = vrot.lane.b32.xlu0 %v5603, 64
    %v5996 = vpop.permute.xlu0 %5995
    %v5998 = vsel %vm843, %v5994, 0
    %v6001 = vsel %vm207, %v5996, 0
    %6003 = vmatprep.subr.bf16.mxu0 0
    %6004 = vmatpush1.bf16.msra.mxu0 %v6001
    %6005 = vmatprep.subr.bf16.mxu0 0
    %6006 = vmatpush1.bf16.msra.mxu0 0
    %6007 = vmatprep.subr.bf16.mxu0 0
    %6008 = vmatpush1.bf16.msra.mxu0 0
    %6009 = vmatprep.subr.bf16.mxu0 0
    %6010 = vmatpush1.bf16.msra.mxu0 0
    %6011 = vmatprep.subr.bf16.mxu0 0
    %6012 = vmatpush1.bf16.msra.mxu0 0
    %6013 = vmatprep.subr.bf16.mxu0 0
    %6014 = vmatpush1.bf16.msra.mxu0 0
    %6015 = vmatprep.subr.bf16.mxu0 0
    %6016 = vmatpush1.bf16.msra.mxu0 0
    %6017 = vmatprep.subr.bf16.mxu0 0
    %6018 = vmatpush1.bf16.msra.mxu0 0
    %6019 = vmatprep.subr.bf16.mxu0 0
    %6020 = vmatpush1.bf16.msra.mxu0 0
    %6021 = vmatprep.subr.bf16.mxu0 0
    %6022 = vmatpush1.bf16.msra.mxu0 0
    %6023 = vmatprep.subr.bf16.mxu0 0
    %6024 = vmatpush1.bf16.msra.mxu0 0
    %6025 = vmatprep.subr.bf16.mxu0 0
    %6026 = vmatpush1.bf16.msra.mxu0 0
    %6027 = vmatprep.subr.bf16.mxu0 0
    %6028 = vmatpush1.bf16.msra.mxu0 0
    %6029 = vmatprep.subr.bf16.mxu0 0
    %6030 = vmatpush1.bf16.msra.mxu0 0
    %6031 = vmatprep.subr.bf16.mxu0 0
    %6032 = vmatpush1.bf16.msra.mxu0 0
    %6033 = vmatprep.subr.bf16.mxu0 0
    %6034 = vmatpush1.bf16.msra.mxu0 0
    %6035 = vmatprep.mubr.bf16.mxu0 0
    %6036 = vmatmul.mubr.bf16.gmra.mrb[0].mxu0 %v5998
    %v6037 = vpop.f32.mrb[0].mxu0
    %v6038 = vadd.f32 0.0, %v6037
    %v6039 = vpop.f32.mrb[0].mxu0
    %v6040 = vpop.f32.mrb[0].mxu0
    %v6041 = vpop.f32.mrb[0].mxu0
    %6042 = vdwg.mxu0
    %v6043 = vpack.c.bf16 %v6038, %v6038
    %v6048 = vunpack.c.l.b16 %v5266
    %v6049 = vunpack.c.l.b16 %v5267
    %v6050 = vunpack.c.l.b16 %v5268
    %v6051 = vunpack.c.l.b16 %v5269
    %v6052 = vpack.c.b16 %v6049, %v6048
    %v6053 = vpack.c.b16 %v6051, %v6050
    %v6057 = vsel %vm279, %v6043, 0
    %6059 = vmatprep.subr.bf16.mxu0 0
    %6060 = vmatpush1.bf16.msra.mxu0 %v6052
    %6061 = vmatprep.subr.bf16.mxu0 0
    %6062 = vmatpush1.bf16.msra.mxu0 %v6053
    %6063 = vmatprep.subr.bf16.mxu0 0
    %6064 = vmatpush1.bf16.msra.mxu0 0
    %6065 = vmatprep.subr.bf16.mxu0 0
    %6066 = vmatpush1.bf16.msra.mxu0 0
    %6067 = vmatprep.subr.bf16.mxu0 0
    %6068 = vmatpush1.bf16.msra.mxu0 0
    %6069 = vmatprep.subr.bf16.mxu0 0
    %6070 = vmatpush1.bf16.msra.mxu0 0
    %6071 = vmatprep.subr.bf16.mxu0 0
    %6072 = vmatpush1.bf16.msra.mxu0 0
    %6073 = vmatprep.subr.bf16.mxu0 0
    %6074 = vmatpush1.bf16.msra.mxu0 0
    %6075 = vmatprep.subr.bf16.mxu0 0
    %6076 = vmatpush1.bf16.msra.mxu0 0
    %6077 = vmatprep.subr.bf16.mxu0 0
    %6078 = vmatpush1.bf16.msra.mxu0 0
    %6079 = vmatprep.subr.bf16.mxu0 0
    %6080 = vmatpush1.bf16.msra.mxu0 0
    %6081 = vmatprep.subr.bf16.mxu0 0
    %6082 = vmatpush1.bf16.msra.mxu0 0
    %6083 = vmatprep.subr.bf16.mxu0 0
    %6084 = vmatpush1.bf16.msra.mxu0 0
    %6085 = vmatprep.subr.bf16.mxu0 0
    %6086 = vmatpush1.bf16.msra.mxu0 0
    %6087 = vmatprep.subr.bf16.mxu0 0
    %6088 = vmatpush1.bf16.msra.mxu0 0
    %6089 = vmatprep.subr.bf16.mxu0 0
    %6090 = vmatpush1.bf16.msra.mxu0 0
    %6091 = vmatprep.mubr.bf16.mxu0 0
    %6092 = vmatmul.mubr.bf16.gmra.mrb[0].mxu0 %v6057
    %v6093 = vpop.f32.mrb[0].mxu0
    %v6094 = vadd.f32 0.0, %v6093
    %v6095 = vpop.f32.mrb[0].mxu0
    %v6096 = vpop.f32.mrb[0].mxu0
    %v6097 = vpop.f32.mrb[0].mxu0
    %6098 = vdwg.mxu0
    %v6099 = vadd.f32 %v5928, %v6094
    %6100 = vrot.lane.b32.xlu0 %v5601, 32
    %v6101 = vpop.permute.xlu0 %6100
    %6102 = vrot.lane.b32.xlu0 %v5602, 32
    %v6103 = vpop.permute.xlu0 %6102
    %v6105 = vsel %vm279, %v6101, 0
    %v6108 = vsel %vm279, %v6103, 0
    %6110 = vmatprep.subr.bf16.mxu0 0
    %6111 = vmatpush1.bf16.xpose.msra.mxu0 %v6108
    %6112 = vmatprep.subr.bf16.mxu0 0
    %6113 = vmatpush1.bf16.xpose.msra.mxu0 0
    %6114 = vmatprep.subr.bf16.mxu0 0
    %6115 = vmatpush1.bf16.xpose.msra.mxu0 0
    %6116 = vmatprep.subr.bf16.mxu0 0
    %6117 = vmatpush1.bf16.xpose.msra.mxu0 0
    %6118 = vmatprep.subr.bf16.mxu0 0
    %6119 = vmatpush1.bf16.xpose.msra.mxu0 0
    %6120 = vmatprep.subr.bf16.mxu0 0
    %6121 = vmatpush1.bf16.xpose.msra.mxu0 0
    %6122 = vmatprep.subr.bf16.mxu0 0
    %6123 = vmatpush1.bf16.xpose.msra.mxu0 0
    %6124 = vmatprep.subr.bf16.mxu0 0
    %6125 = vmatpush1.bf16.xpose.msra.mxu0 0
    %6126 = vmatprep.subr.bf16.mxu0 0
    %6127 = vmatpush1.bf16.xpose.msra.mxu0 0
    %6128 = vmatprep.subr.bf16.mxu0 0
    %6129 = vmatpush1.bf16.xpose.msra.mxu0 0
    %6130 = vmatprep.subr.bf16.mxu0 0
    %6131 = vmatpush1.bf16.xpose.msra.mxu0 0
    %6132 = vmatprep.subr.bf16.mxu0 0
    %6133 = vmatpush1.bf16.xpose.msra.mxu0 0
    %6134 = vmatprep.subr.bf16.mxu0 0
    %6135 = vmatpush1.bf16.xpose.msra.mxu0 0
    %6136 = vmatprep.subr.bf16.mxu0 0
    %6137 = vmatpush1.bf16.xpose.msra.mxu0 0
    %6138 = vmatprep.subr.bf16.mxu0 0
    %6139 = vmatpush1.bf16.xpose.msra.mxu0 0
    %6140 = vmatprep.subr.bf16.mxu0 0
    %6141 = vmatpush1.bf16.xpose.msra.mxu0 0
    %6142 = vmatprep.mubr.bf16.mxu0 0
    %6143 = vmatmul.mubr.bf16.gmra.mrb[0].mxu0 %v6105
    %v6144 = vpop.f32.mrb[0].mxu0
    %v6145 = vadd.f32 0.0, %v6144
    %v6146 = vpop.f32.mrb[0].mxu0
    %v6147 = vpop.f32.mrb[0].mxu0
    %v6148 = vpop.f32.mrb[0].mxu0
    %6149 = vdwg.mxu0
    %v6150 = vsel %vm830, %v6145, -inf
    %6151 = vmax.xlane.f32.xlu0 %v6150
    %v6152 = vpop.xlane.xlu0 %6151
    %v6153 = vsub.f32 %v6145, %v6152
    %v6154 = vmul.f32 %v6153, 1.442695
    %v6155 = vpow.pop %v6154
    %v6156 = vsel %vm830, %v6155, 0.0
    %6157 = vadd.xlane.f32.xlu0 %v6156
    %v6158 = vpop.xlane.xlu0 %6157
    %v6159 = vrcp.pop %v6158
    %v6160 = vmul.f32 %v6155, %v6159
    %v6161 = vpack.c.bf16 %v6160, %v6160
    %6162 = vrot.lane.b32.xlu0 %v5603, 32
    %v6163 = vpop.permute.xlu0 %6162
    %v6165 = vsel %vm843, %v6161, 0
    %v6168 = vsel %vm207, %v6163, 0
    %6170 = vmatprep.subr.bf16.mxu0 0
    %6171 = vmatpush1.bf16.msra.mxu0 %v6168
    %6172 = vmatprep.subr.bf16.mxu0 0
    %6173 = vmatpush1.bf16.msra.mxu0 0
    %6174 = vmatprep.subr.bf16.mxu0 0
    %6175 = vmatpush1.bf16.msra.mxu0 0
    %6176 = vmatprep.subr.bf16.mxu0 0
    %6177 = vmatpush1.bf16.msra.mxu0 0
    %6178 = vmatprep.subr.bf16.mxu0 0
    %6179 = vmatpush1.bf16.msra.mxu0 0
    %6180 = vmatprep.subr.bf16.mxu0 0
    %6181 = vmatpush1.bf16.msra.mxu0 0
    %6182 = vmatprep.subr.bf16.mxu0 0
    %6183 = vmatpush1.bf16.msra.mxu0 0
    %6184 = vmatprep.subr.bf16.mxu0 0
    %6185 = vmatpush1.bf16.msra.mxu0 0
    %6186 = vmatprep.subr.bf16.mxu0 0
    %6187 = vmatpush1.bf16.msra.mxu0 0
    %6188 = vmatprep.subr.bf16.mxu0 0
    %6189 = vmatpush1.bf16.msra.mxu0 0
    %6190 = vmatprep.subr.bf16.mxu0 0
    %6191 = vmatpush1.bf16.msra.mxu0 0
    %6192 = vmatprep.subr.bf16.mxu0 0
    %6193 = vmatpush1.bf16.msra.mxu0 0
    %6194 = vmatprep.subr.bf16.mxu0 0
    %6195 = vmatpush1.bf16.msra.mxu0 0
    %6196 = vmatprep.subr.bf16.mxu0 0
    %6197 = vmatpush1.bf16.msra.mxu0 0
    %6198 = vmatprep.subr.bf16.mxu0 0
    %6199 = vmatpush1.bf16.msra.mxu0 0
    %6200 = vmatprep.subr.bf16.mxu0 0
    %6201 = vmatpush1.bf16.msra.mxu0 0
    %6202 = vmatprep.mubr.bf16.mxu0 0
    %6203 = vmatmul.mubr.bf16.gmra.mrb[0].mxu0 %v6165
    %v6204 = vpop.f32.mrb[0].mxu0
    %v6205 = vadd.f32 0.0, %v6204
    %v6206 = vpop.f32.mrb[0].mxu0
    %v6207 = vpop.f32.mrb[0].mxu0
    %v6208 = vpop.f32.mrb[0].mxu0
    %6209 = vdwg.mxu0
    %v6210 = vpack.c.bf16 %v6205, %v6205
    %v6215 = vunpack.c.l.b16 %v5270
    %v6216 = vunpack.c.l.b16 %v5271
    %v6217 = vunpack.c.l.b16 %v5272
    %v6218 = vunpack.c.l.b16 %v5273
    %v6219 = vpack.c.b16 %v6216, %v6215
    %v6220 = vpack.c.b16 %v6218, %v6217
    %v6224 = vsel %vm279, %v6210, 0
    %6226 = vmatprep.subr.bf16.mxu0 0
    %6227 = vmatpush1.bf16.msra.mxu0 %v6219
    %6228 = vmatprep.subr.bf16.mxu0 0
    %6229 = vmatpush1.bf16.msra.mxu0 %v6220
    %6230 = vmatprep.subr.bf16.mxu0 0
    %6231 = vmatpush1.bf16.msra.mxu0 0
    %6232 = vmatprep.subr.bf16.mxu0 0
    %6233 = vmatpush1.bf16.msra.mxu0 0
    %6234 = vmatprep.subr.bf16.mxu0 0
    %6235 = vmatpush1.bf16.msra.mxu0 0
    %6236 = vmatprep.subr.bf16.mxu0 0
    %6237 = vmatpush1.bf16.msra.mxu0 0
    %6238 = vmatprep.subr.bf16.mxu0 0
    %6239 = vmatpush1.bf16.msra.mxu0 0
    %6240 = vmatprep.subr.bf16.mxu0 0
    %6241 = vmatpush1.bf16.msra.mxu0 0
    %6242 = vmatprep.subr.bf16.mxu0 0
    %6243 = vmatpush1.bf16.msra.mxu0 0
    %6244 = vmatprep.subr.bf16.mxu0 0
    %6245 = vmatpush1.bf16.msra.mxu0 0
    %6246 = vmatprep.subr.bf16.mxu0 0
    %6247 = vmatpush1.bf16.msra.mxu0 0
    %6248 = vmatprep.subr.bf16.mxu0 0
    %6249 = vmatpush1.bf16.msra.mxu0 0
    %6250 = vmatprep.subr.bf16.mxu0 0
    %6251 = vmatpush1.bf16.msra.mxu0 0
    %6252 = vmatprep.subr.bf16.mxu0 0
    %6253 = vmatpush1.bf16.msra.mxu0 0
    %6254 = vmatprep.subr.bf16.mxu0 0
    %6255 = vmatpush1.bf16.msra.mxu0 0
    %6256 = vmatprep.subr.bf16.mxu0 0
    %6257 = vmatpush1.bf16.msra.mxu0 0
    %6258 = vmatprep.mubr.bf16.mxu0 0
    %6259 = vmatmul.mubr.bf16.gmra.mrb[0].mxu0 %v6224
    %v6260 = vpop.f32.mrb[0].mxu0
    %v6261 = vadd.f32 0.0, %v6260
    %v6262 = vpop.f32.mrb[0].mxu0
    %v6263 = vpop.f32.mrb[0].mxu0
    %v6264 = vpop.f32.mrb[0].mxu0
    %6265 = vdwg.mxu0
    %v6266 = vadd.f32 %v6099, %v6261
    %s6267 = scalar_lea.vmem %s10, 3
    %v6268 = vld [vmem:[%s6267] sm:$0x1]
    %v6270 = vlaneseq
    %v6271 = vshrl.u32 %v6270, 7
    %v6272 = vsub.s32 0, %v6271
    %v6273 = vrot.slane %v6268, %v6272
    %v6275 = vadd.f32 %v6266, %v6273
    %v6276 = vadd.f32 %v6275, %v6275
    %v6277 = vpack.c.bf16 %v6276, %v6276
    %s6278 = scalar_lea.vmem %s12, 12
    %v6279 = vld [vmem:[%s6278] sm:$0xf]
    %v6281 = vlaneseq
    %v6282 = vshrl.u32 %v6281, 7
    %v6283 = vsub.s32 0, %v6282
    %v6284 = vrot.slane %v6279, %v6283
    %v6285 = vlaneseq
    %v6286 = vshrl.u32 %v6285, 7
    %v6287 = vsub.s32 1, %v6286
    %v6288 = vrot.slane %v6279, %v6287
    %v6289 = vlaneseq
    %v6290 = vshrl.u32 %v6289, 7
    %v6291 = vsub.s32 2, %v6290
    %v6292 = vrot.slane %v6279, %v6291
    %v6293 = vlaneseq
    %v6294 = vshrl.u32 %v6293, 7
    %v6295 = vsub.s32 3, %v6294
    %v6296 = vrot.slane %v6279, %v6295
    %v6333 = vunpack.c.l.b16 %v5275
    %v6334 = vunpack.c.h.b16 %v5275
    %v6335 = vunpack.c.l.b16 %v5276
    %v6336 = vunpack.c.h.b16 %v5276
    %v6337 = vunpack.c.l.b16 %v5277
    %v6338 = vunpack.c.h.b16 %v5277
    %v6339 = vunpack.c.l.b16 %v5278
    %v6340 = vunpack.c.h.b16 %v5278
    %v6341 = vunpack.c.l.b16 %v5279
    %v6342 = vunpack.c.h.b16 %v5279
    %v6343 = vunpack.c.l.b16 %v5280
    %v6344 = vunpack.c.h.b16 %v5280
    %v6345 = vunpack.c.l.b16 %v5281
    %v6346 = vunpack.c.h.b16 %v5281
    %v6347 = vunpack.c.l.b16 %v5282
    %v6348 = vunpack.c.h.b16 %v5282
    %v6349 = vunpack.c.l.b16 %v5283
    %v6350 = vunpack.c.h.b16 %v5283
    %v6351 = vunpack.c.l.b16 %v5284
    %v6352 = vunpack.c.h.b16 %v5284
    %v6353 = vunpack.c.l.b16 %v5285
    %v6354 = vunpack.c.h.b16 %v5285
    %v6355 = vunpack.c.l.b16 %v5286
    %v6356 = vunpack.c.h.b16 %v5286
    %v6357 = vunpack.c.l.b16 %v5287
    %v6358 = vunpack.c.h.b16 %v5287
    %v6359 = vunpack.c.l.b16 %v5288
    %v6360 = vunpack.c.h.b16 %v5288
    %v6361 = vunpack.c.l.b16 %v5289
    %v6362 = vunpack.c.h.b16 %v5289
    %v6363 = vunpack.c.l.b16 %v5290
    %v6364 = vunpack.c.h.b16 %v5290
    %v6365 = vunpack.c.l.b16 %v5291
    %v6366 = vunpack.c.h.b16 %v5291
    %v6367 = vunpack.c.l.b16 %v5292
    %v6368 = vunpack.c.h.b16 %v5292
    %v6369 = vunpack.c.l.b16 %v5293
    %v6370 = vunpack.c.h.b16 %v5293
    %v6371 = vunpack.c.l.b16 %v5294
    %v6372 = vunpack.c.h.b16 %v5294
    %v6373 = vunpack.c.l.b16 %v5295
    %v6374 = vunpack.c.h.b16 %v5295
    %v6375 = vunpack.c.l.b16 %v5296
    %v6376 = vunpack.c.h.b16 %v5296
    %v6377 = vunpack.c.l.b16 %v5297
    %v6378 = vunpack.c.h.b16 %v5297
    %v6379 = vunpack.c.l.b16 %v5298
    %v6380 = vunpack.c.h.b16 %v5298
    %v6381 = vunpack.c.l.b16 %v5299
    %v6382 = vunpack.c.h.b16 %v5299
    %v6383 = vunpack.c.l.b16 %v5300
    %v6384 = vunpack.c.h.b16 %v5300
    %v6385 = vunpack.c.l.b16 %v5301
    %v6386 = vunpack.c.h.b16 %v5301
    %v6387 = vunpack.c.l.b16 %v5302
    %v6388 = vunpack.c.h.b16 %v5302
    %v6389 = vunpack.c.l.b16 %v5303
    %v6390 = vunpack.c.h.b16 %v5303
    %v6391 = vunpack.c.l.b16 %v5304
    %v6392 = vunpack.c.h.b16 %v5304
    %v6393 = vunpack.c.l.b16 %v5305
    %v6394 = vunpack.c.h.b16 %v5305
    %v6395 = vunpack.c.l.b16 %v5306
    %v6396 = vunpack.c.h.b16 %v5306
    %v6397 = vpack.c.b16 %v6337, %v6333
    %v6398 = vpack.c.b16 %v6338, %v6334
    %v6399 = vpack.c.b16 %v6339, %v6335
    %v6400 = vpack.c.b16 %v6340, %v6336
    %v6401 = vpack.c.b16 %v6345, %v6341
    %v6402 = vpack.c.b16 %v6346, %v6342
    %v6403 = vpack.c.b16 %v6347, %v6343
    %v6404 = vpack.c.b16 %v6348, %v6344
    %v6405 = vpack.c.b16 %v6353, %v6349
    %v6406 = vpack.c.b16 %v6354, %v6350
    %v6407 = vpack.c.b16 %v6355, %v6351
    %v6408 = vpack.c.b16 %v6356, %v6352
    %v6409 = vpack.c.b16 %v6361, %v6357
    %v6410 = vpack.c.b16 %v6362, %v6358
    %v6411 = vpack.c.b16 %v6363, %v6359
    %v6412 = vpack.c.b16 %v6364, %v6360
    %v6413 = vpack.c.b16 %v6369, %v6365
    %v6414 = vpack.c.b16 %v6370, %v6366
    %v6415 = vpack.c.b16 %v6371, %v6367
    %v6416 = vpack.c.b16 %v6372, %v6368
    %v6417 = vpack.c.b16 %v6377, %v6373
    %v6418 = vpack.c.b16 %v6378, %v6374
    %v6419 = vpack.c.b16 %v6379, %v6375
    %v6420 = vpack.c.b16 %v6380, %v6376
    %v6421 = vpack.c.b16 %v6385, %v6381
    %v6422 = vpack.c.b16 %v6386, %v6382
    %v6423 = vpack.c.b16 %v6387, %v6383
    %v6424 = vpack.c.b16 %v6388, %v6384
    %v6425 = vpack.c.b16 %v6393, %v6389
    %v6426 = vpack.c.b16 %v6394, %v6390
    %v6427 = vpack.c.b16 %v6395, %v6391
    %v6428 = vpack.c.b16 %v6396, %v6392
    %6461 = vmatprep.subr.bf16.mxu0 %v6398
    %6462 = vmatpush1.bf16.msra.mxu0 %v6397
    %6463 = vmatprep.subr.bf16.mxu0 %v6402
    %6464 = vmatpush1.bf16.msra.mxu0 %v6401
    %6465 = vmatprep.subr.bf16.mxu0 %v6406
    %6466 = vmatpush1.bf16.msra.mxu0 %v6405
    %6467 = vmatprep.subr.bf16.mxu0 %v6410
    %6468 = vmatpush1.bf16.msra.mxu0 %v6409
    %6469 = vmatprep.subr.bf16.mxu0 %v6414
    %6470 = vmatpush1.bf16.msra.mxu0 %v6413
    %6471 = vmatprep.subr.bf16.mxu0 %v6418
    %6472 = vmatpush1.bf16.msra.mxu0 %v6417
    %6473 = vmatprep.subr.bf16.mxu0 %v6422
    %6474 = vmatpush1.bf16.msra.mxu0 %v6421
    %6475 = vmatprep.subr.bf16.mxu0 %v6426
    %6476 = vmatpush1.bf16.msra.mxu0 %v6425
    %6477 = vmatprep.subr.bf16.mxu0 0
    %6478 = vmatpush1.bf16.msra.mxu0 0
    %6479 = vmatprep.subr.bf16.mxu0 0
    %6480 = vmatpush1.bf16.msra.mxu0 0
    %6481 = vmatprep.subr.bf16.mxu0 0
    %6482 = vmatpush1.bf16.msra.mxu0 0
    %6483 = vmatprep.subr.bf16.mxu0 0
    %6484 = vmatpush1.bf16.msra.mxu0 0
    %6485 = vmatprep.subr.bf16.mxu0 0
    %6486 = vmatpush1.bf16.msra.mxu0 0
    %6487 = vmatprep.subr.bf16.mxu0 0
    %6488 = vmatpush1.bf16.msra.mxu0 0
    %6489 = vmatprep.subr.bf16.mxu0 0
    %6490 = vmatpush1.bf16.msra.mxu0 0
    %6491 = vmatprep.subr.bf16.mxu0 0
    %6492 = vmatpush1.bf16.msra.mxu0 0
    %6493 = vmatprep.mubr.bf16.mxu0 0
    %6494 = vmatmul.mubr.bf16.gmra.mrb[0].mxu0 %v6277
    %v6495 = vpop.f32.mrb[0].mxu0
    %v6496 = vadd.f32 %v6284, %v6495
    %v6497 = vpop.f32.mrb[0].mxu0
    %v6498 = vadd.f32 %v6288, %v6497
    %v6499 = vpop.f32.mrb[0].mxu0
    %v6500 = vpop.f32.mrb[0].mxu0
    %6501 = vdwg.mxu0
    %6502 = vmatprep.subr.bf16.mxu0 %v6400
    %6503 = vmatpush1.bf16.msra.mxu0 %v6399
    %6504 = vmatprep.subr.bf16.mxu0 %v6404
    %6505 = vmatpush1.bf16.msra.mxu0 %v6403
    %6506 = vmatprep.subr.bf16.mxu0 %v6408
    %6507 = vmatpush1.bf16.msra.mxu0 %v6407
    %6508 = vmatprep.subr.bf16.mxu0 %v6412
    %6509 = vmatpush1.bf16.msra.mxu0 %v6411
    %6510 = vmatprep.subr.bf16.mxu0 %v6416
    %6511 = vmatpush1.bf16.msra.mxu0 %v6415
    %6512 = vmatprep.subr.bf16.mxu0 %v6420
    %6513 = vmatpush1.bf16.msra.mxu0 %v6419
    %6514 = vmatprep.subr.bf16.mxu0 %v6424
    %6515 = vmatpush1.bf16.msra.mxu0 %v6423
    %6516 = vmatprep.subr.bf16.mxu0 %v6428
    %6517 = vmatpush1.bf16.msra.mxu0 %v6427
    %6518 = vmatprep.subr.bf16.mxu0 0
    %6519 = vmatpush1.bf16.msra.mxu0 0
    %6520 = vmatprep.subr.bf16.mxu0 0
    %6521 = vmatpush1.bf16.msra.mxu0 0
    %6522 = vmatprep.subr.bf16.mxu0 0
    %6523 = vmatpush1.bf16.msra.mxu0 0
    %6524 = vmatprep.subr.bf16.mxu0 0
    %6525 = vmatpush1.bf16.msra.mxu0 0
    %6526 = vmatprep.subr.bf16.mxu0 0
    %6527 = vmatpush1.bf16.msra.mxu0 0
    %6528 = vmatprep.subr.bf16.mxu0 0
    %6529 = vmatpush1.bf16.msra.mxu0 0
    %6530 = vmatprep.subr.bf16.mxu0 0
    %6531 = vmatpush1.bf16.msra.mxu0 0
    %6532 = vmatprep.subr.bf16.mxu0 0
    %6533 = vmatpush1.bf16.msra.mxu0 0
    %6534 = vmatprep.mubr.bf16.mxu0 0
    %6535 = vmatmul.mubr.bf16.gmra.mrb[0].mxu0 %v6277
    %v6536 = vpop.f32.mrb[0].mxu0
    %v6537 = vadd.f32 %v6292, %v6536
    %v6538 = vpop.f32.mrb[0].mxu0
    %v6539 = vadd.f32 %v6296, %v6538
    %v6540 = vpop.f32.mrb[0].mxu0
    %v6541 = vpop.f32.mrb[0].mxu0
    %6542 = vdwg.mxu0
    %v6543 = vmax.f32 %v6496, 0.0
    %v6544 = vmax.f32 %v6498, 0.0
    %v6545 = vmax.f32 %v6537, 0.0
    %v6546 = vmax.f32 %v6539, 0.0
    %v6547 = vpack.c.bf16 %v6543, %v6543
    %v6548 = vpack.c.bf16 %v6544, %v6544
    %v6549 = vpack.c.bf16 %v6545, %v6545
    %v6550 = vpack.c.bf16 %v6546, %v6546
    %s6551 = scalar_lea.vmem [#allocation19], 3
    %v6552 = vld [vmem:[%s6551] sm:$0x1]
    %v6554 = vlaneseq
    %v6555 = vshrl.u32 %v6554, 7
    %v6556 = vsub.s32 0, %v6555
    %v6557 = vrot.slane %v6552, %v6556
    %v6623 = vunpack.c.l.b16 %v5308
    %v6624 = vunpack.c.l.b16 %v5309
    %v6625 = vunpack.c.l.b16 %v5310
    %v6626 = vunpack.c.l.b16 %v5311
    %v6627 = vunpack.c.l.b16 %v5312
    %v6628 = vunpack.c.l.b16 %v5313
    %v6629 = vunpack.c.l.b16 %v5314
    %v6630 = vunpack.c.l.b16 %v5315
    %v6631 = vunpack.c.l.b16 %v5316
    %v6632 = vunpack.c.l.b16 %v5317
    %v6633 = vunpack.c.l.b16 %v5318
    %v6634 = vunpack.c.l.b16 %v5319
    %v6635 = vunpack.c.l.b16 %v5320
    %v6636 = vunpack.c.l.b16 %v5321
    %v6637 = vunpack.c.l.b16 %v5322
    %v6638 = vunpack.c.l.b16 %v5323
    %v6639 = vunpack.c.l.b16 %v5324
    %v6640 = vunpack.c.l.b16 %v5325
    %v6641 = vunpack.c.l.b16 %v5326
    %v6642 = vunpack.c.l.b16 %v5327
    %v6643 = vunpack.c.l.b16 %v5328
    %v6644 = vunpack.c.l.b16 %v5329
    %v6645 = vunpack.c.l.b16 %v5330
    %v6646 = vunpack.c.l.b16 %v5331
    %v6647 = vunpack.c.l.b16 %v5332
    %v6648 = vunpack.c.l.b16 %v5333
    %v6649 = vunpack.c.l.b16 %v5334
    %v6650 = vunpack.c.l.b16 %v5335
    %v6651 = vunpack.c.l.b16 %v5336
    %v6652 = vunpack.c.l.b16 %v5337
    %v6653 = vunpack.c.l.b16 %v5338
    %v6654 = vunpack.c.l.b16 %v5339
    %v6655 = vunpack.c.l.b16 %v5340
    %v6656 = vunpack.c.l.b16 %v5341
    %v6657 = vunpack.c.l.b16 %v5342
    %v6658 = vunpack.c.l.b16 %v5343
    %v6659 = vunpack.c.l.b16 %v5344
    %v6660 = vunpack.c.l.b16 %v5345
    %v6661 = vunpack.c.l.b16 %v5346
    %v6662 = vunpack.c.l.b16 %v5347
    %v6663 = vunpack.c.l.b16 %v5348
    %v6664 = vunpack.c.l.b16 %v5349
    %v6665 = vunpack.c.l.b16 %v5350
    %v6666 = vunpack.c.l.b16 %v5351
    %v6667 = vunpack.c.l.b16 %v5352
    %v6668 = vunpack.c.l.b16 %v5353
    %v6669 = vunpack.c.l.b16 %v5354
    %v6670 = vunpack.c.l.b16 %v5355
    %v6671 = vunpack.c.l.b16 %v5356
    %v6672 = vunpack.c.l.b16 %v5357
    %v6673 = vunpack.c.l.b16 %v5358
    %v6674 = vunpack.c.l.b16 %v5359
    %v6675 = vunpack.c.l.b16 %v5360
    %v6676 = vunpack.c.l.b16 %v5361
    %v6677 = vunpack.c.l.b16 %v5362
    %v6678 = vunpack.c.l.b16 %v5363
    %v6679 = vunpack.c.l.b16 %v5364
    %v6680 = vunpack.c.l.b16 %v5365
    %v6681 = vunpack.c.l.b16 %v5366
    %v6682 = vunpack.c.l.b16 %v5367
    %v6683 = vunpack.c.l.b16 %v5368
    %v6684 = vunpack.c.l.b16 %v5369
    %v6685 = vunpack.c.l.b16 %v5370
    %v6686 = vunpack.c.l.b16 %v5371
    %v6687 = vpack.c.b16 %v6624, %v6623
    %v6688 = vpack.c.b16 %v6626, %v6625
    %v6689 = vpack.c.b16 %v6628, %v6627
    %v6690 = vpack.c.b16 %v6630, %v6629
    %v6691 = vpack.c.b16 %v6632, %v6631
    %v6692 = vpack.c.b16 %v6634, %v6633
    %v6693 = vpack.c.b16 %v6636, %v6635
    %v6694 = vpack.c.b16 %v6638, %v6637
    %v6695 = vpack.c.b16 %v6640, %v6639
    %v6696 = vpack.c.b16 %v6642, %v6641
    %v6697 = vpack.c.b16 %v6644, %v6643
    %v6698 = vpack.c.b16 %v6646, %v6645
    %v6699 = vpack.c.b16 %v6648, %v6647
    %v6700 = vpack.c.b16 %v6650, %v6649
    %v6701 = vpack.c.b16 %v6652, %v6651
    %v6702 = vpack.c.b16 %v6654, %v6653
    %v6703 = vpack.c.b16 %v6656, %v6655
    %v6704 = vpack.c.b16 %v6658, %v6657
    %v6705 = vpack.c.b16 %v6660, %v6659
    %v6706 = vpack.c.b16 %v6662, %v6661
    %v6707 = vpack.c.b16 %v6664, %v6663
    %v6708 = vpack.c.b16 %v6666, %v6665
    %v6709 = vpack.c.b16 %v6668, %v6667
    %v6710 = vpack.c.b16 %v6670, %v6669
    %v6711 = vpack.c.b16 %v6672, %v6671
    %v6712 = vpack.c.b16 %v6674, %v6673
    %v6713 = vpack.c.b16 %v6676, %v6675
    %v6714 = vpack.c.b16 %v6678, %v6677
    %v6715 = vpack.c.b16 %v6680, %v6679
    %v6716 = vpack.c.b16 %v6682, %v6681
    %v6717 = vpack.c.b16 %v6684, %v6683
    %v6718 = vpack.c.b16 %v6686, %v6685
    %6751 = vmatprep.subr.bf16.mxu0 0
    %6752 = vmatpush1.bf16.msra.mxu0 %v6687
    %6753 = vmatprep.subr.bf16.mxu0 0
    %6754 = vmatpush1.bf16.msra.mxu0 %v6688
    %6755 = vmatprep.subr.bf16.mxu0 0
    %6756 = vmatpush1.bf16.msra.mxu0 %v6689
    %6757 = vmatprep.subr.bf16.mxu0 0
    %6758 = vmatpush1.bf16.msra.mxu0 %v6690
    %6759 = vmatprep.subr.bf16.mxu0 0
    %6760 = vmatpush1.bf16.msra.mxu0 %v6691
    %6761 = vmatprep.subr.bf16.mxu0 0
    %6762 = vmatpush1.bf16.msra.mxu0 %v6692
    %6763 = vmatprep.subr.bf16.mxu0 0
    %6764 = vmatpush1.bf16.msra.mxu0 %v6693
    %6765 = vmatprep.subr.bf16.mxu0 0
    %6766 = vmatpush1.bf16.msra.mxu0 %v6694
    %6767 = vmatprep.subr.bf16.mxu0 0
    %6768 = vmatpush1.bf16.msra.mxu0 %v6695
    %6769 = vmatprep.subr.bf16.mxu0 0
    %6770 = vmatpush1.bf16.msra.mxu0 %v6696
    %6771 = vmatprep.subr.bf16.mxu0 0
    %6772 = vmatpush1.bf16.msra.mxu0 %v6697
    %6773 = vmatprep.subr.bf16.mxu0 0
    %6774 = vmatpush1.bf16.msra.mxu0 %v6698
    %6775 = vmatprep.subr.bf16.mxu0 0
    %6776 = vmatpush1.bf16.msra.mxu0 %v6699
    %6777 = vmatprep.subr.bf16.mxu0 0
    %6778 = vmatpush1.bf16.msra.mxu0 %v6700
    %6779 = vmatprep.subr.bf16.mxu0 0
    %6780 = vmatpush1.bf16.msra.mxu0 %v6701
    %6781 = vmatprep.subr.bf16.mxu0 0
    %6782 = vmatpush1.bf16.msra.mxu0 %v6702
    %6783 = vmatprep.mubr.bf16.mxu0 %v6548
    %6784 = vmatmul.mubr.bf16.gmra.mrb[0].mxu0 %v6547
    %v6785 = vpop.f32.mrb[0].mxu0
    %v6786 = vadd.f32 %v6557, %v6785
    %v6787 = vpop.f32.mrb[0].mxu0
    %v6788 = vpop.f32.mrb[0].mxu0
    %v6789 = vpop.f32.mrb[0].mxu0
    %6790 = vdwg.mxu0
    %6791 = vmatprep.subr.bf16.mxu0 0
    %6792 = vmatpush1.bf16.msra.mxu0 %v6703
    %6793 = vmatprep.subr.bf16.mxu0 0
    %6794 = vmatpush1.bf16.msra.mxu0 %v6704
    %6795 = vmatprep.subr.bf16.mxu0 0
    %6796 = vmatpush1.bf16.msra.mxu0 %v6705
    %6797 = vmatprep.subr.bf16.mxu0 0
    %6798 = vmatpush1.bf16.msra.mxu0 %v6706
    %6799 = vmatprep.subr.bf16.mxu0 0
    %6800 = vmatpush1.bf16.msra.mxu0 %v6707
    %6801 = vmatprep.subr.bf16.mxu0 0
    %6802 = vmatpush1.bf16.msra.mxu0 %v6708
    %6803 = vmatprep.subr.bf16.mxu0 0
    %6804 = vmatpush1.bf16.msra.mxu0 %v6709
    %6805 = vmatprep.subr.bf16.mxu0 0
    %6806 = vmatpush1.bf16.msra.mxu0 %v6710
    %6807 = vmatprep.subr.bf16.mxu0 0
    %6808 = vmatpush1.bf16.msra.mxu0 %v6711
    %6809 = vmatprep.subr.bf16.mxu0 0
    %6810 = vmatpush1.bf16.msra.mxu0 %v6712
    %6811 = vmatprep.subr.bf16.mxu0 0
    %6812 = vmatpush1.bf16.msra.mxu0 %v6713
    %6813 = vmatprep.subr.bf16.mxu0 0
    %6814 = vmatpush1.bf16.msra.mxu0 %v6714
    %6815 = vmatprep.subr.bf16.mxu0 0
    %6816 = vmatpush1.bf16.msra.mxu0 %v6715
    %6817 = vmatprep.subr.bf16.mxu0 0
    %6818 = vmatpush1.bf16.msra.mxu0 %v6716
    %6819 = vmatprep.subr.bf16.mxu0 0
    %6820 = vmatpush1.bf16.msra.mxu0 %v6717
    %6821 = vmatprep.subr.bf16.mxu0 0
    %6822 = vmatpush1.bf16.msra.mxu0 %v6718
    %6823 = vmatprep.mubr.bf16.mxu0 %v6550
    %6824 = vmatmul.mubr.bf16.gmra.mrb[0].mxu0 %v6549
    %v6825 = vpop.f32.mrb[0].mxu0
    %v6826 = vadd.f32 %v6786, %v6825
    %v6827 = vpop.f32.mrb[0].mxu0
    %v6828 = vpop.f32.mrb[0].mxu0
    %v6829 = vpop.f32.mrb[0].mxu0
    %6830 = vdwg.mxu0
    %6831 = vst [vmem:[#allocation20] sm:$0x3] %v6826
    // Predicated region
    $region106: #{fighter_net_forward.1} parent=1 // pred_check
      _
    $region107: #{fighter_net_forward.1} parent=1 // pred_check_branch
      %6833 = sbr.rel (0) target = $region109
    $region108: #{fighter_net_forward.1} parent=1 // pred_region
      %s6835 = ssub.s32 32, 32
      %6836 = vsyncadd [#allocation4], %s6835
      %s6838 = sshll.u32 [#allocation20], 4
      %s6839 = int_to_ptr.vmem [resolvable:$true] %s6838
      %6841 = dma.vmem_to_hbm [thread:$0]  %s6839, 32, %s15, [#allocation4]
    $region109: #{fighter_net_forward.1} parent=1 // pred_fallthru
      _
    // Predicated region
    $region110: #{fighter_net_forward.1} parent=1 // pred_check
      _
    $region111: #{fighter_net_forward.1} parent=1 // pred_check_branch
      %6843 = sbr.rel (0) target = $region113
    $region112: #{fighter_net_forward.1} parent=1 // pred_region
      %6844 = dma.done [#allocation4], 32
    $region113: #{fighter_net_forward.1} parent=1 // pred_fallthru
      _
    %6845 = vsyncpa [#allocation3], 1
    %6846 = vsyncpa [#allocation6], 1
    %6847 = vsyncpa [#allocation9], 1
    %6848 = vsyncpa [#allocation12], 1
    %6849 = vsyncpa [#allocation15], 1
    %6850 = vsyncpa [#allocation18], 1
    %6851 = vsyncpa [#allocation4], 1

</llo_original>
